<compile_context>
chip_gen: v5e
topology: v5e:2x2
jax: 0.10.0
libtpu: 0.0.40
codegen_flags: <defaults>
</compile_context>

<pallas_src>
import functools

import jax
import jax.numpy as jnp
from jax import lax
from jax.experimental import pallas as pl
from jax.experimental.pallas import tpu as pltpu

SOS_TOKEN = 1


def _sigmoid(x):
    # Numerically stable sigmoid routed through the EUP tanh unit.
    return 0.5 * (jnp.tanh(0.5 * x) + 1.0)


def _gru_fused(x, h, w_ref, b_ref, H):
    """PyTorch GRU cell as a single fused matmul.

    w_ref : (2H, 4H) bf16 with column blocks
            [ wih_r ; whh_r | wih_z ; whh_z | wih_n ; 0 | 0 ; whh_n ]
    b_ref : (1, 4H) f32 = [bih_r+bhh_r | bih_z+bhh_z | bih_n | bhh_n]
    so g = [x, h] @ w + b yields (gi_r+gh_r | gi_z+gh_z | gi_n | gh_n),
    preserving n = tanh(gi_n + r * gh_n).
    """
    xh = jnp.concatenate([x, h], axis=1).astype(jnp.bfloat16)       # (B, 2H)
    g = jnp.dot(xh, w_ref[...], preferred_element_type=jnp.float32) + b_ref[...]
    r = _sigmoid(g[:, 0:H])
    z = _sigmoid(g[:, H:2 * H])
    n = jnp.tanh(g[:, 2 * H:3 * H] + r * g[:, 3 * H:4 * H])
    return (1.0 - z) * n + z * h


def _greedy_kernel(
    # SMEM inputs
    seq_ref, qtype_ref,
    # encoder params (VMEM)
    enc_emb_ref, enc_w_ref, enc_b_ref, type_emb_ref,
    # decomposer params (VMEM)
    dcmp_w1_ref, dcmp_b1_ref, dcmp_w2_ref, dcmp_b2_ref,
    # decoder params: big ones stay in HBM (ANY), small biases in VMEM
    dec_emb_hbm, dec_w_hbm, dec_b_ref, wc_hbm, bc_ref, wout_hbm, bout_ref,
    # outputs
    tok_ref, sc_ref,
    # scratch
    enc_scr, dec_emb_vmem, dec_w_vmem, wc_vmem, wout_vmem, dma_sem,
    *, T, H, Vp, L,
):
    f32 = jnp.float32
    bf16 = jnp.bfloat16

    # ---- kick off decoder-weight DMAs; they overlap the encoder compute ----
    cp_emb = pltpu.make_async_copy(dec_emb_hbm, dec_emb_vmem, dma_sem.at[0])
    cp_gru = pltpu.make_async_copy(dec_w_hbm, dec_w_vmem, dma_sem.at[1])
    cp_wc = pltpu.make_async_copy(wc_hbm, wc_vmem, dma_sem.at[2])
    cp_out = pltpu.make_async_copy(wout_hbm, wout_vmem, dma_sem.at[3])
    cp_emb.start()
    cp_gru.start()
    cp_wc.start()
    cp_out.start()

    # ---------- Encoder: 1-layer unidirectional GRU, fully unrolled ----------
    # TODO(synk): original encoder likely uses pack_padded_sequence and/or a
    # bidirectional GRU; we assume input_length == T and a single direction.
    h = jnp.zeros((1, H), f32)
    for t in range(T):
        tok = seq_ref[t]
        x = enc_emb_ref[pl.ds(tok, 1), :]                            # (1, H) f32
        h = _gru_fused(x, h, enc_w_ref, enc_b_ref, H)
        enc_scr[pl.ds(t, 1), :] = h                                  # static row
    enc = enc_scr[...]                                               # (T, H) f32

    qt = qtype_ref[0]
    h_with_type = h + type_emb_ref[pl.ds(qt, 1), :]                  # (1, H)

    # ------------------------------ Decomposer -------------------------------
    sub_h1 = jnp.tanh(jnp.dot(h_with_type, dcmp_w1_ref[...],
                              preferred_element_type=f32) + dcmp_b1_ref[...])
    sub_h2 = jnp.tanh(jnp.dot(h_with_type, dcmp_w2_ref[...],
                              preferred_element_type=f32) + dcmp_b2_ref[...])

    # ---- decoder weights must be resident before the decode loop starts ----
    cp_emb.wait()
    cp_gru.wait()
    cp_wc.wait()
    cp_out.wait()

    # -------------- Both greedy decodes batched into one loop ---------------
    B = 2
    hdec = jnp.concatenate([sub_h1, sub_h2], axis=0)                 # (2, H)
    ids = lax.broadcasted_iota(jnp.int32, (B, Vp), 1)
    onehot = (ids == SOS_TOKEN).astype(bf16)                         # SOS feedback

    tok_cols, sc_cols = [], []
    for _ in range(L):
        # embedding lookup for the fed-back token as a tiny (B,Vp)@(Vp,H) matmul
        # (one-hot is exact in bf16; dec_emb rows are bf16-quantized weights).
        x = jnp.dot(onehot, dec_emb_vmem[...],
                    preferred_element_type=f32)                      # (B, H)
        h_new = _gru_fused(x, hdec, dec_w_vmem, dec_b_ref, H)

        # Luong "dot" attention, lane-dense: scores (B, T), softmax over lanes.
        scores = lax.dot_general(h_new, enc, (((1,), (1,)), ((), ())),
                                 preferred_element_type=f32)         # (B, T)
        scores = scores - jnp.max(scores, axis=1, keepdims=True)
        e = jnp.exp(scores)
        w_att = e * pl.reciprocal(jnp.sum(e, axis=1, keepdims=True),
                                  approx=True)
        ctx = jnp.dot(w_att, enc, preferred_element_type=f32)        # (B, H)

        # fused concat projection: [h_new, ctx] (B,2H) @ wc (2H,H)
        hc = jnp.concatenate([h_new, ctx], axis=1).astype(bf16)
        concat_out = jnp.tanh(jnp.dot(hc, wc_vmem[...],
                                      preferred_element_type=f32) + bc_ref[...])
        logits = jnp.dot(concat_out.astype(bf16), wout_vmem[...],
                         preferred_element_type=f32) + bout_ref[...]  # (B, Vp)

        # softmax is monotonic -> argmax on logits; padded columns are -1e30 so
        # they never win and contribute exactly 0 to the denominator.  Reported
        # score is the max softmax probability = 1 / sum(exp(logits - max)).
        m = jnp.max(logits, axis=1, keepdims=True)                   # (B, 1)
        denom = jnp.sum(jnp.exp(logits - m), axis=1, keepdims=True)
        score = 1.0 / denom                                          # (B, 1)
        tok_row = jnp.min(jnp.where(logits >= m, ids, Vp),
                          axis=1, keepdims=True)                     # (B,1) int32

        tok_cols.append(tok_row)
        sc_cols.append(score)
        onehot = (ids == tok_row).astype(bf16)
        hdec = h_new

    # single lane store of both streams
    tok_ref[...] = jnp.concatenate(tok_cols, axis=1)                 # (2, L)
    sc_ref[...] = jnp.concatenate(sc_cols, axis=1)                   # (2, L)


def _fuse_gru_weights(wih, whh, bih, bhh, H, w_dtype):
    """Pack PyTorch-convention (H,3H)/(H,3H) GRU weights into one (2H,4H)."""
    zeros = jnp.zeros((H, H), dtype=wih.dtype)
    w = jnp.concatenate([
        jnp.concatenate([wih[:, 0:H], wih[:, H:2 * H],
                         wih[:, 2 * H:3 * H], zeros], axis=1),
        jnp.concatenate([whh[:, 0:H], whh[:, H:2 * H],
                         zeros, whh[:, 2 * H:3 * H]], axis=1),
    ], axis=0).astype(w_dtype)                                       # (2H, 4H)
    b = jnp.concatenate([bih[:, 0:H] + bhh[:, 0:H],
                         bih[:, H:2 * H] + bhh[:, H:2 * H],
                         bih[:, 2 * H:3 * H],
                         bhh[:, 2 * H:3 * H]], axis=1).astype(jnp.float32)
    return w, b


def greedy_search_decoder(params, input_seq, input_length, max_length,
                          questiontype):
    T = int(input_seq.shape[0])
    assert int(input_length) == T, "kernel assumes input_length == seq length"
    H = params["enc_wih"].shape[0]
    V = params["enc_emb"].shape[0]
    Vp = ((V + 127) // 128) * 128          # lane-dense padded vocab
    L = int(max_length)
    bf16 = jnp.bfloat16
    f32 = jnp.float32

    enc_w, enc_b = _fuse_gru_weights(params["enc_wih"], params["enc_whh"],
                                     params["enc_bih"], params["enc_bhh"], H, bf16)
    dec_w, dec_b = _fuse_gru_weights(params["dec_wih"], params["dec_whh"],
                                     params["dec_bih"], params["dec_bhh"], H, bf16)

    # Pad vocab-sized decoder tensors to Vp (bf16 weights, f32 biases).
    dec_emb = jnp.zeros((Vp, H), bf16).at[:V, :].set(
        params["dec_emb"].astype(bf16))
    wout = jnp.zeros((H, Vp), bf16).at[:, :V].set(params["wout"].astype(bf16))
    bout = jnp.full((1, Vp), -1e30, f32).at[:, :V].set(
        params["bout"].astype(f32))
    wc = params["wc"].astype(bf16)

    # enc_emb stays f32: it is row-gathered with a dynamic pl.ds index.
    # TODO(synk): for realistic vocab make it bf16 / HBM-resident with row DMA.
    enc_emb = params["enc_emb"].astype(f32)

    kernel = functools.partial(_greedy_kernel, T=T, H=H, Vp=Vp, L=L)

    smem = pl.BlockSpec(memory_space=pltpu.MemorySpace.SMEM)
    vmem = pl.BlockSpec(memory_space=pltpu.MemorySpace.VMEM)
    anymem = pl.BlockSpec(memory_space=pl.ANY)

    out_shape = (
        jax.ShapeDtypeStruct((2, L), jnp.int32),     # tokens (int32, not int64)
        jax.ShapeDtypeStruct((2, L), jnp.float32),   # scores
    )

    scratch_shapes = [
        pltpu.VMEM((T, H), f32),                     # encoder outputs
        pltpu.VMEM((Vp, H), bf16),                   # dec_emb
        pltpu.VMEM((2 * H, 4 * H), bf16),            # fused dec GRU weight
        pltpu.VMEM((2 * H, H), bf16),                # wc
        pltpu.VMEM((H, Vp), bf16),                   # wout
        pltpu.SemaphoreType.DMA((4,)),
    ]

    # Explicit scoped-VMEM limit sized from the real footprint (inputs kept in
    # VMEM + VMEM scratch), with generous headroom; capped well below v7x 64MiB.
    vmem_inputs = [enc_emb, enc_w, enc_b, params["type_emb"],
                   params["dcmp_w1"], params["dcmp_b1"],
                   params["dcmp_w2"], params["dcmp_b2"],
                   dec_b, params["bc"], bout]
    footprint = sum(int(a.size) * a.dtype.itemsize for a in vmem_inputs)
    footprint += (T * H * 4 + Vp * H * 2 + (2 * H) * (4 * H) * 2
                  + (2 * H) * H * 2 + H * Vp * 2)
    vmem_limit = int(min(48 * 2 ** 20, max(16 * 2 ** 20, 4 * footprint)))

    flops = (
        T * 2 * (2 * H) * (4 * H)                        # encoder GRU
        + 2 * 2 * H * H                                  # decomposer
        + L * (2 * 2 * Vp * H                            # one-hot embed
               + 2 * 2 * (2 * H) * (4 * H)               # decoder GRU
               + 2 * 2 * 2 * T * H                       # attention (2 passes)
               + 2 * 2 * (2 * H) * H                     # concat projection
               + 2 * 2 * H * Vp)                         # output logits
    )
    transcendentals = T * 3 * H + L * 2 * (4 * H + Vp + T)
    all_inputs = vmem_inputs + [dec_emb, dec_w, wc, wout]
    bytes_accessed = (sum(int(a.size) * a.dtype.itemsize for a in all_inputs)
                      + 2 * L * (4 + 4) + T * 4 + 4)
    cost = pl.CostEstimate(flops=int(flops),
                           transcendentals=int(transcendentals),
                           bytes_accessed=int(bytes_accessed))

    tok, sc = pl.pallas_call(
        kernel,
        out_shape=out_shape,
        in_specs=[smem, smem,                         # seq, qtype
                  vmem, vmem, vmem, vmem,             # enc_emb, enc_w, enc_b, type_emb
                  vmem, vmem, vmem, vmem,             # decomposer
                  anymem, anymem, vmem,               # dec_emb, dec_w, dec_b
                  anymem, vmem,                       # wc, bc
                  anymem, vmem],                      # wout, bout
        out_specs=(vmem, vmem),
        scratch_shapes=scratch_shapes,
        compiler_params=pltpu.CompilerParams(vmem_limit_bytes=vmem_limit),
        cost_estimate=cost,
    )(
        input_seq.astype(jnp.int32),
        jnp.asarray([questiontype], dtype=jnp.int32),
        enc_emb, enc_w, enc_b, params["type_emb"],
        params["dcmp_w1"], params["dcmp_b1"], params["dcmp_w2"], params["dcmp_b2"],
        dec_emb, dec_w, dec_b,
        wc, params["bc"],
        wout, bout,
    )
    return tok[0], sc[0], tok[1], sc[1]


def init_params(key, V, H, NT):
    names_shapes = [
        ("enc_emb", (V, H)), ("enc_wih", (H, 3 * H)), ("enc_whh", (H, 3 * H)),
        ("enc_bih", (1, 3 * H)), ("enc_bhh", (1, 3 * H)),
        ("type_emb", (NT, H)),
        ("dcmp_w1", (H, H)), ("dcmp_b1", (1, H)),
        ("dcmp_w2", (H, H)), ("dcmp_b2", (1, H)),
        ("dec_emb", (V, H)), ("dec_wih", (H, 3 * H)), ("dec_whh", (H, 3 * H)),
        ("dec_bih", (1, 3 * H)), ("dec_bhh", (1, 3 * H)),
        ("wc", (2 * H, H)), ("bc", (1, H)),
        ("wout", (H, V)), ("bout", (1, V)),
    ]
    keys = jax.random.split(key, len(names_shapes))
    return {
        name: 0.1 * jax.random.normal(k, shape, dtype=jnp.float32)
        for k, (name, shape) in zip(keys, names_shapes)
    }


if __name__ == "__main__":
    V, H, NT = 64, 128, 8        # vocab, hidden, #question types
    T, L = 8, 8                  # input seq length, max decode length

    key = jax.random.PRNGKey(0)
    pkey, skey = jax.random.split(key)
    params = init_params(pkey, V, H, NT)
    input_seq = jax.random.randint(skey, (T,), 2, V, dtype=jnp.int32)

    tokens1, scores1, tokens2, scores2 = greedy_search_decoder(
        params, input_seq, input_length=T, max_length=L, questiontype=3)
    jax.block_until_ready((tokens1, scores1, tokens2, scores2))

    assert tokens1.shape == (L,) and tokens2.shape == (L,)
    assert scores1.shape == (L,) and scores2.shape == (L,)
    assert bool(jnp.all((tokens1 >= 0) & (tokens1 < V)))
    assert bool(jnp.all((tokens2 >= 0) & (tokens2 < V)))
    assert bool(jnp.all(jnp.isfinite(scores1)))
    assert bool(jnp.all(jnp.isfinite(scores2)))
    assert bool(jnp.all((scores1 > 0.0) & (scores1 <= 1.0)))
    assert bool(jnp.all((scores2 > 0.0) & (scores2 <= 1.0)))
    print("KERNEL_OK")
</pallas_src>

<mosaic_0001>
module attributes {stable_mosaic.version = 11 : i64} {
  func.func @_greedy_kernel(%arg0: memref<8xi32, #tpu.memory_space<smem>>, %arg1: memref<1xi32, #tpu.memory_space<smem>>, %arg2: memref<64x128xf32, #tpu.memory_space<vmem>>, %arg3: memref<256x512xbf16, #tpu.memory_space<vmem>>, %arg4: memref<1x512xf32, #tpu.memory_space<vmem>>, %arg5: memref<8x128xf32, #tpu.memory_space<vmem>>, %arg6: memref<128x128xf32, #tpu.memory_space<vmem>>, %arg7: memref<1x128xf32, #tpu.memory_space<vmem>>, %arg8: memref<128x128xf32, #tpu.memory_space<vmem>>, %arg9: memref<1x128xf32, #tpu.memory_space<vmem>>, %arg10: memref<128x128xbf16, #tpu.memory_space<any>>, %arg11: memref<256x512xbf16, #tpu.memory_space<any>>, %arg12: memref<1x512xf32, #tpu.memory_space<vmem>>, %arg13: memref<256x128xbf16, #tpu.memory_space<any>>, %arg14: memref<1x128xf32, #tpu.memory_space<vmem>>, %arg15: memref<128x128xbf16, #tpu.memory_space<any>>, %arg16: memref<1x128xf32, #tpu.memory_space<vmem>>, %arg17: memref<2x8xi32, #tpu.memory_space<vmem>>, %arg18: memref<2x8xf32, #tpu.memory_space<vmem>>, %arg19: memref<8x128xf32, #tpu.memory_space<vmem>>, %arg20: memref<128x128xbf16, #tpu.memory_space<vmem>>, %arg21: memref<256x512xbf16, #tpu.memory_space<vmem>>, %arg22: memref<256x128xbf16, #tpu.memory_space<vmem>>, %arg23: memref<128x128xbf16, #tpu.memory_space<vmem>>, %arg24: memref<4x!tpu.dma_semaphore, #tpu.memory_space<semaphore_mem>>) attributes {dimension_semantics = [], scalar_prefetch = 0 : i64, scratch_operands = 6 : i64, tpu.core_type = #tpu.core_type<tc>} {
    %c0_i32 = arith.constant 0 : i32
    %0 = tpu.memref_slice %arg24[%c0_i32] : memref<4x!tpu.dma_semaphore, #tpu.memory_space<semaphore_mem>> -> memref<1x!tpu.dma_semaphore, #tpu.memory_space<semaphore_mem>>
    %1 = tpu.memref_squeeze %0 : memref<1x!tpu.dma_semaphore, #tpu.memory_space<semaphore_mem>> -> memref<!tpu.dma_semaphore, #tpu.memory_space<semaphore_mem>>
    tpu.enqueue_dma source(%arg10 : memref<128x128xbf16, #tpu.memory_space<any>>) target(%arg20 : memref<128x128xbf16, #tpu.memory_space<vmem>>) target_semaphore(%1 : memref<!tpu.dma_semaphore, #tpu.memory_space<semaphore_mem>>)
    %c1_i32 = arith.constant 1 : i32
    %2 = tpu.memref_slice %arg24[%c1_i32] : memref<4x!tpu.dma_semaphore, #tpu.memory_space<semaphore_mem>> -> memref<1x!tpu.dma_semaphore, #tpu.memory_space<semaphore_mem>>
    %3 = tpu.memref_squeeze %2 : memref<1x!tpu.dma_semaphore, #tpu.memory_space<semaphore_mem>> -> memref<!tpu.dma_semaphore, #tpu.memory_space<semaphore_mem>>
    tpu.enqueue_dma source(%arg11 : memref<256x512xbf16, #tpu.memory_space<any>>) target(%arg21 : memref<256x512xbf16, #tpu.memory_space<vmem>>) target_semaphore(%3 : memref<!tpu.dma_semaphore, #tpu.memory_space<semaphore_mem>>)
    %c2_i32 = arith.constant 2 : i32
    %4 = tpu.memref_slice %arg24[%c2_i32] : memref<4x!tpu.dma_semaphore, #tpu.memory_space<semaphore_mem>> -> memref<1x!tpu.dma_semaphore, #tpu.memory_space<semaphore_mem>>
    %5 = tpu.memref_squeeze %4 : memref<1x!tpu.dma_semaphore, #tpu.memory_space<semaphore_mem>> -> memref<!tpu.dma_semaphore, #tpu.memory_space<semaphore_mem>>
    tpu.enqueue_dma source(%arg13 : memref<256x128xbf16, #tpu.memory_space<any>>) target(%arg22 : memref<256x128xbf16, #tpu.memory_space<vmem>>) target_semaphore(%5 : memref<!tpu.dma_semaphore, #tpu.memory_space<semaphore_mem>>)
    %c3_i32 = arith.constant 3 : i32
    %6 = tpu.memref_slice %arg24[%c3_i32] : memref<4x!tpu.dma_semaphore, #tpu.memory_space<semaphore_mem>> -> memref<1x!tpu.dma_semaphore, #tpu.memory_space<semaphore_mem>>
    %7 = tpu.memref_squeeze %6 : memref<1x!tpu.dma_semaphore, #tpu.memory_space<semaphore_mem>> -> memref<!tpu.dma_semaphore, #tpu.memory_space<semaphore_mem>>
    tpu.enqueue_dma source(%arg15 : memref<128x128xbf16, #tpu.memory_space<any>>) target(%arg23 : memref<128x128xbf16, #tpu.memory_space<vmem>>) target_semaphore(%7 : memref<!tpu.dma_semaphore, #tpu.memory_space<semaphore_mem>>)
    %cst = arith.constant 0.000000e+00 : f32
    %8 = vector.broadcast %cst : f32 to vector<1x128xf32>
    %c0 = arith.constant 0 : index
    %9 = memref.load %arg0[%c0] : memref<8xi32, #tpu.memory_space<smem>>
    %10 = arith.index_cast %9 : i32 to index
    %c0_0 = arith.constant 0 : index
    %11 = vector.load %arg2[%10, %c0_0] : memref<64x128xf32, #tpu.memory_space<vmem>>, vector<1x128xf32>
    %12 = tpu.concatenate %11, %8 in 1 : vector<1x128xf32>, vector<1x128xf32> -> vector<1x256xf32>
    %13 = arith.truncf %12 : vector<1x256xf32> to vector<1x256xbf16>
    %c0_1 = arith.constant 0 : index
    %c0_2 = arith.constant 0 : index
    %14 = vector.load %arg3[%c0_1, %c0_2] : memref<256x512xbf16, #tpu.memory_space<vmem>>, vector<256x512xbf16>
    %cst_3 = arith.constant dense<0.000000e+00> : vector<1x512xf32>
    %15 = tpu.matmul %13, %14, %cst_3 {dimension_numbers = #tpu.dot_dimension_numbers<[1], [0], [0], [1], [0, 0, 1, 1], [], []>} : vector<1x256xbf16>, vector<256x512xbf16>, vector<1x512xf32> -> vector<1x512xf32>
    %c0_4 = arith.constant 0 : index
    %c0_5 = arith.constant 0 : index
    %16 = vector.load %arg4[%c0_4, %c0_5] : memref<1x512xf32, #tpu.memory_space<vmem>>, vector<1x512xf32>
    %17 = arith.addf %15, %16 : vector<1x512xf32>
    %18 = vector.extract_strided_slice %17 {offsets = [0, 0], sizes = [1, 128], strides = [1, 1]} : vector<1x512xf32> to vector<1x128xf32>
    %cst_6 = arith.constant 5.000000e-01 : f32
    %19 = vector.broadcast %cst_6 : f32 to vector<1x128xf32>
    %20 = arith.mulf %19, %18 : vector<1x128xf32>
    %21 = math.tanh %20 : vector<1x128xf32>
    %cst_7 = arith.constant 1.000000e+00 : f32
    %22 = vector.broadcast %cst_7 : f32 to vector<1x128xf32>
    %23 = arith.addf %21, %22 : vector<1x128xf32>
    %cst_8 = arith.constant 5.000000e-01 : f32
    %24 = vector.broadcast %cst_8 : f32 to vector<1x128xf32>
    %25 = arith.mulf %24, %23 : vector<1x128xf32>
    %26 = vector.extract_strided_slice %17 {offsets = [0, 128], sizes = [1, 128], strides = [1, 1]} : vector<1x512xf32> to vector<1x128xf32>
    %cst_9 = arith.constant 5.000000e-01 : f32
    %27 = vector.broadcast %cst_9 : f32 to vector<1x128xf32>
    %28 = arith.mulf %27, %26 : vector<1x128xf32>
    %29 = math.tanh %28 : vector<1x128xf32>
    %cst_10 = arith.constant 1.000000e+00 : f32
    %30 = vector.broadcast %cst_10 : f32 to vector<1x128xf32>
    %31 = arith.addf %29, %30 : vector<1x128xf32>
    %cst_11 = arith.constant 5.000000e-01 : f32
    %32 = vector.broadcast %cst_11 : f32 to vector<1x128xf32>
    %33 = arith.mulf %32, %31 : vector<1x128xf32>
    %34 = vector.extract_strided_slice %17 {offsets = [0, 256], sizes = [1, 128], strides = [1, 1]} : vector<1x512xf32> to vector<1x128xf32>
    %35 = vector.extract_strided_slice %17 {offsets = [0, 384], sizes = [1, 128], strides = [1, 1]} : vector<1x512xf32> to vector<1x128xf32>
    %36 = arith.mulf %25, %35 : vector<1x128xf32>
    %37 = arith.addf %34, %36 : vector<1x128xf32>
    %38 = math.tanh %37 : vector<1x128xf32>
    %cst_12 = arith.constant 1.000000e+00 : f32
    %39 = vector.broadcast %cst_12 : f32 to vector<1x128xf32>
    %40 = arith.subf %39, %33 : vector<1x128xf32>
    %41 = arith.mulf %40, %38 : vector<1x128xf32>
    %42 = arith.mulf %33, %8 : vector<1x128xf32>
    %43 = arith.addf %41, %42 : vector<1x128xf32>
    %c0_13 = arith.constant 0 : index
    %c0_14 = arith.constant 0 : index
    %44 = vector.load %arg19[%c0_13, %c0_14] : memref<8x128xf32, #tpu.memory_space<vmem>>, vector<1x128xf32>
    tpu.vector_store %arg19[%c0_13, %c0_14], %43 {strides = array<i32>} : memref<8x128xf32, #tpu.memory_space<vmem>>, vector<1x128xf32>,
    %c1 = arith.constant 1 : index
    %45 = memref.load %arg0[%c1] : memref<8xi32, #tpu.memory_space<smem>>
    %46 = arith.index_cast %45 : i32 to index
    %c0_15 = arith.constant 0 : index
    %47 = vector.load %arg2[%46, %c0_15] : memref<64x128xf32, #tpu.memory_space<vmem>>, vector<1x128xf32>
    %48 = tpu.concatenate %47, %43 in 1 : vector<1x128xf32>, vector<1x128xf32> -> vector<1x256xf32>
    %49 = arith.truncf %48 : vector<1x256xf32> to vector<1x256xbf16>
    %c0_16 = arith.constant 0 : index
    %c0_17 = arith.constant 0 : index
    %50 = vector.load %arg3[%c0_16, %c0_17] : memref<256x512xbf16, #tpu.memory_space<vmem>>, vector<256x512xbf16>
    %cst_18 = arith.constant dense<0.000000e+00> : vector<1x512xf32>
    %51 = tpu.matmul %49, %50, %cst_18 {dimension_numbers = #tpu.dot_dimension_numbers<[1], [0], [0], [1], [0, 0, 1, 1], [], []>} : vector<1x256xbf16>, vector<256x512xbf16>, vector<1x512xf32> -> vector<1x512xf32>
    %c0_19 = arith.constant 0 : index
    %c0_20 = arith.constant 0 : index
    %52 = vector.load %arg4[%c0_19, %c0_20] : memref<1x512xf32, #tpu.memory_space<vmem>>, vector<1x512xf32>
    %53 = arith.addf %51, %52 : vector<1x512xf32>
    %54 = vector.extract_strided_slice %53 {offsets = [0, 0], sizes = [1, 128], strides = [1, 1]} : vector<1x512xf32> to vector<1x128xf32>
    %cst_21 = arith.constant 5.000000e-01 : f32
    %55 = vector.broadcast %cst_21 : f32 to vector<1x128xf32>
    %56 = arith.mulf %55, %54 : vector<1x128xf32>
    %57 = math.tanh %56 : vector<1x128xf32>
    %cst_22 = arith.constant 1.000000e+00 : f32
    %58 = vector.broadcast %cst_22 : f32 to vector<1x128xf32>
    %59 = arith.addf %57, %58 : vector<1x128xf32>
    %cst_23 = arith.constant 5.000000e-01 : f32
    %60 = vector.broadcast %cst_23 : f32 to vector<1x128xf32>
    %61 = arith.mulf %60, %59 : vector<1x128xf32>
    %62 = vector.extract_strided_slice %53 {offsets = [0, 128], sizes = [1, 128], strides = [1, 1]} : vector<1x512xf32> to vector<1x128xf32>
    %cst_24 = arith.constant 5.000000e-01 : f32
    %63 = vector.broadcast %cst_24 : f32 to vector<1x128xf32>
    %64 = arith.mulf %63, %62 : vector<1x128xf32>
    %65 = math.tanh %64 : vector<1x128xf32>
    %cst_25 = arith.constant 1.000000e+00 : f32
    %66 = vector.broadcast %cst_25 : f32 to vector<1x128xf32>
    %67 = arith.addf %65, %66 : vector<1x128xf32>
    %cst_26 = arith.constant 5.000000e-01 : f32
    %68 = vector.broadcast %cst_26 : f32 to vector<1x128xf32>
    %69 = arith.mulf %68, %67 : vector<1x128xf32>
    %70 = vector.extract_strided_slice %53 {offsets = [0, 256], sizes = [1, 128], strides = [1, 1]} : vector<1x512xf32> to vector<1x128xf32>
    %71 = vector.extract_strided_slice %53 {offsets = [0, 384], sizes = [1, 128], strides = [1, 1]} : vector<1x512xf32> to vector<1x128xf32>
    %72 = arith.mulf %61, %71 : vector<1x128xf32>
    %73 = arith.addf %70, %72 : vector<1x128xf32>
    %74 = math.tanh %73 : vector<1x128xf32>
    %cst_27 = arith.constant 1.000000e+00 : f32
    %75 = vector.broadcast %cst_27 : f32 to vector<1x128xf32>
    %76 = arith.subf %75, %69 : vector<1x128xf32>
    %77 = arith.mulf %76, %74 : vector<1x128xf32>
    %78 = arith.mulf %69, %43 : vector<1x128xf32>
    %79 = arith.addf %77, %78 : vector<1x128xf32>
    %c1_28 = arith.constant 1 : index
    %c0_29 = arith.constant 0 : index
    %80 = vector.load %arg19[%c1_28, %c0_29] : memref<8x128xf32, #tpu.memory_space<vmem>>, vector<1x128xf32>
    tpu.vector_store %arg19[%c1_28, %c0_29], %79 {strides = array<i32>} : memref<8x128xf32, #tpu.memory_space<vmem>>, vector<1x128xf32>,
    %c2 = arith.constant 2 : index
    %81 = memref.load %arg0[%c2] : memref<8xi32, #tpu.memory_space<smem>>
    %82 = arith.index_cast %81 : i32 to index
    %c0_30 = arith.constant 0 : index
    %83 = vector.load %arg2[%82, %c0_30] : memref<64x128xf32, #tpu.memory_space<vmem>>, vector<1x128xf32>
    %84 = tpu.concatenate %83, %79 in 1 : vector<1x128xf32>, vector<1x128xf32> -> vector<1x256xf32>
    %85 = arith.truncf %84 : vector<1x256xf32> to vector<1x256xbf16>
    %c0_31 = arith.constant 0 : index
    %c0_32 = arith.constant 0 : index
    %86 = vector.load %arg3[%c0_31, %c0_32] : memref<256x512xbf16, #tpu.memory_space<vmem>>, vector<256x512xbf16>
    %cst_33 = arith.constant dense<0.000000e+00> : vector<1x512xf32>
    %87 = tpu.matmul %85, %86, %cst_33 {dimension_numbers = #tpu.dot_dimension_numbers<[1], [0], [0], [1], [0, 0, 1, 1], [], []>} : vector<1x256xbf16>, vector<256x512xbf16>, vector<1x512xf32> -> vector<1x512xf32>
    %c0_34 = arith.constant 0 : index
    %c0_35 = arith.constant 0 : index
    %88 = vector.load %arg4[%c0_34, %c0_35] : memref<1x512xf32, #tpu.memory_space<vmem>>, vector<1x512xf32>
    %89 = arith.addf %87, %88 : vector<1x512xf32>
    %90 = vector.extract_strided_slice %89 {offsets = [0, 0], sizes = [1, 128], strides = [1, 1]} : vector<1x512xf32> to vector<1x128xf32>
    %cst_36 = arith.constant 5.000000e-01 : f32
    %91 = vector.broadcast %cst_36 : f32 to vector<1x128xf32>
    %92 = arith.mulf %91, %90 : vector<1x128xf32>
    %93 = math.tanh %92 : vector<1x128xf32>
    %cst_37 = arith.constant 1.000000e+00 : f32
    %94 = vector.broadcast %cst_37 : f32 to vector<1x128xf32>
    %95 = arith.addf %93, %94 : vector<1x128xf32>
    %cst_38 = arith.constant 5.000000e-01 : f32
    %96 = vector.broadcast %cst_38 : f32 to vector<1x128xf32>
    %97 = arith.mulf %96, %95 : vector<1x128xf32>
    %98 = vector.extract_strided_slice %89 {offsets = [0, 128], sizes = [1, 128], strides = [1, 1]} : vector<1x512xf32> to vector<1x128xf32>
    %cst_39 = arith.constant 5.000000e-01 : f32
    %99 = vector.broadcast %cst_39 : f32 to vector<1x128xf32>
    %100 = arith.mulf %99, %98 : vector<1x128xf32>
    %101 = math.tanh %100 : vector<1x128xf32>
    %cst_40 = arith.constant 1.000000e+00 : f32
    %102 = vector.broadcast %cst_40 : f32 to vector<1x128xf32>
    %103 = arith.addf %101, %102 : vector<1x128xf32>
    %cst_41 = arith.constant 5.000000e-01 : f32
    %104 = vector.broadcast %cst_41 : f32 to vector<1x128xf32>
    %105 = arith.mulf %104, %103 : vector<1x128xf32>
    %106 = vector.extract_strided_slice %89 {offsets = [0, 256], sizes = [1, 128], strides = [1, 1]} : vector<1x512xf32> to vector<1x128xf32>
    %107 = vector.extract_strided_slice %89 {offsets = [0, 384], sizes = [1, 128], strides = [1, 1]} : vector<1x512xf32> to vector<1x128xf32>
    %108 = arith.mulf %97, %107 : vector<1x128xf32>
    %109 = arith.addf %106, %108 : vector<1x128xf32>
    %110 = math.tanh %109 : vector<1x128xf32>
    %cst_42 = arith.constant 1.000000e+00 : f32
    %111 = vector.broadcast %cst_42 : f32 to vector<1x128xf32>
    %112 = arith.subf %111, %105 : vector<1x128xf32>
    %113 = arith.mulf %112, %110 : vector<1x128xf32>
    %114 = arith.mulf %105, %79 : vector<1x128xf32>
    %115 = arith.addf %113, %114 : vector<1x128xf32>
    %c2_43 = arith.constant 2 : index
    %c0_44 = arith.constant 0 : index
    %116 = vector.load %arg19[%c2_43, %c0_44] : memref<8x128xf32, #tpu.memory_space<vmem>>, vector<1x128xf32>
    tpu.vector_store %arg19[%c2_43, %c0_44], %115 {strides = array<i32>} : memref<8x128xf32, #tpu.memory_space<vmem>>, vector<1x128xf32>,
    %c3 = arith.constant 3 : index
    %117 = memref.load %arg0[%c3] : memref<8xi32, #tpu.memory_space<smem>>
    %118 = arith.index_cast %117 : i32 to index
    %c0_45 = arith.constant 0 : index
    %119 = vector.load %arg2[%118, %c0_45] : memref<64x128xf32, #tpu.memory_space<vmem>>, vector<1x128xf32>
    %120 = tpu.concatenate %119, %115 in 1 : vector<1x128xf32>, vector<1x128xf32> -> vector<1x256xf32>
    %121 = arith.truncf %120 : vector<1x256xf32> to vector<1x256xbf16>
    %c0_46 = arith.constant 0 : index
    %c0_47 = arith.constant 0 : index
    %122 = vector.load %arg3[%c0_46, %c0_47] : memref<256x512xbf16, #tpu.memory_space<vmem>>, vector<256x512xbf16>
    %cst_48 = arith.constant dense<0.000000e+00> : vector<1x512xf32>
    %123 = tpu.matmul %121, %122, %cst_48 {dimension_numbers = #tpu.dot_dimension_numbers<[1], [0], [0], [1], [0, 0, 1, 1], [], []>} : vector<1x256xbf16>, vector<256x512xbf16>, vector<1x512xf32> -> vector<1x512xf32>
    %c0_49 = arith.constant 0 : index
    %c0_50 = arith.constant 0 : index
    %124 = vector.load %arg4[%c0_49, %c0_50] : memref<1x512xf32, #tpu.memory_space<vmem>>, vector<1x512xf32>
    %125 = arith.addf %123, %124 : vector<1x512xf32>
    %126 = vector.extract_strided_slice %125 {offsets = [0, 0], sizes = [1, 128], strides = [1, 1]} : vector<1x512xf32> to vector<1x128xf32>
    %cst_51 = arith.constant 5.000000e-01 : f32
    %127 = vector.broadcast %cst_51 : f32 to vector<1x128xf32>
    %128 = arith.mulf %127, %126 : vector<1x128xf32>
    %129 = math.tanh %128 : vector<1x128xf32>
    %cst_52 = arith.constant 1.000000e+00 : f32
    %130 = vector.broadcast %cst_52 : f32 to vector<1x128xf32>
    %131 = arith.addf %129, %130 : vector<1x128xf32>
    %cst_53 = arith.constant 5.000000e-01 : f32
    %132 = vector.broadcast %cst_53 : f32 to vector<1x128xf32>
    %133 = arith.mulf %132, %131 : vector<1x128xf32>
    %134 = vector.extract_strided_slice %125 {offsets = [0, 128], sizes = [1, 128], strides = [1, 1]} : vector<1x512xf32> to vector<1x128xf32>
    %cst_54 = arith.constant 5.000000e-01 : f32
    %135 = vector.broadcast %cst_54 : f32 to vector<1x128xf32>
    %136 = arith.mulf %135, %134 : vector<1x128xf32>
    %137 = math.tanh %136 : vector<1x128xf32>
    %cst_55 = arith.constant 1.000000e+00 : f32
    %138 = vector.broadcast %cst_55 : f32 to vector<1x128xf32>
    %139 = arith.addf %137, %138 : vector<1x128xf32>
    %cst_56 = arith.constant 5.000000e-01 : f32
    %140 = vector.broadcast %cst_56 : f32 to vector<1x128xf32>
    %141 = arith.mulf %140, %139 : vector<1x128xf32>
    %142 = vector.extract_strided_slice %125 {offsets = [0, 256], sizes = [1, 128], strides = [1, 1]} : vector<1x512xf32> to vector<1x128xf32>
    %143 = vector.extract_strided_slice %125 {offsets = [0, 384], sizes = [1, 128], strides = [1, 1]} : vector<1x512xf32> to vector<1x128xf32>
    %144 = arith.mulf %133, %143 : vector<1x128xf32>
    %145 = arith.addf %142, %144 : vector<1x128xf32>
    %146 = math.tanh %145 : vector<1x128xf32>
    %cst_57 = arith.constant 1.000000e+00 : f32
    %147 = vector.broadcast %cst_57 : f32 to vector<1x128xf32>
    %148 = arith.subf %147, %141 : vector<1x128xf32>
    %149 = arith.mulf %148, %146 : vector<1x128xf32>
    %150 = arith.mulf %141, %115 : vector<1x128xf32>
    %151 = arith.addf %149, %150 : vector<1x128xf32>
    %c3_58 = arith.constant 3 : index
    %c0_59 = arith.constant 0 : index
    %152 = vector.load %arg19[%c3_58, %c0_59] : memref<8x128xf32, #tpu.memory_space<vmem>>, vector<1x128xf32>
    tpu.vector_store %arg19[%c3_58, %c0_59], %151 {strides = array<i32>} : memref<8x128xf32, #tpu.memory_space<vmem>>, vector<1x128xf32>,
    %c4 = arith.constant 4 : index
    %153 = memref.load %arg0[%c4] : memref<8xi32, #tpu.memory_space<smem>>
    %154 = arith.index_cast %153 : i32 to index
    %c0_60 = arith.constant 0 : index
    %155 = vector.load %arg2[%154, %c0_60] : memref<64x128xf32, #tpu.memory_space<vmem>>, vector<1x128xf32>
    %156 = tpu.concatenate %155, %151 in 1 : vector<1x128xf32>, vector<1x128xf32> -> vector<1x256xf32>
    %157 = arith.truncf %156 : vector<1x256xf32> to vector<1x256xbf16>
    %c0_61 = arith.constant 0 : index
    %c0_62 = arith.constant 0 : index
    %158 = vector.load %arg3[%c0_61, %c0_62] : memref<256x512xbf16, #tpu.memory_space<vmem>>, vector<256x512xbf16>
    %cst_63 = arith.constant dense<0.000000e+00> : vector<1x512xf32>
    %159 = tpu.matmul %157, %158, %cst_63 {dimension_numbers = #tpu.dot_dimension_numbers<[1], [0], [0], [1], [0, 0, 1, 1], [], []>} : vector<1x256xbf16>, vector<256x512xbf16>, vector<1x512xf32> -> vector<1x512xf32>
    %c0_64 = arith.constant 0 : index
    %c0_65 = arith.constant 0 : index
    %160 = vector.load %arg4[%c0_64, %c0_65] : memref<1x512xf32, #tpu.memory_space<vmem>>, vector<1x512xf32>
    %161 = arith.addf %159, %160 : vector<1x512xf32>
    %162 = vector.extract_strided_slice %161 {offsets = [0, 0], sizes = [1, 128], strides = [1, 1]} : vector<1x512xf32> to vector<1x128xf32>
    %cst_66 = arith.constant 5.000000e-01 : f32
    %163 = vector.broadcast %cst_66 : f32 to vector<1x128xf32>
    %164 = arith.mulf %163, %162 : vector<1x128xf32>
    %165 = math.tanh %164 : vector<1x128xf32>
    %cst_67 = arith.constant 1.000000e+00 : f32
    %166 = vector.broadcast %cst_67 : f32 to vector<1x128xf32>
    %167 = arith.addf %165, %166 : vector<1x128xf32>
    %cst_68 = arith.constant 5.000000e-01 : f32
    %168 = vector.broadcast %cst_68 : f32 to vector<1x128xf32>
    %169 = arith.mulf %168, %167 : vector<1x128xf32>
    %170 = vector.extract_strided_slice %161 {offsets = [0, 128], sizes = [1, 128], strides = [1, 1]} : vector<1x512xf32> to vector<1x128xf32>
    %cst_69 = arith.constant 5.000000e-01 : f32
    %171 = vector.broadcast %cst_69 : f32 to vector<1x128xf32>
    %172 = arith.mulf %171, %170 : vector<1x128xf32>
    %173 = math.tanh %172 : vector<1x128xf32>
    %cst_70 = arith.constant 1.000000e+00 : f32
    %174 = vector.broadcast %cst_70 : f32 to vector<1x128xf32>
    %175 = arith.addf %173, %174 : vector<1x128xf32>
    %cst_71 = arith.constant 5.000000e-01 : f32
    %176 = vector.broadcast %cst_71 : f32 to vector<1x128xf32>
    %177 = arith.mulf %176, %175 : vector<1x128xf32>
    %178 = vector.extract_strided_slice %161 {offsets = [0, 256], sizes = [1, 128], strides = [1, 1]} : vector<1x512xf32> to vector<1x128xf32>
    %179 = vector.extract_strided_slice %161 {offsets = [0, 384], sizes = [1, 128], strides = [1, 1]} : vector<1x512xf32> to vector<1x128xf32>
    %180 = arith.mulf %169, %179 : vector<1x128xf32>
    %181 = arith.addf %178, %180 : vector<1x128xf32>
    %182 = math.tanh %181 : vector<1x128xf32>
    %cst_72 = arith.constant 1.000000e+00 : f32
    %183 = vector.broadcast %cst_72 : f32 to vector<1x128xf32>
    %184 = arith.subf %183, %177 : vector<1x128xf32>
    %185 = arith.mulf %184, %182 : vector<1x128xf32>
    %186 = arith.mulf %177, %151 : vector<1x128xf32>
    %187 = arith.addf %185, %186 : vector<1x128xf32>
    %c4_73 = arith.constant 4 : index
    %c0_74 = arith.constant 0 : index
    %188 = vector.load %arg19[%c4_73, %c0_74] : memref<8x128xf32, #tpu.memory_space<vmem>>, vector<1x128xf32>
    tpu.vector_store %arg19[%c4_73, %c0_74], %187 {strides = array<i32>} : memref<8x128xf32, #tpu.memory_space<vmem>>, vector<1x128xf32>,
    %c5 = arith.constant 5 : index
    %189 = memref.load %arg0[%c5] : memref<8xi32, #tpu.memory_space<smem>>
    %190 = arith.index_cast %189 : i32 to index
    %c0_75 = arith.constant 0 : index
    %191 = vector.load %arg2[%190, %c0_75] : memref<64x128xf32, #tpu.memory_space<vmem>>, vector<1x128xf32>
    %192 = tpu.concatenate %191, %187 in 1 : vector<1x128xf32>, vector<1x128xf32> -> vector<1x256xf32>
    %193 = arith.truncf %192 : vector<1x256xf32> to vector<1x256xbf16>
    %c0_76 = arith.constant 0 : index
    %c0_77 = arith.constant 0 : index
    %194 = vector.load %arg3[%c0_76, %c0_77] : memref<256x512xbf16, #tpu.memory_space<vmem>>, vector<256x512xbf16>
    %cst_78 = arith.constant dense<0.000000e+00> : vector<1x512xf32>
    %195 = tpu.matmul %193, %194, %cst_78 {dimension_numbers = #tpu.dot_dimension_numbers<[1], [0], [0], [1], [0, 0, 1, 1], [], []>} : vector<1x256xbf16>, vector<256x512xbf16>, vector<1x512xf32> -> vector<1x512xf32>
    %c0_79 = arith.constant 0 : index
    %c0_80 = arith.constant 0 : index
    %196 = vector.load %arg4[%c0_79, %c0_80] : memref<1x512xf32, #tpu.memory_space<vmem>>, vector<1x512xf32>
    %197 = arith.addf %195, %196 : vector<1x512xf32>
    %198 = vector.extract_strided_slice %197 {offsets = [0, 0], sizes = [1, 128], strides = [1, 1]} : vector<1x512xf32> to vector<1x128xf32>
    %cst_81 = arith.constant 5.000000e-01 : f32
    %199 = vector.broadcast %cst_81 : f32 to vector<1x128xf32>
    %200 = arith.mulf %199, %198 : vector<1x128xf32>
    %201 = math.tanh %200 : vector<1x128xf32>
    %cst_82 = arith.constant 1.000000e+00 : f32
    %202 = vector.broadcast %cst_82 : f32 to vector<1x128xf32>
    %203 = arith.addf %201, %202 : vector<1x128xf32>
    %cst_83 = arith.constant 5.000000e-01 : f32
    %204 = vector.broadcast %cst_83 : f32 to vector<1x128xf32>
    %205 = arith.mulf %204, %203 : vector<1x128xf32>
    %206 = vector.extract_strided_slice %197 {offsets = [0, 128], sizes = [1, 128], strides = [1, 1]} : vector<1x512xf32> to vector<1x128xf32>
    %cst_84 = arith.constant 5.000000e-01 : f32
    %207 = vector.broadcast %cst_84 : f32 to vector<1x128xf32>
    %208 = arith.mulf %207, %206 : vector<1x128xf32>
    %209 = math.tanh %208 : vector<1x128xf32>
    %cst_85 = arith.constant 1.000000e+00 : f32
    %210 = vector.broadcast %cst_85 : f32 to vector<1x128xf32>
    %211 = arith.addf %209, %210 : vector<1x128xf32>
    %cst_86 = arith.constant 5.000000e-01 : f32
    %212 = vector.broadcast %cst_86 : f32 to vector<1x128xf32>
    %213 = arith.mulf %212, %211 : vector<1x128xf32>
    %214 = vector.extract_strided_slice %197 {offsets = [0, 256], sizes = [1, 128], strides = [1, 1]} : vector<1x512xf32> to vector<1x128xf32>
    %215 = vector.extract_strided_slice %197 {offsets = [0, 384], sizes = [1, 128], strides = [1, 1]} : vector<1x512xf32> to vector<1x128xf32>
    %216 = arith.mulf %205, %215 : vector<1x128xf32>
    %217 = arith.addf %214, %216 : vector<1x128xf32>
    %218 = math.tanh %217 : vector<1x128xf32>
    %cst_87 = arith.constant 1.000000e+00 : f32
    %219 = vector.broadcast %cst_87 : f32 to vector<1x128xf32>
    %220 = arith.subf %219, %213 : vector<1x128xf32>
    %221 = arith.mulf %220, %218 : vector<1x128xf32>
    %222 = arith.mulf %213, %187 : vector<1x128xf32>
    %223 = arith.addf %221, %222 : vector<1x128xf32>
    %c5_88 = arith.constant 5 : index
    %c0_89 = arith.constant 0 : index
    %224 = vector.load %arg19[%c5_88, %c0_89] : memref<8x128xf32, #tpu.memory_space<vmem>>, vector<1x128xf32>
    tpu.vector_store %arg19[%c5_88, %c0_89], %223 {strides = array<i32>} : memref<8x128xf32, #tpu.memory_space<vmem>>, vector<1x128xf32>,
    %c6 = arith.constant 6 : index
    %225 = memref.load %arg0[%c6] : memref<8xi32, #tpu.memory_space<smem>>
    %226 = arith.index_cast %225 : i32 to index
    %c0_90 = arith.constant 0 : index
    %227 = vector.load %arg2[%226, %c0_90] : memref<64x128xf32, #tpu.memory_space<vmem>>, vector<1x128xf32>
    %228 = tpu.concatenate %227, %223 in 1 : vector<1x128xf32>, vector<1x128xf32> -> vector<1x256xf32>
    %229 = arith.truncf %228 : vector<1x256xf32> to vector<1x256xbf16>
    %c0_91 = arith.constant 0 : index
    %c0_92 = arith.constant 0 : index
    %230 = vector.load %arg3[%c0_91, %c0_92] : memref<256x512xbf16, #tpu.memory_space<vmem>>, vector<256x512xbf16>
    %cst_93 = arith.constant dense<0.000000e+00> : vector<1x512xf32>
    %231 = tpu.matmul %229, %230, %cst_93 {dimension_numbers = #tpu.dot_dimension_numbers<[1], [0], [0], [1], [0, 0, 1, 1], [], []>} : vector<1x256xbf16>, vector<256x512xbf16>, vector<1x512xf32> -> vector<1x512xf32>
    %c0_94 = arith.constant 0 : index
    %c0_95 = arith.constant 0 : index
    %232 = vector.load %arg4[%c0_94, %c0_95] : memref<1x512xf32, #tpu.memory_space<vmem>>, vector<1x512xf32>
    %233 = arith.addf %231, %232 : vector<1x512xf32>
    %234 = vector.extract_strided_slice %233 {offsets = [0, 0], sizes = [1, 128], strides = [1, 1]} : vector<1x512xf32> to vector<1x128xf32>
    %cst_96 = arith.constant 5.000000e-01 : f32
    %235 = vector.broadcast %cst_96 : f32 to vector<1x128xf32>
    %236 = arith.mulf %235, %234 : vector<1x128xf32>
    %237 = math.tanh %236 : vector<1x128xf32>
    %cst_97 = arith.constant 1.000000e+00 : f32
    %238 = vector.broadcast %cst_97 : f32 to vector<1x128xf32>
    %239 = arith.addf %237, %238 : vector<1x128xf32>
    %cst_98 = arith.constant 5.000000e-01 : f32
    %240 = vector.broadcast %cst_98 : f32 to vector<1x128xf32>
    %241 = arith.mulf %240, %239 : vector<1x128xf32>
    %242 = vector.extract_strided_slice %233 {offsets = [0, 128], sizes = [1, 128], strides = [1, 1]} : vector<1x512xf32> to vector<1x128xf32>
    %cst_99 = arith.constant 5.000000e-01 : f32
    %243 = vector.broadcast %cst_99 : f32 to vector<1x128xf32>
    %244 = arith.mulf %243, %242 : vector<1x128xf32>
    %245 = math.tanh %244 : vector<1x128xf32>
    %cst_100 = arith.constant 1.000000e+00 : f32
    %246 = vector.broadcast %cst_100 : f32 to vector<1x128xf32>
    %247 = arith.addf %245, %246 : vector<1x128xf32>
    %cst_101 = arith.constant 5.000000e-01 : f32
    %248 = vector.broadcast %cst_101 : f32 to vector<1x128xf32>
    %249 = arith.mulf %248, %247 : vector<1x128xf32>
    %250 = vector.extract_strided_slice %233 {offsets = [0, 256], sizes = [1, 128], strides = [1, 1]} : vector<1x512xf32> to vector<1x128xf32>
    %251 = vector.extract_strided_slice %233 {offsets = [0, 384], sizes = [1, 128], strides = [1, 1]} : vector<1x512xf32> to vector<1x128xf32>
    %252 = arith.mulf %241, %251 : vector<1x128xf32>
    %253 = arith.addf %250, %252 : vector<1x128xf32>
    %254 = math.tanh %253 : vector<1x128xf32>
    %cst_102 = arith.constant 1.000000e+00 : f32
    %255 = vector.broadcast %cst_102 : f32 to vector<1x128xf32>
    %256 = arith.subf %255, %249 : vector<1x128xf32>
    %257 = arith.mulf %256, %254 : vector<1x128xf32>
    %258 = arith.mulf %249, %223 : vector<1x128xf32>
    %259 = arith.addf %257, %258 : vector<1x128xf32>
    %c6_103 = arith.constant 6 : index
    %c0_104 = arith.constant 0 : index
    %260 = vector.load %arg19[%c6_103, %c0_104] : memref<8x128xf32, #tpu.memory_space<vmem>>, vector<1x128xf32>
    tpu.vector_store %arg19[%c6_103, %c0_104], %259 {strides = array<i32>} : memref<8x128xf32, #tpu.memory_space<vmem>>, vector<1x128xf32>,
    %c7 = arith.constant 7 : index
    %261 = memref.load %arg0[%c7] : memref<8xi32, #tpu.memory_space<smem>>
    %262 = arith.index_cast %261 : i32 to index
    %c0_105 = arith.constant 0 : index
    %263 = vector.load %arg2[%262, %c0_105] : memref<64x128xf32, #tpu.memory_space<vmem>>, vector<1x128xf32>
    %264 = tpu.concatenate %263, %259 in 1 : vector<1x128xf32>, vector<1x128xf32> -> vector<1x256xf32>
    %265 = arith.truncf %264 : vector<1x256xf32> to vector<1x256xbf16>
    %c0_106 = arith.constant 0 : index
    %c0_107 = arith.constant 0 : index
    %266 = vector.load %arg3[%c0_106, %c0_107] : memref<256x512xbf16, #tpu.memory_space<vmem>>, vector<256x512xbf16>
    %cst_108 = arith.constant dense<0.000000e+00> : vector<1x512xf32>
    %267 = tpu.matmul %265, %266, %cst_108 {dimension_numbers = #tpu.dot_dimension_numbers<[1], [0], [0], [1], [0, 0, 1, 1], [], []>} : vector<1x256xbf16>, vector<256x512xbf16>, vector<1x512xf32> -> vector<1x512xf32>
    %c0_109 = arith.constant 0 : index
    %c0_110 = arith.constant 0 : index
    %268 = vector.load %arg4[%c0_109, %c0_110] : memref<1x512xf32, #tpu.memory_space<vmem>>, vector<1x512xf32>
    %269 = arith.addf %267, %268 : vector<1x512xf32>
    %270 = vector.extract_strided_slice %269 {offsets = [0, 0], sizes = [1, 128], strides = [1, 1]} : vector<1x512xf32> to vector<1x128xf32>
    %cst_111 = arith.constant 5.000000e-01 : f32
    %271 = vector.broadcast %cst_111 : f32 to vector<1x128xf32>
    %272 = arith.mulf %271, %270 : vector<1x128xf32>
    %273 = math.tanh %272 : vector<1x128xf32>
    %cst_112 = arith.constant 1.000000e+00 : f32
    %274 = vector.broadcast %cst_112 : f32 to vector<1x128xf32>
    %275 = arith.addf %273, %274 : vector<1x128xf32>
    %cst_113 = arith.constant 5.000000e-01 : f32
    %276 = vector.broadcast %cst_113 : f32 to vector<1x128xf32>
    %277 = arith.mulf %276, %275 : vector<1x128xf32>
    %278 = vector.extract_strided_slice %269 {offsets = [0, 128], sizes = [1, 128], strides = [1, 1]} : vector<1x512xf32> to vector<1x128xf32>
    %cst_114 = arith.constant 5.000000e-01 : f32
    %279 = vector.broadcast %cst_114 : f32 to vector<1x128xf32>
    %280 = arith.mulf %279, %278 : vector<1x128xf32>
    %281 = math.tanh %280 : vector<1x128xf32>
    %cst_115 = arith.constant 1.000000e+00 : f32
    %282 = vector.broadcast %cst_115 : f32 to vector<1x128xf32>
    %283 = arith.addf %281, %282 : vector<1x128xf32>
    %cst_116 = arith.constant 5.000000e-01 : f32
    %284 = vector.broadcast %cst_116 : f32 to vector<1x128xf32>
    %285 = arith.mulf %284, %283 : vector<1x128xf32>
    %286 = vector.extract_strided_slice %269 {offsets = [0, 256], sizes = [1, 128], strides = [1, 1]} : vector<1x512xf32> to vector<1x128xf32>
    %287 = vector.extract_strided_slice %269 {offsets = [0, 384], sizes = [1, 128], strides = [1, 1]} : vector<1x512xf32> to vector<1x128xf32>
    %288 = arith.mulf %277, %287 : vector<1x128xf32>
    %289 = arith.addf %286, %288 : vector<1x128xf32>
    %290 = math.tanh %289 : vector<1x128xf32>
    %cst_117 = arith.constant 1.000000e+00 : f32
    %291 = vector.broadcast %cst_117 : f32 to vector<1x128xf32>
    %292 = arith.subf %291, %285 : vector<1x128xf32>
    %293 = arith.mulf %292, %290 : vector<1x128xf32>
    %294 = arith.mulf %285, %259 : vector<1x128xf32>
    %295 = arith.addf %293, %294 : vector<1x128xf32>
    %c7_118 = arith.constant 7 : index
    %c0_119 = arith.constant 0 : index
    %296 = vector.load %arg19[%c7_118, %c0_119] : memref<8x128xf32, #tpu.memory_space<vmem>>, vector<1x128xf32>
    tpu.vector_store %arg19[%c7_118, %c0_119], %295 {strides = array<i32>} : memref<8x128xf32, #tpu.memory_space<vmem>>, vector<1x128xf32>,
    %c0_120 = arith.constant 0 : index
    %c0_121 = arith.constant 0 : index
    %297 = vector.load %arg19[%c0_120, %c0_121] : memref<8x128xf32, #tpu.memory_space<vmem>>, vector<8x128xf32>
    %c0_122 = arith.constant 0 : index
    %298 = memref.load %arg1[%c0_122] : memref<1xi32, #tpu.memory_space<smem>>
    %299 = arith.index_cast %298 : i32 to index
    %c0_123 = arith.constant 0 : index
    %300 = vector.load %arg5[%299, %c0_123] : memref<8x128xf32, #tpu.memory_space<vmem>>, vector<1x128xf32>
    %301 = arith.addf %295, %300 : vector<1x128xf32>
    %c0_124 = arith.constant 0 : index
    %c0_125 = arith.constant 0 : index
    %302 = vector.load %arg6[%c0_124, %c0_125] : memref<128x128xf32, #tpu.memory_space<vmem>>, vector<128x128xf32>
    %cst_126 = arith.constant dense<0.000000e+00> : vector<1x128xf32>
    %303 = tpu.matmul %301, %302, %cst_126 {dimension_numbers = #tpu.dot_dimension_numbers<[1], [0], [0], [1], [0, 0, 1, 1], [], []>} : vector<1x128xf32>, vector<128x128xf32>, vector<1x128xf32> -> vector<1x128xf32>
    %c0_127 = arith.constant 0 : index
    %c0_128 = arith.constant 0 : index
    %304 = vector.load %arg7[%c0_127, %c0_128] : memref<1x128xf32, #tpu.memory_space<vmem>>, vector<1x128xf32>
    %305 = arith.addf %303, %304 : vector<1x128xf32>
    %306 = math.tanh %305 : vector<1x128xf32>
    %c0_129 = arith.constant 0 : index
    %c0_130 = arith.constant 0 : index
    %307 = vector.load %arg8[%c0_129, %c0_130] : memref<128x128xf32, #tpu.memory_space<vmem>>, vector<128x128xf32>
    %cst_131 = arith.constant dense<0.000000e+00> : vector<1x128xf32>
    %308 = tpu.matmul %301, %307, %cst_131 {dimension_numbers = #tpu.dot_dimension_numbers<[1], [0], [0], [1], [0, 0, 1, 1], [], []>} : vector<1x128xf32>, vector<128x128xf32>, vector<1x128xf32> -> vector<1x128xf32>
    %c0_132 = arith.constant 0 : index
    %c0_133 = arith.constant 0 : index
    %309 = vector.load %arg9[%c0_132, %c0_133] : memref<1x128xf32, #tpu.memory_space<vmem>>, vector<1x128xf32>
    %310 = arith.addf %308, %309 : vector<1x128xf32>
    %311 = math.tanh %310 : vector<1x128xf32>
    %c0_i32_134 = arith.constant 0 : i32
    %312 = tpu.memref_slice %arg24[%c0_i32_134] : memref<4x!tpu.dma_semaphore, #tpu.memory_space<semaphore_mem>> -> memref<1x!tpu.dma_semaphore, #tpu.memory_space<semaphore_mem>>
    %313 = tpu.memref_squeeze %312 : memref<1x!tpu.dma_semaphore, #tpu.memory_space<semaphore_mem>> -> memref<!tpu.dma_semaphore, #tpu.memory_space<semaphore_mem>>
    tpu.wait_dma2 semaphore(%313 : memref<!tpu.dma_semaphore, #tpu.memory_space<semaphore_mem>>) src(%arg10 : memref<128x128xbf16, #tpu.memory_space<any>>) dst(%arg20 : memref<128x128xbf16, #tpu.memory_space<vmem>>)
    %c1_i32_135 = arith.constant 1 : i32
    %314 = tpu.memref_slice %arg24[%c1_i32_135] : memref<4x!tpu.dma_semaphore, #tpu.memory_space<semaphore_mem>> -> memref<1x!tpu.dma_semaphore, #tpu.memory_space<semaphore_mem>>
    %315 = tpu.memref_squeeze %314 : memref<1x!tpu.dma_semaphore, #tpu.memory_space<semaphore_mem>> -> memref<!tpu.dma_semaphore, #tpu.memory_space<semaphore_mem>>
    tpu.wait_dma2 semaphore(%315 : memref<!tpu.dma_semaphore, #tpu.memory_space<semaphore_mem>>) src(%arg11 : memref<256x512xbf16, #tpu.memory_space<any>>) dst(%arg21 : memref<256x512xbf16, #tpu.memory_space<vmem>>)
    %c2_i32_136 = arith.constant 2 : i32
    %316 = tpu.memref_slice %arg24[%c2_i32_136] : memref<4x!tpu.dma_semaphore, #tpu.memory_space<semaphore_mem>> -> memref<1x!tpu.dma_semaphore, #tpu.memory_space<semaphore_mem>>
    %317 = tpu.memref_squeeze %316 : memref<1x!tpu.dma_semaphore, #tpu.memory_space<semaphore_mem>> -> memref<!tpu.dma_semaphore, #tpu.memory_space<semaphore_mem>>
    tpu.wait_dma2 semaphore(%317 : memref<!tpu.dma_semaphore, #tpu.memory_space<semaphore_mem>>) src(%arg13 : memref<256x128xbf16, #tpu.memory_space<any>>) dst(%arg22 : memref<256x128xbf16, #tpu.memory_space<vmem>>)
    %c3_i32_137 = arith.constant 3 : i32
    %318 = tpu.memref_slice %arg24[%c3_i32_137] : memref<4x!tpu.dma_semaphore, #tpu.memory_space<semaphore_mem>> -> memref<1x!tpu.dma_semaphore, #tpu.memory_space<semaphore_mem>>
    %319 = tpu.memref_squeeze %318 : memref<1x!tpu.dma_semaphore, #tpu.memory_space<semaphore_mem>> -> memref<!tpu.dma_semaphore, #tpu.memory_space<semaphore_mem>>
    tpu.wait_dma2 semaphore(%319 : memref<!tpu.dma_semaphore, #tpu.memory_space<semaphore_mem>>) src(%arg15 : memref<128x128xbf16, #tpu.memory_space<any>>) dst(%arg23 : memref<128x128xbf16, #tpu.memory_space<vmem>>)
    %320 = tpu.concatenate %306, %311 in 0 : vector<1x128xf32>, vector<1x128xf32> -> vector<2x128xf32>
    %321 = tpu.iota {dimensions = array<i32: 1>} : vector<2x128xi32>
    %c1_i32_138 = arith.constant 1 : i32
    %322 = vector.broadcast %c1_i32_138 : i32 to vector<2x128xi32>
    %323 = arith.cmpi eq, %321, %322 : vector<2x128xi32>
    %324 = arith.extui %323 : vector<2x128xi1> to vector<2x128xi32>
    %325 = arith.sitofp %324 : vector<2x128xi32> to vector<2x128xf32>
    %326 = arith.truncf %325 : vector<2x128xf32> to vector<2x128xbf16>
    %c0_139 = arith.constant 0 : index
    %c0_140 = arith.constant 0 : index
    %327 = vector.load %arg20[%c0_139, %c0_140] : memref<128x128xbf16, #tpu.memory_space<vmem>>, vector<128x128xbf16>
    %cst_141 = arith.constant dense<0.000000e+00> : vector<2x128xf32>
    %328 = tpu.matmul %326, %327, %cst_141 {dimension_numbers = #tpu.dot_dimension_numbers<[1], [0], [0], [1], [0, 0, 1, 1], [], []>} : vector<2x128xbf16>, vector<128x128xbf16>, vector<2x128xf32> -> vector<2x128xf32>
    %329 = tpu.concatenate %328, %320 in 1 : vector<2x128xf32>, vector<2x128xf32> -> vector<2x256xf32>
    %330 = arith.truncf %329 : vector<2x256xf32> to vector<2x256xbf16>
    %c0_142 = arith.constant 0 : index
    %c0_143 = arith.constant 0 : index
    %331 = vector.load %arg21[%c0_142, %c0_143] : memref<256x512xbf16, #tpu.memory_space<vmem>>, vector<256x512xbf16>
    %cst_144 = arith.constant dense<0.000000e+00> : vector<2x512xf32>
    %332 = tpu.matmul %330, %331, %cst_144 {dimension_numbers = #tpu.dot_dimension_numbers<[1], [0], [0], [1], [0, 0, 1, 1], [], []>} : vector<2x256xbf16>, vector<256x512xbf16>, vector<2x512xf32> -> vector<2x512xf32>
    %c0_145 = arith.constant 0 : index
    %c0_146 = arith.constant 0 : index
    %333 = vector.load %arg12[%c0_145, %c0_146] : memref<1x512xf32, #tpu.memory_space<vmem>>, vector<1x512xf32>
    %334 = vector.broadcast %333 : vector<1x512xf32> to vector<2x512xf32>
    %335 = arith.addf %332, %334 : vector<2x512xf32>
    %336 = vector.extract_strided_slice %335 {offsets = [0, 0], sizes = [2, 128], strides = [1, 1]} : vector<2x512xf32> to vector<2x128xf32>
    %cst_147 = arith.constant 5.000000e-01 : f32
    %337 = vector.broadcast %cst_147 : f32 to vector<2x128xf32>
    %338 = arith.mulf %337, %336 : vector<2x128xf32>
    %339 = math.tanh %338 : vector<2x128xf32>
    %cst_148 = arith.constant 1.000000e+00 : f32
    %340 = vector.broadcast %cst_148 : f32 to vector<2x128xf32>
    %341 = arith.addf %339, %340 : vector<2x128xf32>
    %cst_149 = arith.constant 5.000000e-01 : f32
    %342 = vector.broadcast %cst_149 : f32 to vector<2x128xf32>
    %343 = arith.mulf %342, %341 : vector<2x128xf32>
    %344 = vector.extract_strided_slice %335 {offsets = [0, 128], sizes = [2, 128], strides = [1, 1]} : vector<2x512xf32> to vector<2x128xf32>
    %cst_150 = arith.constant 5.000000e-01 : f32
    %345 = vector.broadcast %cst_150 : f32 to vector<2x128xf32>
    %346 = arith.mulf %345, %344 : vector<2x128xf32>
    %347 = math.tanh %346 : vector<2x128xf32>
    %cst_151 = arith.constant 1.000000e+00 : f32
    %348 = vector.broadcast %cst_151 : f32 to vector<2x128xf32>
    %349 = arith.addf %347, %348 : vector<2x128xf32>
    %cst_152 = arith.constant 5.000000e-01 : f32
    %350 = vector.broadcast %cst_152 : f32 to vector<2x128xf32>
    %351 = arith.mulf %350, %349 : vector<2x128xf32>
    %352 = vector.extract_strided_slice %335 {offsets = [0, 256], sizes = [2, 128], strides = [1, 1]} : vector<2x512xf32> to vector<2x128xf32>
    %353 = vector.extract_strided_slice %335 {offsets = [0, 384], sizes = [2, 128], strides = [1, 1]} : vector<2x512xf32> to vector<2x128xf32>
    %354 = arith.mulf %343, %353 : vector<2x128xf32>
    %355 = arith.addf %352, %354 : vector<2x128xf32>
    %356 = math.tanh %355 : vector<2x128xf32>
    %cst_153 = arith.constant 1.000000e+00 : f32
    %357 = vector.broadcast %cst_153 : f32 to vector<2x128xf32>
    %358 = arith.subf %357, %351 : vector<2x128xf32>
    %359 = arith.mulf %358, %356 : vector<2x128xf32>
    %360 = arith.mulf %351, %320 : vector<2x128xf32>
    %361 = arith.addf %359, %360 : vector<2x128xf32>
    %cst_154 = arith.constant dense<0.000000e+00> : vector<2x8xf32>
    %362 = tpu.matmul %361, %297, %cst_154 {dimension_numbers = #tpu.dot_dimension_numbers<[1], [1], [0], [0], [0, 0, 1, 0], [], []>} : vector<2x128xf32>, vector<8x128xf32>, vector<2x8xf32> -> vector<2x8xf32>
    %cst_155 = arith.constant dense<0xFF800000> : vector<2xf32>
    %363 = vector.multi_reduction <maximumf>, %362, %cst_155 [1] : vector<2x8xf32> to vector<2xf32>
    %364 = vector.shape_cast %363 : vector<2xf32> to vector<2x1xf32>
    %365 = vector.broadcast %364 : vector<2x1xf32> to vector<2x8xf32>
    %366 = arith.subf %362, %365 : vector<2x8xf32>
    %367 = math.exp %366 : vector<2x8xf32>
    %cst_156 = arith.constant dense<0.000000e+00> : vector<2xf32>
    %368 = vector.multi_reduction <add>, %367, %cst_156 [1] : vector<2x8xf32> to vector<2xf32>
    %369 = vector.shape_cast %368 : vector<2xf32> to vector<2x1xf32>
    %370 = tpu.reciprocal %369 {approx = true} : vector<2x1xf32> -> vector<2x1xf32>
    %371 = vector.broadcast %370 : vector<2x1xf32> to vector<2x8xf32>
    %372 = arith.mulf %367, %371 : vector<2x8xf32>
    %cst_157 = arith.constant dense<0.000000e+00> : vector<2x128xf32>
    %373 = tpu.matmul %372, %297, %cst_157 {dimension_numbers = #tpu.dot_dimension_numbers<[1], [0], [0], [1], [0, 0, 1, 1], [], []>} : vector<2x8xf32>, vector<8x128xf32>, vector<2x128xf32> -> vector<2x128xf32>
    %374 = tpu.concatenate %361, %373 in 1 : vector<2x128xf32>, vector<2x128xf32> -> vector<2x256xf32>
    %375 = arith.truncf %374 : vector<2x256xf32> to vector<2x256xbf16>
    %c0_158 = arith.constant 0 : index
    %c0_159 = arith.constant 0 : index
    %376 = vector.load %arg22[%c0_158, %c0_159] : memref<256x128xbf16, #tpu.memory_space<vmem>>, vector<256x128xbf16>
    %cst_160 = arith.constant dense<0.000000e+00> : vector<2x128xf32>
    %377 = tpu.matmul %375, %376, %cst_160 {dimension_numbers = #tpu.dot_dimension_numbers<[1], [0], [0], [1], [0, 0, 1, 1], [], []>} : vector<2x256xbf16>, vector<256x128xbf16>, vector<2x128xf32> -> vector<2x128xf32>
    %c0_161 = arith.constant 0 : index
    %c0_162 = arith.constant 0 : index
    %378 = vector.load %arg14[%c0_161, %c0_162] : memref<1x128xf32, #tpu.memory_space<vmem>>, vector<1x128xf32>
    %379 = vector.broadcast %378 : vector<1x128xf32> to vector<2x128xf32>
    %380 = arith.addf %377, %379 : vector<2x128xf32>
    %381 = math.tanh %380 : vector<2x128xf32>
    %382 = arith.truncf %381 : vector<2x128xf32> to vector<2x128xbf16>
    %c0_163 = arith.constant 0 : index
    %c0_164 = arith.constant 0 : index
    %383 = vector.load %arg23[%c0_163, %c0_164] : memref<128x128xbf16, #tpu.memory_space<vmem>>, vector<128x128xbf16>
    %cst_165 = arith.constant dense<0.000000e+00> : vector<2x128xf32>
    %384 = tpu.matmul %382, %383, %cst_165 {dimension_numbers = #tpu.dot_dimension_numbers<[1], [0], [0], [1], [0, 0, 1, 1], [], []>} : vector<2x128xbf16>, vector<128x128xbf16>, vector<2x128xf32> -> vector<2x128xf32>
    %c0_166 = arith.constant 0 : index
    %c0_167 = arith.constant 0 : index
    %385 = vector.load %arg16[%c0_166, %c0_167] : memref<1x128xf32, #tpu.memory_space<vmem>>, vector<1x128xf32>
    %386 = vector.broadcast %385 : vector<1x128xf32> to vector<2x128xf32>
    %387 = arith.addf %384, %386 : vector<2x128xf32>
    %cst_168 = arith.constant dense<0xFF800000> : vector<2xf32>
    %388 = vector.multi_reduction <maximumf>, %387, %cst_168 [1] : vector<2x128xf32> to vector<2xf32>
    %389 = vector.shape_cast %388 : vector<2xf32> to vector<2x1xf32>
    %390 = vector.broadcast %389 : vector<2x1xf32> to vector<2x128xf32>
    %391 = arith.subf %387, %390 : vector<2x128xf32>
    %392 = math.exp %391 : vector<2x128xf32>
    %cst_169 = arith.constant dense<0.000000e+00> : vector<2xf32>
    %393 = vector.multi_reduction <add>, %392, %cst_169 [1] : vector<2x128xf32> to vector<2xf32>
    %394 = vector.shape_cast %393 : vector<2xf32> to vector<2x1xf32>
    %cst_170 = arith.constant 1.000000e+00 : f32
    %395 = vector.broadcast %cst_170 : f32 to vector<2x1xf32>
    %396 = arith.divf %395, %394 : vector<2x1xf32>
    %397 = vector.broadcast %389 : vector<2x1xf32> to vector<2x128xf32>
    %398 = arith.cmpf oge, %387, %397 : vector<2x128xf32>
    %c128_i32 = arith.constant 128 : i32
    %399 = vector.broadcast %c128_i32 : i32 to vector<2x128xi32>
    %400 = arith.select %398, %321, %399 : vector<2x128xi1>, vector<2x128xi32>
    %cst_171 = arith.constant dense<2147483647> : vector<2xi32>
    %401 = vector.multi_reduction <minsi>, %400, %cst_171 [1] : vector<2x128xi32> to vector<2xi32>
    %402 = vector.shape_cast %401 : vector<2xi32> to vector<2x1xi32>
    %403 = vector.broadcast %402 : vector<2x1xi32> to vector<2x128xi32>
    %404 = arith.cmpi eq, %321, %403 : vector<2x128xi32>
    %405 = arith.extui %404 : vector<2x128xi1> to vector<2x128xi32>
    %406 = arith.sitofp %405 : vector<2x128xi32> to vector<2x128xf32>
    %407 = arith.truncf %406 : vector<2x128xf32> to vector<2x128xbf16>
    %c0_172 = arith.constant 0 : index
    %c0_173 = arith.constant 0 : index
    %408 = vector.load %arg20[%c0_172, %c0_173] : memref<128x128xbf16, #tpu.memory_space<vmem>>, vector<128x128xbf16>
    %cst_174 = arith.constant dense<0.000000e+00> : vector<2x128xf32>
    %409 = tpu.matmul %407, %408, %cst_174 {dimension_numbers = #tpu.dot_dimension_numbers<[1], [0], [0], [1], [0, 0, 1, 1], [], []>} : vector<2x128xbf16>, vector<128x128xbf16>, vector<2x128xf32> -> vector<2x128xf32>
    %410 = tpu.concatenate %409, %361 in 1 : vector<2x128xf32>, vector<2x128xf32> -> vector<2x256xf32>
    %411 = arith.truncf %410 : vector<2x256xf32> to vector<2x256xbf16>
    %c0_175 = arith.constant 0 : index
    %c0_176 = arith.constant 0 : index
    %412 = vector.load %arg21[%c0_175, %c0_176] : memref<256x512xbf16, #tpu.memory_space<vmem>>, vector<256x512xbf16>
    %cst_177 = arith.constant dense<0.000000e+00> : vector<2x512xf32>
    %413 = tpu.matmul %411, %412, %cst_177 {dimension_numbers = #tpu.dot_dimension_numbers<[1], [0], [0], [1], [0, 0, 1, 1], [], []>} : vector<2x256xbf16>, vector<256x512xbf16>, vector<2x512xf32> -> vector<2x512xf32>
    %c0_178 = arith.constant 0 : index
    %c0_179 = arith.constant 0 : index
    %414 = vector.load %arg12[%c0_178, %c0_179] : memref<1x512xf32, #tpu.memory_space<vmem>>, vector<1x512xf32>
    %415 = vector.broadcast %414 : vector<1x512xf32> to vector<2x512xf32>
    %416 = arith.addf %413, %415 : vector<2x512xf32>
    %417 = vector.extract_strided_slice %416 {offsets = [0, 0], sizes = [2, 128], strides = [1, 1]} : vector<2x512xf32> to vector<2x128xf32>
    %cst_180 = arith.constant 5.000000e-01 : f32
    %418 = vector.broadcast %cst_180 : f32 to vector<2x128xf32>
    %419 = arith.mulf %418, %417 : vector<2x128xf32>
    %420 = math.tanh %419 : vector<2x128xf32>
    %cst_181 = arith.constant 1.000000e+00 : f32
    %421 = vector.broadcast %cst_181 : f32 to vector<2x128xf32>
    %422 = arith.addf %420, %421 : vector<2x128xf32>
    %cst_182 = arith.constant 5.000000e-01 : f32
    %423 = vector.broadcast %cst_182 : f32 to vector<2x128xf32>
    %424 = arith.mulf %423, %422 : vector<2x128xf32>
    %425 = vector.extract_strided_slice %416 {offsets = [0, 128], sizes = [2, 128], strides = [1, 1]} : vector<2x512xf32> to vector<2x128xf32>
    %cst_183 = arith.constant 5.000000e-01 : f32
    %426 = vector.broadcast %cst_183 : f32 to vector<2x128xf32>
    %427 = arith.mulf %426, %425 : vector<2x128xf32>
    %428 = math.tanh %427 : vector<2x128xf32>
    %cst_184 = arith.constant 1.000000e+00 : f32
    %429 = vector.broadcast %cst_184 : f32 to vector<2x128xf32>
    %430 = arith.addf %428, %429 : vector<2x128xf32>
    %cst_185 = arith.constant 5.000000e-01 : f32
    %431 = vector.broadcast %cst_185 : f32 to vector<2x128xf32>
    %432 = arith.mulf %431, %430 : vector<2x128xf32>
    %433 = vector.extract_strided_slice %416 {offsets = [0, 256], sizes = [2, 128], strides = [1, 1]} : vector<2x512xf32> to vector<2x128xf32>
    %434 = vector.extract_strided_slice %416 {offsets = [0, 384], sizes = [2, 128], strides = [1, 1]} : vector<2x512xf32> to vector<2x128xf32>
    %435 = arith.mulf %424, %434 : vector<2x128xf32>
    %436 = arith.addf %433, %435 : vector<2x128xf32>
    %437 = math.tanh %436 : vector<2x128xf32>
    %cst_186 = arith.constant 1.000000e+00 : f32
    %438 = vector.broadcast %cst_186 : f32 to vector<2x128xf32>
    %439 = arith.subf %438, %432 : vector<2x128xf32>
    %440 = arith.mulf %439, %437 : vector<2x128xf32>
    %441 = arith.mulf %432, %361 : vector<2x128xf32>
    %442 = arith.addf %440, %441 : vector<2x128xf32>
    %cst_187 = arith.constant dense<0.000000e+00> : vector<2x8xf32>
    %443 = tpu.matmul %442, %297, %cst_187 {dimension_numbers = #tpu.dot_dimension_numbers<[1], [1], [0], [0], [0, 0, 1, 0], [], []>} : vector<2x128xf32>, vector<8x128xf32>, vector<2x8xf32> -> vector<2x8xf32>
    %cst_188 = arith.constant dense<0xFF800000> : vector<2xf32>
    %444 = vector.multi_reduction <maximumf>, %443, %cst_188 [1] : vector<2x8xf32> to vector<2xf32>
    %445 = vector.shape_cast %444 : vector<2xf32> to vector<2x1xf32>
    %446 = vector.broadcast %445 : vector<2x1xf32> to vector<2x8xf32>
    %447 = arith.subf %443, %446 : vector<2x8xf32>
    %448 = math.exp %447 : vector<2x8xf32>
    %cst_189 = arith.constant dense<0.000000e+00> : vector<2xf32>
    %449 = vector.multi_reduction <add>, %448, %cst_189 [1] : vector<2x8xf32> to vector<2xf32>
    %450 = vector.shape_cast %449 : vector<2xf32> to vector<2x1xf32>
    %451 = tpu.reciprocal %450 {approx = true} : vector<2x1xf32> -> vector<2x1xf32>
    %452 = vector.broadcast %451 : vector<2x1xf32> to vector<2x8xf32>
    %453 = arith.mulf %448, %452 : vector<2x8xf32>
    %cst_190 = arith.constant dense<0.000000e+00> : vector<2x128xf32>
    %454 = tpu.matmul %453, %297, %cst_190 {dimension_numbers = #tpu.dot_dimension_numbers<[1], [0], [0], [1], [0, 0, 1, 1], [], []>} : vector<2x8xf32>, vector<8x128xf32>, vector<2x128xf32> -> vector<2x128xf32>
    %455 = tpu.concatenate %442, %454 in 1 : vector<2x128xf32>, vector<2x128xf32> -> vector<2x256xf32>
    %456 = arith.truncf %455 : vector<2x256xf32> to vector<2x256xbf16>
    %c0_191 = arith.constant 0 : index
    %c0_192 = arith.constant 0 : index
    %457 = vector.load %arg22[%c0_191, %c0_192] : memref<256x128xbf16, #tpu.memory_space<vmem>>, vector<256x128xbf16>
    %cst_193 = arith.constant dense<0.000000e+00> : vector<2x128xf32>
    %458 = tpu.matmul %456, %457, %cst_193 {dimension_numbers = #tpu.dot_dimension_numbers<[1], [0], [0], [1], [0, 0, 1, 1], [], []>} : vector<2x256xbf16>, vector<256x128xbf16>, vector<2x128xf32> -> vector<2x128xf32>
    %c0_194 = arith.constant 0 : index
    %c0_195 = arith.constant 0 : index
    %459 = vector.load %arg14[%c0_194, %c0_195] : memref<1x128xf32, #tpu.memory_space<vmem>>, vector<1x128xf32>
    %460 = vector.broadcast %459 : vector<1x128xf32> to vector<2x128xf32>
    %461 = arith.addf %458, %460 : vector<2x128xf32>
    %462 = math.tanh %461 : vector<2x128xf32>
    %463 = arith.truncf %462 : vector<2x128xf32> to vector<2x128xbf16>
    %c0_196 = arith.constant 0 : index
    %c0_197 = arith.constant 0 : index
    %464 = vector.load %arg23[%c0_196, %c0_197] : memref<128x128xbf16, #tpu.memory_space<vmem>>, vector<128x128xbf16>
    %cst_198 = arith.constant dense<0.000000e+00> : vector<2x128xf32>
    %465 = tpu.matmul %463, %464, %cst_198 {dimension_numbers = #tpu.dot_dimension_numbers<[1], [0], [0], [1], [0, 0, 1, 1], [], []>} : vector<2x128xbf16>, vector<128x128xbf16>, vector<2x128xf32> -> vector<2x128xf32>
    %c0_199 = arith.constant 0 : index
    %c0_200 = arith.constant 0 : index
    %466 = vector.load %arg16[%c0_199, %c0_200] : memref<1x128xf32, #tpu.memory_space<vmem>>, vector<1x128xf32>
    %467 = vector.broadcast %466 : vector<1x128xf32> to vector<2x128xf32>
    %468 = arith.addf %465, %467 : vector<2x128xf32>
    %cst_201 = arith.constant dense<0xFF800000> : vector<2xf32>
    %469 = vector.multi_reduction <maximumf>, %468, %cst_201 [1] : vector<2x128xf32> to vector<2xf32>
    %470 = vector.shape_cast %469 : vector<2xf32> to vector<2x1xf32>
    %471 = vector.broadcast %470 : vector<2x1xf32> to vector<2x128xf32>
    %472 = arith.subf %468, %471 : vector<2x128xf32>
    %473 = math.exp %472 : vector<2x128xf32>
    %cst_202 = arith.constant dense<0.000000e+00> : vector<2xf32>
    %474 = vector.multi_reduction <add>, %473, %cst_202 [1] : vector<2x128xf32> to vector<2xf32>
    %475 = vector.shape_cast %474 : vector<2xf32> to vector<2x1xf32>
    %cst_203 = arith.constant 1.000000e+00 : f32
    %476 = vector.broadcast %cst_203 : f32 to vector<2x1xf32>
    %477 = arith.divf %476, %475 : vector<2x1xf32>
    %478 = vector.broadcast %470 : vector<2x1xf32> to vector<2x128xf32>
    %479 = arith.cmpf oge, %468, %478 : vector<2x128xf32>
    %c128_i32_204 = arith.constant 128 : i32
    %480 = vector.broadcast %c128_i32_204 : i32 to vector<2x128xi32>
    %481 = arith.select %479, %321, %480 : vector<2x128xi1>, vector<2x128xi32>
    %cst_205 = arith.constant dense<2147483647> : vector<2xi32>
    %482 = vector.multi_reduction <minsi>, %481, %cst_205 [1] : vector<2x128xi32> to vector<2xi32>
    %483 = vector.shape_cast %482 : vector<2xi32> to vector<2x1xi32>
    %484 = vector.broadcast %483 : vector<2x1xi32> to vector<2x128xi32>
    %485 = arith.cmpi eq, %321, %484 : vector<2x128xi32>
    %486 = arith.extui %485 : vector<2x128xi1> to vector<2x128xi32>
    %487 = arith.sitofp %486 : vector<2x128xi32> to vector<2x128xf32>
    %488 = arith.truncf %487 : vector<2x128xf32> to vector<2x128xbf16>
    %c0_206 = arith.constant 0 : index
    %c0_207 = arith.constant 0 : index
    %489 = vector.load %arg20[%c0_206, %c0_207] : memref<128x128xbf16, #tpu.memory_space<vmem>>, vector<128x128xbf16>
    %cst_208 = arith.constant dense<0.000000e+00> : vector<2x128xf32>
    %490 = tpu.matmul %488, %489, %cst_208 {dimension_numbers = #tpu.dot_dimension_numbers<[1], [0], [0], [1], [0, 0, 1, 1], [], []>} : vector<2x128xbf16>, vector<128x128xbf16>, vector<2x128xf32> -> vector<2x128xf32>
    %491 = tpu.concatenate %490, %442 in 1 : vector<2x128xf32>, vector<2x128xf32> -> vector<2x256xf32>
    %492 = arith.truncf %491 : vector<2x256xf32> to vector<2x256xbf16>
    %c0_209 = arith.constant 0 : index
    %c0_210 = arith.constant 0 : index
    %493 = vector.load %arg21[%c0_209, %c0_210] : memref<256x512xbf16, #tpu.memory_space<vmem>>, vector<256x512xbf16>
    %cst_211 = arith.constant dense<0.000000e+00> : vector<2x512xf32>
    %494 = tpu.matmul %492, %493, %cst_211 {dimension_numbers = #tpu.dot_dimension_numbers<[1], [0], [0], [1], [0, 0, 1, 1], [], []>} : vector<2x256xbf16>, vector<256x512xbf16>, vector<2x512xf32> -> vector<2x512xf32>
    %c0_212 = arith.constant 0 : index
    %c0_213 = arith.constant 0 : index
    %495 = vector.load %arg12[%c0_212, %c0_213] : memref<1x512xf32, #tpu.memory_space<vmem>>, vector<1x512xf32>
    %496 = vector.broadcast %495 : vector<1x512xf32> to vector<2x512xf32>
    %497 = arith.addf %494, %496 : vector<2x512xf32>
    %498 = vector.extract_strided_slice %497 {offsets = [0, 0], sizes = [2, 128], strides = [1, 1]} : vector<2x512xf32> to vector<2x128xf32>
    %cst_214 = arith.constant 5.000000e-01 : f32
    %499 = vector.broadcast %cst_214 : f32 to vector<2x128xf32>
    %500 = arith.mulf %499, %498 : vector<2x128xf32>
    %501 = math.tanh %500 : vector<2x128xf32>
    %cst_215 = arith.constant 1.000000e+00 : f32
    %502 = vector.broadcast %cst_215 : f32 to vector<2x128xf32>
    %503 = arith.addf %501, %502 : vector<2x128xf32>
    %cst_216 = arith.constant 5.000000e-01 : f32
    %504 = vector.broadcast %cst_216 : f32 to vector<2x128xf32>
    %505 = arith.mulf %504, %503 : vector<2x128xf32>
    %506 = vector.extract_strided_slice %497 {offsets = [0, 128], sizes = [2, 128], strides = [1, 1]} : vector<2x512xf32> to vector<2x128xf32>
    %cst_217 = arith.constant 5.000000e-01 : f32
    %507 = vector.broadcast %cst_217 : f32 to vector<2x128xf32>
    %508 = arith.mulf %507, %506 : vector<2x128xf32>
    %509 = math.tanh %508 : vector<2x128xf32>
    %cst_218 = arith.constant 1.000000e+00 : f32
    %510 = vector.broadcast %cst_218 : f32 to vector<2x128xf32>
    %511 = arith.addf %509, %510 : vector<2x128xf32>
    %cst_219 = arith.constant 5.000000e-01 : f32
    %512 = vector.broadcast %cst_219 : f32 to vector<2x128xf32>
    %513 = arith.mulf %512, %511 : vector<2x128xf32>
    %514 = vector.extract_strided_slice %497 {offsets = [0, 256], sizes = [2, 128], strides = [1, 1]} : vector<2x512xf32> to vector<2x128xf32>
    %515 = vector.extract_strided_slice %497 {offsets = [0, 384], sizes = [2, 128], strides = [1, 1]} : vector<2x512xf32> to vector<2x128xf32>
    %516 = arith.mulf %505, %515 : vector<2x128xf32>
    %517 = arith.addf %514, %516 : vector<2x128xf32>
    %518 = math.tanh %517 : vector<2x128xf32>
    %cst_220 = arith.constant 1.000000e+00 : f32
    %519 = vector.broadcast %cst_220 : f32 to vector<2x128xf32>
    %520 = arith.subf %519, %513 : vector<2x128xf32>
    %521 = arith.mulf %520, %518 : vector<2x128xf32>
    %522 = arith.mulf %513, %442 : vector<2x128xf32>
    %523 = arith.addf %521, %522 : vector<2x128xf32>
    %cst_221 = arith.constant dense<0.000000e+00> : vector<2x8xf32>
    %524 = tpu.matmul %523, %297, %cst_221 {dimension_numbers = #tpu.dot_dimension_numbers<[1], [1], [0], [0], [0, 0, 1, 0], [], []>} : vector<2x128xf32>, vector<8x128xf32>, vector<2x8xf32> -> vector<2x8xf32>
    %cst_222 = arith.constant dense<0xFF800000> : vector<2xf32>
    %525 = vector.multi_reduction <maximumf>, %524, %cst_222 [1] : vector<2x8xf32> to vector<2xf32>
    %526 = vector.shape_cast %525 : vector<2xf32> to vector<2x1xf32>
    %527 = vector.broadcast %526 : vector<2x1xf32> to vector<2x8xf32>
    %528 = arith.subf %524, %527 : vector<2x8xf32>
    %529 = math.exp %528 : vector<2x8xf32>
    %cst_223 = arith.constant dense<0.000000e+00> : vector<2xf32>
    %530 = vector.multi_reduction <add>, %529, %cst_223 [1] : vector<2x8xf32> to vector<2xf32>
    %531 = vector.shape_cast %530 : vector<2xf32> to vector<2x1xf32>
    %532 = tpu.reciprocal %531 {approx = true} : vector<2x1xf32> -> vector<2x1xf32>
    %533 = vector.broadcast %532 : vector<2x1xf32> to vector<2x8xf32>
    %534 = arith.mulf %529, %533 : vector<2x8xf32>
    %cst_224 = arith.constant dense<0.000000e+00> : vector<2x128xf32>
    %535 = tpu.matmul %534, %297, %cst_224 {dimension_numbers = #tpu.dot_dimension_numbers<[1], [0], [0], [1], [0, 0, 1, 1], [], []>} : vector<2x8xf32>, vector<8x128xf32>, vector<2x128xf32> -> vector<2x128xf32>
    %536 = tpu.concatenate %523, %535 in 1 : vector<2x128xf32>, vector<2x128xf32> -> vector<2x256xf32>
    %537 = arith.truncf %536 : vector<2x256xf32> to vector<2x256xbf16>
    %c0_225 = arith.constant 0 : index
    %c0_226 = arith.constant 0 : index
    %538 = vector.load %arg22[%c0_225, %c0_226] : memref<256x128xbf16, #tpu.memory_space<vmem>>, vector<256x128xbf16>
    %cst_227 = arith.constant dense<0.000000e+00> : vector<2x128xf32>
    %539 = tpu.matmul %537, %538, %cst_227 {dimension_numbers = #tpu.dot_dimension_numbers<[1], [0], [0], [1], [0, 0, 1, 1], [], []>} : vector<2x256xbf16>, vector<256x128xbf16>, vector<2x128xf32> -> vector<2x128xf32>
    %c0_228 = arith.constant 0 : index
    %c0_229 = arith.constant 0 : index
    %540 = vector.load %arg14[%c0_228, %c0_229] : memref<1x128xf32, #tpu.memory_space<vmem>>, vector<1x128xf32>
    %541 = vector.broadcast %540 : vector<1x128xf32> to vector<2x128xf32>
    %542 = arith.addf %539, %541 : vector<2x128xf32>
    %543 = math.tanh %542 : vector<2x128xf32>
    %544 = arith.truncf %543 : vector<2x128xf32> to vector<2x128xbf16>
    %c0_230 = arith.constant 0 : index
    %c0_231 = arith.constant 0 : index
    %545 = vector.load %arg23[%c0_230, %c0_231] : memref<128x128xbf16, #tpu.memory_space<vmem>>, vector<128x128xbf16>
    %cst_232 = arith.constant dense<0.000000e+00> : vector<2x128xf32>
    %546 = tpu.matmul %544, %545, %cst_232 {dimension_numbers = #tpu.dot_dimension_numbers<[1], [0], [0], [1], [0, 0, 1, 1], [], []>} : vector<2x128xbf16>, vector<128x128xbf16>, vector<2x128xf32> -> vector<2x128xf32>
    %c0_233 = arith.constant 0 : index
    %c0_234 = arith.constant 0 : index
    %547 = vector.load %arg16[%c0_233, %c0_234] : memref<1x128xf32, #tpu.memory_space<vmem>>, vector<1x128xf32>
    %548 = vector.broadcast %547 : vector<1x128xf32> to vector<2x128xf32>
    %549 = arith.addf %546, %548 : vector<2x128xf32>
    %cst_235 = arith.constant dense<0xFF800000> : vector<2xf32>
    %550 = vector.multi_reduction <maximumf>, %549, %cst_235 [1] : vector<2x128xf32> to vector<2xf32>
    %551 = vector.shape_cast %550 : vector<2xf32> to vector<2x1xf32>
    %552 = vector.broadcast %551 : vector<2x1xf32> to vector<2x128xf32>
    %553 = arith.subf %549, %552 : vector<2x128xf32>
    %554 = math.exp %553 : vector<2x128xf32>
    %cst_236 = arith.constant dense<0.000000e+00> : vector<2xf32>
    %555 = vector.multi_reduction <add>, %554, %cst_236 [1] : vector<2x128xf32> to vector<2xf32>
    %556 = vector.shape_cast %555 : vector<2xf32> to vector<2x1xf32>
    %cst_237 = arith.constant 1.000000e+00 : f32
    %557 = vector.broadcast %cst_237 : f32 to vector<2x1xf32>
    %558 = arith.divf %557, %556 : vector<2x1xf32>
    %559 = vector.broadcast %551 : vector<2x1xf32> to vector<2x128xf32>
    %560 = arith.cmpf oge, %549, %559 : vector<2x128xf32>
    %c128_i32_238 = arith.constant 128 : i32
    %561 = vector.broadcast %c128_i32_238 : i32 to vector<2x128xi32>
    %562 = arith.select %560, %321, %561 : vector<2x128xi1>, vector<2x128xi32>
    %cst_239 = arith.constant dense<2147483647> : vector<2xi32>
    %563 = vector.multi_reduction <minsi>, %562, %cst_239 [1] : vector<2x128xi32> to vector<2xi32>
    %564 = vector.shape_cast %563 : vector<2xi32> to vector<2x1xi32>
    %565 = vector.broadcast %564 : vector<2x1xi32> to vector<2x128xi32>
    %566 = arith.cmpi eq, %321, %565 : vector<2x128xi32>
    %567 = arith.extui %566 : vector<2x128xi1> to vector<2x128xi32>
    %568 = arith.sitofp %567 : vector<2x128xi32> to vector<2x128xf32>
    %569 = arith.truncf %568 : vector<2x128xf32> to vector<2x128xbf16>
    %c0_240 = arith.constant 0 : index
    %c0_241 = arith.constant 0 : index
    %570 = vector.load %arg20[%c0_240, %c0_241] : memref<128x128xbf16, #tpu.memory_space<vmem>>, vector<128x128xbf16>
    %cst_242 = arith.constant dense<0.000000e+00> : vector<2x128xf32>
    %571 = tpu.matmul %569, %570, %cst_242 {dimension_numbers = #tpu.dot_dimension_numbers<[1], [0], [0], [1], [0, 0, 1, 1], [], []>} : vector<2x128xbf16>, vector<128x128xbf16>, vector<2x128xf32> -> vector<2x128xf32>
    %572 = tpu.concatenate %571, %523 in 1 : vector<2x128xf32>, vector<2x128xf32> -> vector<2x256xf32>
    %573 = arith.truncf %572 : vector<2x256xf32> to vector<2x256xbf16>
    %c0_243 = arith.constant 0 : index
    %c0_244 = arith.constant 0 : index
    %574 = vector.load %arg21[%c0_243, %c0_244] : memref<256x512xbf16, #tpu.memory_space<vmem>>, vector<256x512xbf16>
    %cst_245 = arith.constant dense<0.000000e+00> : vector<2x512xf32>
    %575 = tpu.matmul %573, %574, %cst_245 {dimension_numbers = #tpu.dot_dimension_numbers<[1], [0], [0], [1], [0, 0, 1, 1], [], []>} : vector<2x256xbf16>, vector<256x512xbf16>, vector<2x512xf32> -> vector<2x512xf32>
    %c0_246 = arith.constant 0 : index
    %c0_247 = arith.constant 0 : index
    %576 = vector.load %arg12[%c0_246, %c0_247] : memref<1x512xf32, #tpu.memory_space<vmem>>, vector<1x512xf32>
    %577 = vector.broadcast %576 : vector<1x512xf32> to vector<2x512xf32>
    %578 = arith.addf %575, %577 : vector<2x512xf32>
    %579 = vector.extract_strided_slice %578 {offsets = [0, 0], sizes = [2, 128], strides = [1, 1]} : vector<2x512xf32> to vector<2x128xf32>
    %cst_248 = arith.constant 5.000000e-01 : f32
    %580 = vector.broadcast %cst_248 : f32 to vector<2x128xf32>
    %581 = arith.mulf %580, %579 : vector<2x128xf32>
    %582 = math.tanh %581 : vector<2x128xf32>
    %cst_249 = arith.constant 1.000000e+00 : f32
    %583 = vector.broadcast %cst_249 : f32 to vector<2x128xf32>
    %584 = arith.addf %582, %583 : vector<2x128xf32>
    %cst_250 = arith.constant 5.000000e-01 : f32
    %585 = vector.broadcast %cst_250 : f32 to vector<2x128xf32>
    %586 = arith.mulf %585, %584 : vector<2x128xf32>
    %587 = vector.extract_strided_slice %578 {offsets = [0, 128], sizes = [2, 128], strides = [1, 1]} : vector<2x512xf32> to vector<2x128xf32>
    %cst_251 = arith.constant 5.000000e-01 : f32
    %588 = vector.broadcast %cst_251 : f32 to vector<2x128xf32>
    %589 = arith.mulf %588, %587 : vector<2x128xf32>
    %590 = math.tanh %589 : vector<2x128xf32>
    %cst_252 = arith.constant 1.000000e+00 : f32
    %591 = vector.broadcast %cst_252 : f32 to vector<2x128xf32>
    %592 = arith.addf %590, %591 : vector<2x128xf32>
    %cst_253 = arith.constant 5.000000e-01 : f32
    %593 = vector.broadcast %cst_253 : f32 to vector<2x128xf32>
    %594 = arith.mulf %593, %592 : vector<2x128xf32>
    %595 = vector.extract_strided_slice %578 {offsets = [0, 256], sizes = [2, 128], strides = [1, 1]} : vector<2x512xf32> to vector<2x128xf32>
    %596 = vector.extract_strided_slice %578 {offsets = [0, 384], sizes = [2, 128], strides = [1, 1]} : vector<2x512xf32> to vector<2x128xf32>
    %597 = arith.mulf %586, %596 : vector<2x128xf32>
    %598 = arith.addf %595, %597 : vector<2x128xf32>
    %599 = math.tanh %598 : vector<2x128xf32>
    %cst_254 = arith.constant 1.000000e+00 : f32
    %600 = vector.broadcast %cst_254 : f32 to vector<2x128xf32>
    %601 = arith.subf %600, %594 : vector<2x128xf32>
    %602 = arith.mulf %601, %599 : vector<2x128xf32>
    %603 = arith.mulf %594, %523 : vector<2x128xf32>
    %604 = arith.addf %602, %603 : vector<2x128xf32>
    %cst_255 = arith.constant dense<0.000000e+00> : vector<2x8xf32>
    %605 = tpu.matmul %604, %297, %cst_255 {dimension_numbers = #tpu.dot_dimension_numbers<[1], [1], [0], [0], [0, 0, 1, 0], [], []>} : vector<2x128xf32>, vector<8x128xf32>, vector<2x8xf32> -> vector<2x8xf32>
    %cst_256 = arith.constant dense<0xFF800000> : vector<2xf32>
    %606 = vector.multi_reduction <maximumf>, %605, %cst_256 [1] : vector<2x8xf32> to vector<2xf32>
    %607 = vector.shape_cast %606 : vector<2xf32> to vector<2x1xf32>
    %608 = vector.broadcast %607 : vector<2x1xf32> to vector<2x8xf32>
    %609 = arith.subf %605, %608 : vector<2x8xf32>
    %610 = math.exp %609 : vector<2x8xf32>
    %cst_257 = arith.constant dense<0.000000e+00> : vector<2xf32>
    %611 = vector.multi_reduction <add>, %610, %cst_257 [1] : vector<2x8xf32> to vector<2xf32>
    %612 = vector.shape_cast %611 : vector<2xf32> to vector<2x1xf32>
    %613 = tpu.reciprocal %612 {approx = true} : vector<2x1xf32> -> vector<2x1xf32>
    %614 = vector.broadcast %613 : vector<2x1xf32> to vector<2x8xf32>
    %615 = arith.mulf %610, %614 : vector<2x8xf32>
    %cst_258 = arith.constant dense<0.000000e+00> : vector<2x128xf32>
    %616 = tpu.matmul %615, %297, %cst_258 {dimension_numbers = #tpu.dot_dimension_numbers<[1], [0], [0], [1], [0, 0, 1, 1], [], []>} : vector<2x8xf32>, vector<8x128xf32>, vector<2x128xf32> -> vector<2x128xf32>
    %617 = tpu.concatenate %604, %616 in 1 : vector<2x128xf32>, vector<2x128xf32> -> vector<2x256xf32>
    %618 = arith.truncf %617 : vector<2x256xf32> to vector<2x256xbf16>
    %c0_259 = arith.constant 0 : index
    %c0_260 = arith.constant 0 : index
    %619 = vector.load %arg22[%c0_259, %c0_260] : memref<256x128xbf16, #tpu.memory_space<vmem>>, vector<256x128xbf16>
    %cst_261 = arith.constant dense<0.000000e+00> : vector<2x128xf32>
    %620 = tpu.matmul %618, %619, %cst_261 {dimension_numbers = #tpu.dot_dimension_numbers<[1], [0], [0], [1], [0, 0, 1, 1], [], []>} : vector<2x256xbf16>, vector<256x128xbf16>, vector<2x128xf32> -> vector<2x128xf32>
    %c0_262 = arith.constant 0 : index
    %c0_263 = arith.constant 0 : index
    %621 = vector.load %arg14[%c0_262, %c0_263] : memref<1x128xf32, #tpu.memory_space<vmem>>, vector<1x128xf32>
    %622 = vector.broadcast %621 : vector<1x128xf32> to vector<2x128xf32>
    %623 = arith.addf %620, %622 : vector<2x128xf32>
    %624 = math.tanh %623 : vector<2x128xf32>
    %625 = arith.truncf %624 : vector<2x128xf32> to vector<2x128xbf16>
    %c0_264 = arith.constant 0 : index
    %c0_265 = arith.constant 0 : index
    %626 = vector.load %arg23[%c0_264, %c0_265] : memref<128x128xbf16, #tpu.memory_space<vmem>>, vector<128x128xbf16>
    %cst_266 = arith.constant dense<0.000000e+00> : vector<2x128xf32>
    %627 = tpu.matmul %625, %626, %cst_266 {dimension_numbers = #tpu.dot_dimension_numbers<[1], [0], [0], [1], [0, 0, 1, 1], [], []>} : vector<2x128xbf16>, vector<128x128xbf16>, vector<2x128xf32> -> vector<2x128xf32>
    %c0_267 = arith.constant 0 : index
    %c0_268 = arith.constant 0 : index
    %628 = vector.load %arg16[%c0_267, %c0_268] : memref<1x128xf32, #tpu.memory_space<vmem>>, vector<1x128xf32>
    %629 = vector.broadcast %628 : vector<1x128xf32> to vector<2x128xf32>
    %630 = arith.addf %627, %629 : vector<2x128xf32>
    %cst_269 = arith.constant dense<0xFF800000> : vector<2xf32>
    %631 = vector.multi_reduction <maximumf>, %630, %cst_269 [1] : vector<2x128xf32> to vector<2xf32>
    %632 = vector.shape_cast %631 : vector<2xf32> to vector<2x1xf32>
    %633 = vector.broadcast %632 : vector<2x1xf32> to vector<2x128xf32>
    %634 = arith.subf %630, %633 : vector<2x128xf32>
    %635 = math.exp %634 : vector<2x128xf32>
    %cst_270 = arith.constant dense<0.000000e+00> : vector<2xf32>
    %636 = vector.multi_reduction <add>, %635, %cst_270 [1] : vector<2x128xf32> to vector<2xf32>
    %637 = vector.shape_cast %636 : vector<2xf32> to vector<2x1xf32>
    %cst_271 = arith.constant 1.000000e+00 : f32
    %638 = vector.broadcast %cst_271 : f32 to vector<2x1xf32>
    %639 = arith.divf %638, %637 : vector<2x1xf32>
    %640 = vector.broadcast %632 : vector<2x1xf32> to vector<2x128xf32>
    %641 = arith.cmpf oge, %630, %640 : vector<2x128xf32>
    %c128_i32_272 = arith.constant 128 : i32
    %642 = vector.broadcast %c128_i32_272 : i32 to vector<2x128xi32>
    %643 = arith.select %641, %321, %642 : vector<2x128xi1>, vector<2x128xi32>
    %cst_273 = arith.constant dense<2147483647> : vector<2xi32>
    %644 = vector.multi_reduction <minsi>, %643, %cst_273 [1] : vector<2x128xi32> to vector<2xi32>
    %645 = vector.shape_cast %644 : vector<2xi32> to vector<2x1xi32>
    %646 = vector.broadcast %645 : vector<2x1xi32> to vector<2x128xi32>
    %647 = arith.cmpi eq, %321, %646 : vector<2x128xi32>
    %648 = arith.extui %647 : vector<2x128xi1> to vector<2x128xi32>
    %649 = arith.sitofp %648 : vector<2x128xi32> to vector<2x128xf32>
    %650 = arith.truncf %649 : vector<2x128xf32> to vector<2x128xbf16>
    %c0_274 = arith.constant 0 : index
    %c0_275 = arith.constant 0 : index
    %651 = vector.load %arg20[%c0_274, %c0_275] : memref<128x128xbf16, #tpu.memory_space<vmem>>, vector<128x128xbf16>
    %cst_276 = arith.constant dense<0.000000e+00> : vector<2x128xf32>
    %652 = tpu.matmul %650, %651, %cst_276 {dimension_numbers = #tpu.dot_dimension_numbers<[1], [0], [0], [1], [0, 0, 1, 1], [], []>} : vector<2x128xbf16>, vector<128x128xbf16>, vector<2x128xf32> -> vector<2x128xf32>
    %653 = tpu.concatenate %652, %604 in 1 : vector<2x128xf32>, vector<2x128xf32> -> vector<2x256xf32>
    %654 = arith.truncf %653 : vector<2x256xf32> to vector<2x256xbf16>
    %c0_277 = arith.constant 0 : index
    %c0_278 = arith.constant 0 : index
    %655 = vector.load %arg21[%c0_277, %c0_278] : memref<256x512xbf16, #tpu.memory_space<vmem>>, vector<256x512xbf16>
    %cst_279 = arith.constant dense<0.000000e+00> : vector<2x512xf32>
    %656 = tpu.matmul %654, %655, %cst_279 {dimension_numbers = #tpu.dot_dimension_numbers<[1], [0], [0], [1], [0, 0, 1, 1], [], []>} : vector<2x256xbf16>, vector<256x512xbf16>, vector<2x512xf32> -> vector<2x512xf32>
    %c0_280 = arith.constant 0 : index
    %c0_281 = arith.constant 0 : index
    %657 = vector.load %arg12[%c0_280, %c0_281] : memref<1x512xf32, #tpu.memory_space<vmem>>, vector<1x512xf32>
    %658 = vector.broadcast %657 : vector<1x512xf32> to vector<2x512xf32>
    %659 = arith.addf %656, %658 : vector<2x512xf32>
    %660 = vector.extract_strided_slice %659 {offsets = [0, 0], sizes = [2, 128], strides = [1, 1]} : vector<2x512xf32> to vector<2x128xf32>
    %cst_282 = arith.constant 5.000000e-01 : f32
    %661 = vector.broadcast %cst_282 : f32 to vector<2x128xf32>
    %662 = arith.mulf %661, %660 : vector<2x128xf32>
    %663 = math.tanh %662 : vector<2x128xf32>
    %cst_283 = arith.constant 1.000000e+00 : f32
    %664 = vector.broadcast %cst_283 : f32 to vector<2x128xf32>
    %665 = arith.addf %663, %664 : vector<2x128xf32>
    %cst_284 = arith.constant 5.000000e-01 : f32
    %666 = vector.broadcast %cst_284 : f32 to vector<2x128xf32>
    %667 = arith.mulf %666, %665 : vector<2x128xf32>
    %668 = vector.extract_strided_slice %659 {offsets = [0, 128], sizes = [2, 128], strides = [1, 1]} : vector<2x512xf32> to vector<2x128xf32>
    %cst_285 = arith.constant 5.000000e-01 : f32
    %669 = vector.broadcast %cst_285 : f32 to vector<2x128xf32>
    %670 = arith.mulf %669, %668 : vector<2x128xf32>
    %671 = math.tanh %670 : vector<2x128xf32>
    %cst_286 = arith.constant 1.000000e+00 : f32
    %672 = vector.broadcast %cst_286 : f32 to vector<2x128xf32>
    %673 = arith.addf %671, %672 : vector<2x128xf32>
    %cst_287 = arith.constant 5.000000e-01 : f32
    %674 = vector.broadcast %cst_287 : f32 to vector<2x128xf32>
    %675 = arith.mulf %674, %673 : vector<2x128xf32>
    %676 = vector.extract_strided_slice %659 {offsets = [0, 256], sizes = [2, 128], strides = [1, 1]} : vector<2x512xf32> to vector<2x128xf32>
    %677 = vector.extract_strided_slice %659 {offsets = [0, 384], sizes = [2, 128], strides = [1, 1]} : vector<2x512xf32> to vector<2x128xf32>
    %678 = arith.mulf %667, %677 : vector<2x128xf32>
    %679 = arith.addf %676, %678 : vector<2x128xf32>
    %680 = math.tanh %679 : vector<2x128xf32>
    %cst_288 = arith.constant 1.000000e+00 : f32
    %681 = vector.broadcast %cst_288 : f32 to vector<2x128xf32>
    %682 = arith.subf %681, %675 : vector<2x128xf32>
    %683 = arith.mulf %682, %680 : vector<2x128xf32>
    %684 = arith.mulf %675, %604 : vector<2x128xf32>
    %685 = arith.addf %683, %684 : vector<2x128xf32>
    %cst_289 = arith.constant dense<0.000000e+00> : vector<2x8xf32>
    %686 = tpu.matmul %685, %297, %cst_289 {dimension_numbers = #tpu.dot_dimension_numbers<[1], [1], [0], [0], [0, 0, 1, 0], [], []>} : vector<2x128xf32>, vector<8x128xf32>, vector<2x8xf32> -> vector<2x8xf32>
    %cst_290 = arith.constant dense<0xFF800000> : vector<2xf32>
    %687 = vector.multi_reduction <maximumf>, %686, %cst_290 [1] : vector<2x8xf32> to vector<2xf32>
    %688 = vector.shape_cast %687 : vector<2xf32> to vector<2x1xf32>
    %689 = vector.broadcast %688 : vector<2x1xf32> to vector<2x8xf32>
    %690 = arith.subf %686, %689 : vector<2x8xf32>
    %691 = math.exp %690 : vector<2x8xf32>
    %cst_291 = arith.constant dense<0.000000e+00> : vector<2xf32>
    %692 = vector.multi_reduction <add>, %691, %cst_291 [1] : vector<2x8xf32> to vector<2xf32>
    %693 = vector.shape_cast %692 : vector<2xf32> to vector<2x1xf32>
    %694 = tpu.reciprocal %693 {approx = true} : vector<2x1xf32> -> vector<2x1xf32>
    %695 = vector.broadcast %694 : vector<2x1xf32> to vector<2x8xf32>
    %696 = arith.mulf %691, %695 : vector<2x8xf32>
    %cst_292 = arith.constant dense<0.000000e+00> : vector<2x128xf32>
    %697 = tpu.matmul %696, %297, %cst_292 {dimension_numbers = #tpu.dot_dimension_numbers<[1], [0], [0], [1], [0, 0, 1, 1], [], []>} : vector<2x8xf32>, vector<8x128xf32>, vector<2x128xf32> -> vector<2x128xf32>
    %698 = tpu.concatenate %685, %697 in 1 : vector<2x128xf32>, vector<2x128xf32> -> vector<2x256xf32>
    %699 = arith.truncf %698 : vector<2x256xf32> to vector<2x256xbf16>
    %c0_293 = arith.constant 0 : index
    %c0_294 = arith.constant 0 : index
    %700 = vector.load %arg22[%c0_293, %c0_294] : memref<256x128xbf16, #tpu.memory_space<vmem>>, vector<256x128xbf16>
    %cst_295 = arith.constant dense<0.000000e+00> : vector<2x128xf32>
    %701 = tpu.matmul %699, %700, %cst_295 {dimension_numbers = #tpu.dot_dimension_numbers<[1], [0], [0], [1], [0, 0, 1, 1], [], []>} : vector<2x256xbf16>, vector<256x128xbf16>, vector<2x128xf32> -> vector<2x128xf32>
    %c0_296 = arith.constant 0 : index
    %c0_297 = arith.constant 0 : index
    %702 = vector.load %arg14[%c0_296, %c0_297] : memref<1x128xf32, #tpu.memory_space<vmem>>, vector<1x128xf32>
    %703 = vector.broadcast %702 : vector<1x128xf32> to vector<2x128xf32>
    %704 = arith.addf %701, %703 : vector<2x128xf32>
    %705 = math.tanh %704 : vector<2x128xf32>
    %706 = arith.truncf %705 : vector<2x128xf32> to vector<2x128xbf16>
    %c0_298 = arith.constant 0 : index
    %c0_299 = arith.constant 0 : index
    %707 = vector.load %arg23[%c0_298, %c0_299] : memref<128x128xbf16, #tpu.memory_space<vmem>>, vector<128x128xbf16>
    %cst_300 = arith.constant dense<0.000000e+00> : vector<2x128xf32>
    %708 = tpu.matmul %706, %707, %cst_300 {dimension_numbers = #tpu.dot_dimension_numbers<[1], [0], [0], [1], [0, 0, 1, 1], [], []>} : vector<2x128xbf16>, vector<128x128xbf16>, vector<2x128xf32> -> vector<2x128xf32>
    %c0_301 = arith.constant 0 : index
    %c0_302 = arith.constant 0 : index
    %709 = vector.load %arg16[%c0_301, %c0_302] : memref<1x128xf32, #tpu.memory_space<vmem>>, vector<1x128xf32>
    %710 = vector.broadcast %709 : vector<1x128xf32> to vector<2x128xf32>
    %711 = arith.addf %708, %710 : vector<2x128xf32>
    %cst_303 = arith.constant dense<0xFF800000> : vector<2xf32>
    %712 = vector.multi_reduction <maximumf>, %711, %cst_303 [1] : vector<2x128xf32> to vector<2xf32>
    %713 = vector.shape_cast %712 : vector<2xf32> to vector<2x1xf32>
    %714 = vector.broadcast %713 : vector<2x1xf32> to vector<2x128xf32>
    %715 = arith.subf %711, %714 : vector<2x128xf32>
    %716 = math.exp %715 : vector<2x128xf32>
    %cst_304 = arith.constant dense<0.000000e+00> : vector<2xf32>
    %717 = vector.multi_reduction <add>, %716, %cst_304 [1] : vector<2x128xf32> to vector<2xf32>
    %718 = vector.shape_cast %717 : vector<2xf32> to vector<2x1xf32>
    %cst_305 = arith.constant 1.000000e+00 : f32
    %719 = vector.broadcast %cst_305 : f32 to vector<2x1xf32>
    %720 = arith.divf %719, %718 : vector<2x1xf32>
    %721 = vector.broadcast %713 : vector<2x1xf32> to vector<2x128xf32>
    %722 = arith.cmpf oge, %711, %721 : vector<2x128xf32>
    %c128_i32_306 = arith.constant 128 : i32
    %723 = vector.broadcast %c128_i32_306 : i32 to vector<2x128xi32>
    %724 = arith.select %722, %321, %723 : vector<2x128xi1>, vector<2x128xi32>
    %cst_307 = arith.constant dense<2147483647> : vector<2xi32>
    %725 = vector.multi_reduction <minsi>, %724, %cst_307 [1] : vector<2x128xi32> to vector<2xi32>
    %726 = vector.shape_cast %725 : vector<2xi32> to vector<2x1xi32>
    %727 = vector.broadcast %726 : vector<2x1xi32> to vector<2x128xi32>
    %728 = arith.cmpi eq, %321, %727 : vector<2x128xi32>
    %729 = arith.extui %728 : vector<2x128xi1> to vector<2x128xi32>
    %730 = arith.sitofp %729 : vector<2x128xi32> to vector<2x128xf32>
    %731 = arith.truncf %730 : vector<2x128xf32> to vector<2x128xbf16>
    %c0_308 = arith.constant 0 : index
    %c0_309 = arith.constant 0 : index
    %732 = vector.load %arg20[%c0_308, %c0_309] : memref<128x128xbf16, #tpu.memory_space<vmem>>, vector<128x128xbf16>
    %cst_310 = arith.constant dense<0.000000e+00> : vector<2x128xf32>
    %733 = tpu.matmul %731, %732, %cst_310 {dimension_numbers = #tpu.dot_dimension_numbers<[1], [0], [0], [1], [0, 0, 1, 1], [], []>} : vector<2x128xbf16>, vector<128x128xbf16>, vector<2x128xf32> -> vector<2x128xf32>
    %734 = tpu.concatenate %733, %685 in 1 : vector<2x128xf32>, vector<2x128xf32> -> vector<2x256xf32>
    %735 = arith.truncf %734 : vector<2x256xf32> to vector<2x256xbf16>
    %c0_311 = arith.constant 0 : index
    %c0_312 = arith.constant 0 : index
    %736 = vector.load %arg21[%c0_311, %c0_312] : memref<256x512xbf16, #tpu.memory_space<vmem>>, vector<256x512xbf16>
    %cst_313 = arith.constant dense<0.000000e+00> : vector<2x512xf32>
    %737 = tpu.matmul %735, %736, %cst_313 {dimension_numbers = #tpu.dot_dimension_numbers<[1], [0], [0], [1], [0, 0, 1, 1], [], []>} : vector<2x256xbf16>, vector<256x512xbf16>, vector<2x512xf32> -> vector<2x512xf32>
    %c0_314 = arith.constant 0 : index
    %c0_315 = arith.constant 0 : index
    %738 = vector.load %arg12[%c0_314, %c0_315] : memref<1x512xf32, #tpu.memory_space<vmem>>, vector<1x512xf32>
    %739 = vector.broadcast %738 : vector<1x512xf32> to vector<2x512xf32>
    %740 = arith.addf %737, %739 : vector<2x512xf32>
    %741 = vector.extract_strided_slice %740 {offsets = [0, 0], sizes = [2, 128], strides = [1, 1]} : vector<2x512xf32> to vector<2x128xf32>
    %cst_316 = arith.constant 5.000000e-01 : f32
    %742 = vector.broadcast %cst_316 : f32 to vector<2x128xf32>
    %743 = arith.mulf %742, %741 : vector<2x128xf32>
    %744 = math.tanh %743 : vector<2x128xf32>
    %cst_317 = arith.constant 1.000000e+00 : f32
    %745 = vector.broadcast %cst_317 : f32 to vector<2x128xf32>
    %746 = arith.addf %744, %745 : vector<2x128xf32>
    %cst_318 = arith.constant 5.000000e-01 : f32
    %747 = vector.broadcast %cst_318 : f32 to vector<2x128xf32>
    %748 = arith.mulf %747, %746 : vector<2x128xf32>
    %749 = vector.extract_strided_slice %740 {offsets = [0, 128], sizes = [2, 128], strides = [1, 1]} : vector<2x512xf32> to vector<2x128xf32>
    %cst_319 = arith.constant 5.000000e-01 : f32
    %750 = vector.broadcast %cst_319 : f32 to vector<2x128xf32>
    %751 = arith.mulf %750, %749 : vector<2x128xf32>
    %752 = math.tanh %751 : vector<2x128xf32>
    %cst_320 = arith.constant 1.000000e+00 : f32
    %753 = vector.broadcast %cst_320 : f32 to vector<2x128xf32>
    %754 = arith.addf %752, %753 : vector<2x128xf32>
    %cst_321 = arith.constant 5.000000e-01 : f32
    %755 = vector.broadcast %cst_321 : f32 to vector<2x128xf32>
    %756 = arith.mulf %755, %754 : vector<2x128xf32>
    %757 = vector.extract_strided_slice %740 {offsets = [0, 256], sizes = [2, 128], strides = [1, 1]} : vector<2x512xf32> to vector<2x128xf32>
    %758 = vector.extract_strided_slice %740 {offsets = [0, 384], sizes = [2, 128], strides = [1, 1]} : vector<2x512xf32> to vector<2x128xf32>
    %759 = arith.mulf %748, %758 : vector<2x128xf32>
    %760 = arith.addf %757, %759 : vector<2x128xf32>
    %761 = math.tanh %760 : vector<2x128xf32>
    %cst_322 = arith.constant 1.000000e+00 : f32
    %762 = vector.broadcast %cst_322 : f32 to vector<2x128xf32>
    %763 = arith.subf %762, %756 : vector<2x128xf32>
    %764 = arith.mulf %763, %761 : vector<2x128xf32>
    %765 = arith.mulf %756, %685 : vector<2x128xf32>
    %766 = arith.addf %764, %765 : vector<2x128xf32>
    %cst_323 = arith.constant dense<0.000000e+00> : vector<2x8xf32>
    %767 = tpu.matmul %766, %297, %cst_323 {dimension_numbers = #tpu.dot_dimension_numbers<[1], [1], [0], [0], [0, 0, 1, 0], [], []>} : vector<2x128xf32>, vector<8x128xf32>, vector<2x8xf32> -> vector<2x8xf32>
    %cst_324 = arith.constant dense<0xFF800000> : vector<2xf32>
    %768 = vector.multi_reduction <maximumf>, %767, %cst_324 [1] : vector<2x8xf32> to vector<2xf32>
    %769 = vector.shape_cast %768 : vector<2xf32> to vector<2x1xf32>
    %770 = vector.broadcast %769 : vector<2x1xf32> to vector<2x8xf32>
    %771 = arith.subf %767, %770 : vector<2x8xf32>
    %772 = math.exp %771 : vector<2x8xf32>
    %cst_325 = arith.constant dense<0.000000e+00> : vector<2xf32>
    %773 = vector.multi_reduction <add>, %772, %cst_325 [1] : vector<2x8xf32> to vector<2xf32>
    %774 = vector.shape_cast %773 : vector<2xf32> to vector<2x1xf32>
    %775 = tpu.reciprocal %774 {approx = true} : vector<2x1xf32> -> vector<2x1xf32>
    %776 = vector.broadcast %775 : vector<2x1xf32> to vector<2x8xf32>
    %777 = arith.mulf %772, %776 : vector<2x8xf32>
    %cst_326 = arith.constant dense<0.000000e+00> : vector<2x128xf32>
    %778 = tpu.matmul %777, %297, %cst_326 {dimension_numbers = #tpu.dot_dimension_numbers<[1], [0], [0], [1], [0, 0, 1, 1], [], []>} : vector<2x8xf32>, vector<8x128xf32>, vector<2x128xf32> -> vector<2x128xf32>
    %779 = tpu.concatenate %766, %778 in 1 : vector<2x128xf32>, vector<2x128xf32> -> vector<2x256xf32>
    %780 = arith.truncf %779 : vector<2x256xf32> to vector<2x256xbf16>
    %c0_327 = arith.constant 0 : index
    %c0_328 = arith.constant 0 : index
    %781 = vector.load %arg22[%c0_327, %c0_328] : memref<256x128xbf16, #tpu.memory_space<vmem>>, vector<256x128xbf16>
    %cst_329 = arith.constant dense<0.000000e+00> : vector<2x128xf32>
    %782 = tpu.matmul %780, %781, %cst_329 {dimension_numbers = #tpu.dot_dimension_numbers<[1], [0], [0], [1], [0, 0, 1, 1], [], []>} : vector<2x256xbf16>, vector<256x128xbf16>, vector<2x128xf32> -> vector<2x128xf32>
    %c0_330 = arith.constant 0 : index
    %c0_331 = arith.constant 0 : index
    %783 = vector.load %arg14[%c0_330, %c0_331] : memref<1x128xf32, #tpu.memory_space<vmem>>, vector<1x128xf32>
    %784 = vector.broadcast %783 : vector<1x128xf32> to vector<2x128xf32>
    %785 = arith.addf %782, %784 : vector<2x128xf32>
    %786 = math.tanh %785 : vector<2x128xf32>
    %787 = arith.truncf %786 : vector<2x128xf32> to vector<2x128xbf16>
    %c0_332 = arith.constant 0 : index
    %c0_333 = arith.constant 0 : index
    %788 = vector.load %arg23[%c0_332, %c0_333] : memref<128x128xbf16, #tpu.memory_space<vmem>>, vector<128x128xbf16>
    %cst_334 = arith.constant dense<0.000000e+00> : vector<2x128xf32>
    %789 = tpu.matmul %787, %788, %cst_334 {dimension_numbers = #tpu.dot_dimension_numbers<[1], [0], [0], [1], [0, 0, 1, 1], [], []>} : vector<2x128xbf16>, vector<128x128xbf16>, vector<2x128xf32> -> vector<2x128xf32>
    %c0_335 = arith.constant 0 : index
    %c0_336 = arith.constant 0 : index
    %790 = vector.load %arg16[%c0_335, %c0_336] : memref<1x128xf32, #tpu.memory_space<vmem>>, vector<1x128xf32>
    %791 = vector.broadcast %790 : vector<1x128xf32> to vector<2x128xf32>
    %792 = arith.addf %789, %791 : vector<2x128xf32>
    %cst_337 = arith.constant dense<0xFF800000> : vector<2xf32>
    %793 = vector.multi_reduction <maximumf>, %792, %cst_337 [1] : vector<2x128xf32> to vector<2xf32>
    %794 = vector.shape_cast %793 : vector<2xf32> to vector<2x1xf32>
    %795 = vector.broadcast %794 : vector<2x1xf32> to vector<2x128xf32>
    %796 = arith.subf %792, %795 : vector<2x128xf32>
    %797 = math.exp %796 : vector<2x128xf32>
    %cst_338 = arith.constant dense<0.000000e+00> : vector<2xf32>
    %798 = vector.multi_reduction <add>, %797, %cst_338 [1] : vector<2x128xf32> to vector<2xf32>
    %799 = vector.shape_cast %798 : vector<2xf32> to vector<2x1xf32>
    %cst_339 = arith.constant 1.000000e+00 : f32
    %800 = vector.broadcast %cst_339 : f32 to vector<2x1xf32>
    %801 = arith.divf %800, %799 : vector<2x1xf32>
    %802 = vector.broadcast %794 : vector<2x1xf32> to vector<2x128xf32>
    %803 = arith.cmpf oge, %792, %802 : vector<2x128xf32>
    %c128_i32_340 = arith.constant 128 : i32
    %804 = vector.broadcast %c128_i32_340 : i32 to vector<2x128xi32>
    %805 = arith.select %803, %321, %804 : vector<2x128xi1>, vector<2x128xi32>
    %cst_341 = arith.constant dense<2147483647> : vector<2xi32>
    %806 = vector.multi_reduction <minsi>, %805, %cst_341 [1] : vector<2x128xi32> to vector<2xi32>
    %807 = vector.shape_cast %806 : vector<2xi32> to vector<2x1xi32>
    %808 = vector.broadcast %807 : vector<2x1xi32> to vector<2x128xi32>
    %809 = arith.cmpi eq, %321, %808 : vector<2x128xi32>
    %810 = arith.extui %809 : vector<2x128xi1> to vector<2x128xi32>
    %811 = arith.sitofp %810 : vector<2x128xi32> to vector<2x128xf32>
    %812 = arith.truncf %811 : vector<2x128xf32> to vector<2x128xbf16>
    %c0_342 = arith.constant 0 : index
    %c0_343 = arith.constant 0 : index
    %813 = vector.load %arg20[%c0_342, %c0_343] : memref<128x128xbf16, #tpu.memory_space<vmem>>, vector<128x128xbf16>
    %cst_344 = arith.constant dense<0.000000e+00> : vector<2x128xf32>
    %814 = tpu.matmul %812, %813, %cst_344 {dimension_numbers = #tpu.dot_dimension_numbers<[1], [0], [0], [1], [0, 0, 1, 1], [], []>} : vector<2x128xbf16>, vector<128x128xbf16>, vector<2x128xf32> -> vector<2x128xf32>
    %815 = tpu.concatenate %814, %766 in 1 : vector<2x128xf32>, vector<2x128xf32> -> vector<2x256xf32>
    %816 = arith.truncf %815 : vector<2x256xf32> to vector<2x256xbf16>
    %c0_345 = arith.constant 0 : index
    %c0_346 = arith.constant 0 : index
    %817 = vector.load %arg21[%c0_345, %c0_346] : memref<256x512xbf16, #tpu.memory_space<vmem>>, vector<256x512xbf16>
    %cst_347 = arith.constant dense<0.000000e+00> : vector<2x512xf32>
    %818 = tpu.matmul %816, %817, %cst_347 {dimension_numbers = #tpu.dot_dimension_numbers<[1], [0], [0], [1], [0, 0, 1, 1], [], []>} : vector<2x256xbf16>, vector<256x512xbf16>, vector<2x512xf32> -> vector<2x512xf32>
    %c0_348 = arith.constant 0 : index
    %c0_349 = arith.constant 0 : index
    %819 = vector.load %arg12[%c0_348, %c0_349] : memref<1x512xf32, #tpu.memory_space<vmem>>, vector<1x512xf32>
    %820 = vector.broadcast %819 : vector<1x512xf32> to vector<2x512xf32>
    %821 = arith.addf %818, %820 : vector<2x512xf32>
    %822 = vector.extract_strided_slice %821 {offsets = [0, 0], sizes = [2, 128], strides = [1, 1]} : vector<2x512xf32> to vector<2x128xf32>
    %cst_350 = arith.constant 5.000000e-01 : f32
    %823 = vector.broadcast %cst_350 : f32 to vector<2x128xf32>
    %824 = arith.mulf %823, %822 : vector<2x128xf32>
    %825 = math.tanh %824 : vector<2x128xf32>
    %cst_351 = arith.constant 1.000000e+00 : f32
    %826 = vector.broadcast %cst_351 : f32 to vector<2x128xf32>
    %827 = arith.addf %825, %826 : vector<2x128xf32>
    %cst_352 = arith.constant 5.000000e-01 : f32
    %828 = vector.broadcast %cst_352 : f32 to vector<2x128xf32>
    %829 = arith.mulf %828, %827 : vector<2x128xf32>
    %830 = vector.extract_strided_slice %821 {offsets = [0, 128], sizes = [2, 128], strides = [1, 1]} : vector<2x512xf32> to vector<2x128xf32>
    %cst_353 = arith.constant 5.000000e-01 : f32
    %831 = vector.broadcast %cst_353 : f32 to vector<2x128xf32>
    %832 = arith.mulf %831, %830 : vector<2x128xf32>
    %833 = math.tanh %832 : vector<2x128xf32>
    %cst_354 = arith.constant 1.000000e+00 : f32
    %834 = vector.broadcast %cst_354 : f32 to vector<2x128xf32>
    %835 = arith.addf %833, %834 : vector<2x128xf32>
    %cst_355 = arith.constant 5.000000e-01 : f32
    %836 = vector.broadcast %cst_355 : f32 to vector<2x128xf32>
    %837 = arith.mulf %836, %835 : vector<2x128xf32>
    %838 = vector.extract_strided_slice %821 {offsets = [0, 256], sizes = [2, 128], strides = [1, 1]} : vector<2x512xf32> to vector<2x128xf32>
    %839 = vector.extract_strided_slice %821 {offsets = [0, 384], sizes = [2, 128], strides = [1, 1]} : vector<2x512xf32> to vector<2x128xf32>
    %840 = arith.mulf %829, %839 : vector<2x128xf32>
    %841 = arith.addf %838, %840 : vector<2x128xf32>
    %842 = math.tanh %841 : vector<2x128xf32>
    %cst_356 = arith.constant 1.000000e+00 : f32
    %843 = vector.broadcast %cst_356 : f32 to vector<2x128xf32>
    %844 = arith.subf %843, %837 : vector<2x128xf32>
    %845 = arith.mulf %844, %842 : vector<2x128xf32>
    %846 = arith.mulf %837, %766 : vector<2x128xf32>
    %847 = arith.addf %845, %846 : vector<2x128xf32>
    %cst_357 = arith.constant dense<0.000000e+00> : vector<2x8xf32>
    %848 = tpu.matmul %847, %297, %cst_357 {dimension_numbers = #tpu.dot_dimension_numbers<[1], [1], [0], [0], [0, 0, 1, 0], [], []>} : vector<2x128xf32>, vector<8x128xf32>, vector<2x8xf32> -> vector<2x8xf32>
    %cst_358 = arith.constant dense<0xFF800000> : vector<2xf32>
    %849 = vector.multi_reduction <maximumf>, %848, %cst_358 [1] : vector<2x8xf32> to vector<2xf32>
    %850 = vector.shape_cast %849 : vector<2xf32> to vector<2x1xf32>
    %851 = vector.broadcast %850 : vector<2x1xf32> to vector<2x8xf32>
    %852 = arith.subf %848, %851 : vector<2x8xf32>
    %853 = math.exp %852 : vector<2x8xf32>
    %cst_359 = arith.constant dense<0.000000e+00> : vector<2xf32>
    %854 = vector.multi_reduction <add>, %853, %cst_359 [1] : vector<2x8xf32> to vector<2xf32>
    %855 = vector.shape_cast %854 : vector<2xf32> to vector<2x1xf32>
    %856 = tpu.reciprocal %855 {approx = true} : vector<2x1xf32> -> vector<2x1xf32>
    %857 = vector.broadcast %856 : vector<2x1xf32> to vector<2x8xf32>
    %858 = arith.mulf %853, %857 : vector<2x8xf32>
    %cst_360 = arith.constant dense<0.000000e+00> : vector<2x128xf32>
    %859 = tpu.matmul %858, %297, %cst_360 {dimension_numbers = #tpu.dot_dimension_numbers<[1], [0], [0], [1], [0, 0, 1, 1], [], []>} : vector<2x8xf32>, vector<8x128xf32>, vector<2x128xf32> -> vector<2x128xf32>
    %860 = tpu.concatenate %847, %859 in 1 : vector<2x128xf32>, vector<2x128xf32> -> vector<2x256xf32>
    %861 = arith.truncf %860 : vector<2x256xf32> to vector<2x256xbf16>
    %c0_361 = arith.constant 0 : index
    %c0_362 = arith.constant 0 : index
    %862 = vector.load %arg22[%c0_361, %c0_362] : memref<256x128xbf16, #tpu.memory_space<vmem>>, vector<256x128xbf16>
    %cst_363 = arith.constant dense<0.000000e+00> : vector<2x128xf32>
    %863 = tpu.matmul %861, %862, %cst_363 {dimension_numbers = #tpu.dot_dimension_numbers<[1], [0], [0], [1], [0, 0, 1, 1], [], []>} : vector<2x256xbf16>, vector<256x128xbf16>, vector<2x128xf32> -> vector<2x128xf32>
    %c0_364 = arith.constant 0 : index
    %c0_365 = arith.constant 0 : index
    %864 = vector.load %arg14[%c0_364, %c0_365] : memref<1x128xf32, #tpu.memory_space<vmem>>, vector<1x128xf32>
    %865 = vector.broadcast %864 : vector<1x128xf32> to vector<2x128xf32>
    %866 = arith.addf %863, %865 : vector<2x128xf32>
    %867 = math.tanh %866 : vector<2x128xf32>
    %868 = arith.truncf %867 : vector<2x128xf32> to vector<2x128xbf16>
    %c0_366 = arith.constant 0 : index
    %c0_367 = arith.constant 0 : index
    %869 = vector.load %arg23[%c0_366, %c0_367] : memref<128x128xbf16, #tpu.memory_space<vmem>>, vector<128x128xbf16>
    %cst_368 = arith.constant dense<0.000000e+00> : vector<2x128xf32>
    %870 = tpu.matmul %868, %869, %cst_368 {dimension_numbers = #tpu.dot_dimension_numbers<[1], [0], [0], [1], [0, 0, 1, 1], [], []>} : vector<2x128xbf16>, vector<128x128xbf16>, vector<2x128xf32> -> vector<2x128xf32>
    %c0_369 = arith.constant 0 : index
    %c0_370 = arith.constant 0 : index
    %871 = vector.load %arg16[%c0_369, %c0_370] : memref<1x128xf32, #tpu.memory_space<vmem>>, vector<1x128xf32>
    %872 = vector.broadcast %871 : vector<1x128xf32> to vector<2x128xf32>
    %873 = arith.addf %870, %872 : vector<2x128xf32>
    %cst_371 = arith.constant dense<0xFF800000> : vector<2xf32>
    %874 = vector.multi_reduction <maximumf>, %873, %cst_371 [1] : vector<2x128xf32> to vector<2xf32>
    %875 = vector.shape_cast %874 : vector<2xf32> to vector<2x1xf32>
    %876 = vector.broadcast %875 : vector<2x1xf32> to vector<2x128xf32>
    %877 = arith.subf %873, %876 : vector<2x128xf32>
    %878 = math.exp %877 : vector<2x128xf32>
    %cst_372 = arith.constant dense<0.000000e+00> : vector<2xf32>
    %879 = vector.multi_reduction <add>, %878, %cst_372 [1] : vector<2x128xf32> to vector<2xf32>
    %880 = vector.shape_cast %879 : vector<2xf32> to vector<2x1xf32>
    %cst_373 = arith.constant 1.000000e+00 : f32
    %881 = vector.broadcast %cst_373 : f32 to vector<2x1xf32>
    %882 = arith.divf %881, %880 : vector<2x1xf32>
    %883 = vector.broadcast %875 : vector<2x1xf32> to vector<2x128xf32>
    %884 = arith.cmpf oge, %873, %883 : vector<2x128xf32>
    %c128_i32_374 = arith.constant 128 : i32
    %885 = vector.broadcast %c128_i32_374 : i32 to vector<2x128xi32>
    %886 = arith.select %884, %321, %885 : vector<2x128xi1>, vector<2x128xi32>
    %cst_375 = arith.constant dense<2147483647> : vector<2xi32>
    %887 = vector.multi_reduction <minsi>, %886, %cst_375 [1] : vector<2x128xi32> to vector<2xi32>
    %888 = vector.shape_cast %887 : vector<2xi32> to vector<2x1xi32>
    %889 = vector.broadcast %888 : vector<2x1xi32> to vector<2x128xi32>
    %890 = arith.cmpi eq, %321, %889 : vector<2x128xi32>
    %891 = arith.extui %890 : vector<2x128xi1> to vector<2x128xi32>
    %892 = arith.sitofp %891 : vector<2x128xi32> to vector<2x128xf32>
    %893 = arith.truncf %892 : vector<2x128xf32> to vector<2x128xbf16>
    %c0_376 = arith.constant 0 : index
    %c0_377 = arith.constant 0 : index
    %894 = vector.load %arg20[%c0_376, %c0_377] : memref<128x128xbf16, #tpu.memory_space<vmem>>, vector<128x128xbf16>
    %cst_378 = arith.constant dense<0.000000e+00> : vector<2x128xf32>
    %895 = tpu.matmul %893, %894, %cst_378 {dimension_numbers = #tpu.dot_dimension_numbers<[1], [0], [0], [1], [0, 0, 1, 1], [], []>} : vector<2x128xbf16>, vector<128x128xbf16>, vector<2x128xf32> -> vector<2x128xf32>
    %896 = tpu.concatenate %895, %847 in 1 : vector<2x128xf32>, vector<2x128xf32> -> vector<2x256xf32>
    %897 = arith.truncf %896 : vector<2x256xf32> to vector<2x256xbf16>
    %c0_379 = arith.constant 0 : index
    %c0_380 = arith.constant 0 : index
    %898 = vector.load %arg21[%c0_379, %c0_380] : memref<256x512xbf16, #tpu.memory_space<vmem>>, vector<256x512xbf16>
    %cst_381 = arith.constant dense<0.000000e+00> : vector<2x512xf32>
    %899 = tpu.matmul %897, %898, %cst_381 {dimension_numbers = #tpu.dot_dimension_numbers<[1], [0], [0], [1], [0, 0, 1, 1], [], []>} : vector<2x256xbf16>, vector<256x512xbf16>, vector<2x512xf32> -> vector<2x512xf32>
    %c0_382 = arith.constant 0 : index
    %c0_383 = arith.constant 0 : index
    %900 = vector.load %arg12[%c0_382, %c0_383] : memref<1x512xf32, #tpu.memory_space<vmem>>, vector<1x512xf32>
    %901 = vector.broadcast %900 : vector<1x512xf32> to vector<2x512xf32>
    %902 = arith.addf %899, %901 : vector<2x512xf32>
    %903 = vector.extract_strided_slice %902 {offsets = [0, 0], sizes = [2, 128], strides = [1, 1]} : vector<2x512xf32> to vector<2x128xf32>
    %cst_384 = arith.constant 5.000000e-01 : f32
    %904 = vector.broadcast %cst_384 : f32 to vector<2x128xf32>
    %905 = arith.mulf %904, %903 : vector<2x128xf32>
    %906 = math.tanh %905 : vector<2x128xf32>
    %cst_385 = arith.constant 1.000000e+00 : f32
    %907 = vector.broadcast %cst_385 : f32 to vector<2x128xf32>
    %908 = arith.addf %906, %907 : vector<2x128xf32>
    %cst_386 = arith.constant 5.000000e-01 : f32
    %909 = vector.broadcast %cst_386 : f32 to vector<2x128xf32>
    %910 = arith.mulf %909, %908 : vector<2x128xf32>
    %911 = vector.extract_strided_slice %902 {offsets = [0, 128], sizes = [2, 128], strides = [1, 1]} : vector<2x512xf32> to vector<2x128xf32>
    %cst_387 = arith.constant 5.000000e-01 : f32
    %912 = vector.broadcast %cst_387 : f32 to vector<2x128xf32>
    %913 = arith.mulf %912, %911 : vector<2x128xf32>
    %914 = math.tanh %913 : vector<2x128xf32>
    %cst_388 = arith.constant 1.000000e+00 : f32
    %915 = vector.broadcast %cst_388 : f32 to vector<2x128xf32>
    %916 = arith.addf %914, %915 : vector<2x128xf32>
    %cst_389 = arith.constant 5.000000e-01 : f32
    %917 = vector.broadcast %cst_389 : f32 to vector<2x128xf32>
    %918 = arith.mulf %917, %916 : vector<2x128xf32>
    %919 = vector.extract_strided_slice %902 {offsets = [0, 256], sizes = [2, 128], strides = [1, 1]} : vector<2x512xf32> to vector<2x128xf32>
    %920 = vector.extract_strided_slice %902 {offsets = [0, 384], sizes = [2, 128], strides = [1, 1]} : vector<2x512xf32> to vector<2x128xf32>
    %921 = arith.mulf %910, %920 : vector<2x128xf32>
    %922 = arith.addf %919, %921 : vector<2x128xf32>
    %923 = math.tanh %922 : vector<2x128xf32>
    %cst_390 = arith.constant 1.000000e+00 : f32
    %924 = vector.broadcast %cst_390 : f32 to vector<2x128xf32>
    %925 = arith.subf %924, %918 : vector<2x128xf32>
    %926 = arith.mulf %925, %923 : vector<2x128xf32>
    %927 = arith.mulf %918, %847 : vector<2x128xf32>
    %928 = arith.addf %926, %927 : vector<2x128xf32>
    %cst_391 = arith.constant dense<0.000000e+00> : vector<2x8xf32>
    %929 = tpu.matmul %928, %297, %cst_391 {dimension_numbers = #tpu.dot_dimension_numbers<[1], [1], [0], [0], [0, 0, 1, 0], [], []>} : vector<2x128xf32>, vector<8x128xf32>, vector<2x8xf32> -> vector<2x8xf32>
    %cst_392 = arith.constant dense<0xFF800000> : vector<2xf32>
    %930 = vector.multi_reduction <maximumf>, %929, %cst_392 [1] : vector<2x8xf32> to vector<2xf32>
    %931 = vector.shape_cast %930 : vector<2xf32> to vector<2x1xf32>
    %932 = vector.broadcast %931 : vector<2x1xf32> to vector<2x8xf32>
    %933 = arith.subf %929, %932 : vector<2x8xf32>
    %934 = math.exp %933 : vector<2x8xf32>
    %cst_393 = arith.constant dense<0.000000e+00> : vector<2xf32>
    %935 = vector.multi_reduction <add>, %934, %cst_393 [1] : vector<2x8xf32> to vector<2xf32>
    %936 = vector.shape_cast %935 : vector<2xf32> to vector<2x1xf32>
    %937 = tpu.reciprocal %936 {approx = true} : vector<2x1xf32> -> vector<2x1xf32>
    %938 = vector.broadcast %937 : vector<2x1xf32> to vector<2x8xf32>
    %939 = arith.mulf %934, %938 : vector<2x8xf32>
    %cst_394 = arith.constant dense<0.000000e+00> : vector<2x128xf32>
    %940 = tpu.matmul %939, %297, %cst_394 {dimension_numbers = #tpu.dot_dimension_numbers<[1], [0], [0], [1], [0, 0, 1, 1], [], []>} : vector<2x8xf32>, vector<8x128xf32>, vector<2x128xf32> -> vector<2x128xf32>
    %941 = tpu.concatenate %928, %940 in 1 : vector<2x128xf32>, vector<2x128xf32> -> vector<2x256xf32>
    %942 = arith.truncf %941 : vector<2x256xf32> to vector<2x256xbf16>
    %c0_395 = arith.constant 0 : index
    %c0_396 = arith.constant 0 : index
    %943 = vector.load %arg22[%c0_395, %c0_396] : memref<256x128xbf16, #tpu.memory_space<vmem>>, vector<256x128xbf16>
    %cst_397 = arith.constant dense<0.000000e+00> : vector<2x128xf32>
    %944 = tpu.matmul %942, %943, %cst_397 {dimension_numbers = #tpu.dot_dimension_numbers<[1], [0], [0], [1], [0, 0, 1, 1], [], []>} : vector<2x256xbf16>, vector<256x128xbf16>, vector<2x128xf32> -> vector<2x128xf32>
    %c0_398 = arith.constant 0 : index
    %c0_399 = arith.constant 0 : index
    %945 = vector.load %arg14[%c0_398, %c0_399] : memref<1x128xf32, #tpu.memory_space<vmem>>, vector<1x128xf32>
    %946 = vector.broadcast %945 : vector<1x128xf32> to vector<2x128xf32>
    %947 = arith.addf %944, %946 : vector<2x128xf32>
    %948 = math.tanh %947 : vector<2x128xf32>
    %949 = arith.truncf %948 : vector<2x128xf32> to vector<2x128xbf16>
    %c0_400 = arith.constant 0 : index
    %c0_401 = arith.constant 0 : index
    %950 = vector.load %arg23[%c0_400, %c0_401] : memref<128x128xbf16, #tpu.memory_space<vmem>>, vector<128x128xbf16>
    %cst_402 = arith.constant dense<0.000000e+00> : vector<2x128xf32>
    %951 = tpu.matmul %949, %950, %cst_402 {dimension_numbers = #tpu.dot_dimension_numbers<[1], [0], [0], [1], [0, 0, 1, 1], [], []>} : vector<2x128xbf16>, vector<128x128xbf16>, vector<2x128xf32> -> vector<2x128xf32>
    %c0_403 = arith.constant 0 : index
    %c0_404 = arith.constant 0 : index
    %952 = vector.load %arg16[%c0_403, %c0_404] : memref<1x128xf32, #tpu.memory_space<vmem>>, vector<1x128xf32>
    %953 = vector.broadcast %952 : vector<1x128xf32> to vector<2x128xf32>
    %954 = arith.addf %951, %953 : vector<2x128xf32>
    %cst_405 = arith.constant dense<0xFF800000> : vector<2xf32>
    %955 = vector.multi_reduction <maximumf>, %954, %cst_405 [1] : vector<2x128xf32> to vector<2xf32>
    %956 = vector.shape_cast %955 : vector<2xf32> to vector<2x1xf32>
    %957 = vector.broadcast %956 : vector<2x1xf32> to vector<2x128xf32>
    %958 = arith.subf %954, %957 : vector<2x128xf32>
    %959 = math.exp %958 : vector<2x128xf32>
    %cst_406 = arith.constant dense<0.000000e+00> : vector<2xf32>
    %960 = vector.multi_reduction <add>, %959, %cst_406 [1] : vector<2x128xf32> to vector<2xf32>
    %961 = vector.shape_cast %960 : vector<2xf32> to vector<2x1xf32>
    %cst_407 = arith.constant 1.000000e+00 : f32
    %962 = vector.broadcast %cst_407 : f32 to vector<2x1xf32>
    %963 = arith.divf %962, %961 : vector<2x1xf32>
    %964 = vector.broadcast %956 : vector<2x1xf32> to vector<2x128xf32>
    %965 = arith.cmpf oge, %954, %964 : vector<2x128xf32>
    %c128_i32_408 = arith.constant 128 : i32
    %966 = vector.broadcast %c128_i32_408 : i32 to vector<2x128xi32>
    %967 = arith.select %965, %321, %966 : vector<2x128xi1>, vector<2x128xi32>
    %cst_409 = arith.constant dense<2147483647> : vector<2xi32>
    %968 = vector.multi_reduction <minsi>, %967, %cst_409 [1] : vector<2x128xi32> to vector<2xi32>
    %969 = vector.shape_cast %968 : vector<2xi32> to vector<2x1xi32>
    %970 = tpu.concatenate %402, %483, %564, %645, %726, %807, %888, %969 in 1 : vector<2x1xi32>, vector<2x1xi32>, vector<2x1xi32>, vector<2x1xi32>, vector<2x1xi32>, vector<2x1xi32>, vector<2x1xi32>, vector<2x1xi32> -> vector<2x8xi32>
    %c0_410 = arith.constant 0 : index
    %c0_411 = arith.constant 0 : index
    %971 = vector.load %arg17[%c0_410, %c0_411] : memref<2x8xi32, #tpu.memory_space<vmem>>, vector<2x8xi32>
    tpu.vector_store %arg17[%c0_410, %c0_411], %970 {strides = array<i32>} : memref<2x8xi32, #tpu.memory_space<vmem>>, vector<2x8xi32>,
    %972 = tpu.concatenate %396, %477, %558, %639, %720, %801, %882, %963 in 1 : vector<2x1xf32>, vector<2x1xf32>, vector<2x1xf32>, vector<2x1xf32>, vector<2x1xf32>, vector<2x1xf32>, vector<2x1xf32>, vector<2x1xf32> -> vector<2x8xf32>
    %c0_412 = arith.constant 0 : index
    %c0_413 = arith.constant 0 : index
    %973 = vector.load %arg18[%c0_412, %c0_413] : memref<2x8xf32, #tpu.memory_space<vmem>>, vector<2x8xf32>
    tpu.vector_store %arg18[%c0_412, %c0_413], %972 {strides = array<i32>} : memref<2x8xf32, #tpu.memory_space<vmem>>, vector<2x8xf32>,
    return
  }
}

</mosaic_0001>

<llo_original>
// kernel: tpu_custom_call.1
$region0: #{tpu_custom_call.1}
  #allocation0 [shape = 'u32[]', space=smem, size = 0x4, offset = 0x4, fixed_abs, tag = 'smem constant byte address 0x4 - core index']
  #allocation1 [shape = 'u32[72,128]{1,0:T(1,128)}', space=vmem, size = 0x9000, scoped, tag = 'internal scratch']
  #allocation2 [shape = 'f32[8,128]{1,0:T(8,128)}', space=vmem, size = 0x1000, scoped, tag = 'scratch operand']
  #allocation3 [shape = 'bf16[128,128]{1,0:T(8,128)(2,1)}', space=vmem, size = 0x8000, scoped, tag = 'scratch operand']
  #allocation4 [shape = 'bf16[256,512]{1,0:T(8,128)(2,1)}', space=vmem, size = 0x40000, scoped, tag = 'scratch operand']
  #allocation5 [shape = 'bf16[256,128]{1,0:T(8,128)(2,1)}', space=vmem, size = 0x10000, scoped, tag = 'scratch operand']
  #allocation6 [shape = 'bf16[128,128]{1,0:T(8,128)(2,1)}', space=vmem, size = 0x8000, scoped, tag = 'scratch operand']
  #allocation7 [shape = 's32[4]{0}', space=sflag, size = 0x10, scoped, tag = 'scratch operand']
  #allocation8 [shape = 's32[1]{0:T(128)S(6)}', space=smem, size = 0x200, scoped, tag = 'scoped memory for tpu_custom_call.1']
  #allocation25 [shape = 's32[]', space=sflag, size = 0x4, offset = 0, fixed_abs, tag = 'sflag constant byte address 0x0 - dummy sync flag']
  #allocation26 [shape = 's32[]', space=sflag, size = 0x4, offset = 0, fixed_abs, tag = 'sflag constant byte address 0x0 - dummy sync flag']
  #allocation27 [shape = 'u32[]', space=smem, size = 0x4, offset = 0x44, fixed_abs, tag = 'smem constant byte address 0x44 - assertion arg 0']
  #allocation28 [shape = 'u32[]', space=smem, size = 0x4, offset = 0x48, fixed_abs, tag = 'smem constant byte address 0x48 - assertion arg 1']
  #allocation29 [shape = 's32[]', space=sflag, size = 0x4, offset = 0, fixed_abs, tag = 'sflag constant byte address 0x0 - dummy sync flag']
  #allocation30 [shape = 's32[]', space=sflag, size = 0x4, offset = 0, fixed_abs, tag = 'sflag constant byte address 0x0 - dummy sync flag']
  #allocation31 [shape = 's32[]', space=sflag, size = 0x4, offset = 0, fixed_abs, tag = 'sflag constant byte address 0x0 - dummy sync flag']
  #allocation32 [shape = 's32[]', space=sflag, size = 0x4, offset = 0, fixed_abs, tag = 'sflag constant byte address 0x0 - dummy sync flag']
  #allocation33 [shape = 's32[]', space=sflag, size = 0x4, offset = 0, fixed_abs, tag = 'sflag constant byte address 0x0 - dummy sync flag']
  #allocation34 [shape = 's32[]', space=sflag, size = 0x4, offset = 0, fixed_abs, tag = 'sflag constant byte address 0x0 - dummy sync flag']
  %s0 = inlined_call_operand.hbm [shape: s32[8], index: 0, kind: input, shape index: {}]
  %s1 = inlined_call_operand.<no memory space> [shape: s32[1], index: 1, kind: input, shape index: {}]
  %s2 = inlined_call_operand.hbm [shape: f32[64,128], index: 2, kind: input, shape index: {}]
  %s3 = inlined_call_operand.hbm [shape: bf16[256,512], index: 3, kind: input, shape index: {}]
  %s4 = inlined_call_operand.vmem [shape: f32[1,512], index: 4, kind: input, shape index: {}]
  %s5 = inlined_call_operand.hbm [shape: f32[8,128], index: 5, kind: input, shape index: {}]
  %s6 = inlined_call_operand.hbm [shape: f32[128,128], index: 6, kind: input, shape index: {}]
  %s7 = inlined_call_operand.hbm [shape: f32[1,128], index: 7, kind: input, shape index: {}]
  %s8 = inlined_call_operand.hbm [shape: f32[128,128], index: 8, kind: input, shape index: {}]
  %s9 = inlined_call_operand.vmem [shape: f32[1,128], index: 9, kind: input, shape index: {}]
  %s10 = inlined_call_operand.hbm [shape: bf16[128,128], index: 10, kind: input, shape index: {}]
  %s11 = inlined_call_operand.hbm [shape: bf16[256,512], index: 11, kind: input, shape index: {}]
  %s12 = inlined_call_operand.vmem [shape: f32[1,512], index: 12, kind: input, shape index: {}]
  %s13 = inlined_call_operand.hbm [shape: bf16[256,128], index: 13, kind: input, shape index: {}]
  %s14 = inlined_call_operand.vmem [shape: f32[1,128], index: 14, kind: input, shape index: {}]
  %s15 = inlined_call_operand.hbm [shape: bf16[128,128], index: 15, kind: input, shape index: {}]
  %s16 = inlined_call_operand.vmem [shape: f32[1,128], index: 16, kind: input, shape index: {}]
  %s17 = inlined_call_operand.hbm [shape: s32[2,8], index: 17, kind: output, shape index: {0}]
  %s18 = inlined_call_operand.hbm [shape: f32[2,8], index: 18, kind: output, shape index: {1}]
  %19 = xla_tuple %s17, %s18
  %s20 = sld [smem:[#allocation0]]
  $region114: #{tpu_custom_call.1} parent=0
    _
  %s22 = ssub.s32 1, %s20
  %s23 = scalar_select 0, %s22, %s20
  %24 = sst [smem:[#allocation8]] %s1
  $region1: #{tpu_custom_call.1} parent=0
    #allocation9 [shape = 'u8[512]{0}', space=smem, size = 0x200, scoped, tag = 'input window, operand 0, single buffered']
    #allocation10 [shape = 's32[1]{0}', space=sflag, size = 0x4, scoped, tag = 'scoped memory for tpu_custom_call.1']
    #allocation11 [shape = 's32[1]{0}', space=sflag, size = 0x4, scoped, tag = 'scoped memory for tpu_custom_call.1']
    #allocation12 [shape = 's32[1]{0}', space=sflag, size = 0x4, scoped, tag = 'scoped memory for tpu_custom_call.1']
    #allocation13 [shape = 'u8[32768]{0}', space=vmem, size = 0x8000, scoped, tag = 'input window, operand 2, single buffered']
    #allocation14 [shape = 'u8[262144]{0}', space=vmem, size = 0x40000, scoped, tag = 'input window, operand 3, single buffered']
    #allocation15 [shape = 's32[1]{0}', space=sflag, size = 0x4, scoped, tag = 'scoped memory for tpu_custom_call.1']
    #allocation16 [shape = 'u8[4096]{0}', space=vmem, size = 0x1000, scoped, tag = 'input window, operand 5, single buffered']
    #allocation17 [shape = 'u8[65536]{0}', space=vmem, size = 0x10000, scoped, tag = 'input window, operand 6, single buffered']
    #allocation18 [shape = 's32[1]{0}', space=sflag, size = 0x4, scoped, tag = 'scoped memory for tpu_custom_call.1']
    #allocation19 [shape = 'u8[512]{0}', space=vmem, size = 0x400, scoped, tag = 'input window, operand 7, single buffered']
    #allocation20 [shape = 'u8[65536]{0}', space=vmem, size = 0x10000, scoped, tag = 'input window, operand 8, single buffered']
    #allocation21 [shape = 's32[1]{0}', space=sflag, size = 0x4, scoped, tag = 'scoped memory for tpu_custom_call.1']
    #allocation22 [shape = 'u8[1024]{0}', space=vmem, size = 0x400, scoped, tag = 'output window, operand 0, single buffered']
    #allocation23 [shape = 'u8[1024]{0}', space=vmem, size = 0x400, scoped, tag = 'output window, operand 1, single buffered']
    #allocation24 [shape = 's32[1]{0}', space=sflag, size = 0x4, scoped, tag = 'scoped memory for tpu_custom_call.1']
    %25 = vsyncpa [#allocation12], 0
    %26 = vsyncpa [#allocation10], 0
    %27 = vsyncpa [#allocation15], 0
    %28 = vsyncpa [#allocation18], 0
    %29 = vsyncpa [#allocation21], 0
    %30 = vsyncpa [#allocation11], 0
    %31 = vsyncpa [#allocation24], 0
    // Predicated region
    $region2: #{tpu_custom_call.1} parent=1 // pred_check
      _
    $region3: #{tpu_custom_call.1} parent=1 // pred_check_branch
      %33 = sbr.rel (0) target = $region5
    $region4: #{tpu_custom_call.1} parent=1 // pred_region
      %35 = vsyncadd [#allocation12], 0
      %s37 = sshll.u32 %s0, 4
      %s38 = int_to_ptr.hbm [resolvable:$true] %s37
      %40 = dma.hbm_to_smem %s38, 16, [#allocation9], [#allocation12]
    $region5: #{tpu_custom_call.1} parent=1 // pred_fallthru
      _
    // Predicated region
    $region6: #{tpu_custom_call.1} parent=1 // pred_check
      _
    $region7: #{tpu_custom_call.1} parent=1 // pred_check_branch
      %42 = sbr.rel (0) target = $region9
    $region8: #{tpu_custom_call.1} parent=1 // pred_region
      _
    $region9: #{tpu_custom_call.1} parent=1 // pred_fallthru
      _
    // Predicated region
    $region10: #{tpu_custom_call.1} parent=1 // pred_check
      _
    $region11: #{tpu_custom_call.1} parent=1 // pred_check_branch
      %44 = sbr.rel (0) target = $region13
    $region12: #{tpu_custom_call.1} parent=1 // pred_region
      %46 = vsyncadd [#allocation10], 0
      %s47 = sshll.u32 %s2, 4
      %s48 = int_to_ptr.hbm [resolvable:$true] %s47
      %s49 = sshll.u32 [#allocation13], 4
      %s50 = int_to_ptr.vmem [resolvable:$true] %s49
      %55 = dma.hbm_to_vmem [thread:$0]  %s48, 1024, %s50, [#allocation10], 128, 128, 8
    $region13: #{tpu_custom_call.1} parent=1 // pred_fallthru
      _
    // Predicated region
    $region14: #{tpu_custom_call.1} parent=1 // pred_check
      _
    $region15: #{tpu_custom_call.1} parent=1 // pred_check_branch
      %57 = sbr.rel (0) target = $region17
    $region16: #{tpu_custom_call.1} parent=1 // pred_region
      %59 = vsyncadd [#allocation15], 0
      %s60 = sshll.u32 %s3, 4
      %s61 = int_to_ptr.hbm [resolvable:$true] %s60
      %s62 = sshll.u32 [#allocation14], 4
      %s63 = int_to_ptr.vmem [resolvable:$true] %s62
      %68 = dma.hbm_to_vmem [thread:$0]  %s61, 8192, %s63, [#allocation15], 256, 256, 16
    $region17: #{tpu_custom_call.1} parent=1 // pred_fallthru
      _
    // Predicated region
    $region18: #{tpu_custom_call.1} parent=1 // pred_check
      _
    $region19: #{tpu_custom_call.1} parent=1 // pred_check_branch
      %70 = sbr.rel (0) target = $region21
    $region20: #{tpu_custom_call.1} parent=1 // pred_region
      _
    $region21: #{tpu_custom_call.1} parent=1 // pred_fallthru
      _
    // Predicated region
    $region22: #{tpu_custom_call.1} parent=1 // pred_check
      _
    $region23: #{tpu_custom_call.1} parent=1 // pred_check_branch
      %72 = sbr.rel (0) target = $region25
    $region24: #{tpu_custom_call.1} parent=1 // pred_region
      %74 = vsyncadd [#allocation15], 0
      %s76 = sshll.u32 %s5, 4
      %s77 = int_to_ptr.hbm [resolvable:$true] %s76
      %s78 = sshll.u32 [#allocation16], 4
      %s79 = int_to_ptr.vmem [resolvable:$true] %s78
      %81 = dma.hbm_to_vmem [thread:$0]  %s77, 128, %s79, [#allocation15]
    $region25: #{tpu_custom_call.1} parent=1 // pred_fallthru
      _
    // Predicated region
    $region26: #{tpu_custom_call.1} parent=1 // pred_check
      _
    $region27: #{tpu_custom_call.1} parent=1 // pred_check_branch
      %83 = sbr.rel (0) target = $region29
    $region28: #{tpu_custom_call.1} parent=1 // pred_region
      %85 = vsyncadd [#allocation18], 0
      %s86 = sshll.u32 %s6, 4
      %s87 = int_to_ptr.hbm [resolvable:$true] %s86
      %s88 = sshll.u32 [#allocation17], 4
      %s89 = int_to_ptr.vmem [resolvable:$true] %s88
      %94 = dma.hbm_to_vmem [thread:$0]  %s87, 2048, %s89, [#allocation18], 128, 128, 8
    $region29: #{tpu_custom_call.1} parent=1 // pred_fallthru
      _
    // Predicated region
    $region30: #{tpu_custom_call.1} parent=1 // pred_check
      _
    $region31: #{tpu_custom_call.1} parent=1 // pred_check_branch
      %96 = sbr.rel (0) target = $region33
    $region32: #{tpu_custom_call.1} parent=1 // pred_region
      %98 = vsyncadd [#allocation18], 0
      %s100 = sshll.u32 %s7, 4
      %s101 = int_to_ptr.hbm [resolvable:$true] %s100
      %s102 = sshll.u32 [#allocation19], 4
      %s103 = int_to_ptr.vmem [resolvable:$true] %s102
      %105 = dma.hbm_to_vmem [thread:$0]  %s101, 16, %s103, [#allocation18]
    $region33: #{tpu_custom_call.1} parent=1 // pred_fallthru
      _
    // Predicated region
    $region34: #{tpu_custom_call.1} parent=1 // pred_check
      _
    $region35: #{tpu_custom_call.1} parent=1 // pred_check_branch
      %107 = sbr.rel (0) target = $region37
    $region36: #{tpu_custom_call.1} parent=1 // pred_region
      %109 = vsyncadd [#allocation21], 0
      %s110 = sshll.u32 %s8, 4
      %s111 = int_to_ptr.hbm [resolvable:$true] %s110
      %s112 = sshll.u32 [#allocation20], 4
      %s113 = int_to_ptr.vmem [resolvable:$true] %s112
      %118 = dma.hbm_to_vmem [thread:$0]  %s111, 2048, %s113, [#allocation21], 128, 128, 8
    $region37: #{tpu_custom_call.1} parent=1 // pred_fallthru
      _
    // Predicated region
    $region38: #{tpu_custom_call.1} parent=1 // pred_check
      _
    $region39: #{tpu_custom_call.1} parent=1 // pred_check_branch
      %120 = sbr.rel (0) target = $region41
    $region40: #{tpu_custom_call.1} parent=1 // pred_region
      _
    $region41: #{tpu_custom_call.1} parent=1 // pred_fallthru
      _
    // Predicated region
    $region42: #{tpu_custom_call.1} parent=1 // pred_check
      _
    $region43: #{tpu_custom_call.1} parent=1 // pred_check_branch
      %122 = sbr.rel (0) target = $region45
    $region44: #{tpu_custom_call.1} parent=1 // pred_region
      _
    $region45: #{tpu_custom_call.1} parent=1 // pred_fallthru
      _
    // Predicated region
    $region46: #{tpu_custom_call.1} parent=1 // pred_check
      _
    $region47: #{tpu_custom_call.1} parent=1 // pred_check_branch
      %124 = sbr.rel (0) target = $region49
    $region48: #{tpu_custom_call.1} parent=1 // pred_region
      _
    $region49: #{tpu_custom_call.1} parent=1 // pred_fallthru
      _
    // Predicated region
    $region50: #{tpu_custom_call.1} parent=1 // pred_check
      _
    $region51: #{tpu_custom_call.1} parent=1 // pred_check_branch
      %126 = sbr.rel (0) target = $region53
    $region52: #{tpu_custom_call.1} parent=1 // pred_region
      _
    $region53: #{tpu_custom_call.1} parent=1 // pred_fallthru
      _
    // Predicated region
    $region54: #{tpu_custom_call.1} parent=1 // pred_check
      _
    $region55: #{tpu_custom_call.1} parent=1 // pred_check_branch
      %128 = sbr.rel (0) target = $region57
    $region56: #{tpu_custom_call.1} parent=1 // pred_region
      %130 = dma.done [#allocation12], 16
    $region57: #{tpu_custom_call.1} parent=1 // pred_fallthru
      _
    // Predicated region
    $region58: #{tpu_custom_call.1} parent=1 // pred_check
      _
    $region59: #{tpu_custom_call.1} parent=1 // pred_check_branch
      %132 = sbr.rel (0) target = $region61
    $region60: #{tpu_custom_call.1} parent=1 // pred_region
      %134 = dma.done [#allocation10], 1024
    $region61: #{tpu_custom_call.1} parent=1 // pred_fallthru
      _
    // Predicated region
    $region62: #{tpu_custom_call.1} parent=1 // pred_check
      _
    $region63: #{tpu_custom_call.1} parent=1 // pred_check_branch
      %136 = sbr.rel (0) target = $region65
    $region64: #{tpu_custom_call.1} parent=1 // pred_region
      %138 = dma.done [#allocation15], 8192
    $region65: #{tpu_custom_call.1} parent=1 // pred_fallthru
      _
    // Predicated region
    $region66: #{tpu_custom_call.1} parent=1 // pred_check
      _
    $region67: #{tpu_custom_call.1} parent=1 // pred_check_branch
      %140 = sbr.rel (0) target = $region69
    $region68: #{tpu_custom_call.1} parent=1 // pred_region
      %142 = dma.done [#allocation15], 128
    $region69: #{tpu_custom_call.1} parent=1 // pred_fallthru
      _
    // Predicated region
    $region70: #{tpu_custom_call.1} parent=1 // pred_check
      _
    $region71: #{tpu_custom_call.1} parent=1 // pred_check_branch
      %144 = sbr.rel (0) target = $region73
    $region72: #{tpu_custom_call.1} parent=1 // pred_region
      %146 = dma.done [#allocation18], 2048
    $region73: #{tpu_custom_call.1} parent=1 // pred_fallthru
      _
    // Predicated region
    $region74: #{tpu_custom_call.1} parent=1 // pred_check
      _
    $region75: #{tpu_custom_call.1} parent=1 // pred_check_branch
      %148 = sbr.rel (0) target = $region77
    $region76: #{tpu_custom_call.1} parent=1 // pred_region
      %150 = dma.done [#allocation18], 16
    $region77: #{tpu_custom_call.1} parent=1 // pred_fallthru
      _
    // Predicated region
    $region78: #{tpu_custom_call.1} parent=1 // pred_check
      _
    $region79: #{tpu_custom_call.1} parent=1 // pred_check_branch
      %152 = sbr.rel (0) target = $region81
    $region80: #{tpu_custom_call.1} parent=1 // pred_region
      %154 = dma.done [#allocation21], 2048
    $region81: #{tpu_custom_call.1} parent=1 // pred_fallthru
      _
    %155 = sfence
    // Predicated region
    $region82: #{tpu_custom_call.1} parent=1 // pred_check
      _
    $region83: #{tpu_custom_call.1} parent=1 // pred_check_branch
      %157 = sbr.rel target = $region85
    $region84: #{tpu_custom_call.1} parent=1 // pred_region
      %158 = sst [smem:[#allocation27]] [#allocation26]
      %159 = sst [smem:[#allocation28]] [#allocation25]
    $region85: #{tpu_custom_call.1} parent=1 // pred_fallthru
      _
    %161 = shalt.err (0)
    %s163 = sshll.u32 %s10, 4
    %s164 = int_to_ptr.hbm [resolvable:$true] %s163
    %s165 = sshll.u32 [#allocation3], 4
    %s166 = int_to_ptr.vmem [resolvable:$true] %s165
    %168 = dma.hbm_to_vmem [thread:$0]  %s164, 1024, %s166, [#allocation7]
    %s169 = scalar_lea.sflag [#allocation7], 1
    // Predicated region
    $region86: #{tpu_custom_call.1} parent=1 // pred_check
      _
    $region87: #{tpu_custom_call.1} parent=1 // pred_check_branch
      %171 = sbr.rel target = $region89
    $region88: #{tpu_custom_call.1} parent=1 // pred_region
      %172 = sst [smem:[#allocation27]] [#allocation30]
      %173 = sst [smem:[#allocation28]] [#allocation29]
    $region89: #{tpu_custom_call.1} parent=1 // pred_fallthru
      _
    %175 = shalt.err (0)
    %s177 = sshll.u32 %s11, 4
    %s178 = int_to_ptr.hbm [resolvable:$true] %s177
    %s179 = sshll.u32 [#allocation4], 4
    %s180 = int_to_ptr.vmem [resolvable:$true] %s179
    %182 = dma.hbm_to_vmem [thread:$0]  %s178, 8192, %s180, %s169
    %s183 = scalar_lea.sflag [#allocation7], 2
    // Predicated region
    $region90: #{tpu_custom_call.1} parent=1 // pred_check
      _
    $region91: #{tpu_custom_call.1} parent=1 // pred_check_branch
      %185 = sbr.rel target = $region93
    $region92: #{tpu_custom_call.1} parent=1 // pred_region
      %186 = sst [smem:[#allocation27]] [#allocation32]
      %187 = sst [smem:[#allocation28]] [#allocation31]
    $region93: #{tpu_custom_call.1} parent=1 // pred_fallthru
      _
    %189 = shalt.err (0)
    %s191 = sshll.u32 %s13, 4
    %s192 = int_to_ptr.hbm [resolvable:$true] %s191
    %s193 = sshll.u32 [#allocation5], 4
    %s194 = int_to_ptr.vmem [resolvable:$true] %s193
    %196 = dma.hbm_to_vmem [thread:$0]  %s192, 2048, %s194, %s183
    %s197 = scalar_lea.sflag [#allocation7], 3
    // Predicated region
    $region94: #{tpu_custom_call.1} parent=1 // pred_check
      _
    $region95: #{tpu_custom_call.1} parent=1 // pred_check_branch
      %199 = sbr.rel target = $region97
    $region96: #{tpu_custom_call.1} parent=1 // pred_region
      %200 = sst [smem:[#allocation27]] [#allocation34]
      %201 = sst [smem:[#allocation28]] [#allocation33]
    $region97: #{tpu_custom_call.1} parent=1 // pred_fallthru
      _
    %203 = shalt.err (0)
    %s205 = sshll.u32 %s15, 4
    %s206 = int_to_ptr.hbm [resolvable:$true] %s205
    %s207 = sshll.u32 [#allocation6], 4
    %s208 = int_to_ptr.vmem [resolvable:$true] %s207
    %210 = dma.hbm_to_vmem [thread:$0]  %s206, 1024, %s208, %s197
    %s211 = sld [smem:[#allocation9]]
    %s212 = scalar_lea.vmem [#allocation13], %s211
    %v213 = vld [vmem:[%s212] sm:$0x1]
    %v214 = vpack.c.bf16 %v213, %v213
    %v215 = vpack.c.bf16 0.0, 0.0
    %v216 = vld [vmem:[#allocation14] sm:$0xff]
    %v217 = vld [vmem:[#allocation14 + $0x8] sm:$0xff]
    %v218 = vld [vmem:[#allocation14 + $0x10] sm:$0xff]
    %v219 = vld [vmem:[#allocation14 + $0x18] sm:$0xff]
    %v220 = vld [vmem:[#allocation14 + $0x20] sm:$0xff]
    %v221 = vld [vmem:[#allocation14 + $0x28] sm:$0xff]
    %v222 = vld [vmem:[#allocation14 + $0x30] sm:$0xff]
    %v223 = vld [vmem:[#allocation14 + $0x38] sm:$0xff]
    %v224 = vld [vmem:[#allocation14 + $0x40] sm:$0xff]
    %v225 = vld [vmem:[#allocation14 + $0x48] sm:$0xff]
    %v226 = vld [vmem:[#allocation14 + $0x50] sm:$0xff]
    %v227 = vld [vmem:[#allocation14 + $0x58] sm:$0xff]
    %v228 = vld [vmem:[#allocation14 + $0x60] sm:$0xff]
    %v229 = vld [vmem:[#allocation14 + $0x68] sm:$0xff]
    %v230 = vld [vmem:[#allocation14 + $0x70] sm:$0xff]
    %v231 = vld [vmem:[#allocation14 + $0x78] sm:$0xff]
    %v232 = vld [vmem:[#allocation14 + $0x80] sm:$0xff]
    %v233 = vld [vmem:[#allocation14 + $0x88] sm:$0xff]
    %v234 = vld [vmem:[#allocation14 + $0x90] sm:$0xff]
    %v235 = vld [vmem:[#allocation14 + $0x98] sm:$0xff]
    %v236 = vld [vmem:[#allocation14 + $0xa0] sm:$0xff]
    %v237 = vld [vmem:[#allocation14 + $0xa8] sm:$0xff]
    %v238 = vld [vmem:[#allocation14 + $0xb0] sm:$0xff]
    %v239 = vld [vmem:[#allocation14 + $0xb8] sm:$0xff]
    %v240 = vld [vmem:[#allocation14 + $0xc0] sm:$0xff]
    %v241 = vld [vmem:[#allocation14 + $0xc8] sm:$0xff]
    %v242 = vld [vmem:[#allocation14 + $0xd0] sm:$0xff]
    %v243 = vld [vmem:[#allocation14 + $0xd8] sm:$0xff]
    %v244 = vld [vmem:[#allocation14 + $0xe0] sm:$0xff]
    %v245 = vld [vmem:[#allocation14 + $0xe8] sm:$0xff]
    %v246 = vld [vmem:[#allocation14 + $0xf0] sm:$0xff]
    %v247 = vld [vmem:[#allocation14 + $0xf8] sm:$0xff]
    %v248 = vld [vmem:[#allocation14 + $0x100] sm:$0xff]
    %v249 = vld [vmem:[#allocation14 + $0x108] sm:$0xff]
    %v250 = vld [vmem:[#allocation14 + $0x110] sm:$0xff]
    %v251 = vld [vmem:[#allocation14 + $0x118] sm:$0xff]
    %v252 = vld [vmem:[#allocation14 + $0x120] sm:$0xff]
    %v253 = vld [vmem:[#allocation14 + $0x128] sm:$0xff]
    %v254 = vld [vmem:[#allocation14 + $0x130] sm:$0xff]
    %v255 = vld [vmem:[#allocation14 + $0x138] sm:$0xff]
    %v256 = vld [vmem:[#allocation14 + $0x140] sm:$0xff]
    %v257 = vld [vmem:[#allocation14 + $0x148] sm:$0xff]
    %v258 = vld [vmem:[#allocation14 + $0x150] sm:$0xff]
    %v259 = vld [vmem:[#allocation14 + $0x158] sm:$0xff]
    %v260 = vld [vmem:[#allocation14 + $0x160] sm:$0xff]
    %v261 = vld [vmem:[#allocation14 + $0x168] sm:$0xff]
    %v262 = vld [vmem:[#allocation14 + $0x170] sm:$0xff]
    %v263 = vld [vmem:[#allocation14 + $0x178] sm:$0xff]
    %v264 = vld [vmem:[#allocation14 + $0x180] sm:$0xff]
    %v265 = vld [vmem:[#allocation14 + $0x188] sm:$0xff]
    %v266 = vld [vmem:[#allocation14 + $0x190] sm:$0xff]
    %v267 = vld [vmem:[#allocation14 + $0x198] sm:$0xff]
    %v268 = vld [vmem:[#allocation14 + $0x1a0] sm:$0xff]
    %v269 = vld [vmem:[#allocation14 + $0x1a8] sm:$0xff]
    %v270 = vld [vmem:[#allocation14 + $0x1b0] sm:$0xff]
    %v271 = vld [vmem:[#allocation14 + $0x1b8] sm:$0xff]
    %v272 = vld [vmem:[#allocation14 + $0x1c0] sm:$0xff]
    %v273 = vld [vmem:[#allocation14 + $0x1c8] sm:$0xff]
    %v274 = vld [vmem:[#allocation14 + $0x1d0] sm:$0xff]
    %v275 = vld [vmem:[#allocation14 + $0x1d8] sm:$0xff]
    %v276 = vld [vmem:[#allocation14 + $0x1e0] sm:$0xff]
    %v277 = vld [vmem:[#allocation14 + $0x1e8] sm:$0xff]
    %v278 = vld [vmem:[#allocation14 + $0x1f0] sm:$0xff]
    %v279 = vld [vmem:[#allocation14 + $0x1f8] sm:$0xff]
    %v280 = vld [vmem:[%s4] sm:$0xf]
    %v345 = vunpack.c.l.b16 %v216
    %v346 = vunpack.c.h.b16 %v216
    %v347 = vunpack.c.l.b16 %v217
    %v348 = vunpack.c.h.b16 %v217
    %v349 = vunpack.c.l.b16 %v218
    %v350 = vunpack.c.h.b16 %v218
    %v351 = vunpack.c.l.b16 %v219
    %v352 = vunpack.c.h.b16 %v219
    %v353 = vunpack.c.l.b16 %v220
    %v354 = vunpack.c.h.b16 %v220
    %v355 = vunpack.c.l.b16 %v221
    %v356 = vunpack.c.h.b16 %v221
    %v357 = vunpack.c.l.b16 %v222
    %v358 = vunpack.c.h.b16 %v222
    %v359 = vunpack.c.l.b16 %v223
    %v360 = vunpack.c.h.b16 %v223
    %v361 = vunpack.c.l.b16 %v224
    %v362 = vunpack.c.h.b16 %v224
    %v363 = vunpack.c.l.b16 %v225
    %v364 = vunpack.c.h.b16 %v225
    %v365 = vunpack.c.l.b16 %v226
    %v366 = vunpack.c.h.b16 %v226
    %v367 = vunpack.c.l.b16 %v227
    %v368 = vunpack.c.h.b16 %v227
    %v369 = vunpack.c.l.b16 %v228
    %v370 = vunpack.c.h.b16 %v228
    %v371 = vunpack.c.l.b16 %v229
    %v372 = vunpack.c.h.b16 %v229
    %v373 = vunpack.c.l.b16 %v230
    %v374 = vunpack.c.h.b16 %v230
    %v375 = vunpack.c.l.b16 %v231
    %v376 = vunpack.c.h.b16 %v231
    %v377 = vunpack.c.l.b16 %v232
    %v378 = vunpack.c.h.b16 %v232
    %v379 = vunpack.c.l.b16 %v233
    %v380 = vunpack.c.h.b16 %v233
    %v381 = vunpack.c.l.b16 %v234
    %v382 = vunpack.c.h.b16 %v234
    %v383 = vunpack.c.l.b16 %v235
    %v384 = vunpack.c.h.b16 %v235
    %v385 = vunpack.c.l.b16 %v236
    %v386 = vunpack.c.h.b16 %v236
    %v387 = vunpack.c.l.b16 %v237
    %v388 = vunpack.c.h.b16 %v237
    %v389 = vunpack.c.l.b16 %v238
    %v390 = vunpack.c.h.b16 %v238
    %v391 = vunpack.c.l.b16 %v239
    %v392 = vunpack.c.h.b16 %v239
    %v393 = vunpack.c.l.b16 %v240
    %v394 = vunpack.c.h.b16 %v240
    %v395 = vunpack.c.l.b16 %v241
    %v396 = vunpack.c.h.b16 %v241
    %v397 = vunpack.c.l.b16 %v242
    %v398 = vunpack.c.h.b16 %v242
    %v399 = vunpack.c.l.b16 %v243
    %v400 = vunpack.c.h.b16 %v243
    %v401 = vunpack.c.l.b16 %v244
    %v402 = vunpack.c.h.b16 %v244
    %v403 = vunpack.c.l.b16 %v245
    %v404 = vunpack.c.h.b16 %v245
    %v405 = vunpack.c.l.b16 %v246
    %v406 = vunpack.c.h.b16 %v246
    %v407 = vunpack.c.l.b16 %v247
    %v408 = vunpack.c.h.b16 %v247
    %v409 = vunpack.c.l.b16 %v248
    %v410 = vunpack.c.h.b16 %v248
    %v411 = vunpack.c.l.b16 %v249
    %v412 = vunpack.c.h.b16 %v249
    %v413 = vunpack.c.l.b16 %v250
    %v414 = vunpack.c.h.b16 %v250
    %v415 = vunpack.c.l.b16 %v251
    %v416 = vunpack.c.h.b16 %v251
    %v417 = vunpack.c.l.b16 %v252
    %v418 = vunpack.c.h.b16 %v252
    %v419 = vunpack.c.l.b16 %v253
    %v420 = vunpack.c.h.b16 %v253
    %v421 = vunpack.c.l.b16 %v254
    %v422 = vunpack.c.h.b16 %v254
    %v423 = vunpack.c.l.b16 %v255
    %v424 = vunpack.c.h.b16 %v255
    %v425 = vunpack.c.l.b16 %v256
    %v426 = vunpack.c.h.b16 %v256
    %v427 = vunpack.c.l.b16 %v257
    %v428 = vunpack.c.h.b16 %v257
    %v429 = vunpack.c.l.b16 %v258
    %v430 = vunpack.c.h.b16 %v258
    %v431 = vunpack.c.l.b16 %v259
    %v432 = vunpack.c.h.b16 %v259
    %v433 = vunpack.c.l.b16 %v260
    %v434 = vunpack.c.h.b16 %v260
    %v435 = vunpack.c.l.b16 %v261
    %v436 = vunpack.c.h.b16 %v261
    %v437 = vunpack.c.l.b16 %v262
    %v438 = vunpack.c.h.b16 %v262
    %v439 = vunpack.c.l.b16 %v263
    %v440 = vunpack.c.h.b16 %v263
    %v441 = vunpack.c.l.b16 %v264
    %v442 = vunpack.c.h.b16 %v264
    %v443 = vunpack.c.l.b16 %v265
    %v444 = vunpack.c.h.b16 %v265
    %v445 = vunpack.c.l.b16 %v266
    %v446 = vunpack.c.h.b16 %v266
    %v447 = vunpack.c.l.b16 %v267
    %v448 = vunpack.c.h.b16 %v267
    %v449 = vunpack.c.l.b16 %v268
    %v450 = vunpack.c.h.b16 %v268
    %v451 = vunpack.c.l.b16 %v269
    %v452 = vunpack.c.h.b16 %v269
    %v453 = vunpack.c.l.b16 %v270
    %v454 = vunpack.c.h.b16 %v270
    %v455 = vunpack.c.l.b16 %v271
    %v456 = vunpack.c.h.b16 %v271
    %v457 = vunpack.c.l.b16 %v272
    %v458 = vunpack.c.h.b16 %v272
    %v459 = vunpack.c.l.b16 %v273
    %v460 = vunpack.c.h.b16 %v273
    %v461 = vunpack.c.l.b16 %v274
    %v462 = vunpack.c.h.b16 %v274
    %v463 = vunpack.c.l.b16 %v275
    %v464 = vunpack.c.h.b16 %v275
    %v465 = vunpack.c.l.b16 %v276
    %v466 = vunpack.c.h.b16 %v276
    %v467 = vunpack.c.l.b16 %v277
    %v468 = vunpack.c.h.b16 %v277
    %v469 = vunpack.c.l.b16 %v278
    %v470 = vunpack.c.h.b16 %v278
    %v471 = vunpack.c.l.b16 %v279
    %v472 = vunpack.c.h.b16 %v279
    %v473 = vpack.c.b16 %v349, %v345
    %v474 = vpack.c.b16 %v350, %v346
    %v475 = vpack.c.b16 %v351, %v347
    %v476 = vpack.c.b16 %v352, %v348
    %v477 = vpack.c.b16 %v357, %v353
    %v478 = vpack.c.b16 %v358, %v354
    %v479 = vpack.c.b16 %v359, %v355
    %v480 = vpack.c.b16 %v360, %v356
    %v481 = vpack.c.b16 %v365, %v361
    %v482 = vpack.c.b16 %v366, %v362
    %v483 = vpack.c.b16 %v367, %v363
    %v484 = vpack.c.b16 %v368, %v364
    %v485 = vpack.c.b16 %v373, %v369
    %v486 = vpack.c.b16 %v374, %v370
    %v487 = vpack.c.b16 %v375, %v371
    %v488 = vpack.c.b16 %v376, %v372
    %v489 = vpack.c.b16 %v381, %v377
    %v490 = vpack.c.b16 %v382, %v378
    %v491 = vpack.c.b16 %v383, %v379
    %v492 = vpack.c.b16 %v384, %v380
    %v493 = vpack.c.b16 %v389, %v385
    %v494 = vpack.c.b16 %v390, %v386
    %v495 = vpack.c.b16 %v391, %v387
    %v496 = vpack.c.b16 %v392, %v388
    %v497 = vpack.c.b16 %v397, %v393
    %v498 = vpack.c.b16 %v398, %v394
    %v499 = vpack.c.b16 %v399, %v395
    %v500 = vpack.c.b16 %v400, %v396
    %v501 = vpack.c.b16 %v405, %v401
    %v502 = vpack.c.b16 %v406, %v402
    %v503 = vpack.c.b16 %v407, %v403
    %v504 = vpack.c.b16 %v408, %v404
    %v505 = vpack.c.b16 %v413, %v409
    %v506 = vpack.c.b16 %v414, %v410
    %v507 = vpack.c.b16 %v415, %v411
    %v508 = vpack.c.b16 %v416, %v412
    %v509 = vpack.c.b16 %v421, %v417
    %v510 = vpack.c.b16 %v422, %v418
    %v511 = vpack.c.b16 %v423, %v419
    %v512 = vpack.c.b16 %v424, %v420
    %v513 = vpack.c.b16 %v429, %v425
    %v514 = vpack.c.b16 %v430, %v426
    %v515 = vpack.c.b16 %v431, %v427
    %v516 = vpack.c.b16 %v432, %v428
    %v517 = vpack.c.b16 %v437, %v433
    %v518 = vpack.c.b16 %v438, %v434
    %v519 = vpack.c.b16 %v439, %v435
    %v520 = vpack.c.b16 %v440, %v436
    %v521 = vpack.c.b16 %v445, %v441
    %v522 = vpack.c.b16 %v446, %v442
    %v523 = vpack.c.b16 %v447, %v443
    %v524 = vpack.c.b16 %v448, %v444
    %v525 = vpack.c.b16 %v453, %v449
    %v526 = vpack.c.b16 %v454, %v450
    %v527 = vpack.c.b16 %v455, %v451
    %v528 = vpack.c.b16 %v456, %v452
    %v529 = vpack.c.b16 %v461, %v457
    %v530 = vpack.c.b16 %v462, %v458
    %v531 = vpack.c.b16 %v463, %v459
    %v532 = vpack.c.b16 %v464, %v460
    %v533 = vpack.c.b16 %v469, %v465
    %v534 = vpack.c.b16 %v470, %v466
    %v535 = vpack.c.b16 %v471, %v467
    %v536 = vpack.c.b16 %v472, %v468
    %v602 = vperm.slane %v280, 0
    %v603 = vperm.slane %v280, 1
    %v604 = vperm.slane %v280, 2
    %v605 = vperm.slane %v280, 3
    %610 = vmatpush.bf16.msra.mxu0 %v501
    %611 = vmatpush.bf16.msra.mxu0 %v497
    %612 = vmatpush.bf16.msra.mxu0 %v493
    %613 = vmatpush.bf16.msra.mxu0 %v489
    %614 = vmatpush.bf16.msra.mxu0 %v485
    %615 = vmatpush.bf16.msra.mxu0 %v481
    %616 = vmatpush.bf16.msra.mxu0 %v477
    %617 = vmatpush.bf16.msra.mxu0 %v473
    %618 = vmatmul.bf16.gmra.mxu0 %v214
    %v619 = vpop.f32.mrf.mxu0
    %v620 = vadd.f32 %v602, %v619
    %v621 = vpop.f32.mrf.mxu0
    %622 = vdwg.mxu0
    %623 = vmatpush.bf16.msra.mxu0 %v533
    %624 = vmatpush.bf16.msra.mxu0 %v529
    %625 = vmatpush.bf16.msra.mxu0 %v525
    %626 = vmatpush.bf16.msra.mxu0 %v521
    %627 = vmatpush.bf16.msra.mxu0 %v517
    %628 = vmatpush.bf16.msra.mxu0 %v513
    %629 = vmatpush.bf16.msra.mxu0 %v509
    %630 = vmatpush.bf16.msra.mxu0 %v505
    %631 = vmatmul.bf16.gmra.mxu0 %v215
    %v632 = vpop.f32.mrf.mxu0
    %v633 = vadd.f32 %v620, %v632
    %v634 = vpop.f32.mrf.mxu0
    %635 = vdwg.mxu0
    %636 = vmatpush.bf16.msra.mxu0 %v502
    %637 = vmatpush.bf16.msra.mxu0 %v498
    %638 = vmatpush.bf16.msra.mxu0 %v494
    %639 = vmatpush.bf16.msra.mxu0 %v490
    %640 = vmatpush.bf16.msra.mxu0 %v486
    %641 = vmatpush.bf16.msra.mxu0 %v482
    %642 = vmatpush.bf16.msra.mxu0 %v478
    %643 = vmatpush.bf16.msra.mxu0 %v474
    %644 = vmatmul.bf16.gmra.mxu0 %v214
    %v645 = vpop.f32.mrf.mxu0
    %v646 = vadd.f32 %v603, %v645
    %v647 = vpop.f32.mrf.mxu0
    %648 = vdwg.mxu0
    %649 = vmatpush.bf16.msra.mxu0 %v534
    %650 = vmatpush.bf16.msra.mxu0 %v530
    %651 = vmatpush.bf16.msra.mxu0 %v526
    %652 = vmatpush.bf16.msra.mxu0 %v522
    %653 = vmatpush.bf16.msra.mxu0 %v518
    %654 = vmatpush.bf16.msra.mxu0 %v514
    %655 = vmatpush.bf16.msra.mxu0 %v510
    %656 = vmatpush.bf16.msra.mxu0 %v506
    %657 = vmatmul.bf16.gmra.mxu0 %v215
    %v658 = vpop.f32.mrf.mxu0
    %v659 = vadd.f32 %v646, %v658
    %v660 = vpop.f32.mrf.mxu0
    %661 = vdwg.mxu0
    %662 = vmatpush.bf16.msra.mxu0 %v503
    %663 = vmatpush.bf16.msra.mxu0 %v499
    %664 = vmatpush.bf16.msra.mxu0 %v495
    %665 = vmatpush.bf16.msra.mxu0 %v491
    %666 = vmatpush.bf16.msra.mxu0 %v487
    %667 = vmatpush.bf16.msra.mxu0 %v483
    %668 = vmatpush.bf16.msra.mxu0 %v479
    %669 = vmatpush.bf16.msra.mxu0 %v475
    %670 = vmatmul.bf16.gmra.mxu0 %v214
    %v671 = vpop.f32.mrf.mxu0
    %v672 = vadd.f32 %v604, %v671
    %v673 = vpop.f32.mrf.mxu0
    %674 = vdwg.mxu0
    %675 = vmatpush.bf16.msra.mxu0 %v535
    %676 = vmatpush.bf16.msra.mxu0 %v531
    %677 = vmatpush.bf16.msra.mxu0 %v527
    %678 = vmatpush.bf16.msra.mxu0 %v523
    %679 = vmatpush.bf16.msra.mxu0 %v519
    %680 = vmatpush.bf16.msra.mxu0 %v515
    %681 = vmatpush.bf16.msra.mxu0 %v511
    %682 = vmatpush.bf16.msra.mxu0 %v507
    %683 = vmatmul.bf16.gmra.mxu0 %v215
    %v684 = vpop.f32.mrf.mxu0
    %v685 = vadd.f32 %v672, %v684
    %v686 = vpop.f32.mrf.mxu0
    %687 = vdwg.mxu0
    %688 = vmatpush.bf16.msra.mxu0 %v504
    %689 = vmatpush.bf16.msra.mxu0 %v500
    %690 = vmatpush.bf16.msra.mxu0 %v496
    %691 = vmatpush.bf16.msra.mxu0 %v492
    %692 = vmatpush.bf16.msra.mxu0 %v488
    %693 = vmatpush.bf16.msra.mxu0 %v484
    %694 = vmatpush.bf16.msra.mxu0 %v480
    %695 = vmatpush.bf16.msra.mxu0 %v476
    %696 = vmatmul.bf16.gmra.mxu0 %v214
    %v697 = vpop.f32.mrf.mxu0
    %v698 = vadd.f32 %v605, %v697
    %v699 = vpop.f32.mrf.mxu0
    %700 = vdwg.mxu0
    %701 = vmatpush.bf16.msra.mxu0 %v536
    %702 = vmatpush.bf16.msra.mxu0 %v532
    %703 = vmatpush.bf16.msra.mxu0 %v528
    %704 = vmatpush.bf16.msra.mxu0 %v524
    %705 = vmatpush.bf16.msra.mxu0 %v520
    %706 = vmatpush.bf16.msra.mxu0 %v516
    %707 = vmatpush.bf16.msra.mxu0 %v512
    %708 = vmatpush.bf16.msra.mxu0 %v508
    %709 = vmatmul.bf16.gmra.mxu0 %v215
    %v710 = vpop.f32.mrf.mxu0
    %v711 = vadd.f32 %v698, %v710
    %v712 = vpop.f32.mrf.mxu0
    %713 = vdwg.mxu0
    %v714 = vmul.f32 %v633, 0.5
    %v715 = vtanh.pop %v714
    %v716 = vadd.f32 %v715, 1.0
    %v717 = vmul.f32 %v716, 0.5
    %v718 = vmul.f32 %v659, 0.5
    %v719 = vtanh.pop %v718
    %v720 = vadd.f32 %v719, 1.0
    %v721 = vmul.f32 %v720, 0.5
    %v722 = vmul.f32 %v717, %v711
    %v723 = vadd.f32 %v685, %v722
    %v724 = vtanh.pop %v723
    %v725 = vsub.f32 1.0, %v721
    %v726 = vmul.f32 %v725, %v724
    %v727 = vmul.f32 %v721, 0.0
    %v728 = vadd.f32 %v726, %v727
    %729 = vst [vmem:[#allocation2] sm:$0x1] %v728
    %s730 = sld [smem:[#allocation9 + $0x1]]
    %s731 = scalar_lea.vmem [#allocation13], %s730
    %v732 = vld [vmem:[%s731] sm:$0x1]
    %v733 = vpack.c.bf16 %v732, %v732
    %v734 = vpack.c.bf16 %v728, %v728
    %v735 = vld [vmem:[#allocation14] sm:$0xff]
    %v736 = vld [vmem:[#allocation14 + $0x8] sm:$0xff]
    %v737 = vld [vmem:[#allocation14 + $0x10] sm:$0xff]
    %v738 = vld [vmem:[#allocation14 + $0x18] sm:$0xff]
    %v739 = vld [vmem:[#allocation14 + $0x20] sm:$0xff]
    %v740 = vld [vmem:[#allocation14 + $0x28] sm:$0xff]
    %v741 = vld [vmem:[#allocation14 + $0x30] sm:$0xff]
    %v742 = vld [vmem:[#allocation14 + $0x38] sm:$0xff]
    %v743 = vld [vmem:[#allocation14 + $0x40] sm:$0xff]
    %v744 = vld [vmem:[#allocation14 + $0x48] sm:$0xff]
    %v745 = vld [vmem:[#allocation14 + $0x50] sm:$0xff]
    %v746 = vld [vmem:[#allocation14 + $0x58] sm:$0xff]
    %v747 = vld [vmem:[#allocation14 + $0x60] sm:$0xff]
    %v748 = vld [vmem:[#allocation14 + $0x68] sm:$0xff]
    %v749 = vld [vmem:[#allocation14 + $0x70] sm:$0xff]
    %v750 = vld [vmem:[#allocation14 + $0x78] sm:$0xff]
    %v751 = vld [vmem:[#allocation14 + $0x80] sm:$0xff]
    %v752 = vld [vmem:[#allocation14 + $0x88] sm:$0xff]
    %v753 = vld [vmem:[#allocation14 + $0x90] sm:$0xff]
    %v754 = vld [vmem:[#allocation14 + $0x98] sm:$0xff]
    %v755 = vld [vmem:[#allocation14 + $0xa0] sm:$0xff]
    %v756 = vld [vmem:[#allocation14 + $0xa8] sm:$0xff]
    %v757 = vld [vmem:[#allocation14 + $0xb0] sm:$0xff]
    %v758 = vld [vmem:[#allocation14 + $0xb8] sm:$0xff]
    %v759 = vld [vmem:[#allocation14 + $0xc0] sm:$0xff]
    %v760 = vld [vmem:[#allocation14 + $0xc8] sm:$0xff]
    %v761 = vld [vmem:[#allocation14 + $0xd0] sm:$0xff]
    %v762 = vld [vmem:[#allocation14 + $0xd8] sm:$0xff]
    %v763 = vld [vmem:[#allocation14 + $0xe0] sm:$0xff]
    %v764 = vld [vmem:[#allocation14 + $0xe8] sm:$0xff]
    %v765 = vld [vmem:[#allocation14 + $0xf0] sm:$0xff]
    %v766 = vld [vmem:[#allocation14 + $0xf8] sm:$0xff]
    %v767 = vld [vmem:[#allocation14 + $0x100] sm:$0xff]
    %v768 = vld [vmem:[#allocation14 + $0x108] sm:$0xff]
    %v769 = vld [vmem:[#allocation14 + $0x110] sm:$0xff]
    %v770 = vld [vmem:[#allocation14 + $0x118] sm:$0xff]
    %v771 = vld [vmem:[#allocation14 + $0x120] sm:$0xff]
    %v772 = vld [vmem:[#allocation14 + $0x128] sm:$0xff]
    %v773 = vld [vmem:[#allocation14 + $0x130] sm:$0xff]
    %v774 = vld [vmem:[#allocation14 + $0x138] sm:$0xff]
    %v775 = vld [vmem:[#allocation14 + $0x140] sm:$0xff]
    %v776 = vld [vmem:[#allocation14 + $0x148] sm:$0xff]
    %v777 = vld [vmem:[#allocation14 + $0x150] sm:$0xff]
    %v778 = vld [vmem:[#allocation14 + $0x158] sm:$0xff]
    %v779 = vld [vmem:[#allocation14 + $0x160] sm:$0xff]
    %v780 = vld [vmem:[#allocation14 + $0x168] sm:$0xff]
    %v781 = vld [vmem:[#allocation14 + $0x170] sm:$0xff]
    %v782 = vld [vmem:[#allocation14 + $0x178] sm:$0xff]
    %v783 = vld [vmem:[#allocation14 + $0x180] sm:$0xff]
    %v784 = vld [vmem:[#allocation14 + $0x188] sm:$0xff]
    %v785 = vld [vmem:[#allocation14 + $0x190] sm:$0xff]
    %v786 = vld [vmem:[#allocation14 + $0x198] sm:$0xff]
    %v787 = vld [vmem:[#allocation14 + $0x1a0] sm:$0xff]
    %v788 = vld [vmem:[#allocation14 + $0x1a8] sm:$0xff]
    %v789 = vld [vmem:[#allocation14 + $0x1b0] sm:$0xff]
    %v790 = vld [vmem:[#allocation14 + $0x1b8] sm:$0xff]
    %v791 = vld [vmem:[#allocation14 + $0x1c0] sm:$0xff]
    %v792 = vld [vmem:[#allocation14 + $0x1c8] sm:$0xff]
    %v793 = vld [vmem:[#allocation14 + $0x1d0] sm:$0xff]
    %v794 = vld [vmem:[#allocation14 + $0x1d8] sm:$0xff]
    %v795 = vld [vmem:[#allocation14 + $0x1e0] sm:$0xff]
    %v796 = vld [vmem:[#allocation14 + $0x1e8] sm:$0xff]
    %v797 = vld [vmem:[#allocation14 + $0x1f0] sm:$0xff]
    %v798 = vld [vmem:[#allocation14 + $0x1f8] sm:$0xff]
    %v799 = vld [vmem:[%s4] sm:$0xf]
    %v864 = vunpack.c.l.b16 %v735
    %v865 = vunpack.c.h.b16 %v735
    %v866 = vunpack.c.l.b16 %v736
    %v867 = vunpack.c.h.b16 %v736
    %v868 = vunpack.c.l.b16 %v737
    %v869 = vunpack.c.h.b16 %v737
    %v870 = vunpack.c.l.b16 %v738
    %v871 = vunpack.c.h.b16 %v738
    %v872 = vunpack.c.l.b16 %v739
    %v873 = vunpack.c.h.b16 %v739
    %v874 = vunpack.c.l.b16 %v740
    %v875 = vunpack.c.h.b16 %v740
    %v876 = vunpack.c.l.b16 %v741
    %v877 = vunpack.c.h.b16 %v741
    %v878 = vunpack.c.l.b16 %v742
    %v879 = vunpack.c.h.b16 %v742
    %v880 = vunpack.c.l.b16 %v743
    %v881 = vunpack.c.h.b16 %v743
    %v882 = vunpack.c.l.b16 %v744
    %v883 = vunpack.c.h.b16 %v744
    %v884 = vunpack.c.l.b16 %v745
    %v885 = vunpack.c.h.b16 %v745
    %v886 = vunpack.c.l.b16 %v746
    %v887 = vunpack.c.h.b16 %v746
    %v888 = vunpack.c.l.b16 %v747
    %v889 = vunpack.c.h.b16 %v747
    %v890 = vunpack.c.l.b16 %v748
    %v891 = vunpack.c.h.b16 %v748
    %v892 = vunpack.c.l.b16 %v749
    %v893 = vunpack.c.h.b16 %v749
    %v894 = vunpack.c.l.b16 %v750
    %v895 = vunpack.c.h.b16 %v750
    %v896 = vunpack.c.l.b16 %v751
    %v897 = vunpack.c.h.b16 %v751
    %v898 = vunpack.c.l.b16 %v752
    %v899 = vunpack.c.h.b16 %v752
    %v900 = vunpack.c.l.b16 %v753
    %v901 = vunpack.c.h.b16 %v753
    %v902 = vunpack.c.l.b16 %v754
    %v903 = vunpack.c.h.b16 %v754
    %v904 = vunpack.c.l.b16 %v755
    %v905 = vunpack.c.h.b16 %v755
    %v906 = vunpack.c.l.b16 %v756
    %v907 = vunpack.c.h.b16 %v756
    %v908 = vunpack.c.l.b16 %v757
    %v909 = vunpack.c.h.b16 %v757
    %v910 = vunpack.c.l.b16 %v758
    %v911 = vunpack.c.h.b16 %v758
    %v912 = vunpack.c.l.b16 %v759
    %v913 = vunpack.c.h.b16 %v759
    %v914 = vunpack.c.l.b16 %v760
    %v915 = vunpack.c.h.b16 %v760
    %v916 = vunpack.c.l.b16 %v761
    %v917 = vunpack.c.h.b16 %v761
    %v918 = vunpack.c.l.b16 %v762
    %v919 = vunpack.c.h.b16 %v762
    %v920 = vunpack.c.l.b16 %v763
    %v921 = vunpack.c.h.b16 %v763
    %v922 = vunpack.c.l.b16 %v764
    %v923 = vunpack.c.h.b16 %v764
    %v924 = vunpack.c.l.b16 %v765
    %v925 = vunpack.c.h.b16 %v765
    %v926 = vunpack.c.l.b16 %v766
    %v927 = vunpack.c.h.b16 %v766
    %v928 = vunpack.c.l.b16 %v767
    %v929 = vunpack.c.h.b16 %v767
    %v930 = vunpack.c.l.b16 %v768
    %v931 = vunpack.c.h.b16 %v768
    %v932 = vunpack.c.l.b16 %v769
    %v933 = vunpack.c.h.b16 %v769
    %v934 = vunpack.c.l.b16 %v770
    %v935 = vunpack.c.h.b16 %v770
    %v936 = vunpack.c.l.b16 %v771
    %v937 = vunpack.c.h.b16 %v771
    %v938 = vunpack.c.l.b16 %v772
    %v939 = vunpack.c.h.b16 %v772
    %v940 = vunpack.c.l.b16 %v773
    %v941 = vunpack.c.h.b16 %v773
    %v942 = vunpack.c.l.b16 %v774
    %v943 = vunpack.c.h.b16 %v774
    %v944 = vunpack.c.l.b16 %v775
    %v945 = vunpack.c.h.b16 %v775
    %v946 = vunpack.c.l.b16 %v776
    %v947 = vunpack.c.h.b16 %v776
    %v948 = vunpack.c.l.b16 %v777
    %v949 = vunpack.c.h.b16 %v777
    %v950 = vunpack.c.l.b16 %v778
    %v951 = vunpack.c.h.b16 %v778
    %v952 = vunpack.c.l.b16 %v779
    %v953 = vunpack.c.h.b16 %v779
    %v954 = vunpack.c.l.b16 %v780
    %v955 = vunpack.c.h.b16 %v780
    %v956 = vunpack.c.l.b16 %v781
    %v957 = vunpack.c.h.b16 %v781
    %v958 = vunpack.c.l.b16 %v782
    %v959 = vunpack.c.h.b16 %v782
    %v960 = vunpack.c.l.b16 %v783
    %v961 = vunpack.c.h.b16 %v783
    %v962 = vunpack.c.l.b16 %v784
    %v963 = vunpack.c.h.b16 %v784
    %v964 = vunpack.c.l.b16 %v785
    %v965 = vunpack.c.h.b16 %v785
    %v966 = vunpack.c.l.b16 %v786
    %v967 = vunpack.c.h.b16 %v786
    %v968 = vunpack.c.l.b16 %v787
    %v969 = vunpack.c.h.b16 %v787
    %v970 = vunpack.c.l.b16 %v788
    %v971 = vunpack.c.h.b16 %v788
    %v972 = vunpack.c.l.b16 %v789
    %v973 = vunpack.c.h.b16 %v789
    %v974 = vunpack.c.l.b16 %v790
    %v975 = vunpack.c.h.b16 %v790
    %v976 = vunpack.c.l.b16 %v791
    %v977 = vunpack.c.h.b16 %v791
    %v978 = vunpack.c.l.b16 %v792
    %v979 = vunpack.c.h.b16 %v792
    %v980 = vunpack.c.l.b16 %v793
    %v981 = vunpack.c.h.b16 %v793
    %v982 = vunpack.c.l.b16 %v794
    %v983 = vunpack.c.h.b16 %v794
    %v984 = vunpack.c.l.b16 %v795
    %v985 = vunpack.c.h.b16 %v795
    %v986 = vunpack.c.l.b16 %v796
    %v987 = vunpack.c.h.b16 %v796
    %v988 = vunpack.c.l.b16 %v797
    %v989 = vunpack.c.h.b16 %v797
    %v990 = vunpack.c.l.b16 %v798
    %v991 = vunpack.c.h.b16 %v798
    %v992 = vpack.c.b16 %v868, %v864
    %v993 = vpack.c.b16 %v869, %v865
    %v994 = vpack.c.b16 %v870, %v866
    %v995 = vpack.c.b16 %v871, %v867
    %v996 = vpack.c.b16 %v876, %v872
    %v997 = vpack.c.b16 %v877, %v873
    %v998 = vpack.c.b16 %v878, %v874
    %v999 = vpack.c.b16 %v879, %v875
    %v1000 = vpack.c.b16 %v884, %v880
    %v1001 = vpack.c.b16 %v885, %v881
    %v1002 = vpack.c.b16 %v886, %v882
    %v1003 = vpack.c.b16 %v887, %v883
    %v1004 = vpack.c.b16 %v892, %v888
    %v1005 = vpack.c.b16 %v893, %v889
    %v1006 = vpack.c.b16 %v894, %v890
    %v1007 = vpack.c.b16 %v895, %v891
    %v1008 = vpack.c.b16 %v900, %v896
    %v1009 = vpack.c.b16 %v901, %v897
    %v1010 = vpack.c.b16 %v902, %v898
    %v1011 = vpack.c.b16 %v903, %v899
    %v1012 = vpack.c.b16 %v908, %v904
    %v1013 = vpack.c.b16 %v909, %v905
    %v1014 = vpack.c.b16 %v910, %v906
    %v1015 = vpack.c.b16 %v911, %v907
    %v1016 = vpack.c.b16 %v916, %v912
    %v1017 = vpack.c.b16 %v917, %v913
    %v1018 = vpack.c.b16 %v918, %v914
    %v1019 = vpack.c.b16 %v919, %v915
    %v1020 = vpack.c.b16 %v924, %v920
    %v1021 = vpack.c.b16 %v925, %v921
    %v1022 = vpack.c.b16 %v926, %v922
    %v1023 = vpack.c.b16 %v927, %v923
    %v1024 = vpack.c.b16 %v932, %v928
    %v1025 = vpack.c.b16 %v933, %v929
    %v1026 = vpack.c.b16 %v934, %v930
    %v1027 = vpack.c.b16 %v935, %v931
    %v1028 = vpack.c.b16 %v940, %v936
    %v1029 = vpack.c.b16 %v941, %v937
    %v1030 = vpack.c.b16 %v942, %v938
    %v1031 = vpack.c.b16 %v943, %v939
    %v1032 = vpack.c.b16 %v948, %v944
    %v1033 = vpack.c.b16 %v949, %v945
    %v1034 = vpack.c.b16 %v950, %v946
    %v1035 = vpack.c.b16 %v951, %v947
    %v1036 = vpack.c.b16 %v956, %v952
    %v1037 = vpack.c.b16 %v957, %v953
    %v1038 = vpack.c.b16 %v958, %v954
    %v1039 = vpack.c.b16 %v959, %v955
    %v1040 = vpack.c.b16 %v964, %v960
    %v1041 = vpack.c.b16 %v965, %v961
    %v1042 = vpack.c.b16 %v966, %v962
    %v1043 = vpack.c.b16 %v967, %v963
    %v1044 = vpack.c.b16 %v972, %v968
    %v1045 = vpack.c.b16 %v973, %v969
    %v1046 = vpack.c.b16 %v974, %v970
    %v1047 = vpack.c.b16 %v975, %v971
    %v1048 = vpack.c.b16 %v980, %v976
    %v1049 = vpack.c.b16 %v981, %v977
    %v1050 = vpack.c.b16 %v982, %v978
    %v1051 = vpack.c.b16 %v983, %v979
    %v1052 = vpack.c.b16 %v988, %v984
    %v1053 = vpack.c.b16 %v989, %v985
    %v1054 = vpack.c.b16 %v990, %v986
    %v1055 = vpack.c.b16 %v991, %v987
    %v1121 = vperm.slane %v799, 0
    %v1122 = vperm.slane %v799, 1
    %v1123 = vperm.slane %v799, 2
    %v1124 = vperm.slane %v799, 3
    %1129 = vmatpush.bf16.msra.mxu0 %v1020
    %1130 = vmatpush.bf16.msra.mxu0 %v1016
    %1131 = vmatpush.bf16.msra.mxu0 %v1012
    %1132 = vmatpush.bf16.msra.mxu0 %v1008
    %1133 = vmatpush.bf16.msra.mxu0 %v1004
    %1134 = vmatpush.bf16.msra.mxu0 %v1000
    %1135 = vmatpush.bf16.msra.mxu0 %v996
    %1136 = vmatpush.bf16.msra.mxu0 %v992
    %1137 = vmatmul.bf16.gmra.mxu0 %v733
    %v1138 = vpop.f32.mrf.mxu0
    %v1139 = vadd.f32 %v1121, %v1138
    %v1140 = vpop.f32.mrf.mxu0
    %1141 = vdwg.mxu0
    %1142 = vmatpush.bf16.msra.mxu0 %v1052
    %1143 = vmatpush.bf16.msra.mxu0 %v1048
    %1144 = vmatpush.bf16.msra.mxu0 %v1044
    %1145 = vmatpush.bf16.msra.mxu0 %v1040
    %1146 = vmatpush.bf16.msra.mxu0 %v1036
    %1147 = vmatpush.bf16.msra.mxu0 %v1032
    %1148 = vmatpush.bf16.msra.mxu0 %v1028
    %1149 = vmatpush.bf16.msra.mxu0 %v1024
    %1150 = vmatmul.bf16.gmra.mxu0 %v734
    %v1151 = vpop.f32.mrf.mxu0
    %v1152 = vadd.f32 %v1139, %v1151
    %v1153 = vpop.f32.mrf.mxu0
    %1154 = vdwg.mxu0
    %1155 = vmatpush.bf16.msra.mxu0 %v1021
    %1156 = vmatpush.bf16.msra.mxu0 %v1017
    %1157 = vmatpush.bf16.msra.mxu0 %v1013
    %1158 = vmatpush.bf16.msra.mxu0 %v1009
    %1159 = vmatpush.bf16.msra.mxu0 %v1005
    %1160 = vmatpush.bf16.msra.mxu0 %v1001
    %1161 = vmatpush.bf16.msra.mxu0 %v997
    %1162 = vmatpush.bf16.msra.mxu0 %v993
    %1163 = vmatmul.bf16.gmra.mxu0 %v733
    %v1164 = vpop.f32.mrf.mxu0
    %v1165 = vadd.f32 %v1122, %v1164
    %v1166 = vpop.f32.mrf.mxu0
    %1167 = vdwg.mxu0
    %1168 = vmatpush.bf16.msra.mxu0 %v1053
    %1169 = vmatpush.bf16.msra.mxu0 %v1049
    %1170 = vmatpush.bf16.msra.mxu0 %v1045
    %1171 = vmatpush.bf16.msra.mxu0 %v1041
    %1172 = vmatpush.bf16.msra.mxu0 %v1037
    %1173 = vmatpush.bf16.msra.mxu0 %v1033
    %1174 = vmatpush.bf16.msra.mxu0 %v1029
    %1175 = vmatpush.bf16.msra.mxu0 %v1025
    %1176 = vmatmul.bf16.gmra.mxu0 %v734
    %v1177 = vpop.f32.mrf.mxu0
    %v1178 = vadd.f32 %v1165, %v1177
    %v1179 = vpop.f32.mrf.mxu0
    %1180 = vdwg.mxu0
    %1181 = vmatpush.bf16.msra.mxu0 %v1022
    %1182 = vmatpush.bf16.msra.mxu0 %v1018
    %1183 = vmatpush.bf16.msra.mxu0 %v1014
    %1184 = vmatpush.bf16.msra.mxu0 %v1010
    %1185 = vmatpush.bf16.msra.mxu0 %v1006
    %1186 = vmatpush.bf16.msra.mxu0 %v1002
    %1187 = vmatpush.bf16.msra.mxu0 %v998
    %1188 = vmatpush.bf16.msra.mxu0 %v994
    %1189 = vmatmul.bf16.gmra.mxu0 %v733
    %v1190 = vpop.f32.mrf.mxu0
    %v1191 = vadd.f32 %v1123, %v1190
    %v1192 = vpop.f32.mrf.mxu0
    %1193 = vdwg.mxu0
    %1194 = vmatpush.bf16.msra.mxu0 %v1054
    %1195 = vmatpush.bf16.msra.mxu0 %v1050
    %1196 = vmatpush.bf16.msra.mxu0 %v1046
    %1197 = vmatpush.bf16.msra.mxu0 %v1042
    %1198 = vmatpush.bf16.msra.mxu0 %v1038
    %1199 = vmatpush.bf16.msra.mxu0 %v1034
    %1200 = vmatpush.bf16.msra.mxu0 %v1030
    %1201 = vmatpush.bf16.msra.mxu0 %v1026
    %1202 = vmatmul.bf16.gmra.mxu0 %v734
    %v1203 = vpop.f32.mrf.mxu0
    %v1204 = vadd.f32 %v1191, %v1203
    %v1205 = vpop.f32.mrf.mxu0
    %1206 = vdwg.mxu0
    %1207 = vmatpush.bf16.msra.mxu0 %v1023
    %1208 = vmatpush.bf16.msra.mxu0 %v1019
    %1209 = vmatpush.bf16.msra.mxu0 %v1015
    %1210 = vmatpush.bf16.msra.mxu0 %v1011
    %1211 = vmatpush.bf16.msra.mxu0 %v1007
    %1212 = vmatpush.bf16.msra.mxu0 %v1003
    %1213 = vmatpush.bf16.msra.mxu0 %v999
    %1214 = vmatpush.bf16.msra.mxu0 %v995
    %1215 = vmatmul.bf16.gmra.mxu0 %v733
    %v1216 = vpop.f32.mrf.mxu0
    %v1217 = vadd.f32 %v1124, %v1216
    %v1218 = vpop.f32.mrf.mxu0
    %1219 = vdwg.mxu0
    %1220 = vmatpush.bf16.msra.mxu0 %v1055
    %1221 = vmatpush.bf16.msra.mxu0 %v1051
    %1222 = vmatpush.bf16.msra.mxu0 %v1047
    %1223 = vmatpush.bf16.msra.mxu0 %v1043
    %1224 = vmatpush.bf16.msra.mxu0 %v1039
    %1225 = vmatpush.bf16.msra.mxu0 %v1035
    %1226 = vmatpush.bf16.msra.mxu0 %v1031
    %1227 = vmatpush.bf16.msra.mxu0 %v1027
    %1228 = vmatmul.bf16.gmra.mxu0 %v734
    %v1229 = vpop.f32.mrf.mxu0
    %v1230 = vadd.f32 %v1217, %v1229
    %v1231 = vpop.f32.mrf.mxu0
    %1232 = vdwg.mxu0
    %v1233 = vmul.f32 %v1152, 0.5
    %v1234 = vtanh.pop %v1233
    %v1235 = vadd.f32 %v1234, 1.0
    %v1236 = vmul.f32 %v1235, 0.5
    %v1237 = vmul.f32 %v1178, 0.5
    %v1238 = vtanh.pop %v1237
    %v1239 = vadd.f32 %v1238, 1.0
    %v1240 = vmul.f32 %v1239, 0.5
    %v1241 = vmul.f32 %v1236, %v1230
    %v1242 = vadd.f32 %v1204, %v1241
    %v1243 = vtanh.pop %v1242
    %v1244 = vsub.f32 1.0, %v1240
    %v1245 = vmul.f32 %v1244, %v1243
    %v1246 = vmul.f32 %v1240, %v728
    %v1247 = vadd.f32 %v1245, %v1246
    %1248 = vst [vmem:[#allocation2 + $0x1] sm:$0x1] %v1247
    %s1249 = sld [smem:[#allocation9 + $0x2]]
    %s1250 = scalar_lea.vmem [#allocation13], %s1249
    %v1251 = vld [vmem:[%s1250] sm:$0x1]
    %v1252 = vpack.c.bf16 %v1251, %v1251
    %v1253 = vpack.c.bf16 %v1247, %v1247
    %v1254 = vld [vmem:[#allocation14] sm:$0xff]
    %v1255 = vld [vmem:[#allocation14 + $0x8] sm:$0xff]
    %v1256 = vld [vmem:[#allocation14 + $0x10] sm:$0xff]
    %v1257 = vld [vmem:[#allocation14 + $0x18] sm:$0xff]
    %v1258 = vld [vmem:[#allocation14 + $0x20] sm:$0xff]
    %v1259 = vld [vmem:[#allocation14 + $0x28] sm:$0xff]
    %v1260 = vld [vmem:[#allocation14 + $0x30] sm:$0xff]
    %v1261 = vld [vmem:[#allocation14 + $0x38] sm:$0xff]
    %v1262 = vld [vmem:[#allocation14 + $0x40] sm:$0xff]
    %v1263 = vld [vmem:[#allocation14 + $0x48] sm:$0xff]
    %v1264 = vld [vmem:[#allocation14 + $0x50] sm:$0xff]
    %v1265 = vld [vmem:[#allocation14 + $0x58] sm:$0xff]
    %v1266 = vld [vmem:[#allocation14 + $0x60] sm:$0xff]
    %v1267 = vld [vmem:[#allocation14 + $0x68] sm:$0xff]
    %v1268 = vld [vmem:[#allocation14 + $0x70] sm:$0xff]
    %v1269 = vld [vmem:[#allocation14 + $0x78] sm:$0xff]
    %v1270 = vld [vmem:[#allocation14 + $0x80] sm:$0xff]
    %v1271 = vld [vmem:[#allocation14 + $0x88] sm:$0xff]
    %v1272 = vld [vmem:[#allocation14 + $0x90] sm:$0xff]
    %v1273 = vld [vmem:[#allocation14 + $0x98] sm:$0xff]
    %v1274 = vld [vmem:[#allocation14 + $0xa0] sm:$0xff]
    %v1275 = vld [vmem:[#allocation14 + $0xa8] sm:$0xff]
    %v1276 = vld [vmem:[#allocation14 + $0xb0] sm:$0xff]
    %v1277 = vld [vmem:[#allocation14 + $0xb8] sm:$0xff]
    %v1278 = vld [vmem:[#allocation14 + $0xc0] sm:$0xff]
    %v1279 = vld [vmem:[#allocation14 + $0xc8] sm:$0xff]
    %v1280 = vld [vmem:[#allocation14 + $0xd0] sm:$0xff]
    %v1281 = vld [vmem:[#allocation14 + $0xd8] sm:$0xff]
    %v1282 = vld [vmem:[#allocation14 + $0xe0] sm:$0xff]
    %v1283 = vld [vmem:[#allocation14 + $0xe8] sm:$0xff]
    %v1284 = vld [vmem:[#allocation14 + $0xf0] sm:$0xff]
    %v1285 = vld [vmem:[#allocation14 + $0xf8] sm:$0xff]
    %v1286 = vld [vmem:[#allocation14 + $0x100] sm:$0xff]
    %v1287 = vld [vmem:[#allocation14 + $0x108] sm:$0xff]
    %v1288 = vld [vmem:[#allocation14 + $0x110] sm:$0xff]
    %v1289 = vld [vmem:[#allocation14 + $0x118] sm:$0xff]
    %v1290 = vld [vmem:[#allocation14 + $0x120] sm:$0xff]
    %v1291 = vld [vmem:[#allocation14 + $0x128] sm:$0xff]
    %v1292 = vld [vmem:[#allocation14 + $0x130] sm:$0xff]
    %v1293 = vld [vmem:[#allocation14 + $0x138] sm:$0xff]
    %v1294 = vld [vmem:[#allocation14 + $0x140] sm:$0xff]
    %v1295 = vld [vmem:[#allocation14 + $0x148] sm:$0xff]
    %v1296 = vld [vmem:[#allocation14 + $0x150] sm:$0xff]
    %v1297 = vld [vmem:[#allocation14 + $0x158] sm:$0xff]
    %v1298 = vld [vmem:[#allocation14 + $0x160] sm:$0xff]
    %v1299 = vld [vmem:[#allocation14 + $0x168] sm:$0xff]
    %v1300 = vld [vmem:[#allocation14 + $0x170] sm:$0xff]
    %v1301 = vld [vmem:[#allocation14 + $0x178] sm:$0xff]
    %v1302 = vld [vmem:[#allocation14 + $0x180] sm:$0xff]
    %v1303 = vld [vmem:[#allocation14 + $0x188] sm:$0xff]
    %v1304 = vld [vmem:[#allocation14 + $0x190] sm:$0xff]
    %v1305 = vld [vmem:[#allocation14 + $0x198] sm:$0xff]
    %v1306 = vld [vmem:[#allocation14 + $0x1a0] sm:$0xff]
    %v1307 = vld [vmem:[#allocation14 + $0x1a8] sm:$0xff]
    %v1308 = vld [vmem:[#allocation14 + $0x1b0] sm:$0xff]
    %v1309 = vld [vmem:[#allocation14 + $0x1b8] sm:$0xff]
    %v1310 = vld [vmem:[#allocation14 + $0x1c0] sm:$0xff]
    %v1311 = vld [vmem:[#allocation14 + $0x1c8] sm:$0xff]
    %v1312 = vld [vmem:[#allocation14 + $0x1d0] sm:$0xff]
    %v1313 = vld [vmem:[#allocation14 + $0x1d8] sm:$0xff]
    %v1314 = vld [vmem:[#allocation14 + $0x1e0] sm:$0xff]
    %v1315 = vld [vmem:[#allocation14 + $0x1e8] sm:$0xff]
    %v1316 = vld [vmem:[#allocation14 + $0x1f0] sm:$0xff]
    %v1317 = vld [vmem:[#allocation14 + $0x1f8] sm:$0xff]
    %v1318 = vld [vmem:[%s4] sm:$0xf]
    %v1383 = vunpack.c.l.b16 %v1254
    %v1384 = vunpack.c.h.b16 %v1254
    %v1385 = vunpack.c.l.b16 %v1255
    %v1386 = vunpack.c.h.b16 %v1255
    %v1387 = vunpack.c.l.b16 %v1256
    %v1388 = vunpack.c.h.b16 %v1256
    %v1389 = vunpack.c.l.b16 %v1257
    %v1390 = vunpack.c.h.b16 %v1257
    %v1391 = vunpack.c.l.b16 %v1258
    %v1392 = vunpack.c.h.b16 %v1258
    %v1393 = vunpack.c.l.b16 %v1259
    %v1394 = vunpack.c.h.b16 %v1259
    %v1395 = vunpack.c.l.b16 %v1260
    %v1396 = vunpack.c.h.b16 %v1260
    %v1397 = vunpack.c.l.b16 %v1261
    %v1398 = vunpack.c.h.b16 %v1261
    %v1399 = vunpack.c.l.b16 %v1262
    %v1400 = vunpack.c.h.b16 %v1262
    %v1401 = vunpack.c.l.b16 %v1263
    %v1402 = vunpack.c.h.b16 %v1263
    %v1403 = vunpack.c.l.b16 %v1264
    %v1404 = vunpack.c.h.b16 %v1264
    %v1405 = vunpack.c.l.b16 %v1265
    %v1406 = vunpack.c.h.b16 %v1265
    %v1407 = vunpack.c.l.b16 %v1266
    %v1408 = vunpack.c.h.b16 %v1266
    %v1409 = vunpack.c.l.b16 %v1267
    %v1410 = vunpack.c.h.b16 %v1267
    %v1411 = vunpack.c.l.b16 %v1268
    %v1412 = vunpack.c.h.b16 %v1268
    %v1413 = vunpack.c.l.b16 %v1269
    %v1414 = vunpack.c.h.b16 %v1269
    %v1415 = vunpack.c.l.b16 %v1270
    %v1416 = vunpack.c.h.b16 %v1270
    %v1417 = vunpack.c.l.b16 %v1271
    %v1418 = vunpack.c.h.b16 %v1271
    %v1419 = vunpack.c.l.b16 %v1272
    %v1420 = vunpack.c.h.b16 %v1272
    %v1421 = vunpack.c.l.b16 %v1273
    %v1422 = vunpack.c.h.b16 %v1273
    %v1423 = vunpack.c.l.b16 %v1274
    %v1424 = vunpack.c.h.b16 %v1274
    %v1425 = vunpack.c.l.b16 %v1275
    %v1426 = vunpack.c.h.b16 %v1275
    %v1427 = vunpack.c.l.b16 %v1276
    %v1428 = vunpack.c.h.b16 %v1276
    %v1429 = vunpack.c.l.b16 %v1277
    %v1430 = vunpack.c.h.b16 %v1277
    %v1431 = vunpack.c.l.b16 %v1278
    %v1432 = vunpack.c.h.b16 %v1278
    %v1433 = vunpack.c.l.b16 %v1279
    %v1434 = vunpack.c.h.b16 %v1279
    %v1435 = vunpack.c.l.b16 %v1280
    %v1436 = vunpack.c.h.b16 %v1280
    %v1437 = vunpack.c.l.b16 %v1281
    %v1438 = vunpack.c.h.b16 %v1281
    %v1439 = vunpack.c.l.b16 %v1282
    %v1440 = vunpack.c.h.b16 %v1282
    %v1441 = vunpack.c.l.b16 %v1283
    %v1442 = vunpack.c.h.b16 %v1283
    %v1443 = vunpack.c.l.b16 %v1284
    %v1444 = vunpack.c.h.b16 %v1284
    %v1445 = vunpack.c.l.b16 %v1285
    %v1446 = vunpack.c.h.b16 %v1285
    %v1447 = vunpack.c.l.b16 %v1286
    %v1448 = vunpack.c.h.b16 %v1286
    %v1449 = vunpack.c.l.b16 %v1287
    %v1450 = vunpack.c.h.b16 %v1287
    %v1451 = vunpack.c.l.b16 %v1288
    %v1452 = vunpack.c.h.b16 %v1288
    %v1453 = vunpack.c.l.b16 %v1289
    %v1454 = vunpack.c.h.b16 %v1289
    %v1455 = vunpack.c.l.b16 %v1290
    %v1456 = vunpack.c.h.b16 %v1290
    %v1457 = vunpack.c.l.b16 %v1291
    %v1458 = vunpack.c.h.b16 %v1291
    %v1459 = vunpack.c.l.b16 %v1292
    %v1460 = vunpack.c.h.b16 %v1292
    %v1461 = vunpack.c.l.b16 %v1293
    %v1462 = vunpack.c.h.b16 %v1293
    %v1463 = vunpack.c.l.b16 %v1294
    %v1464 = vunpack.c.h.b16 %v1294
    %v1465 = vunpack.c.l.b16 %v1295
    %v1466 = vunpack.c.h.b16 %v1295
    %v1467 = vunpack.c.l.b16 %v1296
    %v1468 = vunpack.c.h.b16 %v1296
    %v1469 = vunpack.c.l.b16 %v1297
    %v1470 = vunpack.c.h.b16 %v1297
    %v1471 = vunpack.c.l.b16 %v1298
    %v1472 = vunpack.c.h.b16 %v1298
    %v1473 = vunpack.c.l.b16 %v1299
    %v1474 = vunpack.c.h.b16 %v1299
    %v1475 = vunpack.c.l.b16 %v1300
    %v1476 = vunpack.c.h.b16 %v1300
    %v1477 = vunpack.c.l.b16 %v1301
    %v1478 = vunpack.c.h.b16 %v1301
    %v1479 = vunpack.c.l.b16 %v1302
    %v1480 = vunpack.c.h.b16 %v1302
    %v1481 = vunpack.c.l.b16 %v1303
    %v1482 = vunpack.c.h.b16 %v1303
    %v1483 = vunpack.c.l.b16 %v1304
    %v1484 = vunpack.c.h.b16 %v1304
    %v1485 = vunpack.c.l.b16 %v1305
    %v1486 = vunpack.c.h.b16 %v1305
    %v1487 = vunpack.c.l.b16 %v1306
    %v1488 = vunpack.c.h.b16 %v1306
    %v1489 = vunpack.c.l.b16 %v1307
    %v1490 = vunpack.c.h.b16 %v1307
    %v1491 = vunpack.c.l.b16 %v1308
    %v1492 = vunpack.c.h.b16 %v1308
    %v1493 = vunpack.c.l.b16 %v1309
    %v1494 = vunpack.c.h.b16 %v1309
    %v1495 = vunpack.c.l.b16 %v1310
    %v1496 = vunpack.c.h.b16 %v1310
    %v1497 = vunpack.c.l.b16 %v1311
    %v1498 = vunpack.c.h.b16 %v1311
    %v1499 = vunpack.c.l.b16 %v1312
    %v1500 = vunpack.c.h.b16 %v1312
    %v1501 = vunpack.c.l.b16 %v1313
    %v1502 = vunpack.c.h.b16 %v1313
    %v1503 = vunpack.c.l.b16 %v1314
    %v1504 = vunpack.c.h.b16 %v1314
    %v1505 = vunpack.c.l.b16 %v1315
    %v1506 = vunpack.c.h.b16 %v1315
    %v1507 = vunpack.c.l.b16 %v1316
    %v1508 = vunpack.c.h.b16 %v1316
    %v1509 = vunpack.c.l.b16 %v1317
    %v1510 = vunpack.c.h.b16 %v1317
    %v1511 = vpack.c.b16 %v1387, %v1383
    %v1512 = vpack.c.b16 %v1388, %v1384
    %v1513 = vpack.c.b16 %v1389, %v1385
    %v1514 = vpack.c.b16 %v1390, %v1386
    %v1515 = vpack.c.b16 %v1395, %v1391
    %v1516 = vpack.c.b16 %v1396, %v1392
    %v1517 = vpack.c.b16 %v1397, %v1393
    %v1518 = vpack.c.b16 %v1398, %v1394
    %v1519 = vpack.c.b16 %v1403, %v1399
    %v1520 = vpack.c.b16 %v1404, %v1400
    %v1521 = vpack.c.b16 %v1405, %v1401
    %v1522 = vpack.c.b16 %v1406, %v1402
    %v1523 = vpack.c.b16 %v1411, %v1407
    %v1524 = vpack.c.b16 %v1412, %v1408
    %v1525 = vpack.c.b16 %v1413, %v1409
    %v1526 = vpack.c.b16 %v1414, %v1410
    %v1527 = vpack.c.b16 %v1419, %v1415
    %v1528 = vpack.c.b16 %v1420, %v1416
    %v1529 = vpack.c.b16 %v1421, %v1417
    %v1530 = vpack.c.b16 %v1422, %v1418
    %v1531 = vpack.c.b16 %v1427, %v1423
    %v1532 = vpack.c.b16 %v1428, %v1424
    %v1533 = vpack.c.b16 %v1429, %v1425
    %v1534 = vpack.c.b16 %v1430, %v1426
    %v1535 = vpack.c.b16 %v1435, %v1431
    %v1536 = vpack.c.b16 %v1436, %v1432
    %v1537 = vpack.c.b16 %v1437, %v1433
    %v1538 = vpack.c.b16 %v1438, %v1434
    %v1539 = vpack.c.b16 %v1443, %v1439
    %v1540 = vpack.c.b16 %v1444, %v1440
    %v1541 = vpack.c.b16 %v1445, %v1441
    %v1542 = vpack.c.b16 %v1446, %v1442
    %v1543 = vpack.c.b16 %v1451, %v1447
    %v1544 = vpack.c.b16 %v1452, %v1448
    %v1545 = vpack.c.b16 %v1453, %v1449
    %v1546 = vpack.c.b16 %v1454, %v1450
    %v1547 = vpack.c.b16 %v1459, %v1455
    %v1548 = vpack.c.b16 %v1460, %v1456
    %v1549 = vpack.c.b16 %v1461, %v1457
    %v1550 = vpack.c.b16 %v1462, %v1458
    %v1551 = vpack.c.b16 %v1467, %v1463
    %v1552 = vpack.c.b16 %v1468, %v1464
    %v1553 = vpack.c.b16 %v1469, %v1465
    %v1554 = vpack.c.b16 %v1470, %v1466
    %v1555 = vpack.c.b16 %v1475, %v1471
    %v1556 = vpack.c.b16 %v1476, %v1472
    %v1557 = vpack.c.b16 %v1477, %v1473
    %v1558 = vpack.c.b16 %v1478, %v1474
    %v1559 = vpack.c.b16 %v1483, %v1479
    %v1560 = vpack.c.b16 %v1484, %v1480
    %v1561 = vpack.c.b16 %v1485, %v1481
    %v1562 = vpack.c.b16 %v1486, %v1482
    %v1563 = vpack.c.b16 %v1491, %v1487
    %v1564 = vpack.c.b16 %v1492, %v1488
    %v1565 = vpack.c.b16 %v1493, %v1489
    %v1566 = vpack.c.b16 %v1494, %v1490
    %v1567 = vpack.c.b16 %v1499, %v1495
    %v1568 = vpack.c.b16 %v1500, %v1496
    %v1569 = vpack.c.b16 %v1501, %v1497
    %v1570 = vpack.c.b16 %v1502, %v1498
    %v1571 = vpack.c.b16 %v1507, %v1503
    %v1572 = vpack.c.b16 %v1508, %v1504
    %v1573 = vpack.c.b16 %v1509, %v1505
    %v1574 = vpack.c.b16 %v1510, %v1506
    %v1640 = vperm.slane %v1318, 0
    %v1641 = vperm.slane %v1318, 1
    %v1642 = vperm.slane %v1318, 2
    %v1643 = vperm.slane %v1318, 3
    %1648 = vmatpush.bf16.msra.mxu0 %v1539
    %1649 = vmatpush.bf16.msra.mxu0 %v1535
    %1650 = vmatpush.bf16.msra.mxu0 %v1531
    %1651 = vmatpush.bf16.msra.mxu0 %v1527
    %1652 = vmatpush.bf16.msra.mxu0 %v1523
    %1653 = vmatpush.bf16.msra.mxu0 %v1519
    %1654 = vmatpush.bf16.msra.mxu0 %v1515
    %1655 = vmatpush.bf16.msra.mxu0 %v1511
    %1656 = vmatmul.bf16.gmra.mxu0 %v1252
    %v1657 = vpop.f32.mrf.mxu0
    %v1658 = vadd.f32 %v1640, %v1657
    %v1659 = vpop.f32.mrf.mxu0
    %1660 = vdwg.mxu0
    %1661 = vmatpush.bf16.msra.mxu0 %v1571
    %1662 = vmatpush.bf16.msra.mxu0 %v1567
    %1663 = vmatpush.bf16.msra.mxu0 %v1563
    %1664 = vmatpush.bf16.msra.mxu0 %v1559
    %1665 = vmatpush.bf16.msra.mxu0 %v1555
    %1666 = vmatpush.bf16.msra.mxu0 %v1551
    %1667 = vmatpush.bf16.msra.mxu0 %v1547
    %1668 = vmatpush.bf16.msra.mxu0 %v1543
    %1669 = vmatmul.bf16.gmra.mxu0 %v1253
    %v1670 = vpop.f32.mrf.mxu0
    %v1671 = vadd.f32 %v1658, %v1670
    %v1672 = vpop.f32.mrf.mxu0
    %1673 = vdwg.mxu0
    %1674 = vmatpush.bf16.msra.mxu0 %v1540
    %1675 = vmatpush.bf16.msra.mxu0 %v1536
    %1676 = vmatpush.bf16.msra.mxu0 %v1532
    %1677 = vmatpush.bf16.msra.mxu0 %v1528
    %1678 = vmatpush.bf16.msra.mxu0 %v1524
    %1679 = vmatpush.bf16.msra.mxu0 %v1520
    %1680 = vmatpush.bf16.msra.mxu0 %v1516
    %1681 = vmatpush.bf16.msra.mxu0 %v1512
    %1682 = vmatmul.bf16.gmra.mxu0 %v1252
    %v1683 = vpop.f32.mrf.mxu0
    %v1684 = vadd.f32 %v1641, %v1683
    %v1685 = vpop.f32.mrf.mxu0
    %1686 = vdwg.mxu0
    %1687 = vmatpush.bf16.msra.mxu0 %v1572
    %1688 = vmatpush.bf16.msra.mxu0 %v1568
    %1689 = vmatpush.bf16.msra.mxu0 %v1564
    %1690 = vmatpush.bf16.msra.mxu0 %v1560
    %1691 = vmatpush.bf16.msra.mxu0 %v1556
    %1692 = vmatpush.bf16.msra.mxu0 %v1552
    %1693 = vmatpush.bf16.msra.mxu0 %v1548
    %1694 = vmatpush.bf16.msra.mxu0 %v1544
    %1695 = vmatmul.bf16.gmra.mxu0 %v1253
    %v1696 = vpop.f32.mrf.mxu0
    %v1697 = vadd.f32 %v1684, %v1696
    %v1698 = vpop.f32.mrf.mxu0
    %1699 = vdwg.mxu0
    %1700 = vmatpush.bf16.msra.mxu0 %v1541
    %1701 = vmatpush.bf16.msra.mxu0 %v1537
    %1702 = vmatpush.bf16.msra.mxu0 %v1533
    %1703 = vmatpush.bf16.msra.mxu0 %v1529
    %1704 = vmatpush.bf16.msra.mxu0 %v1525
    %1705 = vmatpush.bf16.msra.mxu0 %v1521
    %1706 = vmatpush.bf16.msra.mxu0 %v1517
    %1707 = vmatpush.bf16.msra.mxu0 %v1513
    %1708 = vmatmul.bf16.gmra.mxu0 %v1252
    %v1709 = vpop.f32.mrf.mxu0
    %v1710 = vadd.f32 %v1642, %v1709
    %v1711 = vpop.f32.mrf.mxu0
    %1712 = vdwg.mxu0
    %1713 = vmatpush.bf16.msra.mxu0 %v1573
    %1714 = vmatpush.bf16.msra.mxu0 %v1569
    %1715 = vmatpush.bf16.msra.mxu0 %v1565
    %1716 = vmatpush.bf16.msra.mxu0 %v1561
    %1717 = vmatpush.bf16.msra.mxu0 %v1557
    %1718 = vmatpush.bf16.msra.mxu0 %v1553
    %1719 = vmatpush.bf16.msra.mxu0 %v1549
    %1720 = vmatpush.bf16.msra.mxu0 %v1545
    %1721 = vmatmul.bf16.gmra.mxu0 %v1253
    %v1722 = vpop.f32.mrf.mxu0
    %v1723 = vadd.f32 %v1710, %v1722
    %v1724 = vpop.f32.mrf.mxu0
    %1725 = vdwg.mxu0
    %1726 = vmatpush.bf16.msra.mxu0 %v1542
    %1727 = vmatpush.bf16.msra.mxu0 %v1538
    %1728 = vmatpush.bf16.msra.mxu0 %v1534
    %1729 = vmatpush.bf16.msra.mxu0 %v1530
    %1730 = vmatpush.bf16.msra.mxu0 %v1526
    %1731 = vmatpush.bf16.msra.mxu0 %v1522
    %1732 = vmatpush.bf16.msra.mxu0 %v1518
    %1733 = vmatpush.bf16.msra.mxu0 %v1514
    %1734 = vmatmul.bf16.gmra.mxu0 %v1252
    %v1735 = vpop.f32.mrf.mxu0
    %v1736 = vadd.f32 %v1643, %v1735
    %v1737 = vpop.f32.mrf.mxu0
    %1738 = vdwg.mxu0
    %1739 = vmatpush.bf16.msra.mxu0 %v1574
    %1740 = vmatpush.bf16.msra.mxu0 %v1570
    %1741 = vmatpush.bf16.msra.mxu0 %v1566
    %1742 = vmatpush.bf16.msra.mxu0 %v1562
    %1743 = vmatpush.bf16.msra.mxu0 %v1558
    %1744 = vmatpush.bf16.msra.mxu0 %v1554
    %1745 = vmatpush.bf16.msra.mxu0 %v1550
    %1746 = vmatpush.bf16.msra.mxu0 %v1546
    %1747 = vmatmul.bf16.gmra.mxu0 %v1253
    %v1748 = vpop.f32.mrf.mxu0
    %v1749 = vadd.f32 %v1736, %v1748
    %v1750 = vpop.f32.mrf.mxu0
    %1751 = vdwg.mxu0
    %v1752 = vmul.f32 %v1671, 0.5
    %v1753 = vtanh.pop %v1752
    %v1754 = vadd.f32 %v1753, 1.0
    %v1755 = vmul.f32 %v1754, 0.5
    %v1756 = vmul.f32 %v1697, 0.5
    %v1757 = vtanh.pop %v1756
    %v1758 = vadd.f32 %v1757, 1.0
    %v1759 = vmul.f32 %v1758, 0.5
    %v1760 = vmul.f32 %v1755, %v1749
    %v1761 = vadd.f32 %v1723, %v1760
    %v1762 = vtanh.pop %v1761
    %v1763 = vsub.f32 1.0, %v1759
    %v1764 = vmul.f32 %v1763, %v1762
    %v1765 = vmul.f32 %v1759, %v1247
    %v1766 = vadd.f32 %v1764, %v1765
    %1767 = vst [vmem:[#allocation2 + $0x2] sm:$0x1] %v1766
    %s1768 = sld [smem:[#allocation9 + $0x3]]
    %s1769 = scalar_lea.vmem [#allocation13], %s1768
    %v1770 = vld [vmem:[%s1769] sm:$0x1]
    %v1771 = vpack.c.bf16 %v1770, %v1770
    %v1772 = vpack.c.bf16 %v1766, %v1766
    %v1773 = vld [vmem:[#allocation14] sm:$0xff]
    %v1774 = vld [vmem:[#allocation14 + $0x8] sm:$0xff]
    %v1775 = vld [vmem:[#allocation14 + $0x10] sm:$0xff]
    %v1776 = vld [vmem:[#allocation14 + $0x18] sm:$0xff]
    %v1777 = vld [vmem:[#allocation14 + $0x20] sm:$0xff]
    %v1778 = vld [vmem:[#allocation14 + $0x28] sm:$0xff]
    %v1779 = vld [vmem:[#allocation14 + $0x30] sm:$0xff]
    %v1780 = vld [vmem:[#allocation14 + $0x38] sm:$0xff]
    %v1781 = vld [vmem:[#allocation14 + $0x40] sm:$0xff]
    %v1782 = vld [vmem:[#allocation14 + $0x48] sm:$0xff]
    %v1783 = vld [vmem:[#allocation14 + $0x50] sm:$0xff]
    %v1784 = vld [vmem:[#allocation14 + $0x58] sm:$0xff]
    %v1785 = vld [vmem:[#allocation14 + $0x60] sm:$0xff]
    %v1786 = vld [vmem:[#allocation14 + $0x68] sm:$0xff]
    %v1787 = vld [vmem:[#allocation14 + $0x70] sm:$0xff]
    %v1788 = vld [vmem:[#allocation14 + $0x78] sm:$0xff]
    %v1789 = vld [vmem:[#allocation14 + $0x80] sm:$0xff]
    %v1790 = vld [vmem:[#allocation14 + $0x88] sm:$0xff]
    %v1791 = vld [vmem:[#allocation14 + $0x90] sm:$0xff]
    %v1792 = vld [vmem:[#allocation14 + $0x98] sm:$0xff]
    %v1793 = vld [vmem:[#allocation14 + $0xa0] sm:$0xff]
    %v1794 = vld [vmem:[#allocation14 + $0xa8] sm:$0xff]
    %v1795 = vld [vmem:[#allocation14 + $0xb0] sm:$0xff]
    %v1796 = vld [vmem:[#allocation14 + $0xb8] sm:$0xff]
    %v1797 = vld [vmem:[#allocation14 + $0xc0] sm:$0xff]
    %v1798 = vld [vmem:[#allocation14 + $0xc8] sm:$0xff]
    %v1799 = vld [vmem:[#allocation14 + $0xd0] sm:$0xff]
    %v1800 = vld [vmem:[#allocation14 + $0xd8] sm:$0xff]
    %v1801 = vld [vmem:[#allocation14 + $0xe0] sm:$0xff]
    %v1802 = vld [vmem:[#allocation14 + $0xe8] sm:$0xff]
    %v1803 = vld [vmem:[#allocation14 + $0xf0] sm:$0xff]
    %v1804 = vld [vmem:[#allocation14 + $0xf8] sm:$0xff]
    %v1805 = vld [vmem:[#allocation14 + $0x100] sm:$0xff]
    %v1806 = vld [vmem:[#allocation14 + $0x108] sm:$0xff]
    %v1807 = vld [vmem:[#allocation14 + $0x110] sm:$0xff]
    %v1808 = vld [vmem:[#allocation14 + $0x118] sm:$0xff]
    %v1809 = vld [vmem:[#allocation14 + $0x120] sm:$0xff]
    %v1810 = vld [vmem:[#allocation14 + $0x128] sm:$0xff]
    %v1811 = vld [vmem:[#allocation14 + $0x130] sm:$0xff]
    %v1812 = vld [vmem:[#allocation14 + $0x138] sm:$0xff]
    %v1813 = vld [vmem:[#allocation14 + $0x140] sm:$0xff]
    %v1814 = vld [vmem:[#allocation14 + $0x148] sm:$0xff]
    %v1815 = vld [vmem:[#allocation14 + $0x150] sm:$0xff]
    %v1816 = vld [vmem:[#allocation14 + $0x158] sm:$0xff]
    %v1817 = vld [vmem:[#allocation14 + $0x160] sm:$0xff]
    %v1818 = vld [vmem:[#allocation14 + $0x168] sm:$0xff]
    %v1819 = vld [vmem:[#allocation14 + $0x170] sm:$0xff]
    %v1820 = vld [vmem:[#allocation14 + $0x178] sm:$0xff]
    %v1821 = vld [vmem:[#allocation14 + $0x180] sm:$0xff]
    %v1822 = vld [vmem:[#allocation14 + $0x188] sm:$0xff]
    %v1823 = vld [vmem:[#allocation14 + $0x190] sm:$0xff]
    %v1824 = vld [vmem:[#allocation14 + $0x198] sm:$0xff]
    %v1825 = vld [vmem:[#allocation14 + $0x1a0] sm:$0xff]
    %v1826 = vld [vmem:[#allocation14 + $0x1a8] sm:$0xff]
    %v1827 = vld [vmem:[#allocation14 + $0x1b0] sm:$0xff]
    %v1828 = vld [vmem:[#allocation14 + $0x1b8] sm:$0xff]
    %v1829 = vld [vmem:[#allocation14 + $0x1c0] sm:$0xff]
    %v1830 = vld [vmem:[#allocation14 + $0x1c8] sm:$0xff]
    %v1831 = vld [vmem:[#allocation14 + $0x1d0] sm:$0xff]
    %v1832 = vld [vmem:[#allocation14 + $0x1d8] sm:$0xff]
    %v1833 = vld [vmem:[#allocation14 + $0x1e0] sm:$0xff]
    %v1834 = vld [vmem:[#allocation14 + $0x1e8] sm:$0xff]
    %v1835 = vld [vmem:[#allocation14 + $0x1f0] sm:$0xff]
    %v1836 = vld [vmem:[#allocation14 + $0x1f8] sm:$0xff]
    %v1837 = vld [vmem:[%s4] sm:$0xf]
    %v1902 = vunpack.c.l.b16 %v1773
    %v1903 = vunpack.c.h.b16 %v1773
    %v1904 = vunpack.c.l.b16 %v1774
    %v1905 = vunpack.c.h.b16 %v1774
    %v1906 = vunpack.c.l.b16 %v1775
    %v1907 = vunpack.c.h.b16 %v1775
    %v1908 = vunpack.c.l.b16 %v1776
    %v1909 = vunpack.c.h.b16 %v1776
    %v1910 = vunpack.c.l.b16 %v1777
    %v1911 = vunpack.c.h.b16 %v1777
    %v1912 = vunpack.c.l.b16 %v1778
    %v1913 = vunpack.c.h.b16 %v1778
    %v1914 = vunpack.c.l.b16 %v1779
    %v1915 = vunpack.c.h.b16 %v1779
    %v1916 = vunpack.c.l.b16 %v1780
    %v1917 = vunpack.c.h.b16 %v1780
    %v1918 = vunpack.c.l.b16 %v1781
    %v1919 = vunpack.c.h.b16 %v1781
    %v1920 = vunpack.c.l.b16 %v1782
    %v1921 = vunpack.c.h.b16 %v1782
    %v1922 = vunpack.c.l.b16 %v1783
    %v1923 = vunpack.c.h.b16 %v1783
    %v1924 = vunpack.c.l.b16 %v1784
    %v1925 = vunpack.c.h.b16 %v1784
    %v1926 = vunpack.c.l.b16 %v1785
    %v1927 = vunpack.c.h.b16 %v1785
    %v1928 = vunpack.c.l.b16 %v1786
    %v1929 = vunpack.c.h.b16 %v1786
    %v1930 = vunpack.c.l.b16 %v1787
    %v1931 = vunpack.c.h.b16 %v1787
    %v1932 = vunpack.c.l.b16 %v1788
    %v1933 = vunpack.c.h.b16 %v1788
    %v1934 = vunpack.c.l.b16 %v1789
    %v1935 = vunpack.c.h.b16 %v1789
    %v1936 = vunpack.c.l.b16 %v1790
    %v1937 = vunpack.c.h.b16 %v1790
    %v1938 = vunpack.c.l.b16 %v1791
    %v1939 = vunpack.c.h.b16 %v1791
    %v1940 = vunpack.c.l.b16 %v1792
    %v1941 = vunpack.c.h.b16 %v1792
    %v1942 = vunpack.c.l.b16 %v1793
    %v1943 = vunpack.c.h.b16 %v1793
    %v1944 = vunpack.c.l.b16 %v1794
    %v1945 = vunpack.c.h.b16 %v1794
    %v1946 = vunpack.c.l.b16 %v1795
    %v1947 = vunpack.c.h.b16 %v1795
    %v1948 = vunpack.c.l.b16 %v1796
    %v1949 = vunpack.c.h.b16 %v1796
    %v1950 = vunpack.c.l.b16 %v1797
    %v1951 = vunpack.c.h.b16 %v1797
    %v1952 = vunpack.c.l.b16 %v1798
    %v1953 = vunpack.c.h.b16 %v1798
    %v1954 = vunpack.c.l.b16 %v1799
    %v1955 = vunpack.c.h.b16 %v1799
    %v1956 = vunpack.c.l.b16 %v1800
    %v1957 = vunpack.c.h.b16 %v1800
    %v1958 = vunpack.c.l.b16 %v1801
    %v1959 = vunpack.c.h.b16 %v1801
    %v1960 = vunpack.c.l.b16 %v1802
    %v1961 = vunpack.c.h.b16 %v1802
    %v1962 = vunpack.c.l.b16 %v1803
    %v1963 = vunpack.c.h.b16 %v1803
    %v1964 = vunpack.c.l.b16 %v1804
    %v1965 = vunpack.c.h.b16 %v1804
    %v1966 = vunpack.c.l.b16 %v1805
    %v1967 = vunpack.c.h.b16 %v1805
    %v1968 = vunpack.c.l.b16 %v1806
    %v1969 = vunpack.c.h.b16 %v1806
    %v1970 = vunpack.c.l.b16 %v1807
    %v1971 = vunpack.c.h.b16 %v1807
    %v1972 = vunpack.c.l.b16 %v1808
    %v1973 = vunpack.c.h.b16 %v1808
    %v1974 = vunpack.c.l.b16 %v1809
    %v1975 = vunpack.c.h.b16 %v1809
    %v1976 = vunpack.c.l.b16 %v1810
    %v1977 = vunpack.c.h.b16 %v1810
    %v1978 = vunpack.c.l.b16 %v1811
    %v1979 = vunpack.c.h.b16 %v1811
    %v1980 = vunpack.c.l.b16 %v1812
    %v1981 = vunpack.c.h.b16 %v1812
    %v1982 = vunpack.c.l.b16 %v1813
    %v1983 = vunpack.c.h.b16 %v1813
    %v1984 = vunpack.c.l.b16 %v1814
    %v1985 = vunpack.c.h.b16 %v1814
    %v1986 = vunpack.c.l.b16 %v1815
    %v1987 = vunpack.c.h.b16 %v1815
    %v1988 = vunpack.c.l.b16 %v1816
    %v1989 = vunpack.c.h.b16 %v1816
    %v1990 = vunpack.c.l.b16 %v1817
    %v1991 = vunpack.c.h.b16 %v1817
    %v1992 = vunpack.c.l.b16 %v1818
    %v1993 = vunpack.c.h.b16 %v1818
    %v1994 = vunpack.c.l.b16 %v1819
    %v1995 = vunpack.c.h.b16 %v1819
    %v1996 = vunpack.c.l.b16 %v1820
    %v1997 = vunpack.c.h.b16 %v1820
    %v1998 = vunpack.c.l.b16 %v1821
    %v1999 = vunpack.c.h.b16 %v1821
    %v2000 = vunpack.c.l.b16 %v1822
    %v2001 = vunpack.c.h.b16 %v1822
    %v2002 = vunpack.c.l.b16 %v1823
    %v2003 = vunpack.c.h.b16 %v1823
    %v2004 = vunpack.c.l.b16 %v1824
    %v2005 = vunpack.c.h.b16 %v1824
    %v2006 = vunpack.c.l.b16 %v1825
    %v2007 = vunpack.c.h.b16 %v1825
    %v2008 = vunpack.c.l.b16 %v1826
    %v2009 = vunpack.c.h.b16 %v1826
    %v2010 = vunpack.c.l.b16 %v1827
    %v2011 = vunpack.c.h.b16 %v1827
    %v2012 = vunpack.c.l.b16 %v1828
    %v2013 = vunpack.c.h.b16 %v1828
    %v2014 = vunpack.c.l.b16 %v1829
    %v2015 = vunpack.c.h.b16 %v1829
    %v2016 = vunpack.c.l.b16 %v1830
    %v2017 = vunpack.c.h.b16 %v1830
    %v2018 = vunpack.c.l.b16 %v1831
    %v2019 = vunpack.c.h.b16 %v1831
    %v2020 = vunpack.c.l.b16 %v1832
    %v2021 = vunpack.c.h.b16 %v1832
    %v2022 = vunpack.c.l.b16 %v1833
    %v2023 = vunpack.c.h.b16 %v1833
    %v2024 = vunpack.c.l.b16 %v1834
    %v2025 = vunpack.c.h.b16 %v1834
    %v2026 = vunpack.c.l.b16 %v1835
    %v2027 = vunpack.c.h.b16 %v1835
    %v2028 = vunpack.c.l.b16 %v1836
    %v2029 = vunpack.c.h.b16 %v1836
    %v2030 = vpack.c.b16 %v1906, %v1902
    %v2031 = vpack.c.b16 %v1907, %v1903
    %v2032 = vpack.c.b16 %v1908, %v1904
    %v2033 = vpack.c.b16 %v1909, %v1905
    %v2034 = vpack.c.b16 %v1914, %v1910
    %v2035 = vpack.c.b16 %v1915, %v1911
    %v2036 = vpack.c.b16 %v1916, %v1912
    %v2037 = vpack.c.b16 %v1917, %v1913
    %v2038 = vpack.c.b16 %v1922, %v1918
    %v2039 = vpack.c.b16 %v1923, %v1919
    %v2040 = vpack.c.b16 %v1924, %v1920
    %v2041 = vpack.c.b16 %v1925, %v1921
    %v2042 = vpack.c.b16 %v1930, %v1926
    %v2043 = vpack.c.b16 %v1931, %v1927
    %v2044 = vpack.c.b16 %v1932, %v1928
    %v2045 = vpack.c.b16 %v1933, %v1929
    %v2046 = vpack.c.b16 %v1938, %v1934
    %v2047 = vpack.c.b16 %v1939, %v1935
    %v2048 = vpack.c.b16 %v1940, %v1936
    %v2049 = vpack.c.b16 %v1941, %v1937
    %v2050 = vpack.c.b16 %v1946, %v1942
    %v2051 = vpack.c.b16 %v1947, %v1943
    %v2052 = vpack.c.b16 %v1948, %v1944
    %v2053 = vpack.c.b16 %v1949, %v1945
    %v2054 = vpack.c.b16 %v1954, %v1950
    %v2055 = vpack.c.b16 %v1955, %v1951
    %v2056 = vpack.c.b16 %v1956, %v1952
    %v2057 = vpack.c.b16 %v1957, %v1953
    %v2058 = vpack.c.b16 %v1962, %v1958
    %v2059 = vpack.c.b16 %v1963, %v1959
    %v2060 = vpack.c.b16 %v1964, %v1960
    %v2061 = vpack.c.b16 %v1965, %v1961
    %v2062 = vpack.c.b16 %v1970, %v1966
    %v2063 = vpack.c.b16 %v1971, %v1967
    %v2064 = vpack.c.b16 %v1972, %v1968
    %v2065 = vpack.c.b16 %v1973, %v1969
    %v2066 = vpack.c.b16 %v1978, %v1974
    %v2067 = vpack.c.b16 %v1979, %v1975
    %v2068 = vpack.c.b16 %v1980, %v1976
    %v2069 = vpack.c.b16 %v1981, %v1977
    %v2070 = vpack.c.b16 %v1986, %v1982
    %v2071 = vpack.c.b16 %v1987, %v1983
    %v2072 = vpack.c.b16 %v1988, %v1984
    %v2073 = vpack.c.b16 %v1989, %v1985
    %v2074 = vpack.c.b16 %v1994, %v1990
    %v2075 = vpack.c.b16 %v1995, %v1991
    %v2076 = vpack.c.b16 %v1996, %v1992
    %v2077 = vpack.c.b16 %v1997, %v1993
    %v2078 = vpack.c.b16 %v2002, %v1998
    %v2079 = vpack.c.b16 %v2003, %v1999
    %v2080 = vpack.c.b16 %v2004, %v2000
    %v2081 = vpack.c.b16 %v2005, %v2001
    %v2082 = vpack.c.b16 %v2010, %v2006
    %v2083 = vpack.c.b16 %v2011, %v2007
    %v2084 = vpack.c.b16 %v2012, %v2008
    %v2085 = vpack.c.b16 %v2013, %v2009
    %v2086 = vpack.c.b16 %v2018, %v2014
    %v2087 = vpack.c.b16 %v2019, %v2015
    %v2088 = vpack.c.b16 %v2020, %v2016
    %v2089 = vpack.c.b16 %v2021, %v2017
    %v2090 = vpack.c.b16 %v2026, %v2022
    %v2091 = vpack.c.b16 %v2027, %v2023
    %v2092 = vpack.c.b16 %v2028, %v2024
    %v2093 = vpack.c.b16 %v2029, %v2025
    %v2159 = vperm.slane %v1837, 0
    %v2160 = vperm.slane %v1837, 1
    %v2161 = vperm.slane %v1837, 2
    %v2162 = vperm.slane %v1837, 3
    %2167 = vmatpush.bf16.msra.mxu0 %v2058
    %2168 = vmatpush.bf16.msra.mxu0 %v2054
    %2169 = vmatpush.bf16.msra.mxu0 %v2050
    %2170 = vmatpush.bf16.msra.mxu0 %v2046
    %2171 = vmatpush.bf16.msra.mxu0 %v2042
    %2172 = vmatpush.bf16.msra.mxu0 %v2038
    %2173 = vmatpush.bf16.msra.mxu0 %v2034
    %2174 = vmatpush.bf16.msra.mxu0 %v2030
    %2175 = vmatmul.bf16.gmra.mxu0 %v1771
    %v2176 = vpop.f32.mrf.mxu0
    %v2177 = vadd.f32 %v2159, %v2176
    %v2178 = vpop.f32.mrf.mxu0
    %2179 = vdwg.mxu0
    %2180 = vmatpush.bf16.msra.mxu0 %v2090
    %2181 = vmatpush.bf16.msra.mxu0 %v2086
    %2182 = vmatpush.bf16.msra.mxu0 %v2082
    %2183 = vmatpush.bf16.msra.mxu0 %v2078
    %2184 = vmatpush.bf16.msra.mxu0 %v2074
    %2185 = vmatpush.bf16.msra.mxu0 %v2070
    %2186 = vmatpush.bf16.msra.mxu0 %v2066
    %2187 = vmatpush.bf16.msra.mxu0 %v2062
    %2188 = vmatmul.bf16.gmra.mxu0 %v1772
    %v2189 = vpop.f32.mrf.mxu0
    %v2190 = vadd.f32 %v2177, %v2189
    %v2191 = vpop.f32.mrf.mxu0
    %2192 = vdwg.mxu0
    %2193 = vmatpush.bf16.msra.mxu0 %v2059
    %2194 = vmatpush.bf16.msra.mxu0 %v2055
    %2195 = vmatpush.bf16.msra.mxu0 %v2051
    %2196 = vmatpush.bf16.msra.mxu0 %v2047
    %2197 = vmatpush.bf16.msra.mxu0 %v2043
    %2198 = vmatpush.bf16.msra.mxu0 %v2039
    %2199 = vmatpush.bf16.msra.mxu0 %v2035
    %2200 = vmatpush.bf16.msra.mxu0 %v2031
    %2201 = vmatmul.bf16.gmra.mxu0 %v1771
    %v2202 = vpop.f32.mrf.mxu0
    %v2203 = vadd.f32 %v2160, %v2202
    %v2204 = vpop.f32.mrf.mxu0
    %2205 = vdwg.mxu0
    %2206 = vmatpush.bf16.msra.mxu0 %v2091
    %2207 = vmatpush.bf16.msra.mxu0 %v2087
    %2208 = vmatpush.bf16.msra.mxu0 %v2083
    %2209 = vmatpush.bf16.msra.mxu0 %v2079
    %2210 = vmatpush.bf16.msra.mxu0 %v2075
    %2211 = vmatpush.bf16.msra.mxu0 %v2071
    %2212 = vmatpush.bf16.msra.mxu0 %v2067
    %2213 = vmatpush.bf16.msra.mxu0 %v2063
    %2214 = vmatmul.bf16.gmra.mxu0 %v1772
    %v2215 = vpop.f32.mrf.mxu0
    %v2216 = vadd.f32 %v2203, %v2215
    %v2217 = vpop.f32.mrf.mxu0
    %2218 = vdwg.mxu0
    %2219 = vmatpush.bf16.msra.mxu0 %v2060
    %2220 = vmatpush.bf16.msra.mxu0 %v2056
    %2221 = vmatpush.bf16.msra.mxu0 %v2052
    %2222 = vmatpush.bf16.msra.mxu0 %v2048
    %2223 = vmatpush.bf16.msra.mxu0 %v2044
    %2224 = vmatpush.bf16.msra.mxu0 %v2040
    %2225 = vmatpush.bf16.msra.mxu0 %v2036
    %2226 = vmatpush.bf16.msra.mxu0 %v2032
    %2227 = vmatmul.bf16.gmra.mxu0 %v1771
    %v2228 = vpop.f32.mrf.mxu0
    %v2229 = vadd.f32 %v2161, %v2228
    %v2230 = vpop.f32.mrf.mxu0
    %2231 = vdwg.mxu0
    %2232 = vmatpush.bf16.msra.mxu0 %v2092
    %2233 = vmatpush.bf16.msra.mxu0 %v2088
    %2234 = vmatpush.bf16.msra.mxu0 %v2084
    %2235 = vmatpush.bf16.msra.mxu0 %v2080
    %2236 = vmatpush.bf16.msra.mxu0 %v2076
    %2237 = vmatpush.bf16.msra.mxu0 %v2072
    %2238 = vmatpush.bf16.msra.mxu0 %v2068
    %2239 = vmatpush.bf16.msra.mxu0 %v2064
    %2240 = vmatmul.bf16.gmra.mxu0 %v1772
    %v2241 = vpop.f32.mrf.mxu0
    %v2242 = vadd.f32 %v2229, %v2241
    %v2243 = vpop.f32.mrf.mxu0
    %2244 = vdwg.mxu0
    %2245 = vmatpush.bf16.msra.mxu0 %v2061
    %2246 = vmatpush.bf16.msra.mxu0 %v2057
    %2247 = vmatpush.bf16.msra.mxu0 %v2053
    %2248 = vmatpush.bf16.msra.mxu0 %v2049
    %2249 = vmatpush.bf16.msra.mxu0 %v2045
    %2250 = vmatpush.bf16.msra.mxu0 %v2041
    %2251 = vmatpush.bf16.msra.mxu0 %v2037
    %2252 = vmatpush.bf16.msra.mxu0 %v2033
    %2253 = vmatmul.bf16.gmra.mxu0 %v1771
    %v2254 = vpop.f32.mrf.mxu0
    %v2255 = vadd.f32 %v2162, %v2254
    %v2256 = vpop.f32.mrf.mxu0
    %2257 = vdwg.mxu0
    %2258 = vmatpush.bf16.msra.mxu0 %v2093
    %2259 = vmatpush.bf16.msra.mxu0 %v2089
    %2260 = vmatpush.bf16.msra.mxu0 %v2085
    %2261 = vmatpush.bf16.msra.mxu0 %v2081
    %2262 = vmatpush.bf16.msra.mxu0 %v2077
    %2263 = vmatpush.bf16.msra.mxu0 %v2073
    %2264 = vmatpush.bf16.msra.mxu0 %v2069
    %2265 = vmatpush.bf16.msra.mxu0 %v2065
    %2266 = vmatmul.bf16.gmra.mxu0 %v1772
    %v2267 = vpop.f32.mrf.mxu0
    %v2268 = vadd.f32 %v2255, %v2267
    %v2269 = vpop.f32.mrf.mxu0
    %2270 = vdwg.mxu0
    %v2271 = vmul.f32 %v2190, 0.5
    %v2272 = vtanh.pop %v2271
    %v2273 = vadd.f32 %v2272, 1.0
    %v2274 = vmul.f32 %v2273, 0.5
    %v2275 = vmul.f32 %v2216, 0.5
    %v2276 = vtanh.pop %v2275
    %v2277 = vadd.f32 %v2276, 1.0
    %v2278 = vmul.f32 %v2277, 0.5
    %v2279 = vmul.f32 %v2274, %v2268
    %v2280 = vadd.f32 %v2242, %v2279
    %v2281 = vtanh.pop %v2280
    %v2282 = vsub.f32 1.0, %v2278
    %v2283 = vmul.f32 %v2282, %v2281
    %v2284 = vmul.f32 %v2278, %v1766
    %v2285 = vadd.f32 %v2283, %v2284
    %2286 = vst [vmem:[#allocation2 + $0x3] sm:$0x1] %v2285
    %s2287 = sld [smem:[#allocation9 + $0x4]]
    %s2288 = scalar_lea.vmem [#allocation13], %s2287
    %v2289 = vld [vmem:[%s2288] sm:$0x1]
    %v2290 = vpack.c.bf16 %v2289, %v2289
    %v2291 = vpack.c.bf16 %v2285, %v2285
    %v2292 = vld [vmem:[#allocation14] sm:$0xff]
    %v2293 = vld [vmem:[#allocation14 + $0x8] sm:$0xff]
    %v2294 = vld [vmem:[#allocation14 + $0x10] sm:$0xff]
    %v2295 = vld [vmem:[#allocation14 + $0x18] sm:$0xff]
    %v2296 = vld [vmem:[#allocation14 + $0x20] sm:$0xff]
    %v2297 = vld [vmem:[#allocation14 + $0x28] sm:$0xff]
    %v2298 = vld [vmem:[#allocation14 + $0x30] sm:$0xff]
    %v2299 = vld [vmem:[#allocation14 + $0x38] sm:$0xff]
    %v2300 = vld [vmem:[#allocation14 + $0x40] sm:$0xff]
    %v2301 = vld [vmem:[#allocation14 + $0x48] sm:$0xff]
    %v2302 = vld [vmem:[#allocation14 + $0x50] sm:$0xff]
    %v2303 = vld [vmem:[#allocation14 + $0x58] sm:$0xff]
    %v2304 = vld [vmem:[#allocation14 + $0x60] sm:$0xff]
    %v2305 = vld [vmem:[#allocation14 + $0x68] sm:$0xff]
    %v2306 = vld [vmem:[#allocation14 + $0x70] sm:$0xff]
    %v2307 = vld [vmem:[#allocation14 + $0x78] sm:$0xff]
    %v2308 = vld [vmem:[#allocation14 + $0x80] sm:$0xff]
    %v2309 = vld [vmem:[#allocation14 + $0x88] sm:$0xff]
    %v2310 = vld [vmem:[#allocation14 + $0x90] sm:$0xff]
    %v2311 = vld [vmem:[#allocation14 + $0x98] sm:$0xff]
    %v2312 = vld [vmem:[#allocation14 + $0xa0] sm:$0xff]
    %v2313 = vld [vmem:[#allocation14 + $0xa8] sm:$0xff]
    %v2314 = vld [vmem:[#allocation14 + $0xb0] sm:$0xff]
    %v2315 = vld [vmem:[#allocation14 + $0xb8] sm:$0xff]
    %v2316 = vld [vmem:[#allocation14 + $0xc0] sm:$0xff]
    %v2317 = vld [vmem:[#allocation14 + $0xc8] sm:$0xff]
    %v2318 = vld [vmem:[#allocation14 + $0xd0] sm:$0xff]
    %v2319 = vld [vmem:[#allocation14 + $0xd8] sm:$0xff]
    %v2320 = vld [vmem:[#allocation14 + $0xe0] sm:$0xff]
    %v2321 = vld [vmem:[#allocation14 + $0xe8] sm:$0xff]
    %v2322 = vld [vmem:[#allocation14 + $0xf0] sm:$0xff]
    %v2323 = vld [vmem:[#allocation14 + $0xf8] sm:$0xff]
    %v2324 = vld [vmem:[#allocation14 + $0x100] sm:$0xff]
    %v2325 = vld [vmem:[#allocation14 + $0x108] sm:$0xff]
    %v2326 = vld [vmem:[#allocation14 + $0x110] sm:$0xff]
    %v2327 = vld [vmem:[#allocation14 + $0x118] sm:$0xff]
    %v2328 = vld [vmem:[#allocation14 + $0x120] sm:$0xff]
    %v2329 = vld [vmem:[#allocation14 + $0x128] sm:$0xff]
    %v2330 = vld [vmem:[#allocation14 + $0x130] sm:$0xff]
    %v2331 = vld [vmem:[#allocation14 + $0x138] sm:$0xff]
    %v2332 = vld [vmem:[#allocation14 + $0x140] sm:$0xff]
    %v2333 = vld [vmem:[#allocation14 + $0x148] sm:$0xff]
    %v2334 = vld [vmem:[#allocation14 + $0x150] sm:$0xff]
    %v2335 = vld [vmem:[#allocation14 + $0x158] sm:$0xff]
    %v2336 = vld [vmem:[#allocation14 + $0x160] sm:$0xff]
    %v2337 = vld [vmem:[#allocation14 + $0x168] sm:$0xff]
    %v2338 = vld [vmem:[#allocation14 + $0x170] sm:$0xff]
    %v2339 = vld [vmem:[#allocation14 + $0x178] sm:$0xff]
    %v2340 = vld [vmem:[#allocation14 + $0x180] sm:$0xff]
    %v2341 = vld [vmem:[#allocation14 + $0x188] sm:$0xff]
    %v2342 = vld [vmem:[#allocation14 + $0x190] sm:$0xff]
    %v2343 = vld [vmem:[#allocation14 + $0x198] sm:$0xff]
    %v2344 = vld [vmem:[#allocation14 + $0x1a0] sm:$0xff]
    %v2345 = vld [vmem:[#allocation14 + $0x1a8] sm:$0xff]
    %v2346 = vld [vmem:[#allocation14 + $0x1b0] sm:$0xff]
    %v2347 = vld [vmem:[#allocation14 + $0x1b8] sm:$0xff]
    %v2348 = vld [vmem:[#allocation14 + $0x1c0] sm:$0xff]
    %v2349 = vld [vmem:[#allocation14 + $0x1c8] sm:$0xff]
    %v2350 = vld [vmem:[#allocation14 + $0x1d0] sm:$0xff]
    %v2351 = vld [vmem:[#allocation14 + $0x1d8] sm:$0xff]
    %v2352 = vld [vmem:[#allocation14 + $0x1e0] sm:$0xff]
    %v2353 = vld [vmem:[#allocation14 + $0x1e8] sm:$0xff]
    %v2354 = vld [vmem:[#allocation14 + $0x1f0] sm:$0xff]
    %v2355 = vld [vmem:[#allocation14 + $0x1f8] sm:$0xff]
    %v2356 = vld [vmem:[%s4] sm:$0xf]
    %v2421 = vunpack.c.l.b16 %v2292
    %v2422 = vunpack.c.h.b16 %v2292
    %v2423 = vunpack.c.l.b16 %v2293
    %v2424 = vunpack.c.h.b16 %v2293
    %v2425 = vunpack.c.l.b16 %v2294
    %v2426 = vunpack.c.h.b16 %v2294
    %v2427 = vunpack.c.l.b16 %v2295
    %v2428 = vunpack.c.h.b16 %v2295
    %v2429 = vunpack.c.l.b16 %v2296
    %v2430 = vunpack.c.h.b16 %v2296
    %v2431 = vunpack.c.l.b16 %v2297
    %v2432 = vunpack.c.h.b16 %v2297
    %v2433 = vunpack.c.l.b16 %v2298
    %v2434 = vunpack.c.h.b16 %v2298
    %v2435 = vunpack.c.l.b16 %v2299
    %v2436 = vunpack.c.h.b16 %v2299
    %v2437 = vunpack.c.l.b16 %v2300
    %v2438 = vunpack.c.h.b16 %v2300
    %v2439 = vunpack.c.l.b16 %v2301
    %v2440 = vunpack.c.h.b16 %v2301
    %v2441 = vunpack.c.l.b16 %v2302
    %v2442 = vunpack.c.h.b16 %v2302
    %v2443 = vunpack.c.l.b16 %v2303
    %v2444 = vunpack.c.h.b16 %v2303
    %v2445 = vunpack.c.l.b16 %v2304
    %v2446 = vunpack.c.h.b16 %v2304
    %v2447 = vunpack.c.l.b16 %v2305
    %v2448 = vunpack.c.h.b16 %v2305
    %v2449 = vunpack.c.l.b16 %v2306
    %v2450 = vunpack.c.h.b16 %v2306
    %v2451 = vunpack.c.l.b16 %v2307
    %v2452 = vunpack.c.h.b16 %v2307
    %v2453 = vunpack.c.l.b16 %v2308
    %v2454 = vunpack.c.h.b16 %v2308
    %v2455 = vunpack.c.l.b16 %v2309
    %v2456 = vunpack.c.h.b16 %v2309
    %v2457 = vunpack.c.l.b16 %v2310
    %v2458 = vunpack.c.h.b16 %v2310
    %v2459 = vunpack.c.l.b16 %v2311
    %v2460 = vunpack.c.h.b16 %v2311
    %v2461 = vunpack.c.l.b16 %v2312
    %v2462 = vunpack.c.h.b16 %v2312
    %v2463 = vunpack.c.l.b16 %v2313
    %v2464 = vunpack.c.h.b16 %v2313
    %v2465 = vunpack.c.l.b16 %v2314
    %v2466 = vunpack.c.h.b16 %v2314
    %v2467 = vunpack.c.l.b16 %v2315
    %v2468 = vunpack.c.h.b16 %v2315
    %v2469 = vunpack.c.l.b16 %v2316
    %v2470 = vunpack.c.h.b16 %v2316
    %v2471 = vunpack.c.l.b16 %v2317
    %v2472 = vunpack.c.h.b16 %v2317
    %v2473 = vunpack.c.l.b16 %v2318
    %v2474 = vunpack.c.h.b16 %v2318
    %v2475 = vunpack.c.l.b16 %v2319
    %v2476 = vunpack.c.h.b16 %v2319
    %v2477 = vunpack.c.l.b16 %v2320
    %v2478 = vunpack.c.h.b16 %v2320
    %v2479 = vunpack.c.l.b16 %v2321
    %v2480 = vunpack.c.h.b16 %v2321
    %v2481 = vunpack.c.l.b16 %v2322
    %v2482 = vunpack.c.h.b16 %v2322
    %v2483 = vunpack.c.l.b16 %v2323
    %v2484 = vunpack.c.h.b16 %v2323
    %v2485 = vunpack.c.l.b16 %v2324
    %v2486 = vunpack.c.h.b16 %v2324
    %v2487 = vunpack.c.l.b16 %v2325
    %v2488 = vunpack.c.h.b16 %v2325
    %v2489 = vunpack.c.l.b16 %v2326
    %v2490 = vunpack.c.h.b16 %v2326
    %v2491 = vunpack.c.l.b16 %v2327
    %v2492 = vunpack.c.h.b16 %v2327
    %v2493 = vunpack.c.l.b16 %v2328
    %v2494 = vunpack.c.h.b16 %v2328
    %v2495 = vunpack.c.l.b16 %v2329
    %v2496 = vunpack.c.h.b16 %v2329
    %v2497 = vunpack.c.l.b16 %v2330
    %v2498 = vunpack.c.h.b16 %v2330
    %v2499 = vunpack.c.l.b16 %v2331
    %v2500 = vunpack.c.h.b16 %v2331
    %v2501 = vunpack.c.l.b16 %v2332
    %v2502 = vunpack.c.h.b16 %v2332
    %v2503 = vunpack.c.l.b16 %v2333
    %v2504 = vunpack.c.h.b16 %v2333
    %v2505 = vunpack.c.l.b16 %v2334
    %v2506 = vunpack.c.h.b16 %v2334
    %v2507 = vunpack.c.l.b16 %v2335
    %v2508 = vunpack.c.h.b16 %v2335
    %v2509 = vunpack.c.l.b16 %v2336
    %v2510 = vunpack.c.h.b16 %v2336
    %v2511 = vunpack.c.l.b16 %v2337
    %v2512 = vunpack.c.h.b16 %v2337
    %v2513 = vunpack.c.l.b16 %v2338
    %v2514 = vunpack.c.h.b16 %v2338
    %v2515 = vunpack.c.l.b16 %v2339
    %v2516 = vunpack.c.h.b16 %v2339
    %v2517 = vunpack.c.l.b16 %v2340
    %v2518 = vunpack.c.h.b16 %v2340
    %v2519 = vunpack.c.l.b16 %v2341
    %v2520 = vunpack.c.h.b16 %v2341
    %v2521 = vunpack.c.l.b16 %v2342
    %v2522 = vunpack.c.h.b16 %v2342
    %v2523 = vunpack.c.l.b16 %v2343
    %v2524 = vunpack.c.h.b16 %v2343
    %v2525 = vunpack.c.l.b16 %v2344
    %v2526 = vunpack.c.h.b16 %v2344
    %v2527 = vunpack.c.l.b16 %v2345
    %v2528 = vunpack.c.h.b16 %v2345
    %v2529 = vunpack.c.l.b16 %v2346
    %v2530 = vunpack.c.h.b16 %v2346
    %v2531 = vunpack.c.l.b16 %v2347
    %v2532 = vunpack.c.h.b16 %v2347
    %v2533 = vunpack.c.l.b16 %v2348
    %v2534 = vunpack.c.h.b16 %v2348
    %v2535 = vunpack.c.l.b16 %v2349
    %v2536 = vunpack.c.h.b16 %v2349
    %v2537 = vunpack.c.l.b16 %v2350
    %v2538 = vunpack.c.h.b16 %v2350
    %v2539 = vunpack.c.l.b16 %v2351
    %v2540 = vunpack.c.h.b16 %v2351
    %v2541 = vunpack.c.l.b16 %v2352
    %v2542 = vunpack.c.h.b16 %v2352
    %v2543 = vunpack.c.l.b16 %v2353
    %v2544 = vunpack.c.h.b16 %v2353
    %v2545 = vunpack.c.l.b16 %v2354
    %v2546 = vunpack.c.h.b16 %v2354
    %v2547 = vunpack.c.l.b16 %v2355
    %v2548 = vunpack.c.h.b16 %v2355
    %v2549 = vpack.c.b16 %v2425, %v2421
    %v2550 = vpack.c.b16 %v2426, %v2422
    %v2551 = vpack.c.b16 %v2427, %v2423
    %v2552 = vpack.c.b16 %v2428, %v2424
    %v2553 = vpack.c.b16 %v2433, %v2429
    %v2554 = vpack.c.b16 %v2434, %v2430
    %v2555 = vpack.c.b16 %v2435, %v2431
    %v2556 = vpack.c.b16 %v2436, %v2432
    %v2557 = vpack.c.b16 %v2441, %v2437
    %v2558 = vpack.c.b16 %v2442, %v2438
    %v2559 = vpack.c.b16 %v2443, %v2439
    %v2560 = vpack.c.b16 %v2444, %v2440
    %v2561 = vpack.c.b16 %v2449, %v2445
    %v2562 = vpack.c.b16 %v2450, %v2446
    %v2563 = vpack.c.b16 %v2451, %v2447
    %v2564 = vpack.c.b16 %v2452, %v2448
    %v2565 = vpack.c.b16 %v2457, %v2453
    %v2566 = vpack.c.b16 %v2458, %v2454
    %v2567 = vpack.c.b16 %v2459, %v2455
    %v2568 = vpack.c.b16 %v2460, %v2456
    %v2569 = vpack.c.b16 %v2465, %v2461
    %v2570 = vpack.c.b16 %v2466, %v2462
    %v2571 = vpack.c.b16 %v2467, %v2463
    %v2572 = vpack.c.b16 %v2468, %v2464
    %v2573 = vpack.c.b16 %v2473, %v2469
    %v2574 = vpack.c.b16 %v2474, %v2470
    %v2575 = vpack.c.b16 %v2475, %v2471
    %v2576 = vpack.c.b16 %v2476, %v2472
    %v2577 = vpack.c.b16 %v2481, %v2477
    %v2578 = vpack.c.b16 %v2482, %v2478
    %v2579 = vpack.c.b16 %v2483, %v2479
    %v2580 = vpack.c.b16 %v2484, %v2480
    %v2581 = vpack.c.b16 %v2489, %v2485
    %v2582 = vpack.c.b16 %v2490, %v2486
    %v2583 = vpack.c.b16 %v2491, %v2487
    %v2584 = vpack.c.b16 %v2492, %v2488
    %v2585 = vpack.c.b16 %v2497, %v2493
    %v2586 = vpack.c.b16 %v2498, %v2494
    %v2587 = vpack.c.b16 %v2499, %v2495
    %v2588 = vpack.c.b16 %v2500, %v2496
    %v2589 = vpack.c.b16 %v2505, %v2501
    %v2590 = vpack.c.b16 %v2506, %v2502
    %v2591 = vpack.c.b16 %v2507, %v2503
    %v2592 = vpack.c.b16 %v2508, %v2504
    %v2593 = vpack.c.b16 %v2513, %v2509
    %v2594 = vpack.c.b16 %v2514, %v2510
    %v2595 = vpack.c.b16 %v2515, %v2511
    %v2596 = vpack.c.b16 %v2516, %v2512
    %v2597 = vpack.c.b16 %v2521, %v2517
    %v2598 = vpack.c.b16 %v2522, %v2518
    %v2599 = vpack.c.b16 %v2523, %v2519
    %v2600 = vpack.c.b16 %v2524, %v2520
    %v2601 = vpack.c.b16 %v2529, %v2525
    %v2602 = vpack.c.b16 %v2530, %v2526
    %v2603 = vpack.c.b16 %v2531, %v2527
    %v2604 = vpack.c.b16 %v2532, %v2528
    %v2605 = vpack.c.b16 %v2537, %v2533
    %v2606 = vpack.c.b16 %v2538, %v2534
    %v2607 = vpack.c.b16 %v2539, %v2535
    %v2608 = vpack.c.b16 %v2540, %v2536
    %v2609 = vpack.c.b16 %v2545, %v2541
    %v2610 = vpack.c.b16 %v2546, %v2542
    %v2611 = vpack.c.b16 %v2547, %v2543
    %v2612 = vpack.c.b16 %v2548, %v2544
    %v2678 = vperm.slane %v2356, 0
    %v2679 = vperm.slane %v2356, 1
    %v2680 = vperm.slane %v2356, 2
    %v2681 = vperm.slane %v2356, 3
    %2686 = vmatpush.bf16.msra.mxu0 %v2577
    %2687 = vmatpush.bf16.msra.mxu0 %v2573
    %2688 = vmatpush.bf16.msra.mxu0 %v2569
    %2689 = vmatpush.bf16.msra.mxu0 %v2565
    %2690 = vmatpush.bf16.msra.mxu0 %v2561
    %2691 = vmatpush.bf16.msra.mxu0 %v2557
    %2692 = vmatpush.bf16.msra.mxu0 %v2553
    %2693 = vmatpush.bf16.msra.mxu0 %v2549
    %2694 = vmatmul.bf16.gmra.mxu0 %v2290
    %v2695 = vpop.f32.mrf.mxu0
    %v2696 = vadd.f32 %v2678, %v2695
    %v2697 = vpop.f32.mrf.mxu0
    %2698 = vdwg.mxu0
    %2699 = vmatpush.bf16.msra.mxu0 %v2609
    %2700 = vmatpush.bf16.msra.mxu0 %v2605
    %2701 = vmatpush.bf16.msra.mxu0 %v2601
    %2702 = vmatpush.bf16.msra.mxu0 %v2597
    %2703 = vmatpush.bf16.msra.mxu0 %v2593
    %2704 = vmatpush.bf16.msra.mxu0 %v2589
    %2705 = vmatpush.bf16.msra.mxu0 %v2585
    %2706 = vmatpush.bf16.msra.mxu0 %v2581
    %2707 = vmatmul.bf16.gmra.mxu0 %v2291
    %v2708 = vpop.f32.mrf.mxu0
    %v2709 = vadd.f32 %v2696, %v2708
    %v2710 = vpop.f32.mrf.mxu0
    %2711 = vdwg.mxu0
    %2712 = vmatpush.bf16.msra.mxu0 %v2578
    %2713 = vmatpush.bf16.msra.mxu0 %v2574
    %2714 = vmatpush.bf16.msra.mxu0 %v2570
    %2715 = vmatpush.bf16.msra.mxu0 %v2566
    %2716 = vmatpush.bf16.msra.mxu0 %v2562
    %2717 = vmatpush.bf16.msra.mxu0 %v2558
    %2718 = vmatpush.bf16.msra.mxu0 %v2554
    %2719 = vmatpush.bf16.msra.mxu0 %v2550
    %2720 = vmatmul.bf16.gmra.mxu0 %v2290
    %v2721 = vpop.f32.mrf.mxu0
    %v2722 = vadd.f32 %v2679, %v2721
    %v2723 = vpop.f32.mrf.mxu0
    %2724 = vdwg.mxu0
    %2725 = vmatpush.bf16.msra.mxu0 %v2610
    %2726 = vmatpush.bf16.msra.mxu0 %v2606
    %2727 = vmatpush.bf16.msra.mxu0 %v2602
    %2728 = vmatpush.bf16.msra.mxu0 %v2598
    %2729 = vmatpush.bf16.msra.mxu0 %v2594
    %2730 = vmatpush.bf16.msra.mxu0 %v2590
    %2731 = vmatpush.bf16.msra.mxu0 %v2586
    %2732 = vmatpush.bf16.msra.mxu0 %v2582
    %2733 = vmatmul.bf16.gmra.mxu0 %v2291
    %v2734 = vpop.f32.mrf.mxu0
    %v2735 = vadd.f32 %v2722, %v2734
    %v2736 = vpop.f32.mrf.mxu0
    %2737 = vdwg.mxu0
    %2738 = vmatpush.bf16.msra.mxu0 %v2579
    %2739 = vmatpush.bf16.msra.mxu0 %v2575
    %2740 = vmatpush.bf16.msra.mxu0 %v2571
    %2741 = vmatpush.bf16.msra.mxu0 %v2567
    %2742 = vmatpush.bf16.msra.mxu0 %v2563
    %2743 = vmatpush.bf16.msra.mxu0 %v2559
    %2744 = vmatpush.bf16.msra.mxu0 %v2555
    %2745 = vmatpush.bf16.msra.mxu0 %v2551
    %2746 = vmatmul.bf16.gmra.mxu0 %v2290
    %v2747 = vpop.f32.mrf.mxu0
    %v2748 = vadd.f32 %v2680, %v2747
    %v2749 = vpop.f32.mrf.mxu0
    %2750 = vdwg.mxu0
    %2751 = vmatpush.bf16.msra.mxu0 %v2611
    %2752 = vmatpush.bf16.msra.mxu0 %v2607
    %2753 = vmatpush.bf16.msra.mxu0 %v2603
    %2754 = vmatpush.bf16.msra.mxu0 %v2599
    %2755 = vmatpush.bf16.msra.mxu0 %v2595
    %2756 = vmatpush.bf16.msra.mxu0 %v2591
    %2757 = vmatpush.bf16.msra.mxu0 %v2587
    %2758 = vmatpush.bf16.msra.mxu0 %v2583
    %2759 = vmatmul.bf16.gmra.mxu0 %v2291
    %v2760 = vpop.f32.mrf.mxu0
    %v2761 = vadd.f32 %v2748, %v2760
    %v2762 = vpop.f32.mrf.mxu0
    %2763 = vdwg.mxu0
    %2764 = vmatpush.bf16.msra.mxu0 %v2580
    %2765 = vmatpush.bf16.msra.mxu0 %v2576
    %2766 = vmatpush.bf16.msra.mxu0 %v2572
    %2767 = vmatpush.bf16.msra.mxu0 %v2568
    %2768 = vmatpush.bf16.msra.mxu0 %v2564
    %2769 = vmatpush.bf16.msra.mxu0 %v2560
    %2770 = vmatpush.bf16.msra.mxu0 %v2556
    %2771 = vmatpush.bf16.msra.mxu0 %v2552
    %2772 = vmatmul.bf16.gmra.mxu0 %v2290
    %v2773 = vpop.f32.mrf.mxu0
    %v2774 = vadd.f32 %v2681, %v2773
    %v2775 = vpop.f32.mrf.mxu0
    %2776 = vdwg.mxu0
    %2777 = vmatpush.bf16.msra.mxu0 %v2612
    %2778 = vmatpush.bf16.msra.mxu0 %v2608
    %2779 = vmatpush.bf16.msra.mxu0 %v2604
    %2780 = vmatpush.bf16.msra.mxu0 %v2600
    %2781 = vmatpush.bf16.msra.mxu0 %v2596
    %2782 = vmatpush.bf16.msra.mxu0 %v2592
    %2783 = vmatpush.bf16.msra.mxu0 %v2588
    %2784 = vmatpush.bf16.msra.mxu0 %v2584
    %2785 = vmatmul.bf16.gmra.mxu0 %v2291
    %v2786 = vpop.f32.mrf.mxu0
    %v2787 = vadd.f32 %v2774, %v2786
    %v2788 = vpop.f32.mrf.mxu0
    %2789 = vdwg.mxu0
    %v2790 = vmul.f32 %v2709, 0.5
    %v2791 = vtanh.pop %v2790
    %v2792 = vadd.f32 %v2791, 1.0
    %v2793 = vmul.f32 %v2792, 0.5
    %v2794 = vmul.f32 %v2735, 0.5
    %v2795 = vtanh.pop %v2794
    %v2796 = vadd.f32 %v2795, 1.0
    %v2797 = vmul.f32 %v2796, 0.5
    %v2798 = vmul.f32 %v2793, %v2787
    %v2799 = vadd.f32 %v2761, %v2798
    %v2800 = vtanh.pop %v2799
    %v2801 = vsub.f32 1.0, %v2797
    %v2802 = vmul.f32 %v2801, %v2800
    %v2803 = vmul.f32 %v2797, %v2285
    %v2804 = vadd.f32 %v2802, %v2803
    %2805 = vst [vmem:[#allocation2 + $0x4] sm:$0x1] %v2804
    %s2806 = sld [smem:[#allocation9 + $0x5]]
    %s2807 = scalar_lea.vmem [#allocation13], %s2806
    %v2808 = vld [vmem:[%s2807] sm:$0x1]
    %v2809 = vpack.c.bf16 %v2808, %v2808
    %v2810 = vpack.c.bf16 %v2804, %v2804
    %v2811 = vld [vmem:[#allocation14] sm:$0xff]
    %v2812 = vld [vmem:[#allocation14 + $0x8] sm:$0xff]
    %v2813 = vld [vmem:[#allocation14 + $0x10] sm:$0xff]
    %v2814 = vld [vmem:[#allocation14 + $0x18] sm:$0xff]
    %v2815 = vld [vmem:[#allocation14 + $0x20] sm:$0xff]
    %v2816 = vld [vmem:[#allocation14 + $0x28] sm:$0xff]
    %v2817 = vld [vmem:[#allocation14 + $0x30] sm:$0xff]
    %v2818 = vld [vmem:[#allocation14 + $0x38] sm:$0xff]
    %v2819 = vld [vmem:[#allocation14 + $0x40] sm:$0xff]
    %v2820 = vld [vmem:[#allocation14 + $0x48] sm:$0xff]
    %v2821 = vld [vmem:[#allocation14 + $0x50] sm:$0xff]
    %v2822 = vld [vmem:[#allocation14 + $0x58] sm:$0xff]
    %v2823 = vld [vmem:[#allocation14 + $0x60] sm:$0xff]
    %v2824 = vld [vmem:[#allocation14 + $0x68] sm:$0xff]
    %v2825 = vld [vmem:[#allocation14 + $0x70] sm:$0xff]
    %v2826 = vld [vmem:[#allocation14 + $0x78] sm:$0xff]
    %v2827 = vld [vmem:[#allocation14 + $0x80] sm:$0xff]
    %v2828 = vld [vmem:[#allocation14 + $0x88] sm:$0xff]
    %v2829 = vld [vmem:[#allocation14 + $0x90] sm:$0xff]
    %v2830 = vld [vmem:[#allocation14 + $0x98] sm:$0xff]
    %v2831 = vld [vmem:[#allocation14 + $0xa0] sm:$0xff]
    %v2832 = vld [vmem:[#allocation14 + $0xa8] sm:$0xff]
    %v2833 = vld [vmem:[#allocation14 + $0xb0] sm:$0xff]
    %v2834 = vld [vmem:[#allocation14 + $0xb8] sm:$0xff]
    %v2835 = vld [vmem:[#allocation14 + $0xc0] sm:$0xff]
    %v2836 = vld [vmem:[#allocation14 + $0xc8] sm:$0xff]
    %v2837 = vld [vmem:[#allocation14 + $0xd0] sm:$0xff]
    %v2838 = vld [vmem:[#allocation14 + $0xd8] sm:$0xff]
    %v2839 = vld [vmem:[#allocation14 + $0xe0] sm:$0xff]
    %v2840 = vld [vmem:[#allocation14 + $0xe8] sm:$0xff]
    %v2841 = vld [vmem:[#allocation14 + $0xf0] sm:$0xff]
    %v2842 = vld [vmem:[#allocation14 + $0xf8] sm:$0xff]
    %v2843 = vld [vmem:[#allocation14 + $0x100] sm:$0xff]
    %v2844 = vld [vmem:[#allocation14 + $0x108] sm:$0xff]
    %v2845 = vld [vmem:[#allocation14 + $0x110] sm:$0xff]
    %v2846 = vld [vmem:[#allocation14 + $0x118] sm:$0xff]
    %v2847 = vld [vmem:[#allocation14 + $0x120] sm:$0xff]
    %v2848 = vld [vmem:[#allocation14 + $0x128] sm:$0xff]
    %v2849 = vld [vmem:[#allocation14 + $0x130] sm:$0xff]
    %v2850 = vld [vmem:[#allocation14 + $0x138] sm:$0xff]
    %v2851 = vld [vmem:[#allocation14 + $0x140] sm:$0xff]
    %v2852 = vld [vmem:[#allocation14 + $0x148] sm:$0xff]
    %v2853 = vld [vmem:[#allocation14 + $0x150] sm:$0xff]
    %v2854 = vld [vmem:[#allocation14 + $0x158] sm:$0xff]
    %v2855 = vld [vmem:[#allocation14 + $0x160] sm:$0xff]
    %v2856 = vld [vmem:[#allocation14 + $0x168] sm:$0xff]
    %v2857 = vld [vmem:[#allocation14 + $0x170] sm:$0xff]
    %v2858 = vld [vmem:[#allocation14 + $0x178] sm:$0xff]
    %v2859 = vld [vmem:[#allocation14 + $0x180] sm:$0xff]
    %v2860 = vld [vmem:[#allocation14 + $0x188] sm:$0xff]
    %v2861 = vld [vmem:[#allocation14 + $0x190] sm:$0xff]
    %v2862 = vld [vmem:[#allocation14 + $0x198] sm:$0xff]
    %v2863 = vld [vmem:[#allocation14 + $0x1a0] sm:$0xff]
    %v2864 = vld [vmem:[#allocation14 + $0x1a8] sm:$0xff]
    %v2865 = vld [vmem:[#allocation14 + $0x1b0] sm:$0xff]
    %v2866 = vld [vmem:[#allocation14 + $0x1b8] sm:$0xff]
    %v2867 = vld [vmem:[#allocation14 + $0x1c0] sm:$0xff]
    %v2868 = vld [vmem:[#allocation14 + $0x1c8] sm:$0xff]
    %v2869 = vld [vmem:[#allocation14 + $0x1d0] sm:$0xff]
    %v2870 = vld [vmem:[#allocation14 + $0x1d8] sm:$0xff]
    %v2871 = vld [vmem:[#allocation14 + $0x1e0] sm:$0xff]
    %v2872 = vld [vmem:[#allocation14 + $0x1e8] sm:$0xff]
    %v2873 = vld [vmem:[#allocation14 + $0x1f0] sm:$0xff]
    %v2874 = vld [vmem:[#allocation14 + $0x1f8] sm:$0xff]
    %v2875 = vld [vmem:[%s4] sm:$0xf]
    %v2940 = vunpack.c.l.b16 %v2811
    %v2941 = vunpack.c.h.b16 %v2811
    %v2942 = vunpack.c.l.b16 %v2812
    %v2943 = vunpack.c.h.b16 %v2812
    %v2944 = vunpack.c.l.b16 %v2813
    %v2945 = vunpack.c.h.b16 %v2813
    %v2946 = vunpack.c.l.b16 %v2814
    %v2947 = vunpack.c.h.b16 %v2814
    %v2948 = vunpack.c.l.b16 %v2815
    %v2949 = vunpack.c.h.b16 %v2815
    %v2950 = vunpack.c.l.b16 %v2816
    %v2951 = vunpack.c.h.b16 %v2816
    %v2952 = vunpack.c.l.b16 %v2817
    %v2953 = vunpack.c.h.b16 %v2817
    %v2954 = vunpack.c.l.b16 %v2818
    %v2955 = vunpack.c.h.b16 %v2818
    %v2956 = vunpack.c.l.b16 %v2819
    %v2957 = vunpack.c.h.b16 %v2819
    %v2958 = vunpack.c.l.b16 %v2820
    %v2959 = vunpack.c.h.b16 %v2820
    %v2960 = vunpack.c.l.b16 %v2821
    %v2961 = vunpack.c.h.b16 %v2821
    %v2962 = vunpack.c.l.b16 %v2822
    %v2963 = vunpack.c.h.b16 %v2822
    %v2964 = vunpack.c.l.b16 %v2823
    %v2965 = vunpack.c.h.b16 %v2823
    %v2966 = vunpack.c.l.b16 %v2824
    %v2967 = vunpack.c.h.b16 %v2824
    %v2968 = vunpack.c.l.b16 %v2825
    %v2969 = vunpack.c.h.b16 %v2825
    %v2970 = vunpack.c.l.b16 %v2826
    %v2971 = vunpack.c.h.b16 %v2826
    %v2972 = vunpack.c.l.b16 %v2827
    %v2973 = vunpack.c.h.b16 %v2827
    %v2974 = vunpack.c.l.b16 %v2828
    %v2975 = vunpack.c.h.b16 %v2828
    %v2976 = vunpack.c.l.b16 %v2829
    %v2977 = vunpack.c.h.b16 %v2829
    %v2978 = vunpack.c.l.b16 %v2830
    %v2979 = vunpack.c.h.b16 %v2830
    %v2980 = vunpack.c.l.b16 %v2831
    %v2981 = vunpack.c.h.b16 %v2831
    %v2982 = vunpack.c.l.b16 %v2832
    %v2983 = vunpack.c.h.b16 %v2832
    %v2984 = vunpack.c.l.b16 %v2833
    %v2985 = vunpack.c.h.b16 %v2833
    %v2986 = vunpack.c.l.b16 %v2834
    %v2987 = vunpack.c.h.b16 %v2834
    %v2988 = vunpack.c.l.b16 %v2835
    %v2989 = vunpack.c.h.b16 %v2835
    %v2990 = vunpack.c.l.b16 %v2836
    %v2991 = vunpack.c.h.b16 %v2836
    %v2992 = vunpack.c.l.b16 %v2837
    %v2993 = vunpack.c.h.b16 %v2837
    %v2994 = vunpack.c.l.b16 %v2838
    %v2995 = vunpack.c.h.b16 %v2838
    %v2996 = vunpack.c.l.b16 %v2839
    %v2997 = vunpack.c.h.b16 %v2839
    %v2998 = vunpack.c.l.b16 %v2840
    %v2999 = vunpack.c.h.b16 %v2840
    %v3000 = vunpack.c.l.b16 %v2841
    %v3001 = vunpack.c.h.b16 %v2841
    %v3002 = vunpack.c.l.b16 %v2842
    %v3003 = vunpack.c.h.b16 %v2842
    %v3004 = vunpack.c.l.b16 %v2843
    %v3005 = vunpack.c.h.b16 %v2843
    %v3006 = vunpack.c.l.b16 %v2844
    %v3007 = vunpack.c.h.b16 %v2844
    %v3008 = vunpack.c.l.b16 %v2845
    %v3009 = vunpack.c.h.b16 %v2845
    %v3010 = vunpack.c.l.b16 %v2846
    %v3011 = vunpack.c.h.b16 %v2846
    %v3012 = vunpack.c.l.b16 %v2847
    %v3013 = vunpack.c.h.b16 %v2847
    %v3014 = vunpack.c.l.b16 %v2848
    %v3015 = vunpack.c.h.b16 %v2848
    %v3016 = vunpack.c.l.b16 %v2849
    %v3017 = vunpack.c.h.b16 %v2849
    %v3018 = vunpack.c.l.b16 %v2850
    %v3019 = vunpack.c.h.b16 %v2850
    %v3020 = vunpack.c.l.b16 %v2851
    %v3021 = vunpack.c.h.b16 %v2851
    %v3022 = vunpack.c.l.b16 %v2852
    %v3023 = vunpack.c.h.b16 %v2852
    %v3024 = vunpack.c.l.b16 %v2853
    %v3025 = vunpack.c.h.b16 %v2853
    %v3026 = vunpack.c.l.b16 %v2854
    %v3027 = vunpack.c.h.b16 %v2854
    %v3028 = vunpack.c.l.b16 %v2855
    %v3029 = vunpack.c.h.b16 %v2855
    %v3030 = vunpack.c.l.b16 %v2856
    %v3031 = vunpack.c.h.b16 %v2856
    %v3032 = vunpack.c.l.b16 %v2857
    %v3033 = vunpack.c.h.b16 %v2857
    %v3034 = vunpack.c.l.b16 %v2858
    %v3035 = vunpack.c.h.b16 %v2858
    %v3036 = vunpack.c.l.b16 %v2859
    %v3037 = vunpack.c.h.b16 %v2859
    %v3038 = vunpack.c.l.b16 %v2860
    %v3039 = vunpack.c.h.b16 %v2860
    %v3040 = vunpack.c.l.b16 %v2861
    %v3041 = vunpack.c.h.b16 %v2861
    %v3042 = vunpack.c.l.b16 %v2862
    %v3043 = vunpack.c.h.b16 %v2862
    %v3044 = vunpack.c.l.b16 %v2863
    %v3045 = vunpack.c.h.b16 %v2863
    %v3046 = vunpack.c.l.b16 %v2864
    %v3047 = vunpack.c.h.b16 %v2864
    %v3048 = vunpack.c.l.b16 %v2865
    %v3049 = vunpack.c.h.b16 %v2865
    %v3050 = vunpack.c.l.b16 %v2866
    %v3051 = vunpack.c.h.b16 %v2866
    %v3052 = vunpack.c.l.b16 %v2867
    %v3053 = vunpack.c.h.b16 %v2867
    %v3054 = vunpack.c.l.b16 %v2868
    %v3055 = vunpack.c.h.b16 %v2868
    %v3056 = vunpack.c.l.b16 %v2869
    %v3057 = vunpack.c.h.b16 %v2869
    %v3058 = vunpack.c.l.b16 %v2870
    %v3059 = vunpack.c.h.b16 %v2870
    %v3060 = vunpack.c.l.b16 %v2871
    %v3061 = vunpack.c.h.b16 %v2871
    %v3062 = vunpack.c.l.b16 %v2872
    %v3063 = vunpack.c.h.b16 %v2872
    %v3064 = vunpack.c.l.b16 %v2873
    %v3065 = vunpack.c.h.b16 %v2873
    %v3066 = vunpack.c.l.b16 %v2874
    %v3067 = vunpack.c.h.b16 %v2874
    %v3068 = vpack.c.b16 %v2944, %v2940
    %v3069 = vpack.c.b16 %v2945, %v2941
    %v3070 = vpack.c.b16 %v2946, %v2942
    %v3071 = vpack.c.b16 %v2947, %v2943
    %v3072 = vpack.c.b16 %v2952, %v2948
    %v3073 = vpack.c.b16 %v2953, %v2949
    %v3074 = vpack.c.b16 %v2954, %v2950
    %v3075 = vpack.c.b16 %v2955, %v2951
    %v3076 = vpack.c.b16 %v2960, %v2956
    %v3077 = vpack.c.b16 %v2961, %v2957
    %v3078 = vpack.c.b16 %v2962, %v2958
    %v3079 = vpack.c.b16 %v2963, %v2959
    %v3080 = vpack.c.b16 %v2968, %v2964
    %v3081 = vpack.c.b16 %v2969, %v2965
    %v3082 = vpack.c.b16 %v2970, %v2966
    %v3083 = vpack.c.b16 %v2971, %v2967
    %v3084 = vpack.c.b16 %v2976, %v2972
    %v3085 = vpack.c.b16 %v2977, %v2973
    %v3086 = vpack.c.b16 %v2978, %v2974
    %v3087 = vpack.c.b16 %v2979, %v2975
    %v3088 = vpack.c.b16 %v2984, %v2980
    %v3089 = vpack.c.b16 %v2985, %v2981
    %v3090 = vpack.c.b16 %v2986, %v2982
    %v3091 = vpack.c.b16 %v2987, %v2983
    %v3092 = vpack.c.b16 %v2992, %v2988
    %v3093 = vpack.c.b16 %v2993, %v2989
    %v3094 = vpack.c.b16 %v2994, %v2990
    %v3095 = vpack.c.b16 %v2995, %v2991
    %v3096 = vpack.c.b16 %v3000, %v2996
    %v3097 = vpack.c.b16 %v3001, %v2997
    %v3098 = vpack.c.b16 %v3002, %v2998
    %v3099 = vpack.c.b16 %v3003, %v2999
    %v3100 = vpack.c.b16 %v3008, %v3004
    %v3101 = vpack.c.b16 %v3009, %v3005
    %v3102 = vpack.c.b16 %v3010, %v3006
    %v3103 = vpack.c.b16 %v3011, %v3007
    %v3104 = vpack.c.b16 %v3016, %v3012
    %v3105 = vpack.c.b16 %v3017, %v3013
    %v3106 = vpack.c.b16 %v3018, %v3014
    %v3107 = vpack.c.b16 %v3019, %v3015
    %v3108 = vpack.c.b16 %v3024, %v3020
    %v3109 = vpack.c.b16 %v3025, %v3021
    %v3110 = vpack.c.b16 %v3026, %v3022
    %v3111 = vpack.c.b16 %v3027, %v3023
    %v3112 = vpack.c.b16 %v3032, %v3028
    %v3113 = vpack.c.b16 %v3033, %v3029
    %v3114 = vpack.c.b16 %v3034, %v3030
    %v3115 = vpack.c.b16 %v3035, %v3031
    %v3116 = vpack.c.b16 %v3040, %v3036
    %v3117 = vpack.c.b16 %v3041, %v3037
    %v3118 = vpack.c.b16 %v3042, %v3038
    %v3119 = vpack.c.b16 %v3043, %v3039
    %v3120 = vpack.c.b16 %v3048, %v3044
    %v3121 = vpack.c.b16 %v3049, %v3045
    %v3122 = vpack.c.b16 %v3050, %v3046
    %v3123 = vpack.c.b16 %v3051, %v3047
    %v3124 = vpack.c.b16 %v3056, %v3052
    %v3125 = vpack.c.b16 %v3057, %v3053
    %v3126 = vpack.c.b16 %v3058, %v3054
    %v3127 = vpack.c.b16 %v3059, %v3055
    %v3128 = vpack.c.b16 %v3064, %v3060
    %v3129 = vpack.c.b16 %v3065, %v3061
    %v3130 = vpack.c.b16 %v3066, %v3062
    %v3131 = vpack.c.b16 %v3067, %v3063
    %v3197 = vperm.slane %v2875, 0
    %v3198 = vperm.slane %v2875, 1
    %v3199 = vperm.slane %v2875, 2
    %v3200 = vperm.slane %v2875, 3
    %3205 = vmatpush.bf16.msra.mxu0 %v3096
    %3206 = vmatpush.bf16.msra.mxu0 %v3092
    %3207 = vmatpush.bf16.msra.mxu0 %v3088
    %3208 = vmatpush.bf16.msra.mxu0 %v3084
    %3209 = vmatpush.bf16.msra.mxu0 %v3080
    %3210 = vmatpush.bf16.msra.mxu0 %v3076
    %3211 = vmatpush.bf16.msra.mxu0 %v3072
    %3212 = vmatpush.bf16.msra.mxu0 %v3068
    %3213 = vmatmul.bf16.gmra.mxu0 %v2809
    %v3214 = vpop.f32.mrf.mxu0
    %v3215 = vadd.f32 %v3197, %v3214
    %v3216 = vpop.f32.mrf.mxu0
    %3217 = vdwg.mxu0
    %3218 = vmatpush.bf16.msra.mxu0 %v3128
    %3219 = vmatpush.bf16.msra.mxu0 %v3124
    %3220 = vmatpush.bf16.msra.mxu0 %v3120
    %3221 = vmatpush.bf16.msra.mxu0 %v3116
    %3222 = vmatpush.bf16.msra.mxu0 %v3112
    %3223 = vmatpush.bf16.msra.mxu0 %v3108
    %3224 = vmatpush.bf16.msra.mxu0 %v3104
    %3225 = vmatpush.bf16.msra.mxu0 %v3100
    %3226 = vmatmul.bf16.gmra.mxu0 %v2810
    %v3227 = vpop.f32.mrf.mxu0
    %v3228 = vadd.f32 %v3215, %v3227
    %v3229 = vpop.f32.mrf.mxu0
    %3230 = vdwg.mxu0
    %3231 = vmatpush.bf16.msra.mxu0 %v3097
    %3232 = vmatpush.bf16.msra.mxu0 %v3093
    %3233 = vmatpush.bf16.msra.mxu0 %v3089
    %3234 = vmatpush.bf16.msra.mxu0 %v3085
    %3235 = vmatpush.bf16.msra.mxu0 %v3081
    %3236 = vmatpush.bf16.msra.mxu0 %v3077
    %3237 = vmatpush.bf16.msra.mxu0 %v3073
    %3238 = vmatpush.bf16.msra.mxu0 %v3069
    %3239 = vmatmul.bf16.gmra.mxu0 %v2809
    %v3240 = vpop.f32.mrf.mxu0
    %v3241 = vadd.f32 %v3198, %v3240
    %v3242 = vpop.f32.mrf.mxu0
    %3243 = vdwg.mxu0
    %3244 = vmatpush.bf16.msra.mxu0 %v3129
    %3245 = vmatpush.bf16.msra.mxu0 %v3125
    %3246 = vmatpush.bf16.msra.mxu0 %v3121
    %3247 = vmatpush.bf16.msra.mxu0 %v3117
    %3248 = vmatpush.bf16.msra.mxu0 %v3113
    %3249 = vmatpush.bf16.msra.mxu0 %v3109
    %3250 = vmatpush.bf16.msra.mxu0 %v3105
    %3251 = vmatpush.bf16.msra.mxu0 %v3101
    %3252 = vmatmul.bf16.gmra.mxu0 %v2810
    %v3253 = vpop.f32.mrf.mxu0
    %v3254 = vadd.f32 %v3241, %v3253
    %v3255 = vpop.f32.mrf.mxu0
    %3256 = vdwg.mxu0
    %3257 = vmatpush.bf16.msra.mxu0 %v3098
    %3258 = vmatpush.bf16.msra.mxu0 %v3094
    %3259 = vmatpush.bf16.msra.mxu0 %v3090
    %3260 = vmatpush.bf16.msra.mxu0 %v3086
    %3261 = vmatpush.bf16.msra.mxu0 %v3082
    %3262 = vmatpush.bf16.msra.mxu0 %v3078
    %3263 = vmatpush.bf16.msra.mxu0 %v3074
    %3264 = vmatpush.bf16.msra.mxu0 %v3070
    %3265 = vmatmul.bf16.gmra.mxu0 %v2809
    %v3266 = vpop.f32.mrf.mxu0
    %v3267 = vadd.f32 %v3199, %v3266
    %v3268 = vpop.f32.mrf.mxu0
    %3269 = vdwg.mxu0
    %3270 = vmatpush.bf16.msra.mxu0 %v3130
    %3271 = vmatpush.bf16.msra.mxu0 %v3126
    %3272 = vmatpush.bf16.msra.mxu0 %v3122
    %3273 = vmatpush.bf16.msra.mxu0 %v3118
    %3274 = vmatpush.bf16.msra.mxu0 %v3114
    %3275 = vmatpush.bf16.msra.mxu0 %v3110
    %3276 = vmatpush.bf16.msra.mxu0 %v3106
    %3277 = vmatpush.bf16.msra.mxu0 %v3102
    %3278 = vmatmul.bf16.gmra.mxu0 %v2810
    %v3279 = vpop.f32.mrf.mxu0
    %v3280 = vadd.f32 %v3267, %v3279
    %v3281 = vpop.f32.mrf.mxu0
    %3282 = vdwg.mxu0
    %3283 = vmatpush.bf16.msra.mxu0 %v3099
    %3284 = vmatpush.bf16.msra.mxu0 %v3095
    %3285 = vmatpush.bf16.msra.mxu0 %v3091
    %3286 = vmatpush.bf16.msra.mxu0 %v3087
    %3287 = vmatpush.bf16.msra.mxu0 %v3083
    %3288 = vmatpush.bf16.msra.mxu0 %v3079
    %3289 = vmatpush.bf16.msra.mxu0 %v3075
    %3290 = vmatpush.bf16.msra.mxu0 %v3071
    %3291 = vmatmul.bf16.gmra.mxu0 %v2809
    %v3292 = vpop.f32.mrf.mxu0
    %v3293 = vadd.f32 %v3200, %v3292
    %v3294 = vpop.f32.mrf.mxu0
    %3295 = vdwg.mxu0
    %3296 = vmatpush.bf16.msra.mxu0 %v3131
    %3297 = vmatpush.bf16.msra.mxu0 %v3127
    %3298 = vmatpush.bf16.msra.mxu0 %v3123
    %3299 = vmatpush.bf16.msra.mxu0 %v3119
    %3300 = vmatpush.bf16.msra.mxu0 %v3115
    %3301 = vmatpush.bf16.msra.mxu0 %v3111
    %3302 = vmatpush.bf16.msra.mxu0 %v3107
    %3303 = vmatpush.bf16.msra.mxu0 %v3103
    %3304 = vmatmul.bf16.gmra.mxu0 %v2810
    %v3305 = vpop.f32.mrf.mxu0
    %v3306 = vadd.f32 %v3293, %v3305
    %v3307 = vpop.f32.mrf.mxu0
    %3308 = vdwg.mxu0
    %v3309 = vmul.f32 %v3228, 0.5
    %v3310 = vtanh.pop %v3309
    %v3311 = vadd.f32 %v3310, 1.0
    %v3312 = vmul.f32 %v3311, 0.5
    %v3313 = vmul.f32 %v3254, 0.5
    %v3314 = vtanh.pop %v3313
    %v3315 = vadd.f32 %v3314, 1.0
    %v3316 = vmul.f32 %v3315, 0.5
    %v3317 = vmul.f32 %v3312, %v3306
    %v3318 = vadd.f32 %v3280, %v3317
    %v3319 = vtanh.pop %v3318
    %v3320 = vsub.f32 1.0, %v3316
    %v3321 = vmul.f32 %v3320, %v3319
    %v3322 = vmul.f32 %v3316, %v2804
    %v3323 = vadd.f32 %v3321, %v3322
    %3324 = vst [vmem:[#allocation2 + $0x5] sm:$0x1] %v3323
    %s3325 = sld [smem:[#allocation9 + $0x6]]
    %s3326 = scalar_lea.vmem [#allocation13], %s3325
    %v3327 = vld [vmem:[%s3326] sm:$0x1]
    %v3328 = vpack.c.bf16 %v3327, %v3327
    %v3329 = vpack.c.bf16 %v3323, %v3323
    %v3330 = vld [vmem:[#allocation14] sm:$0xff]
    %v3331 = vld [vmem:[#allocation14 + $0x8] sm:$0xff]
    %v3332 = vld [vmem:[#allocation14 + $0x10] sm:$0xff]
    %v3333 = vld [vmem:[#allocation14 + $0x18] sm:$0xff]
    %v3334 = vld [vmem:[#allocation14 + $0x20] sm:$0xff]
    %v3335 = vld [vmem:[#allocation14 + $0x28] sm:$0xff]
    %v3336 = vld [vmem:[#allocation14 + $0x30] sm:$0xff]
    %v3337 = vld [vmem:[#allocation14 + $0x38] sm:$0xff]
    %v3338 = vld [vmem:[#allocation14 + $0x40] sm:$0xff]
    %v3339 = vld [vmem:[#allocation14 + $0x48] sm:$0xff]
    %v3340 = vld [vmem:[#allocation14 + $0x50] sm:$0xff]
    %v3341 = vld [vmem:[#allocation14 + $0x58] sm:$0xff]
    %v3342 = vld [vmem:[#allocation14 + $0x60] sm:$0xff]
    %v3343 = vld [vmem:[#allocation14 + $0x68] sm:$0xff]
    %v3344 = vld [vmem:[#allocation14 + $0x70] sm:$0xff]
    %v3345 = vld [vmem:[#allocation14 + $0x78] sm:$0xff]
    %v3346 = vld [vmem:[#allocation14 + $0x80] sm:$0xff]
    %v3347 = vld [vmem:[#allocation14 + $0x88] sm:$0xff]
    %v3348 = vld [vmem:[#allocation14 + $0x90] sm:$0xff]
    %v3349 = vld [vmem:[#allocation14 + $0x98] sm:$0xff]
    %v3350 = vld [vmem:[#allocation14 + $0xa0] sm:$0xff]
    %v3351 = vld [vmem:[#allocation14 + $0xa8] sm:$0xff]
    %v3352 = vld [vmem:[#allocation14 + $0xb0] sm:$0xff]
    %v3353 = vld [vmem:[#allocation14 + $0xb8] sm:$0xff]
    %v3354 = vld [vmem:[#allocation14 + $0xc0] sm:$0xff]
    %v3355 = vld [vmem:[#allocation14 + $0xc8] sm:$0xff]
    %v3356 = vld [vmem:[#allocation14 + $0xd0] sm:$0xff]
    %v3357 = vld [vmem:[#allocation14 + $0xd8] sm:$0xff]
    %v3358 = vld [vmem:[#allocation14 + $0xe0] sm:$0xff]
    %v3359 = vld [vmem:[#allocation14 + $0xe8] sm:$0xff]
    %v3360 = vld [vmem:[#allocation14 + $0xf0] sm:$0xff]
    %v3361 = vld [vmem:[#allocation14 + $0xf8] sm:$0xff]
    %v3362 = vld [vmem:[#allocation14 + $0x100] sm:$0xff]
    %v3363 = vld [vmem:[#allocation14 + $0x108] sm:$0xff]
    %v3364 = vld [vmem:[#allocation14 + $0x110] sm:$0xff]
    %v3365 = vld [vmem:[#allocation14 + $0x118] sm:$0xff]
    %v3366 = vld [vmem:[#allocation14 + $0x120] sm:$0xff]
    %v3367 = vld [vmem:[#allocation14 + $0x128] sm:$0xff]
    %v3368 = vld [vmem:[#allocation14 + $0x130] sm:$0xff]
    %v3369 = vld [vmem:[#allocation14 + $0x138] sm:$0xff]
    %v3370 = vld [vmem:[#allocation14 + $0x140] sm:$0xff]
    %v3371 = vld [vmem:[#allocation14 + $0x148] sm:$0xff]
    %v3372 = vld [vmem:[#allocation14 + $0x150] sm:$0xff]
    %v3373 = vld [vmem:[#allocation14 + $0x158] sm:$0xff]
    %v3374 = vld [vmem:[#allocation14 + $0x160] sm:$0xff]
    %v3375 = vld [vmem:[#allocation14 + $0x168] sm:$0xff]
    %v3376 = vld [vmem:[#allocation14 + $0x170] sm:$0xff]
    %v3377 = vld [vmem:[#allocation14 + $0x178] sm:$0xff]
    %v3378 = vld [vmem:[#allocation14 + $0x180] sm:$0xff]
    %v3379 = vld [vmem:[#allocation14 + $0x188] sm:$0xff]
    %v3380 = vld [vmem:[#allocation14 + $0x190] sm:$0xff]
    %v3381 = vld [vmem:[#allocation14 + $0x198] sm:$0xff]
    %v3382 = vld [vmem:[#allocation14 + $0x1a0] sm:$0xff]
    %v3383 = vld [vmem:[#allocation14 + $0x1a8] sm:$0xff]
    %v3384 = vld [vmem:[#allocation14 + $0x1b0] sm:$0xff]
    %v3385 = vld [vmem:[#allocation14 + $0x1b8] sm:$0xff]
    %v3386 = vld [vmem:[#allocation14 + $0x1c0] sm:$0xff]
    %v3387 = vld [vmem:[#allocation14 + $0x1c8] sm:$0xff]
    %v3388 = vld [vmem:[#allocation14 + $0x1d0] sm:$0xff]
    %v3389 = vld [vmem:[#allocation14 + $0x1d8] sm:$0xff]
    %v3390 = vld [vmem:[#allocation14 + $0x1e0] sm:$0xff]
    %v3391 = vld [vmem:[#allocation14 + $0x1e8] sm:$0xff]
    %v3392 = vld [vmem:[#allocation14 + $0x1f0] sm:$0xff]
    %v3393 = vld [vmem:[#allocation14 + $0x1f8] sm:$0xff]
    %v3394 = vld [vmem:[%s4] sm:$0xf]
    %v3459 = vunpack.c.l.b16 %v3330
    %v3460 = vunpack.c.h.b16 %v3330
    %v3461 = vunpack.c.l.b16 %v3331
    %v3462 = vunpack.c.h.b16 %v3331
    %v3463 = vunpack.c.l.b16 %v3332
    %v3464 = vunpack.c.h.b16 %v3332
    %v3465 = vunpack.c.l.b16 %v3333
    %v3466 = vunpack.c.h.b16 %v3333
    %v3467 = vunpack.c.l.b16 %v3334
    %v3468 = vunpack.c.h.b16 %v3334
    %v3469 = vunpack.c.l.b16 %v3335
    %v3470 = vunpack.c.h.b16 %v3335
    %v3471 = vunpack.c.l.b16 %v3336
    %v3472 = vunpack.c.h.b16 %v3336
    %v3473 = vunpack.c.l.b16 %v3337
    %v3474 = vunpack.c.h.b16 %v3337
    %v3475 = vunpack.c.l.b16 %v3338
    %v3476 = vunpack.c.h.b16 %v3338
    %v3477 = vunpack.c.l.b16 %v3339
    %v3478 = vunpack.c.h.b16 %v3339
    %v3479 = vunpack.c.l.b16 %v3340
    %v3480 = vunpack.c.h.b16 %v3340
    %v3481 = vunpack.c.l.b16 %v3341
    %v3482 = vunpack.c.h.b16 %v3341
    %v3483 = vunpack.c.l.b16 %v3342
    %v3484 = vunpack.c.h.b16 %v3342
    %v3485 = vunpack.c.l.b16 %v3343
    %v3486 = vunpack.c.h.b16 %v3343
    %v3487 = vunpack.c.l.b16 %v3344
    %v3488 = vunpack.c.h.b16 %v3344
    %v3489 = vunpack.c.l.b16 %v3345
    %v3490 = vunpack.c.h.b16 %v3345
    %v3491 = vunpack.c.l.b16 %v3346
    %v3492 = vunpack.c.h.b16 %v3346
    %v3493 = vunpack.c.l.b16 %v3347
    %v3494 = vunpack.c.h.b16 %v3347
    %v3495 = vunpack.c.l.b16 %v3348
    %v3496 = vunpack.c.h.b16 %v3348
    %v3497 = vunpack.c.l.b16 %v3349
    %v3498 = vunpack.c.h.b16 %v3349
    %v3499 = vunpack.c.l.b16 %v3350
    %v3500 = vunpack.c.h.b16 %v3350
    %v3501 = vunpack.c.l.b16 %v3351
    %v3502 = vunpack.c.h.b16 %v3351
    %v3503 = vunpack.c.l.b16 %v3352
    %v3504 = vunpack.c.h.b16 %v3352
    %v3505 = vunpack.c.l.b16 %v3353
    %v3506 = vunpack.c.h.b16 %v3353
    %v3507 = vunpack.c.l.b16 %v3354
    %v3508 = vunpack.c.h.b16 %v3354
    %v3509 = vunpack.c.l.b16 %v3355
    %v3510 = vunpack.c.h.b16 %v3355
    %v3511 = vunpack.c.l.b16 %v3356
    %v3512 = vunpack.c.h.b16 %v3356
    %v3513 = vunpack.c.l.b16 %v3357
    %v3514 = vunpack.c.h.b16 %v3357
    %v3515 = vunpack.c.l.b16 %v3358
    %v3516 = vunpack.c.h.b16 %v3358
    %v3517 = vunpack.c.l.b16 %v3359
    %v3518 = vunpack.c.h.b16 %v3359
    %v3519 = vunpack.c.l.b16 %v3360
    %v3520 = vunpack.c.h.b16 %v3360
    %v3521 = vunpack.c.l.b16 %v3361
    %v3522 = vunpack.c.h.b16 %v3361
    %v3523 = vunpack.c.l.b16 %v3362
    %v3524 = vunpack.c.h.b16 %v3362
    %v3525 = vunpack.c.l.b16 %v3363
    %v3526 = vunpack.c.h.b16 %v3363
    %v3527 = vunpack.c.l.b16 %v3364
    %v3528 = vunpack.c.h.b16 %v3364
    %v3529 = vunpack.c.l.b16 %v3365
    %v3530 = vunpack.c.h.b16 %v3365
    %v3531 = vunpack.c.l.b16 %v3366
    %v3532 = vunpack.c.h.b16 %v3366
    %v3533 = vunpack.c.l.b16 %v3367
    %v3534 = vunpack.c.h.b16 %v3367
    %v3535 = vunpack.c.l.b16 %v3368
    %v3536 = vunpack.c.h.b16 %v3368
    %v3537 = vunpack.c.l.b16 %v3369
    %v3538 = vunpack.c.h.b16 %v3369
    %v3539 = vunpack.c.l.b16 %v3370
    %v3540 = vunpack.c.h.b16 %v3370
    %v3541 = vunpack.c.l.b16 %v3371
    %v3542 = vunpack.c.h.b16 %v3371
    %v3543 = vunpack.c.l.b16 %v3372
    %v3544 = vunpack.c.h.b16 %v3372
    %v3545 = vunpack.c.l.b16 %v3373
    %v3546 = vunpack.c.h.b16 %v3373
    %v3547 = vunpack.c.l.b16 %v3374
    %v3548 = vunpack.c.h.b16 %v3374
    %v3549 = vunpack.c.l.b16 %v3375
    %v3550 = vunpack.c.h.b16 %v3375
    %v3551 = vunpack.c.l.b16 %v3376
    %v3552 = vunpack.c.h.b16 %v3376
    %v3553 = vunpack.c.l.b16 %v3377
    %v3554 = vunpack.c.h.b16 %v3377
    %v3555 = vunpack.c.l.b16 %v3378
    %v3556 = vunpack.c.h.b16 %v3378
    %v3557 = vunpack.c.l.b16 %v3379
    %v3558 = vunpack.c.h.b16 %v3379
    %v3559 = vunpack.c.l.b16 %v3380
    %v3560 = vunpack.c.h.b16 %v3380
    %v3561 = vunpack.c.l.b16 %v3381
    %v3562 = vunpack.c.h.b16 %v3381
    %v3563 = vunpack.c.l.b16 %v3382
    %v3564 = vunpack.c.h.b16 %v3382
    %v3565 = vunpack.c.l.b16 %v3383
    %v3566 = vunpack.c.h.b16 %v3383
    %v3567 = vunpack.c.l.b16 %v3384
    %v3568 = vunpack.c.h.b16 %v3384
    %v3569 = vunpack.c.l.b16 %v3385
    %v3570 = vunpack.c.h.b16 %v3385
    %v3571 = vunpack.c.l.b16 %v3386
    %v3572 = vunpack.c.h.b16 %v3386
    %v3573 = vunpack.c.l.b16 %v3387
    %v3574 = vunpack.c.h.b16 %v3387
    %v3575 = vunpack.c.l.b16 %v3388
    %v3576 = vunpack.c.h.b16 %v3388
    %v3577 = vunpack.c.l.b16 %v3389
    %v3578 = vunpack.c.h.b16 %v3389
    %v3579 = vunpack.c.l.b16 %v3390
    %v3580 = vunpack.c.h.b16 %v3390
    %v3581 = vunpack.c.l.b16 %v3391
    %v3582 = vunpack.c.h.b16 %v3391
    %v3583 = vunpack.c.l.b16 %v3392
    %v3584 = vunpack.c.h.b16 %v3392
    %v3585 = vunpack.c.l.b16 %v3393
    %v3586 = vunpack.c.h.b16 %v3393
    %v3587 = vpack.c.b16 %v3463, %v3459
    %v3588 = vpack.c.b16 %v3464, %v3460
    %v3589 = vpack.c.b16 %v3465, %v3461
    %v3590 = vpack.c.b16 %v3466, %v3462
    %v3591 = vpack.c.b16 %v3471, %v3467
    %v3592 = vpack.c.b16 %v3472, %v3468
    %v3593 = vpack.c.b16 %v3473, %v3469
    %v3594 = vpack.c.b16 %v3474, %v3470
    %v3595 = vpack.c.b16 %v3479, %v3475
    %v3596 = vpack.c.b16 %v3480, %v3476
    %v3597 = vpack.c.b16 %v3481, %v3477
    %v3598 = vpack.c.b16 %v3482, %v3478
    %v3599 = vpack.c.b16 %v3487, %v3483
    %v3600 = vpack.c.b16 %v3488, %v3484
    %v3601 = vpack.c.b16 %v3489, %v3485
    %v3602 = vpack.c.b16 %v3490, %v3486
    %v3603 = vpack.c.b16 %v3495, %v3491
    %v3604 = vpack.c.b16 %v3496, %v3492
    %v3605 = vpack.c.b16 %v3497, %v3493
    %v3606 = vpack.c.b16 %v3498, %v3494
    %v3607 = vpack.c.b16 %v3503, %v3499
    %v3608 = vpack.c.b16 %v3504, %v3500
    %v3609 = vpack.c.b16 %v3505, %v3501
    %v3610 = vpack.c.b16 %v3506, %v3502
    %v3611 = vpack.c.b16 %v3511, %v3507
    %v3612 = vpack.c.b16 %v3512, %v3508
    %v3613 = vpack.c.b16 %v3513, %v3509
    %v3614 = vpack.c.b16 %v3514, %v3510
    %v3615 = vpack.c.b16 %v3519, %v3515
    %v3616 = vpack.c.b16 %v3520, %v3516
    %v3617 = vpack.c.b16 %v3521, %v3517
    %v3618 = vpack.c.b16 %v3522, %v3518
    %v3619 = vpack.c.b16 %v3527, %v3523
    %v3620 = vpack.c.b16 %v3528, %v3524
    %v3621 = vpack.c.b16 %v3529, %v3525
    %v3622 = vpack.c.b16 %v3530, %v3526
    %v3623 = vpack.c.b16 %v3535, %v3531
    %v3624 = vpack.c.b16 %v3536, %v3532
    %v3625 = vpack.c.b16 %v3537, %v3533
    %v3626 = vpack.c.b16 %v3538, %v3534
    %v3627 = vpack.c.b16 %v3543, %v3539
    %v3628 = vpack.c.b16 %v3544, %v3540
    %v3629 = vpack.c.b16 %v3545, %v3541
    %v3630 = vpack.c.b16 %v3546, %v3542
    %v3631 = vpack.c.b16 %v3551, %v3547
    %v3632 = vpack.c.b16 %v3552, %v3548
    %v3633 = vpack.c.b16 %v3553, %v3549
    %v3634 = vpack.c.b16 %v3554, %v3550
    %v3635 = vpack.c.b16 %v3559, %v3555
    %v3636 = vpack.c.b16 %v3560, %v3556
    %v3637 = vpack.c.b16 %v3561, %v3557
    %v3638 = vpack.c.b16 %v3562, %v3558
    %v3639 = vpack.c.b16 %v3567, %v3563
    %v3640 = vpack.c.b16 %v3568, %v3564
    %v3641 = vpack.c.b16 %v3569, %v3565
    %v3642 = vpack.c.b16 %v3570, %v3566
    %v3643 = vpack.c.b16 %v3575, %v3571
    %v3644 = vpack.c.b16 %v3576, %v3572
    %v3645 = vpack.c.b16 %v3577, %v3573
    %v3646 = vpack.c.b16 %v3578, %v3574
    %v3647 = vpack.c.b16 %v3583, %v3579
    %v3648 = vpack.c.b16 %v3584, %v3580
    %v3649 = vpack.c.b16 %v3585, %v3581
    %v3650 = vpack.c.b16 %v3586, %v3582
    %v3716 = vperm.slane %v3394, 0
    %v3717 = vperm.slane %v3394, 1
    %v3718 = vperm.slane %v3394, 2
    %v3719 = vperm.slane %v3394, 3
    %3724 = vmatpush.bf16.msra.mxu0 %v3615
    %3725 = vmatpush.bf16.msra.mxu0 %v3611
    %3726 = vmatpush.bf16.msra.mxu0 %v3607
    %3727 = vmatpush.bf16.msra.mxu0 %v3603
    %3728 = vmatpush.bf16.msra.mxu0 %v3599
    %3729 = vmatpush.bf16.msra.mxu0 %v3595
    %3730 = vmatpush.bf16.msra.mxu0 %v3591
    %3731 = vmatpush.bf16.msra.mxu0 %v3587
    %3732 = vmatmul.bf16.gmra.mxu0 %v3328
    %v3733 = vpop.f32.mrf.mxu0
    %v3734 = vadd.f32 %v3716, %v3733
    %v3735 = vpop.f32.mrf.mxu0
    %3736 = vdwg.mxu0
    %3737 = vmatpush.bf16.msra.mxu0 %v3647
    %3738 = vmatpush.bf16.msra.mxu0 %v3643
    %3739 = vmatpush.bf16.msra.mxu0 %v3639
    %3740 = vmatpush.bf16.msra.mxu0 %v3635
    %3741 = vmatpush.bf16.msra.mxu0 %v3631
    %3742 = vmatpush.bf16.msra.mxu0 %v3627
    %3743 = vmatpush.bf16.msra.mxu0 %v3623
    %3744 = vmatpush.bf16.msra.mxu0 %v3619
    %3745 = vmatmul.bf16.gmra.mxu0 %v3329
    %v3746 = vpop.f32.mrf.mxu0
    %v3747 = vadd.f32 %v3734, %v3746
    %v3748 = vpop.f32.mrf.mxu0
    %3749 = vdwg.mxu0
    %3750 = vmatpush.bf16.msra.mxu0 %v3616
    %3751 = vmatpush.bf16.msra.mxu0 %v3612
    %3752 = vmatpush.bf16.msra.mxu0 %v3608
    %3753 = vmatpush.bf16.msra.mxu0 %v3604
    %3754 = vmatpush.bf16.msra.mxu0 %v3600
    %3755 = vmatpush.bf16.msra.mxu0 %v3596
    %3756 = vmatpush.bf16.msra.mxu0 %v3592
    %3757 = vmatpush.bf16.msra.mxu0 %v3588
    %3758 = vmatmul.bf16.gmra.mxu0 %v3328
    %v3759 = vpop.f32.mrf.mxu0
    %v3760 = vadd.f32 %v3717, %v3759
    %v3761 = vpop.f32.mrf.mxu0
    %3762 = vdwg.mxu0
    %3763 = vmatpush.bf16.msra.mxu0 %v3648
    %3764 = vmatpush.bf16.msra.mxu0 %v3644
    %3765 = vmatpush.bf16.msra.mxu0 %v3640
    %3766 = vmatpush.bf16.msra.mxu0 %v3636
    %3767 = vmatpush.bf16.msra.mxu0 %v3632
    %3768 = vmatpush.bf16.msra.mxu0 %v3628
    %3769 = vmatpush.bf16.msra.mxu0 %v3624
    %3770 = vmatpush.bf16.msra.mxu0 %v3620
    %3771 = vmatmul.bf16.gmra.mxu0 %v3329
    %v3772 = vpop.f32.mrf.mxu0
    %v3773 = vadd.f32 %v3760, %v3772
    %v3774 = vpop.f32.mrf.mxu0
    %3775 = vdwg.mxu0
    %3776 = vmatpush.bf16.msra.mxu0 %v3617
    %3777 = vmatpush.bf16.msra.mxu0 %v3613
    %3778 = vmatpush.bf16.msra.mxu0 %v3609
    %3779 = vmatpush.bf16.msra.mxu0 %v3605
    %3780 = vmatpush.bf16.msra.mxu0 %v3601
    %3781 = vmatpush.bf16.msra.mxu0 %v3597
    %3782 = vmatpush.bf16.msra.mxu0 %v3593
    %3783 = vmatpush.bf16.msra.mxu0 %v3589
    %3784 = vmatmul.bf16.gmra.mxu0 %v3328
    %v3785 = vpop.f32.mrf.mxu0
    %v3786 = vadd.f32 %v3718, %v3785
    %v3787 = vpop.f32.mrf.mxu0
    %3788 = vdwg.mxu0
    %3789 = vmatpush.bf16.msra.mxu0 %v3649
    %3790 = vmatpush.bf16.msra.mxu0 %v3645
    %3791 = vmatpush.bf16.msra.mxu0 %v3641
    %3792 = vmatpush.bf16.msra.mxu0 %v3637
    %3793 = vmatpush.bf16.msra.mxu0 %v3633
    %3794 = vmatpush.bf16.msra.mxu0 %v3629
    %3795 = vmatpush.bf16.msra.mxu0 %v3625
    %3796 = vmatpush.bf16.msra.mxu0 %v3621
    %3797 = vmatmul.bf16.gmra.mxu0 %v3329
    %v3798 = vpop.f32.mrf.mxu0
    %v3799 = vadd.f32 %v3786, %v3798
    %v3800 = vpop.f32.mrf.mxu0
    %3801 = vdwg.mxu0
    %3802 = vmatpush.bf16.msra.mxu0 %v3618
    %3803 = vmatpush.bf16.msra.mxu0 %v3614
    %3804 = vmatpush.bf16.msra.mxu0 %v3610
    %3805 = vmatpush.bf16.msra.mxu0 %v3606
    %3806 = vmatpush.bf16.msra.mxu0 %v3602
    %3807 = vmatpush.bf16.msra.mxu0 %v3598
    %3808 = vmatpush.bf16.msra.mxu0 %v3594
    %3809 = vmatpush.bf16.msra.mxu0 %v3590
    %3810 = vmatmul.bf16.gmra.mxu0 %v3328
    %v3811 = vpop.f32.mrf.mxu0
    %v3812 = vadd.f32 %v3719, %v3811
    %v3813 = vpop.f32.mrf.mxu0
    %3814 = vdwg.mxu0
    %3815 = vmatpush.bf16.msra.mxu0 %v3650
    %3816 = vmatpush.bf16.msra.mxu0 %v3646
    %3817 = vmatpush.bf16.msra.mxu0 %v3642
    %3818 = vmatpush.bf16.msra.mxu0 %v3638
    %3819 = vmatpush.bf16.msra.mxu0 %v3634
    %3820 = vmatpush.bf16.msra.mxu0 %v3630
    %3821 = vmatpush.bf16.msra.mxu0 %v3626
    %3822 = vmatpush.bf16.msra.mxu0 %v3622
    %3823 = vmatmul.bf16.gmra.mxu0 %v3329
    %v3824 = vpop.f32.mrf.mxu0
    %v3825 = vadd.f32 %v3812, %v3824
    %v3826 = vpop.f32.mrf.mxu0
    %3827 = vdwg.mxu0
    %v3828 = vmul.f32 %v3747, 0.5
    %v3829 = vtanh.pop %v3828
    %v3830 = vadd.f32 %v3829, 1.0
    %v3831 = vmul.f32 %v3830, 0.5
    %v3832 = vmul.f32 %v3773, 0.5
    %v3833 = vtanh.pop %v3832
    %v3834 = vadd.f32 %v3833, 1.0
    %v3835 = vmul.f32 %v3834, 0.5
    %v3836 = vmul.f32 %v3831, %v3825
    %v3837 = vadd.f32 %v3799, %v3836
    %v3838 = vtanh.pop %v3837
    %v3839 = vsub.f32 1.0, %v3835
    %v3840 = vmul.f32 %v3839, %v3838
    %v3841 = vmul.f32 %v3835, %v3323
    %v3842 = vadd.f32 %v3840, %v3841
    %3843 = vst [vmem:[#allocation2 + $0x6] sm:$0x1] %v3842
    %s3844 = sld [smem:[#allocation9 + $0x7]]
    %s3845 = scalar_lea.vmem [#allocation13], %s3844
    %v3846 = vld [vmem:[%s3845] sm:$0x1]
    %v3847 = vpack.c.bf16 %v3846, %v3846
    %v3848 = vpack.c.bf16 %v3842, %v3842
    %v3849 = vld [vmem:[#allocation14] sm:$0xff]
    %v3850 = vld [vmem:[#allocation14 + $0x8] sm:$0xff]
    %v3851 = vld [vmem:[#allocation14 + $0x10] sm:$0xff]
    %v3852 = vld [vmem:[#allocation14 + $0x18] sm:$0xff]
    %v3853 = vld [vmem:[#allocation14 + $0x20] sm:$0xff]
    %v3854 = vld [vmem:[#allocation14 + $0x28] sm:$0xff]
    %v3855 = vld [vmem:[#allocation14 + $0x30] sm:$0xff]
    %v3856 = vld [vmem:[#allocation14 + $0x38] sm:$0xff]
    %v3857 = vld [vmem:[#allocation14 + $0x40] sm:$0xff]
    %v3858 = vld [vmem:[#allocation14 + $0x48] sm:$0xff]
    %v3859 = vld [vmem:[#allocation14 + $0x50] sm:$0xff]
    %v3860 = vld [vmem:[#allocation14 + $0x58] sm:$0xff]
    %v3861 = vld [vmem:[#allocation14 + $0x60] sm:$0xff]
    %v3862 = vld [vmem:[#allocation14 + $0x68] sm:$0xff]
    %v3863 = vld [vmem:[#allocation14 + $0x70] sm:$0xff]
    %v3864 = vld [vmem:[#allocation14 + $0x78] sm:$0xff]
    %v3865 = vld [vmem:[#allocation14 + $0x80] sm:$0xff]
    %v3866 = vld [vmem:[#allocation14 + $0x88] sm:$0xff]
    %v3867 = vld [vmem:[#allocation14 + $0x90] sm:$0xff]
    %v3868 = vld [vmem:[#allocation14 + $0x98] sm:$0xff]
    %v3869 = vld [vmem:[#allocation14 + $0xa0] sm:$0xff]
    %v3870 = vld [vmem:[#allocation14 + $0xa8] sm:$0xff]
    %v3871 = vld [vmem:[#allocation14 + $0xb0] sm:$0xff]
    %v3872 = vld [vmem:[#allocation14 + $0xb8] sm:$0xff]
    %v3873 = vld [vmem:[#allocation14 + $0xc0] sm:$0xff]
    %v3874 = vld [vmem:[#allocation14 + $0xc8] sm:$0xff]
    %v3875 = vld [vmem:[#allocation14 + $0xd0] sm:$0xff]
    %v3876 = vld [vmem:[#allocation14 + $0xd8] sm:$0xff]
    %v3877 = vld [vmem:[#allocation14 + $0xe0] sm:$0xff]
    %v3878 = vld [vmem:[#allocation14 + $0xe8] sm:$0xff]
    %v3879 = vld [vmem:[#allocation14 + $0xf0] sm:$0xff]
    %v3880 = vld [vmem:[#allocation14 + $0xf8] sm:$0xff]
    %v3881 = vld [vmem:[#allocation14 + $0x100] sm:$0xff]
    %v3882 = vld [vmem:[#allocation14 + $0x108] sm:$0xff]
    %v3883 = vld [vmem:[#allocation14 + $0x110] sm:$0xff]
    %v3884 = vld [vmem:[#allocation14 + $0x118] sm:$0xff]
    %v3885 = vld [vmem:[#allocation14 + $0x120] sm:$0xff]
    %v3886 = vld [vmem:[#allocation14 + $0x128] sm:$0xff]
    %v3887 = vld [vmem:[#allocation14 + $0x130] sm:$0xff]
    %v3888 = vld [vmem:[#allocation14 + $0x138] sm:$0xff]
    %v3889 = vld [vmem:[#allocation14 + $0x140] sm:$0xff]
    %v3890 = vld [vmem:[#allocation14 + $0x148] sm:$0xff]
    %v3891 = vld [vmem:[#allocation14 + $0x150] sm:$0xff]
    %v3892 = vld [vmem:[#allocation14 + $0x158] sm:$0xff]
    %v3893 = vld [vmem:[#allocation14 + $0x160] sm:$0xff]
    %v3894 = vld [vmem:[#allocation14 + $0x168] sm:$0xff]
    %v3895 = vld [vmem:[#allocation14 + $0x170] sm:$0xff]
    %v3896 = vld [vmem:[#allocation14 + $0x178] sm:$0xff]
    %v3897 = vld [vmem:[#allocation14 + $0x180] sm:$0xff]
    %v3898 = vld [vmem:[#allocation14 + $0x188] sm:$0xff]
    %v3899 = vld [vmem:[#allocation14 + $0x190] sm:$0xff]
    %v3900 = vld [vmem:[#allocation14 + $0x198] sm:$0xff]
    %v3901 = vld [vmem:[#allocation14 + $0x1a0] sm:$0xff]
    %v3902 = vld [vmem:[#allocation14 + $0x1a8] sm:$0xff]
    %v3903 = vld [vmem:[#allocation14 + $0x1b0] sm:$0xff]
    %v3904 = vld [vmem:[#allocation14 + $0x1b8] sm:$0xff]
    %v3905 = vld [vmem:[#allocation14 + $0x1c0] sm:$0xff]
    %v3906 = vld [vmem:[#allocation14 + $0x1c8] sm:$0xff]
    %v3907 = vld [vmem:[#allocation14 + $0x1d0] sm:$0xff]
    %v3908 = vld [vmem:[#allocation14 + $0x1d8] sm:$0xff]
    %v3909 = vld [vmem:[#allocation14 + $0x1e0] sm:$0xff]
    %v3910 = vld [vmem:[#allocation14 + $0x1e8] sm:$0xff]
    %v3911 = vld [vmem:[#allocation14 + $0x1f0] sm:$0xff]
    %v3912 = vld [vmem:[#allocation14 + $0x1f8] sm:$0xff]
    %v3913 = vld [vmem:[%s4] sm:$0xf]
    %v3978 = vunpack.c.l.b16 %v3849
    %v3979 = vunpack.c.h.b16 %v3849
    %v3980 = vunpack.c.l.b16 %v3850
    %v3981 = vunpack.c.h.b16 %v3850
    %v3982 = vunpack.c.l.b16 %v3851
    %v3983 = vunpack.c.h.b16 %v3851
    %v3984 = vunpack.c.l.b16 %v3852
    %v3985 = vunpack.c.h.b16 %v3852
    %v3986 = vunpack.c.l.b16 %v3853
    %v3987 = vunpack.c.h.b16 %v3853
    %v3988 = vunpack.c.l.b16 %v3854
    %v3989 = vunpack.c.h.b16 %v3854
    %v3990 = vunpack.c.l.b16 %v3855
    %v3991 = vunpack.c.h.b16 %v3855
    %v3992 = vunpack.c.l.b16 %v3856
    %v3993 = vunpack.c.h.b16 %v3856
    %v3994 = vunpack.c.l.b16 %v3857
    %v3995 = vunpack.c.h.b16 %v3857
    %v3996 = vunpack.c.l.b16 %v3858
    %v3997 = vunpack.c.h.b16 %v3858
    %v3998 = vunpack.c.l.b16 %v3859
    %v3999 = vunpack.c.h.b16 %v3859
    %v4000 = vunpack.c.l.b16 %v3860
    %v4001 = vunpack.c.h.b16 %v3860
    %v4002 = vunpack.c.l.b16 %v3861
    %v4003 = vunpack.c.h.b16 %v3861
    %v4004 = vunpack.c.l.b16 %v3862
    %v4005 = vunpack.c.h.b16 %v3862
    %v4006 = vunpack.c.l.b16 %v3863
    %v4007 = vunpack.c.h.b16 %v3863
    %v4008 = vunpack.c.l.b16 %v3864
    %v4009 = vunpack.c.h.b16 %v3864
    %v4010 = vunpack.c.l.b16 %v3865
    %v4011 = vunpack.c.h.b16 %v3865
    %v4012 = vunpack.c.l.b16 %v3866
    %v4013 = vunpack.c.h.b16 %v3866
    %v4014 = vunpack.c.l.b16 %v3867
    %v4015 = vunpack.c.h.b16 %v3867
    %v4016 = vunpack.c.l.b16 %v3868
    %v4017 = vunpack.c.h.b16 %v3868
    %v4018 = vunpack.c.l.b16 %v3869
    %v4019 = vunpack.c.h.b16 %v3869
    %v4020 = vunpack.c.l.b16 %v3870
    %v4021 = vunpack.c.h.b16 %v3870
    %v4022 = vunpack.c.l.b16 %v3871
    %v4023 = vunpack.c.h.b16 %v3871
    %v4024 = vunpack.c.l.b16 %v3872
    %v4025 = vunpack.c.h.b16 %v3872
    %v4026 = vunpack.c.l.b16 %v3873
    %v4027 = vunpack.c.h.b16 %v3873
    %v4028 = vunpack.c.l.b16 %v3874
    %v4029 = vunpack.c.h.b16 %v3874
    %v4030 = vunpack.c.l.b16 %v3875
    %v4031 = vunpack.c.h.b16 %v3875
    %v4032 = vunpack.c.l.b16 %v3876
    %v4033 = vunpack.c.h.b16 %v3876
    %v4034 = vunpack.c.l.b16 %v3877
    %v4035 = vunpack.c.h.b16 %v3877
    %v4036 = vunpack.c.l.b16 %v3878
    %v4037 = vunpack.c.h.b16 %v3878
    %v4038 = vunpack.c.l.b16 %v3879
    %v4039 = vunpack.c.h.b16 %v3879
    %v4040 = vunpack.c.l.b16 %v3880
    %v4041 = vunpack.c.h.b16 %v3880
    %v4042 = vunpack.c.l.b16 %v3881
    %v4043 = vunpack.c.h.b16 %v3881
    %v4044 = vunpack.c.l.b16 %v3882
    %v4045 = vunpack.c.h.b16 %v3882
    %v4046 = vunpack.c.l.b16 %v3883
    %v4047 = vunpack.c.h.b16 %v3883
    %v4048 = vunpack.c.l.b16 %v3884
    %v4049 = vunpack.c.h.b16 %v3884
    %v4050 = vunpack.c.l.b16 %v3885
    %v4051 = vunpack.c.h.b16 %v3885
    %v4052 = vunpack.c.l.b16 %v3886
    %v4053 = vunpack.c.h.b16 %v3886
    %v4054 = vunpack.c.l.b16 %v3887
    %v4055 = vunpack.c.h.b16 %v3887
    %v4056 = vunpack.c.l.b16 %v3888
    %v4057 = vunpack.c.h.b16 %v3888
    %v4058 = vunpack.c.l.b16 %v3889
    %v4059 = vunpack.c.h.b16 %v3889
    %v4060 = vunpack.c.l.b16 %v3890
    %v4061 = vunpack.c.h.b16 %v3890
    %v4062 = vunpack.c.l.b16 %v3891
    %v4063 = vunpack.c.h.b16 %v3891
    %v4064 = vunpack.c.l.b16 %v3892
    %v4065 = vunpack.c.h.b16 %v3892
    %v4066 = vunpack.c.l.b16 %v3893
    %v4067 = vunpack.c.h.b16 %v3893
    %v4068 = vunpack.c.l.b16 %v3894
    %v4069 = vunpack.c.h.b16 %v3894
    %v4070 = vunpack.c.l.b16 %v3895
    %v4071 = vunpack.c.h.b16 %v3895
    %v4072 = vunpack.c.l.b16 %v3896
    %v4073 = vunpack.c.h.b16 %v3896
    %v4074 = vunpack.c.l.b16 %v3897
    %v4075 = vunpack.c.h.b16 %v3897
    %v4076 = vunpack.c.l.b16 %v3898
    %v4077 = vunpack.c.h.b16 %v3898
    %v4078 = vunpack.c.l.b16 %v3899
    %v4079 = vunpack.c.h.b16 %v3899
    %v4080 = vunpack.c.l.b16 %v3900
    %v4081 = vunpack.c.h.b16 %v3900
    %v4082 = vunpack.c.l.b16 %v3901
    %v4083 = vunpack.c.h.b16 %v3901
    %v4084 = vunpack.c.l.b16 %v3902
    %v4085 = vunpack.c.h.b16 %v3902
    %v4086 = vunpack.c.l.b16 %v3903
    %v4087 = vunpack.c.h.b16 %v3903
    %v4088 = vunpack.c.l.b16 %v3904
    %v4089 = vunpack.c.h.b16 %v3904
    %v4090 = vunpack.c.l.b16 %v3905
    %v4091 = vunpack.c.h.b16 %v3905
    %v4092 = vunpack.c.l.b16 %v3906
    %v4093 = vunpack.c.h.b16 %v3906
    %v4094 = vunpack.c.l.b16 %v3907
    %v4095 = vunpack.c.h.b16 %v3907
    %v4096 = vunpack.c.l.b16 %v3908
    %v4097 = vunpack.c.h.b16 %v3908
    %v4098 = vunpack.c.l.b16 %v3909
    %v4099 = vunpack.c.h.b16 %v3909
    %v4100 = vunpack.c.l.b16 %v3910
    %v4101 = vunpack.c.h.b16 %v3910
    %v4102 = vunpack.c.l.b16 %v3911
    %v4103 = vunpack.c.h.b16 %v3911
    %v4104 = vunpack.c.l.b16 %v3912
    %v4105 = vunpack.c.h.b16 %v3912
    %v4106 = vpack.c.b16 %v3982, %v3978
    %v4107 = vpack.c.b16 %v3983, %v3979
    %v4108 = vpack.c.b16 %v3984, %v3980
    %v4109 = vpack.c.b16 %v3985, %v3981
    %v4110 = vpack.c.b16 %v3990, %v3986
    %v4111 = vpack.c.b16 %v3991, %v3987
    %v4112 = vpack.c.b16 %v3992, %v3988
    %v4113 = vpack.c.b16 %v3993, %v3989
    %v4114 = vpack.c.b16 %v3998, %v3994
    %v4115 = vpack.c.b16 %v3999, %v3995
    %v4116 = vpack.c.b16 %v4000, %v3996
    %v4117 = vpack.c.b16 %v4001, %v3997
    %v4118 = vpack.c.b16 %v4006, %v4002
    %v4119 = vpack.c.b16 %v4007, %v4003
    %v4120 = vpack.c.b16 %v4008, %v4004
    %v4121 = vpack.c.b16 %v4009, %v4005
    %v4122 = vpack.c.b16 %v4014, %v4010
    %v4123 = vpack.c.b16 %v4015, %v4011
    %v4124 = vpack.c.b16 %v4016, %v4012
    %v4125 = vpack.c.b16 %v4017, %v4013
    %v4126 = vpack.c.b16 %v4022, %v4018
    %v4127 = vpack.c.b16 %v4023, %v4019
    %v4128 = vpack.c.b16 %v4024, %v4020
    %v4129 = vpack.c.b16 %v4025, %v4021
    %v4130 = vpack.c.b16 %v4030, %v4026
    %v4131 = vpack.c.b16 %v4031, %v4027
    %v4132 = vpack.c.b16 %v4032, %v4028
    %v4133 = vpack.c.b16 %v4033, %v4029
    %v4134 = vpack.c.b16 %v4038, %v4034
    %v4135 = vpack.c.b16 %v4039, %v4035
    %v4136 = vpack.c.b16 %v4040, %v4036
    %v4137 = vpack.c.b16 %v4041, %v4037
    %v4138 = vpack.c.b16 %v4046, %v4042
    %v4139 = vpack.c.b16 %v4047, %v4043
    %v4140 = vpack.c.b16 %v4048, %v4044
    %v4141 = vpack.c.b16 %v4049, %v4045
    %v4142 = vpack.c.b16 %v4054, %v4050
    %v4143 = vpack.c.b16 %v4055, %v4051
    %v4144 = vpack.c.b16 %v4056, %v4052
    %v4145 = vpack.c.b16 %v4057, %v4053
    %v4146 = vpack.c.b16 %v4062, %v4058
    %v4147 = vpack.c.b16 %v4063, %v4059
    %v4148 = vpack.c.b16 %v4064, %v4060
    %v4149 = vpack.c.b16 %v4065, %v4061
    %v4150 = vpack.c.b16 %v4070, %v4066
    %v4151 = vpack.c.b16 %v4071, %v4067
    %v4152 = vpack.c.b16 %v4072, %v4068
    %v4153 = vpack.c.b16 %v4073, %v4069
    %v4154 = vpack.c.b16 %v4078, %v4074
    %v4155 = vpack.c.b16 %v4079, %v4075
    %v4156 = vpack.c.b16 %v4080, %v4076
    %v4157 = vpack.c.b16 %v4081, %v4077
    %v4158 = vpack.c.b16 %v4086, %v4082
    %v4159 = vpack.c.b16 %v4087, %v4083
    %v4160 = vpack.c.b16 %v4088, %v4084
    %v4161 = vpack.c.b16 %v4089, %v4085
    %v4162 = vpack.c.b16 %v4094, %v4090
    %v4163 = vpack.c.b16 %v4095, %v4091
    %v4164 = vpack.c.b16 %v4096, %v4092
    %v4165 = vpack.c.b16 %v4097, %v4093
    %v4166 = vpack.c.b16 %v4102, %v4098
    %v4167 = vpack.c.b16 %v4103, %v4099
    %v4168 = vpack.c.b16 %v4104, %v4100
    %v4169 = vpack.c.b16 %v4105, %v4101
    %v4235 = vperm.slane %v3913, 0
    %v4236 = vperm.slane %v3913, 1
    %v4237 = vperm.slane %v3913, 2
    %v4238 = vperm.slane %v3913, 3
    %4243 = vmatpush.bf16.msra.mxu0 %v4134
    %4244 = vmatpush.bf16.msra.mxu0 %v4130
    %4245 = vmatpush.bf16.msra.mxu0 %v4126
    %4246 = vmatpush.bf16.msra.mxu0 %v4122
    %4247 = vmatpush.bf16.msra.mxu0 %v4118
    %4248 = vmatpush.bf16.msra.mxu0 %v4114
    %4249 = vmatpush.bf16.msra.mxu0 %v4110
    %4250 = vmatpush.bf16.msra.mxu0 %v4106
    %4251 = vmatmul.bf16.gmra.mxu0 %v3847
    %v4252 = vpop.f32.mrf.mxu0
    %v4253 = vadd.f32 %v4235, %v4252
    %v4254 = vpop.f32.mrf.mxu0
    %4255 = vdwg.mxu0
    %4256 = vmatpush.bf16.msra.mxu0 %v4166
    %4257 = vmatpush.bf16.msra.mxu0 %v4162
    %4258 = vmatpush.bf16.msra.mxu0 %v4158
    %4259 = vmatpush.bf16.msra.mxu0 %v4154
    %4260 = vmatpush.bf16.msra.mxu0 %v4150
    %4261 = vmatpush.bf16.msra.mxu0 %v4146
    %4262 = vmatpush.bf16.msra.mxu0 %v4142
    %4263 = vmatpush.bf16.msra.mxu0 %v4138
    %4264 = vmatmul.bf16.gmra.mxu0 %v3848
    %v4265 = vpop.f32.mrf.mxu0
    %v4266 = vadd.f32 %v4253, %v4265
    %v4267 = vpop.f32.mrf.mxu0
    %4268 = vdwg.mxu0
    %4269 = vmatpush.bf16.msra.mxu0 %v4135
    %4270 = vmatpush.bf16.msra.mxu0 %v4131
    %4271 = vmatpush.bf16.msra.mxu0 %v4127
    %4272 = vmatpush.bf16.msra.mxu0 %v4123
    %4273 = vmatpush.bf16.msra.mxu0 %v4119
    %4274 = vmatpush.bf16.msra.mxu0 %v4115
    %4275 = vmatpush.bf16.msra.mxu0 %v4111
    %4276 = vmatpush.bf16.msra.mxu0 %v4107
    %4277 = vmatmul.bf16.gmra.mxu0 %v3847
    %v4278 = vpop.f32.mrf.mxu0
    %v4279 = vadd.f32 %v4236, %v4278
    %v4280 = vpop.f32.mrf.mxu0
    %4281 = vdwg.mxu0
    %4282 = vmatpush.bf16.msra.mxu0 %v4167
    %4283 = vmatpush.bf16.msra.mxu0 %v4163
    %4284 = vmatpush.bf16.msra.mxu0 %v4159
    %4285 = vmatpush.bf16.msra.mxu0 %v4155
    %4286 = vmatpush.bf16.msra.mxu0 %v4151
    %4287 = vmatpush.bf16.msra.mxu0 %v4147
    %4288 = vmatpush.bf16.msra.mxu0 %v4143
    %4289 = vmatpush.bf16.msra.mxu0 %v4139
    %4290 = vmatmul.bf16.gmra.mxu0 %v3848
    %v4291 = vpop.f32.mrf.mxu0
    %v4292 = vadd.f32 %v4279, %v4291
    %v4293 = vpop.f32.mrf.mxu0
    %4294 = vdwg.mxu0
    %4295 = vmatpush.bf16.msra.mxu0 %v4136
    %4296 = vmatpush.bf16.msra.mxu0 %v4132
    %4297 = vmatpush.bf16.msra.mxu0 %v4128
    %4298 = vmatpush.bf16.msra.mxu0 %v4124
    %4299 = vmatpush.bf16.msra.mxu0 %v4120
    %4300 = vmatpush.bf16.msra.mxu0 %v4116
    %4301 = vmatpush.bf16.msra.mxu0 %v4112
    %4302 = vmatpush.bf16.msra.mxu0 %v4108
    %4303 = vmatmul.bf16.gmra.mxu0 %v3847
    %v4304 = vpop.f32.mrf.mxu0
    %v4305 = vadd.f32 %v4237, %v4304
    %v4306 = vpop.f32.mrf.mxu0
    %4307 = vdwg.mxu0
    %4308 = vmatpush.bf16.msra.mxu0 %v4168
    %4309 = vmatpush.bf16.msra.mxu0 %v4164
    %4310 = vmatpush.bf16.msra.mxu0 %v4160
    %4311 = vmatpush.bf16.msra.mxu0 %v4156
    %4312 = vmatpush.bf16.msra.mxu0 %v4152
    %4313 = vmatpush.bf16.msra.mxu0 %v4148
    %4314 = vmatpush.bf16.msra.mxu0 %v4144
    %4315 = vmatpush.bf16.msra.mxu0 %v4140
    %4316 = vmatmul.bf16.gmra.mxu0 %v3848
    %v4317 = vpop.f32.mrf.mxu0
    %v4318 = vadd.f32 %v4305, %v4317
    %v4319 = vpop.f32.mrf.mxu0
    %4320 = vdwg.mxu0
    %4321 = vmatpush.bf16.msra.mxu0 %v4137
    %4322 = vmatpush.bf16.msra.mxu0 %v4133
    %4323 = vmatpush.bf16.msra.mxu0 %v4129
    %4324 = vmatpush.bf16.msra.mxu0 %v4125
    %4325 = vmatpush.bf16.msra.mxu0 %v4121
    %4326 = vmatpush.bf16.msra.mxu0 %v4117
    %4327 = vmatpush.bf16.msra.mxu0 %v4113
    %4328 = vmatpush.bf16.msra.mxu0 %v4109
    %4329 = vmatmul.bf16.gmra.mxu0 %v3847
    %v4330 = vpop.f32.mrf.mxu0
    %v4331 = vadd.f32 %v4238, %v4330
    %v4332 = vpop.f32.mrf.mxu0
    %4333 = vdwg.mxu0
    %4334 = vmatpush.bf16.msra.mxu0 %v4169
    %4335 = vmatpush.bf16.msra.mxu0 %v4165
    %4336 = vmatpush.bf16.msra.mxu0 %v4161
    %4337 = vmatpush.bf16.msra.mxu0 %v4157
    %4338 = vmatpush.bf16.msra.mxu0 %v4153
    %4339 = vmatpush.bf16.msra.mxu0 %v4149
    %4340 = vmatpush.bf16.msra.mxu0 %v4145
    %4341 = vmatpush.bf16.msra.mxu0 %v4141
    %4342 = vmatmul.bf16.gmra.mxu0 %v3848
    %v4343 = vpop.f32.mrf.mxu0
    %v4344 = vadd.f32 %v4331, %v4343
    %v4345 = vpop.f32.mrf.mxu0
    %4346 = vdwg.mxu0
    %v4347 = vmul.f32 %v4266, 0.5
    %v4348 = vtanh.pop %v4347
    %v4349 = vadd.f32 %v4348, 1.0
    %v4350 = vmul.f32 %v4349, 0.5
    %v4351 = vmul.f32 %v4292, 0.5
    %v4352 = vtanh.pop %v4351
    %v4353 = vadd.f32 %v4352, 1.0
    %v4354 = vmul.f32 %v4353, 0.5
    %v4355 = vmul.f32 %v4350, %v4344
    %v4356 = vadd.f32 %v4318, %v4355
    %v4357 = vtanh.pop %v4356
    %v4358 = vsub.f32 1.0, %v4354
    %v4359 = vmul.f32 %v4358, %v4357
    %v4360 = vmul.f32 %v4354, %v3842
    %v4361 = vadd.f32 %v4359, %v4360
    %4362 = vst [vmem:[#allocation2 + $0x7] sm:$0x1] %v4361
    %v4363 = vld [vmem:[#allocation2] sm:$0xff]
    %s4364 = sld [smem:[#allocation8]]
    %s4365 = scalar_lea.vmem [#allocation16], %s4364
    %v4366 = vld [vmem:[%s4365] sm:$0x1]
    %v4367 = vadd.f32 %v4361, %v4366
    %v4368 = vld [vmem:[#allocation17] sm:$0xff]
    %v4369 = vld [vmem:[#allocation17 + $0x8] sm:$0xff]
    %v4370 = vld [vmem:[#allocation17 + $0x10] sm:$0xff]
    %v4371 = vld [vmem:[#allocation17 + $0x18] sm:$0xff]
    %v4372 = vld [vmem:[#allocation17 + $0x20] sm:$0xff]
    %v4373 = vld [vmem:[#allocation17 + $0x28] sm:$0xff]
    %v4374 = vld [vmem:[#allocation17 + $0x30] sm:$0xff]
    %v4375 = vld [vmem:[#allocation17 + $0x38] sm:$0xff]
    %v4376 = vld [vmem:[#allocation17 + $0x40] sm:$0xff]
    %v4377 = vld [vmem:[#allocation17 + $0x48] sm:$0xff]
    %v4378 = vld [vmem:[#allocation17 + $0x50] sm:$0xff]
    %v4379 = vld [vmem:[#allocation17 + $0x58] sm:$0xff]
    %v4380 = vld [vmem:[#allocation17 + $0x60] sm:$0xff]
    %v4381 = vld [vmem:[#allocation17 + $0x68] sm:$0xff]
    %v4382 = vld [vmem:[#allocation17 + $0x70] sm:$0xff]
    %v4383 = vld [vmem:[#allocation17 + $0x78] sm:$0xff]
    %v4384 = vld [vmem:[#allocation19] sm:$0x1]
    %4385 = vmatpush.msra.mxu0 %v4383
    %4386 = vmatpush.msra.mxu0 %v4382
    %4387 = vmatpush.msra.mxu0 %v4381
    %4388 = vmatpush.msra.mxu0 %v4380
    %4389 = vmatpush.msra.mxu0 %v4379
    %4390 = vmatpush.msra.mxu0 %v4378
    %4391 = vmatpush.msra.mxu0 %v4377
    %4392 = vmatpush.msra.mxu0 %v4376
    %4393 = vmatpush.msra.mxu0 %v4375
    %4394 = vmatpush.msra.mxu0 %v4374
    %4395 = vmatpush.msra.mxu0 %v4373
    %4396 = vmatpush.msra.mxu0 %v4372
    %4397 = vmatpush.msra.mxu0 %v4371
    %4398 = vmatpush.msra.mxu0 %v4370
    %4399 = vmatpush.msra.mxu0 %v4369
    %4400 = vmatpush.msra.mxu0 %v4368
    %4401 = vmatmul.f32.gmra.mxu0 %v4367
    %v4402 = vpop.f32.mrf.mxu0
    %v4403 = vadd.f32 %v4384, %v4402
    %4404 = vdwg.mxu0
    %v4405 = vtanh.pop %v4403
    %v4406 = vld [vmem:[#allocation20] sm:$0xff]
    %v4407 = vld [vmem:[#allocation20 + $0x8] sm:$0xff]
    %v4408 = vld [vmem:[#allocation20 + $0x10] sm:$0xff]
    %v4409 = vld [vmem:[#allocation20 + $0x18] sm:$0xff]
    %v4410 = vld [vmem:[#allocation20 + $0x20] sm:$0xff]
    %v4411 = vld [vmem:[#allocation20 + $0x28] sm:$0xff]
    %v4412 = vld [vmem:[#allocation20 + $0x30] sm:$0xff]
    %v4413 = vld [vmem:[#allocation20 + $0x38] sm:$0xff]
    %v4414 = vld [vmem:[#allocation20 + $0x40] sm:$0xff]
    %v4415 = vld [vmem:[#allocation20 + $0x48] sm:$0xff]
    %v4416 = vld [vmem:[#allocation20 + $0x50] sm:$0xff]
    %v4417 = vld [vmem:[#allocation20 + $0x58] sm:$0xff]
    %v4418 = vld [vmem:[#allocation20 + $0x60] sm:$0xff]
    %v4419 = vld [vmem:[#allocation20 + $0x68] sm:$0xff]
    %v4420 = vld [vmem:[#allocation20 + $0x70] sm:$0xff]
    %v4421 = vld [vmem:[#allocation20 + $0x78] sm:$0xff]
    %v4422 = vld [vmem:[%s9] sm:$0x1]
    %4423 = vmatpush.msra.mxu0 %v4421
    %4424 = vmatpush.msra.mxu0 %v4420
    %4425 = vmatpush.msra.mxu0 %v4419
    %4426 = vmatpush.msra.mxu0 %v4418
    %4427 = vmatpush.msra.mxu0 %v4417
    %4428 = vmatpush.msra.mxu0 %v4416
    %4429 = vmatpush.msra.mxu0 %v4415
    %4430 = vmatpush.msra.mxu0 %v4414
    %4431 = vmatpush.msra.mxu0 %v4413
    %4432 = vmatpush.msra.mxu0 %v4412
    %4433 = vmatpush.msra.mxu0 %v4411
    %4434 = vmatpush.msra.mxu0 %v4410
    %4435 = vmatpush.msra.mxu0 %v4409
    %4436 = vmatpush.msra.mxu0 %v4408
    %4437 = vmatpush.msra.mxu0 %v4407
    %4438 = vmatpush.msra.mxu0 %v4406
    %4439 = vmatmul.f32.gmra.mxu0 %v4367
    %v4440 = vpop.f32.mrf.mxu0
    %v4441 = vadd.f32 %v4422, %v4440
    %4442 = vdwg.mxu0
    %v4443 = vtanh.pop %v4441
    %s4444 = smul.u32 4, 16
    %s4445 = smul.u32 %s4444, 1
    %s4446 = sshll.u32 %s4445, 4
    %4447 = dma.done [#allocation7], %s4446
    %s4448 = smul.u32 4, 32
    %s4449 = smul.u32 %s4448, 4
    %s4450 = sshll.u32 %s4449, 4
    %4451 = dma.done %s169, %s4450
    %s4452 = smul.u32 %s4448, 1
    %s4453 = sshll.u32 %s4452, 4
    %4454 = dma.done %s183, %s4453
    %s4455 = sshll.u32 %s4445, 4
    %4456 = dma.done %s197, %s4455
    %v4458 = vrot.slane %v4443, 7
    %vm4460 = vcmask 1040384
    %v4461 = vsel %vm4460, %v4405, %v4458
    %v4462 = vlaneseq
    %v4463 = vand.u32 %v4462, 127
    %vm4464 = vcmp.eq.s32.totalorder %v4463, 1
    %v4465 = vsel %vm4464, 1, 0
    %v4466 = vcvt.s32.f32 %v4465
    %v4467 = vpack.c.bf16 %v4466, %v4466
    %v4468 = vld [vmem:[#allocation3] sm:$0xf]
    %v4469 = vld [vmem:[#allocation3 + $0x4] sm:$0xf]
    %v4470 = vld [vmem:[#allocation3 + $0x8] sm:$0xf]
    %v4471 = vld [vmem:[#allocation3 + $0xc] sm:$0xf]
    %v4472 = vld [vmem:[#allocation3 + $0x10] sm:$0xf]
    %v4473 = vld [vmem:[#allocation3 + $0x14] sm:$0xf]
    %v4474 = vld [vmem:[#allocation3 + $0x18] sm:$0xf]
    %v4475 = vld [vmem:[#allocation3 + $0x1c] sm:$0xf]
    %v4476 = vld [vmem:[#allocation3 + $0x20] sm:$0xf]
    %v4477 = vld [vmem:[#allocation3 + $0x24] sm:$0xf]
    %v4478 = vld [vmem:[#allocation3 + $0x28] sm:$0xf]
    %v4479 = vld [vmem:[#allocation3 + $0x2c] sm:$0xf]
    %v4480 = vld [vmem:[#allocation3 + $0x30] sm:$0xf]
    %v4481 = vld [vmem:[#allocation3 + $0x34] sm:$0xf]
    %v4482 = vld [vmem:[#allocation3 + $0x38] sm:$0xf]
    %v4483 = vld [vmem:[#allocation3 + $0x3c] sm:$0xf]
    %v4500 = vunpack.c.l.b16 %v4468
    %v4501 = vunpack.c.l.b16 %v4469
    %v4502 = vunpack.c.l.b16 %v4470
    %v4503 = vunpack.c.l.b16 %v4471
    %v4504 = vunpack.c.l.b16 %v4472
    %v4505 = vunpack.c.l.b16 %v4473
    %v4506 = vunpack.c.l.b16 %v4474
    %v4507 = vunpack.c.l.b16 %v4475
    %v4508 = vunpack.c.l.b16 %v4476
    %v4509 = vunpack.c.l.b16 %v4477
    %v4510 = vunpack.c.l.b16 %v4478
    %v4511 = vunpack.c.l.b16 %v4479
    %v4512 = vunpack.c.l.b16 %v4480
    %v4513 = vunpack.c.l.b16 %v4481
    %v4514 = vunpack.c.l.b16 %v4482
    %v4515 = vunpack.c.l.b16 %v4483
    %v4516 = vpack.c.b16 %v4501, %v4500
    %v4517 = vpack.c.b16 %v4503, %v4502
    %v4518 = vpack.c.b16 %v4505, %v4504
    %v4519 = vpack.c.b16 %v4507, %v4506
    %v4520 = vpack.c.b16 %v4509, %v4508
    %v4521 = vpack.c.b16 %v4511, %v4510
    %v4522 = vpack.c.b16 %v4513, %v4512
    %v4523 = vpack.c.b16 %v4515, %v4514
    %4532 = vmatpush.bf16.msra.mxu0 %v4523
    %4533 = vmatpush.bf16.msra.mxu0 %v4522
    %4534 = vmatpush.bf16.msra.mxu0 %v4521
    %4535 = vmatpush.bf16.msra.mxu0 %v4520
    %4536 = vmatpush.bf16.msra.mxu0 %v4519
    %4537 = vmatpush.bf16.msra.mxu0 %v4518
    %4538 = vmatpush.bf16.msra.mxu0 %v4517
    %4539 = vmatpush.bf16.msra.mxu0 %v4516
    %4540 = vmatmul.bf16.gmra.mxu0 %v4467
    %v4541 = vpop.f32.mrf.mxu0
    %v4542 = vadd.f32 0.0, %v4541
    %v4543 = vpop.f32.mrf.mxu0
    %4544 = vdwg.mxu0
    %v4545 = vpack.c.bf16 %v4542, %v4542
    %v4546 = vpack.c.bf16 %v4461, %v4461
    %v4547 = vld [vmem:[#allocation4] sm:$0xff]
    %v4548 = vld [vmem:[#allocation4 + $0x8] sm:$0xff]
    %v4549 = vld [vmem:[#allocation4 + $0x10] sm:$0xff]
    %v4550 = vld [vmem:[#allocation4 + $0x18] sm:$0xff]
    %v4551 = vld [vmem:[#allocation4 + $0x20] sm:$0xff]
    %v4552 = vld [vmem:[#allocation4 + $0x28] sm:$0xff]
    %v4553 = vld [vmem:[#allocation4 + $0x30] sm:$0xff]
    %v4554 = vld [vmem:[#allocation4 + $0x38] sm:$0xff]
    %v4555 = vld [vmem:[#allocation4 + $0x40] sm:$0xff]
    %v4556 = vld [vmem:[#allocation4 + $0x48] sm:$0xff]
    %v4557 = vld [vmem:[#allocation4 + $0x50] sm:$0xff]
    %v4558 = vld [vmem:[#allocation4 + $0x58] sm:$0xff]
    %v4559 = vld [vmem:[#allocation4 + $0x60] sm:$0xff]
    %v4560 = vld [vmem:[#allocation4 + $0x68] sm:$0xff]
    %v4561 = vld [vmem:[#allocation4 + $0x70] sm:$0xff]
    %v4562 = vld [vmem:[#allocation4 + $0x78] sm:$0xff]
    %v4563 = vld [vmem:[#allocation4 + $0x80] sm:$0xff]
    %v4564 = vld [vmem:[#allocation4 + $0x88] sm:$0xff]
    %v4565 = vld [vmem:[#allocation4 + $0x90] sm:$0xff]
    %v4566 = vld [vmem:[#allocation4 + $0x98] sm:$0xff]
    %v4567 = vld [vmem:[#allocation4 + $0xa0] sm:$0xff]
    %v4568 = vld [vmem:[#allocation4 + $0xa8] sm:$0xff]
    %v4569 = vld [vmem:[#allocation4 + $0xb0] sm:$0xff]
    %v4570 = vld [vmem:[#allocation4 + $0xb8] sm:$0xff]
    %v4571 = vld [vmem:[#allocation4 + $0xc0] sm:$0xff]
    %v4572 = vld [vmem:[#allocation4 + $0xc8] sm:$0xff]
    %v4573 = vld [vmem:[#allocation4 + $0xd0] sm:$0xff]
    %v4574 = vld [vmem:[#allocation4 + $0xd8] sm:$0xff]
    %v4575 = vld [vmem:[#allocation4 + $0xe0] sm:$0xff]
    %v4576 = vld [vmem:[#allocation4 + $0xe8] sm:$0xff]
    %v4577 = vld [vmem:[#allocation4 + $0xf0] sm:$0xff]
    %v4578 = vld [vmem:[#allocation4 + $0xf8] sm:$0xff]
    %v4579 = vld [vmem:[#allocation4 + $0x100] sm:$0xff]
    %v4580 = vld [vmem:[#allocation4 + $0x108] sm:$0xff]
    %v4581 = vld [vmem:[#allocation4 + $0x110] sm:$0xff]
    %v4582 = vld [vmem:[#allocation4 + $0x118] sm:$0xff]
    %v4583 = vld [vmem:[#allocation4 + $0x120] sm:$0xff]
    %v4584 = vld [vmem:[#allocation4 + $0x128] sm:$0xff]
    %v4585 = vld [vmem:[#allocation4 + $0x130] sm:$0xff]
    %v4586 = vld [vmem:[#allocation4 + $0x138] sm:$0xff]
    %v4587 = vld [vmem:[#allocation4 + $0x140] sm:$0xff]
    %v4588 = vld [vmem:[#allocation4 + $0x148] sm:$0xff]
    %v4589 = vld [vmem:[#allocation4 + $0x150] sm:$0xff]
    %v4590 = vld [vmem:[#allocation4 + $0x158] sm:$0xff]
    %v4591 = vld [vmem:[#allocation4 + $0x160] sm:$0xff]
    %v4592 = vld [vmem:[#allocation4 + $0x168] sm:$0xff]
    %v4593 = vld [vmem:[#allocation4 + $0x170] sm:$0xff]
    %v4594 = vld [vmem:[#allocation4 + $0x178] sm:$0xff]
    %v4595 = vld [vmem:[#allocation4 + $0x180] sm:$0xff]
    %v4596 = vld [vmem:[#allocation4 + $0x188] sm:$0xff]
    %v4597 = vld [vmem:[#allocation4 + $0x190] sm:$0xff]
    %v4598 = vld [vmem:[#allocation4 + $0x198] sm:$0xff]
    %v4599 = vld [vmem:[#allocation4 + $0x1a0] sm:$0xff]
    %v4600 = vld [vmem:[#allocation4 + $0x1a8] sm:$0xff]
    %v4601 = vld [vmem:[#allocation4 + $0x1b0] sm:$0xff]
    %v4602 = vld [vmem:[#allocation4 + $0x1b8] sm:$0xff]
    %v4603 = vld [vmem:[#allocation4 + $0x1c0] sm:$0xff]
    %v4604 = vld [vmem:[#allocation4 + $0x1c8] sm:$0xff]
    %v4605 = vld [vmem:[#allocation4 + $0x1d0] sm:$0xff]
    %v4606 = vld [vmem:[#allocation4 + $0x1d8] sm:$0xff]
    %v4607 = vld [vmem:[#allocation4 + $0x1e0] sm:$0xff]
    %v4608 = vld [vmem:[#allocation4 + $0x1e8] sm:$0xff]
    %v4609 = vld [vmem:[#allocation4 + $0x1f0] sm:$0xff]
    %v4610 = vld [vmem:[#allocation4 + $0x1f8] sm:$0xff]
    %v4611 = vld [vmem:[%s12] sm:$0xf]
    %v4613 = vperm.slane %v4611, 0
    %v4614 = vperm.slane %v4611, 1
    %v4615 = vperm.slane %v4611, 2
    %v4616 = vperm.slane %v4611, 3
    %v4685 = vunpack.c.l.b16 %v4547
    %v4686 = vunpack.c.h.b16 %v4547
    %v4687 = vunpack.c.l.b16 %v4548
    %v4688 = vunpack.c.h.b16 %v4548
    %v4689 = vunpack.c.l.b16 %v4549
    %v4690 = vunpack.c.h.b16 %v4549
    %v4691 = vunpack.c.l.b16 %v4550
    %v4692 = vunpack.c.h.b16 %v4550
    %v4693 = vunpack.c.l.b16 %v4551
    %v4694 = vunpack.c.h.b16 %v4551
    %v4695 = vunpack.c.l.b16 %v4552
    %v4696 = vunpack.c.h.b16 %v4552
    %v4697 = vunpack.c.l.b16 %v4553
    %v4698 = vunpack.c.h.b16 %v4553
    %v4699 = vunpack.c.l.b16 %v4554
    %v4700 = vunpack.c.h.b16 %v4554
    %v4701 = vunpack.c.l.b16 %v4555
    %v4702 = vunpack.c.h.b16 %v4555
    %v4703 = vunpack.c.l.b16 %v4556
    %v4704 = vunpack.c.h.b16 %v4556
    %v4705 = vunpack.c.l.b16 %v4557
    %v4706 = vunpack.c.h.b16 %v4557
    %v4707 = vunpack.c.l.b16 %v4558
    %v4708 = vunpack.c.h.b16 %v4558
    %v4709 = vunpack.c.l.b16 %v4559
    %v4710 = vunpack.c.h.b16 %v4559
    %v4711 = vunpack.c.l.b16 %v4560
    %v4712 = vunpack.c.h.b16 %v4560
    %v4713 = vunpack.c.l.b16 %v4561
    %v4714 = vunpack.c.h.b16 %v4561
    %v4715 = vunpack.c.l.b16 %v4562
    %v4716 = vunpack.c.h.b16 %v4562
    %v4717 = vunpack.c.l.b16 %v4563
    %v4718 = vunpack.c.h.b16 %v4563
    %v4719 = vunpack.c.l.b16 %v4564
    %v4720 = vunpack.c.h.b16 %v4564
    %v4721 = vunpack.c.l.b16 %v4565
    %v4722 = vunpack.c.h.b16 %v4565
    %v4723 = vunpack.c.l.b16 %v4566
    %v4724 = vunpack.c.h.b16 %v4566
    %v4725 = vunpack.c.l.b16 %v4567
    %v4726 = vunpack.c.h.b16 %v4567
    %v4727 = vunpack.c.l.b16 %v4568
    %v4728 = vunpack.c.h.b16 %v4568
    %v4729 = vunpack.c.l.b16 %v4569
    %v4730 = vunpack.c.h.b16 %v4569
    %v4731 = vunpack.c.l.b16 %v4570
    %v4732 = vunpack.c.h.b16 %v4570
    %v4733 = vunpack.c.l.b16 %v4571
    %v4734 = vunpack.c.h.b16 %v4571
    %v4735 = vunpack.c.l.b16 %v4572
    %v4736 = vunpack.c.h.b16 %v4572
    %v4737 = vunpack.c.l.b16 %v4573
    %v4738 = vunpack.c.h.b16 %v4573
    %v4739 = vunpack.c.l.b16 %v4574
    %v4740 = vunpack.c.h.b16 %v4574
    %v4741 = vunpack.c.l.b16 %v4575
    %v4742 = vunpack.c.h.b16 %v4575
    %v4743 = vunpack.c.l.b16 %v4576
    %v4744 = vunpack.c.h.b16 %v4576
    %v4745 = vunpack.c.l.b16 %v4577
    %v4746 = vunpack.c.h.b16 %v4577
    %v4747 = vunpack.c.l.b16 %v4578
    %v4748 = vunpack.c.h.b16 %v4578
    %v4749 = vunpack.c.l.b16 %v4579
    %v4750 = vunpack.c.h.b16 %v4579
    %v4751 = vunpack.c.l.b16 %v4580
    %v4752 = vunpack.c.h.b16 %v4580
    %v4753 = vunpack.c.l.b16 %v4581
    %v4754 = vunpack.c.h.b16 %v4581
    %v4755 = vunpack.c.l.b16 %v4582
    %v4756 = vunpack.c.h.b16 %v4582
    %v4757 = vunpack.c.l.b16 %v4583
    %v4758 = vunpack.c.h.b16 %v4583
    %v4759 = vunpack.c.l.b16 %v4584
    %v4760 = vunpack.c.h.b16 %v4584
    %v4761 = vunpack.c.l.b16 %v4585
    %v4762 = vunpack.c.h.b16 %v4585
    %v4763 = vunpack.c.l.b16 %v4586
    %v4764 = vunpack.c.h.b16 %v4586
    %v4765 = vunpack.c.l.b16 %v4587
    %v4766 = vunpack.c.h.b16 %v4587
    %v4767 = vunpack.c.l.b16 %v4588
    %v4768 = vunpack.c.h.b16 %v4588
    %v4769 = vunpack.c.l.b16 %v4589
    %v4770 = vunpack.c.h.b16 %v4589
    %v4771 = vunpack.c.l.b16 %v4590
    %v4772 = vunpack.c.h.b16 %v4590
    %v4773 = vunpack.c.l.b16 %v4591
    %v4774 = vunpack.c.h.b16 %v4591
    %v4775 = vunpack.c.l.b16 %v4592
    %v4776 = vunpack.c.h.b16 %v4592
    %v4777 = vunpack.c.l.b16 %v4593
    %v4778 = vunpack.c.h.b16 %v4593
    %v4779 = vunpack.c.l.b16 %v4594
    %v4780 = vunpack.c.h.b16 %v4594
    %v4781 = vunpack.c.l.b16 %v4595
    %v4782 = vunpack.c.h.b16 %v4595
    %v4783 = vunpack.c.l.b16 %v4596
    %v4784 = vunpack.c.h.b16 %v4596
    %v4785 = vunpack.c.l.b16 %v4597
    %v4786 = vunpack.c.h.b16 %v4597
    %v4787 = vunpack.c.l.b16 %v4598
    %v4788 = vunpack.c.h.b16 %v4598
    %v4789 = vunpack.c.l.b16 %v4599
    %v4790 = vunpack.c.h.b16 %v4599
    %v4791 = vunpack.c.l.b16 %v4600
    %v4792 = vunpack.c.h.b16 %v4600
    %v4793 = vunpack.c.l.b16 %v4601
    %v4794 = vunpack.c.h.b16 %v4601
    %v4795 = vunpack.c.l.b16 %v4602
    %v4796 = vunpack.c.h.b16 %v4602
    %v4797 = vunpack.c.l.b16 %v4603
    %v4798 = vunpack.c.h.b16 %v4603
    %v4799 = vunpack.c.l.b16 %v4604
    %v4800 = vunpack.c.h.b16 %v4604
    %v4801 = vunpack.c.l.b16 %v4605
    %v4802 = vunpack.c.h.b16 %v4605
    %v4803 = vunpack.c.l.b16 %v4606
    %v4804 = vunpack.c.h.b16 %v4606
    %v4805 = vunpack.c.l.b16 %v4607
    %v4806 = vunpack.c.h.b16 %v4607
    %v4807 = vunpack.c.l.b16 %v4608
    %v4808 = vunpack.c.h.b16 %v4608
    %v4809 = vunpack.c.l.b16 %v4609
    %v4810 = vunpack.c.h.b16 %v4609
    %v4811 = vunpack.c.l.b16 %v4610
    %v4812 = vunpack.c.h.b16 %v4610
    %v4813 = vpack.c.b16 %v4689, %v4685
    %v4814 = vpack.c.b16 %v4690, %v4686
    %v4815 = vpack.c.b16 %v4691, %v4687
    %v4816 = vpack.c.b16 %v4692, %v4688
    %v4817 = vpack.c.b16 %v4697, %v4693
    %v4818 = vpack.c.b16 %v4698, %v4694
    %v4819 = vpack.c.b16 %v4699, %v4695
    %v4820 = vpack.c.b16 %v4700, %v4696
    %v4821 = vpack.c.b16 %v4705, %v4701
    %v4822 = vpack.c.b16 %v4706, %v4702
    %v4823 = vpack.c.b16 %v4707, %v4703
    %v4824 = vpack.c.b16 %v4708, %v4704
    %v4825 = vpack.c.b16 %v4713, %v4709
    %v4826 = vpack.c.b16 %v4714, %v4710
    %v4827 = vpack.c.b16 %v4715, %v4711
    %v4828 = vpack.c.b16 %v4716, %v4712
    %v4829 = vpack.c.b16 %v4721, %v4717
    %v4830 = vpack.c.b16 %v4722, %v4718
    %v4831 = vpack.c.b16 %v4723, %v4719
    %v4832 = vpack.c.b16 %v4724, %v4720
    %v4833 = vpack.c.b16 %v4729, %v4725
    %v4834 = vpack.c.b16 %v4730, %v4726
    %v4835 = vpack.c.b16 %v4731, %v4727
    %v4836 = vpack.c.b16 %v4732, %v4728
    %v4837 = vpack.c.b16 %v4737, %v4733
    %v4838 = vpack.c.b16 %v4738, %v4734
    %v4839 = vpack.c.b16 %v4739, %v4735
    %v4840 = vpack.c.b16 %v4740, %v4736
    %v4841 = vpack.c.b16 %v4745, %v4741
    %v4842 = vpack.c.b16 %v4746, %v4742
    %v4843 = vpack.c.b16 %v4747, %v4743
    %v4844 = vpack.c.b16 %v4748, %v4744
    %v4845 = vpack.c.b16 %v4753, %v4749
    %v4846 = vpack.c.b16 %v4754, %v4750
    %v4847 = vpack.c.b16 %v4755, %v4751
    %v4848 = vpack.c.b16 %v4756, %v4752
    %v4849 = vpack.c.b16 %v4761, %v4757
    %v4850 = vpack.c.b16 %v4762, %v4758
    %v4851 = vpack.c.b16 %v4763, %v4759
    %v4852 = vpack.c.b16 %v4764, %v4760
    %v4853 = vpack.c.b16 %v4769, %v4765
    %v4854 = vpack.c.b16 %v4770, %v4766
    %v4855 = vpack.c.b16 %v4771, %v4767
    %v4856 = vpack.c.b16 %v4772, %v4768
    %v4857 = vpack.c.b16 %v4777, %v4773
    %v4858 = vpack.c.b16 %v4778, %v4774
    %v4859 = vpack.c.b16 %v4779, %v4775
    %v4860 = vpack.c.b16 %v4780, %v4776
    %v4861 = vpack.c.b16 %v4785, %v4781
    %v4862 = vpack.c.b16 %v4786, %v4782
    %v4863 = vpack.c.b16 %v4787, %v4783
    %v4864 = vpack.c.b16 %v4788, %v4784
    %v4865 = vpack.c.b16 %v4793, %v4789
    %v4866 = vpack.c.b16 %v4794, %v4790
    %v4867 = vpack.c.b16 %v4795, %v4791
    %v4868 = vpack.c.b16 %v4796, %v4792
    %v4869 = vpack.c.b16 %v4801, %v4797
    %v4870 = vpack.c.b16 %v4802, %v4798
    %v4871 = vpack.c.b16 %v4803, %v4799
    %v4872 = vpack.c.b16 %v4804, %v4800
    %v4873 = vpack.c.b16 %v4809, %v4805
    %v4874 = vpack.c.b16 %v4810, %v4806
    %v4875 = vpack.c.b16 %v4811, %v4807
    %v4876 = vpack.c.b16 %v4812, %v4808
    %4941 = vmatpush.bf16.msra.mxu0 %v4841
    %4942 = vmatpush.bf16.msra.mxu0 %v4837
    %4943 = vmatpush.bf16.msra.mxu0 %v4833
    %4944 = vmatpush.bf16.msra.mxu0 %v4829
    %4945 = vmatpush.bf16.msra.mxu0 %v4825
    %4946 = vmatpush.bf16.msra.mxu0 %v4821
    %4947 = vmatpush.bf16.msra.mxu0 %v4817
    %4948 = vmatpush.bf16.msra.mxu0 %v4813
    %4949 = vmatmul.bf16.gmra.mxu0 %v4545
    %v4950 = vpop.f32.mrf.mxu0
    %v4951 = vadd.f32 %v4613, %v4950
    %v4952 = vpop.f32.mrf.mxu0
    %4953 = vdwg.mxu0
    %4954 = vmatpush.bf16.msra.mxu0 %v4873
    %4955 = vmatpush.bf16.msra.mxu0 %v4869
    %4956 = vmatpush.bf16.msra.mxu0 %v4865
    %4957 = vmatpush.bf16.msra.mxu0 %v4861
    %4958 = vmatpush.bf16.msra.mxu0 %v4857
    %4959 = vmatpush.bf16.msra.mxu0 %v4853
    %4960 = vmatpush.bf16.msra.mxu0 %v4849
    %4961 = vmatpush.bf16.msra.mxu0 %v4845
    %4962 = vmatmul.bf16.gmra.mxu0 %v4546
    %v4963 = vpop.f32.mrf.mxu0
    %v4964 = vadd.f32 %v4951, %v4963
    %v4965 = vpop.f32.mrf.mxu0
    %4966 = vdwg.mxu0
    %4967 = vmatpush.bf16.msra.mxu0 %v4842
    %4968 = vmatpush.bf16.msra.mxu0 %v4838
    %4969 = vmatpush.bf16.msra.mxu0 %v4834
    %4970 = vmatpush.bf16.msra.mxu0 %v4830
    %4971 = vmatpush.bf16.msra.mxu0 %v4826
    %4972 = vmatpush.bf16.msra.mxu0 %v4822
    %4973 = vmatpush.bf16.msra.mxu0 %v4818
    %4974 = vmatpush.bf16.msra.mxu0 %v4814
    %4975 = vmatmul.bf16.gmra.mxu0 %v4545
    %v4976 = vpop.f32.mrf.mxu0
    %v4977 = vadd.f32 %v4614, %v4976
    %v4978 = vpop.f32.mrf.mxu0
    %4979 = vdwg.mxu0
    %4980 = vmatpush.bf16.msra.mxu0 %v4874
    %4981 = vmatpush.bf16.msra.mxu0 %v4870
    %4982 = vmatpush.bf16.msra.mxu0 %v4866
    %4983 = vmatpush.bf16.msra.mxu0 %v4862
    %4984 = vmatpush.bf16.msra.mxu0 %v4858
    %4985 = vmatpush.bf16.msra.mxu0 %v4854
    %4986 = vmatpush.bf16.msra.mxu0 %v4850
    %4987 = vmatpush.bf16.msra.mxu0 %v4846
    %4988 = vmatmul.bf16.gmra.mxu0 %v4546
    %v4989 = vpop.f32.mrf.mxu0
    %v4990 = vadd.f32 %v4977, %v4989
    %v4991 = vpop.f32.mrf.mxu0
    %4992 = vdwg.mxu0
    %4993 = vmatpush.bf16.msra.mxu0 %v4843
    %4994 = vmatpush.bf16.msra.mxu0 %v4839
    %4995 = vmatpush.bf16.msra.mxu0 %v4835
    %4996 = vmatpush.bf16.msra.mxu0 %v4831
    %4997 = vmatpush.bf16.msra.mxu0 %v4827
    %4998 = vmatpush.bf16.msra.mxu0 %v4823
    %4999 = vmatpush.bf16.msra.mxu0 %v4819
    %5000 = vmatpush.bf16.msra.mxu0 %v4815
    %5001 = vmatmul.bf16.gmra.mxu0 %v4545
    %v5002 = vpop.f32.mrf.mxu0
    %v5003 = vadd.f32 %v4615, %v5002
    %v5004 = vpop.f32.mrf.mxu0
    %5005 = vdwg.mxu0
    %5006 = vmatpush.bf16.msra.mxu0 %v4875
    %5007 = vmatpush.bf16.msra.mxu0 %v4871
    %5008 = vmatpush.bf16.msra.mxu0 %v4867
    %5009 = vmatpush.bf16.msra.mxu0 %v4863
    %5010 = vmatpush.bf16.msra.mxu0 %v4859
    %5011 = vmatpush.bf16.msra.mxu0 %v4855
    %5012 = vmatpush.bf16.msra.mxu0 %v4851
    %5013 = vmatpush.bf16.msra.mxu0 %v4847
    %5014 = vmatmul.bf16.gmra.mxu0 %v4546
    %v5015 = vpop.f32.mrf.mxu0
    %v5016 = vadd.f32 %v5003, %v5015
    %v5017 = vpop.f32.mrf.mxu0
    %5018 = vdwg.mxu0
    %5019 = vmatpush.bf16.msra.mxu0 %v4844
    %5020 = vmatpush.bf16.msra.mxu0 %v4840
    %5021 = vmatpush.bf16.msra.mxu0 %v4836
    %5022 = vmatpush.bf16.msra.mxu0 %v4832
    %5023 = vmatpush.bf16.msra.mxu0 %v4828
    %5024 = vmatpush.bf16.msra.mxu0 %v4824
    %5025 = vmatpush.bf16.msra.mxu0 %v4820
    %5026 = vmatpush.bf16.msra.mxu0 %v4816
    %5027 = vmatmul.bf16.gmra.mxu0 %v4545
    %v5028 = vpop.f32.mrf.mxu0
    %v5029 = vadd.f32 %v4616, %v5028
    %v5030 = vpop.f32.mrf.mxu0
    %5031 = vdwg.mxu0
    %5032 = vmatpush.bf16.msra.mxu0 %v4876
    %5033 = vmatpush.bf16.msra.mxu0 %v4872
    %5034 = vmatpush.bf16.msra.mxu0 %v4868
    %5035 = vmatpush.bf16.msra.mxu0 %v4864
    %5036 = vmatpush.bf16.msra.mxu0 %v4860
    %5037 = vmatpush.bf16.msra.mxu0 %v4856
    %5038 = vmatpush.bf16.msra.mxu0 %v4852
    %5039 = vmatpush.bf16.msra.mxu0 %v4848
    %5040 = vmatmul.bf16.gmra.mxu0 %v4546
    %v5041 = vpop.f32.mrf.mxu0
    %v5042 = vadd.f32 %v5029, %v5041
    %v5043 = vpop.f32.mrf.mxu0
    %5044 = vdwg.mxu0
    %v5045 = vmul.f32 %v4964, 0.5
    %v5046 = vtanh.pop %v5045
    %v5047 = vadd.f32 %v5046, 1.0
    %v5048 = vmul.f32 %v5047, 0.5
    %v5049 = vmul.f32 %v4990, 0.5
    %v5050 = vtanh.pop %v5049
    %v5051 = vadd.f32 %v5050, 1.0
    %v5052 = vmul.f32 %v5051, 0.5
    %v5053 = vmul.f32 %v5048, %v5042
    %v5054 = vadd.f32 %v5016, %v5053
    %v5055 = vtanh.pop %v5054
    %v5056 = vsub.f32 1.0, %v5052
    %v5057 = vmul.f32 %v5056, %v5055
    %v5058 = vmul.f32 %v5052, %v4461
    %v5059 = vadd.f32 %v5057, %v5058
    %5060 = vmatpush.xpose.msra.mxu0 0.0
    %5061 = vmatpush.xpose.msra.mxu0 0.0
    %5062 = vmatpush.xpose.msra.mxu0 0.0
    %5063 = vmatpush.xpose.msra.mxu0 0.0
    %5064 = vmatpush.xpose.msra.mxu0 0.0
    %5065 = vmatpush.xpose.msra.mxu0 0.0
    %5066 = vmatpush.xpose.msra.mxu0 0.0
    %5067 = vmatpush.xpose.msra.mxu0 0.0
    %5068 = vmatpush.xpose.msra.mxu0 0.0
    %5069 = vmatpush.xpose.msra.mxu0 0.0
    %5070 = vmatpush.xpose.msra.mxu0 0.0
    %5071 = vmatpush.xpose.msra.mxu0 0.0
    %5072 = vmatpush.xpose.msra.mxu0 0.0
    %5073 = vmatpush.xpose.msra.mxu0 0.0
    %5074 = vmatpush.xpose.msra.mxu0 0.0
    %5075 = vmatpush.xpose.msra.mxu0 %v4363
    %5076 = vmatmul.f32.gmra.mxu0 %v5059
    %v5077 = vpop.f32.mrf.mxu0
    %v5078 = vadd.f32 0.0, %v5077
    %5079 = vdwg.mxu0
    %vm5080 = vcmask 58368
    %v5081 = vsel %vm5080, %v5078, -inf
    %5082 = vmax.xlane.f32.xlu0 %v5081
    %v5083 = vpop.xlane.xlu0 %5082
    %v5084 = vsub.f32 %v5078, %v5083
    %v5085 = vmul.f32 %v5084, 1.442695
    %v5086 = vpow.pop %v5085
    %v5087 = vsel %vm5080, %v5086, 0.0
    %5088 = vadd.xlane.f32.xlu0 %v5087
    %v5089 = vpop.xlane.xlu0 %5088
    %v5090 = vrcp.pop %v5089
    %v5091 = vmul.f32 %v5086, %v5090
    %vm5092 = vcmask 64512
    %v5094 = vsel %vm5092, %v5091, 0
    %5096 = vmatpush.msra.mxu0 0.0
    %5097 = vmatpush.msra.mxu0 0.0
    %5098 = vmatpush.msra.mxu0 0.0
    %5099 = vmatpush.msra.mxu0 0.0
    %5100 = vmatpush.msra.mxu0 0.0
    %5101 = vmatpush.msra.mxu0 0.0
    %5102 = vmatpush.msra.mxu0 0.0
    %5103 = vmatpush.msra.mxu0 0.0
    %5104 = vmatpush.msra.mxu0 0.0
    %5105 = vmatpush.msra.mxu0 0.0
    %5106 = vmatpush.msra.mxu0 0.0
    %5107 = vmatpush.msra.mxu0 0.0
    %5108 = vmatpush.msra.mxu0 0.0
    %5109 = vmatpush.msra.mxu0 0.0
    %5110 = vmatpush.msra.mxu0 0.0
    %5111 = vmatpush.msra.mxu0 %v4363
    %5112 = vmatmul.f32.gmra.mxu0 %v5094
    %v5113 = vpop.f32.mrf.mxu0
    %v5114 = vadd.f32 0.0, %v5113
    %5115 = vdwg.mxu0
    %v5116 = vpack.c.bf16 %v5059, %v5059
    %v5117 = vpack.c.bf16 %v5114, %v5114
    %v5118 = vld [vmem:[#allocation5] sm:$0xf]
    %v5119 = vld [vmem:[#allocation5 + $0x4] sm:$0xf]
    %v5120 = vld [vmem:[#allocation5 + $0x8] sm:$0xf]
    %v5121 = vld [vmem:[#allocation5 + $0xc] sm:$0xf]
    %v5122 = vld [vmem:[#allocation5 + $0x10] sm:$0xf]
    %v5123 = vld [vmem:[#allocation5 + $0x14] sm:$0xf]
    %v5124 = vld [vmem:[#allocation5 + $0x18] sm:$0xf]
    %v5125 = vld [vmem:[#allocation5 + $0x1c] sm:$0xf]
    %v5126 = vld [vmem:[#allocation5 + $0x20] sm:$0xf]
    %v5127 = vld [vmem:[#allocation5 + $0x24] sm:$0xf]
    %v5128 = vld [vmem:[#allocation5 + $0x28] sm:$0xf]
    %v5129 = vld [vmem:[#allocation5 + $0x2c] sm:$0xf]
    %v5130 = vld [vmem:[#allocation5 + $0x30] sm:$0xf]
    %v5131 = vld [vmem:[#allocation5 + $0x34] sm:$0xf]
    %v5132 = vld [vmem:[#allocation5 + $0x38] sm:$0xf]
    %v5133 = vld [vmem:[#allocation5 + $0x3c] sm:$0xf]
    %v5134 = vld [vmem:[#allocation5 + $0x40] sm:$0xf]
    %v5135 = vld [vmem:[#allocation5 + $0x44] sm:$0xf]
    %v5136 = vld [vmem:[#allocation5 + $0x48] sm:$0xf]
    %v5137 = vld [vmem:[#allocation5 + $0x4c] sm:$0xf]
    %v5138 = vld [vmem:[#allocation5 + $0x50] sm:$0xf]
    %v5139 = vld [vmem:[#allocation5 + $0x54] sm:$0xf]
    %v5140 = vld [vmem:[#allocation5 + $0x58] sm:$0xf]
    %v5141 = vld [vmem:[#allocation5 + $0x5c] sm:$0xf]
    %v5142 = vld [vmem:[#allocation5 + $0x60] sm:$0xf]
    %v5143 = vld [vmem:[#allocation5 + $0x64] sm:$0xf]
    %v5144 = vld [vmem:[#allocation5 + $0x68] sm:$0xf]
    %v5145 = vld [vmem:[#allocation5 + $0x6c] sm:$0xf]
    %v5146 = vld [vmem:[#allocation5 + $0x70] sm:$0xf]
    %v5147 = vld [vmem:[#allocation5 + $0x74] sm:$0xf]
    %v5148 = vld [vmem:[#allocation5 + $0x78] sm:$0xf]
    %v5149 = vld [vmem:[#allocation5 + $0x7c] sm:$0xf]
    %v5150 = vld [vmem:[%s14] sm:$0x1]
    %v5152 = vperm.slane %v5150, 0
    %v5186 = vunpack.c.l.b16 %v5118
    %v5187 = vunpack.c.l.b16 %v5119
    %v5188 = vunpack.c.l.b16 %v5120
    %v5189 = vunpack.c.l.b16 %v5121
    %v5190 = vunpack.c.l.b16 %v5122
    %v5191 = vunpack.c.l.b16 %v5123
    %v5192 = vunpack.c.l.b16 %v5124
    %v5193 = vunpack.c.l.b16 %v5125
    %v5194 = vunpack.c.l.b16 %v5126
    %v5195 = vunpack.c.l.b16 %v5127
    %v5196 = vunpack.c.l.b16 %v5128
    %v5197 = vunpack.c.l.b16 %v5129
    %v5198 = vunpack.c.l.b16 %v5130
    %v5199 = vunpack.c.l.b16 %v5131
    %v5200 = vunpack.c.l.b16 %v5132
    %v5201 = vunpack.c.l.b16 %v5133
    %v5202 = vunpack.c.l.b16 %v5134
    %v5203 = vunpack.c.l.b16 %v5135
    %v5204 = vunpack.c.l.b16 %v5136
    %v5205 = vunpack.c.l.b16 %v5137
    %v5206 = vunpack.c.l.b16 %v5138
    %v5207 = vunpack.c.l.b16 %v5139
    %v5208 = vunpack.c.l.b16 %v5140
    %v5209 = vunpack.c.l.b16 %v5141
    %v5210 = vunpack.c.l.b16 %v5142
    %v5211 = vunpack.c.l.b16 %v5143
    %v5212 = vunpack.c.l.b16 %v5144
    %v5213 = vunpack.c.l.b16 %v5145
    %v5214 = vunpack.c.l.b16 %v5146
    %v5215 = vunpack.c.l.b16 %v5147
    %v5216 = vunpack.c.l.b16 %v5148
    %v5217 = vunpack.c.l.b16 %v5149
    %v5218 = vpack.c.b16 %v5187, %v5186
    %v5219 = vpack.c.b16 %v5189, %v5188
    %v5220 = vpack.c.b16 %v5191, %v5190
    %v5221 = vpack.c.b16 %v5193, %v5192
    %v5222 = vpack.c.b16 %v5195, %v5194
    %v5223 = vpack.c.b16 %v5197, %v5196
    %v5224 = vpack.c.b16 %v5199, %v5198
    %v5225 = vpack.c.b16 %v5201, %v5200
    %v5226 = vpack.c.b16 %v5203, %v5202
    %v5227 = vpack.c.b16 %v5205, %v5204
    %v5228 = vpack.c.b16 %v5207, %v5206
    %v5229 = vpack.c.b16 %v5209, %v5208
    %v5230 = vpack.c.b16 %v5211, %v5210
    %v5231 = vpack.c.b16 %v5213, %v5212
    %v5232 = vpack.c.b16 %v5215, %v5214
    %v5233 = vpack.c.b16 %v5217, %v5216
    %5250 = vmatpush.bf16.msra.mxu0 %v5225
    %5251 = vmatpush.bf16.msra.mxu0 %v5224
    %5252 = vmatpush.bf16.msra.mxu0 %v5223
    %5253 = vmatpush.bf16.msra.mxu0 %v5222
    %5254 = vmatpush.bf16.msra.mxu0 %v5221
    %5255 = vmatpush.bf16.msra.mxu0 %v5220
    %5256 = vmatpush.bf16.msra.mxu0 %v5219
    %5257 = vmatpush.bf16.msra.mxu0 %v5218
    %5258 = vmatmul.bf16.gmra.mxu0 %v5116
    %v5259 = vpop.f32.mrf.mxu0
    %v5260 = vadd.f32 %v5152, %v5259
    %v5261 = vpop.f32.mrf.mxu0
    %5262 = vdwg.mxu0
    %5263 = vmatpush.bf16.msra.mxu0 %v5233
    %5264 = vmatpush.bf16.msra.mxu0 %v5232
    %5265 = vmatpush.bf16.msra.mxu0 %v5231
    %5266 = vmatpush.bf16.msra.mxu0 %v5230
    %5267 = vmatpush.bf16.msra.mxu0 %v5229
    %5268 = vmatpush.bf16.msra.mxu0 %v5228
    %5269 = vmatpush.bf16.msra.mxu0 %v5227
    %5270 = vmatpush.bf16.msra.mxu0 %v5226
    %5271 = vmatmul.bf16.gmra.mxu0 %v5117
    %v5272 = vpop.f32.mrf.mxu0
    %v5273 = vadd.f32 %v5260, %v5272
    %v5274 = vpop.f32.mrf.mxu0
    %5275 = vdwg.mxu0
    %v5276 = vtanh.pop %v5273
    %v5277 = vpack.c.bf16 %v5276, %v5276
    %v5278 = vld [vmem:[#allocation6] sm:$0xf]
    %v5279 = vld [vmem:[#allocation6 + $0x4] sm:$0xf]
    %v5280 = vld [vmem:[#allocation6 + $0x8] sm:$0xf]
    %v5281 = vld [vmem:[#allocation6 + $0xc] sm:$0xf]
    %v5282 = vld [vmem:[#allocation6 + $0x10] sm:$0xf]
    %v5283 = vld [vmem:[#allocation6 + $0x14] sm:$0xf]
    %v5284 = vld [vmem:[#allocation6 + $0x18] sm:$0xf]
    %v5285 = vld [vmem:[#allocation6 + $0x1c] sm:$0xf]
    %v5286 = vld [vmem:[#allocation6 + $0x20] sm:$0xf]
    %v5287 = vld [vmem:[#allocation6 + $0x24] sm:$0xf]
    %v5288 = vld [vmem:[#allocation6 + $0x28] sm:$0xf]
    %v5289 = vld [vmem:[#allocation6 + $0x2c] sm:$0xf]
    %v5290 = vld [vmem:[#allocation6 + $0x30] sm:$0xf]
    %v5291 = vld [vmem:[#allocation6 + $0x34] sm:$0xf]
    %v5292 = vld [vmem:[#allocation6 + $0x38] sm:$0xf]
    %v5293 = vld [vmem:[#allocation6 + $0x3c] sm:$0xf]
    %v5294 = vld [vmem:[%s16] sm:$0x1]
    %v5296 = vperm.slane %v5294, 0
    %v5314 = vunpack.c.l.b16 %v5278
    %v5315 = vunpack.c.l.b16 %v5279
    %v5316 = vunpack.c.l.b16 %v5280
    %v5317 = vunpack.c.l.b16 %v5281
    %v5318 = vunpack.c.l.b16 %v5282
    %v5319 = vunpack.c.l.b16 %v5283
    %v5320 = vunpack.c.l.b16 %v5284
    %v5321 = vunpack.c.l.b16 %v5285
    %v5322 = vunpack.c.l.b16 %v5286
    %v5323 = vunpack.c.l.b16 %v5287
    %v5324 = vunpack.c.l.b16 %v5288
    %v5325 = vunpack.c.l.b16 %v5289
    %v5326 = vunpack.c.l.b16 %v5290
    %v5327 = vunpack.c.l.b16 %v5291
    %v5328 = vunpack.c.l.b16 %v5292
    %v5329 = vunpack.c.l.b16 %v5293
    %v5330 = vpack.c.b16 %v5315, %v5314
    %v5331 = vpack.c.b16 %v5317, %v5316
    %v5332 = vpack.c.b16 %v5319, %v5318
    %v5333 = vpack.c.b16 %v5321, %v5320
    %v5334 = vpack.c.b16 %v5323, %v5322
    %v5335 = vpack.c.b16 %v5325, %v5324
    %v5336 = vpack.c.b16 %v5327, %v5326
    %v5337 = vpack.c.b16 %v5329, %v5328
    %5346 = vmatpush.bf16.msra.mxu0 %v5337
    %5347 = vmatpush.bf16.msra.mxu0 %v5336
    %5348 = vmatpush.bf16.msra.mxu0 %v5335
    %5349 = vmatpush.bf16.msra.mxu0 %v5334
    %5350 = vmatpush.bf16.msra.mxu0 %v5333
    %5351 = vmatpush.bf16.msra.mxu0 %v5332
    %5352 = vmatpush.bf16.msra.mxu0 %v5331
    %5353 = vmatpush.bf16.msra.mxu0 %v5330
    %5354 = vmatmul.bf16.gmra.mxu0 %v5277
    %v5355 = vpop.f32.mrf.mxu0
    %v5356 = vadd.f32 %v5296, %v5355
    %v5357 = vpop.f32.mrf.mxu0
    %5358 = vdwg.mxu0
    %vm5359 = vcmask 1041408
    %v5360 = vsel %vm5359, %v5356, -inf
    %5361 = vmax.xlane.f32.xlu0 %v5360
    %v5362 = vpop.xlane.xlu0 %5361
    %v5363 = vsub.f32 %v5356, %v5362
    %v5364 = vmul.f32 %v5363, 1.442695
    %v5365 = vpow.pop %v5364
    %v5366 = vsel %vm5359, %v5365, 0.0
    %5367 = vadd.xlane.f32.xlu0 %v5366
    %v5368 = vpop.xlane.xlu0 %5367
    %v5369 = vrcp.pop %v5368
    %v5370 = vmul.f32 %v5368, %v5369
    %v5371 = vsub.f32 1.0, %v5370
    %v5372 = vmul.f32 %v5369, %v5371
    %v5373 = vadd.f32 %v5369, %v5372
    %vm5374 = vweird.f32 %v5368
    %vm5375 = vweird.f32 %v5369
    %vm5376 = vmor %vm5374, %vm5375
    %v5377 = vsel %vm5376, %v5369, %v5373
    %v5378 = vand.u32 2147483647, %v5368
    %vm5379 = vcmp.eq.f32.partialorder %v5378, 8.507059e+37
    %v5380 = vand.u32 %v5368, 2147483648
    %v5381 = vor.u32 1.1754944e-38, %v5380
    %v5382 = vsel %vm5379, %v5381, %v5377
    %v5383 = vmul.f32 1.0, %v5382
    %vm5384 = vcmp.ge.f32.partialorder %v5356, %v5362
    %v5385 = vsel %vm5384, %v4463, 128
    %v5386 = vsel %vm5359, %v5385, 2147483647
    %v5387 = vand.u32 %v5386, 65535
    %v5388 = vshra.s32 %v5386, 16
    %v5389 = vcvt.s32.f32 %v5387
    %v5390 = vcvt.s32.f32 %v5388
    %5391 = vmin.xlane.f32.xlu0 %v5390
    %v5392 = vpop.xlane.xlu0 %5391
    %vm5393 = vcmp.eq.f32.partialorder %v5390, %v5392
    %v5394 = vsel %vm5393, %v5389, inf
    %5395 = vmin.xlane.f32.xlu0 %v5394
    %v5396 = vpop.xlane.xlu0 %5395
    %v5397 = vcvt.f32.s32 %v5396
    %v5398 = vcvt.f32.s32 %v5392
    %v5399 = vshll.u32 %v5398, 16
    %v5400 = vadd.s32 %v5399, %v5397
    %vm5401 = vcmp.eq.s32.totalorder %v4463, %v5400
    %v5402 = vsel %vm5401, 1, 0
    %v5403 = vcvt.s32.f32 %v5402
    %v5404 = vpack.c.bf16 %v5403, %v5403
    %5405 = vmatpush.bf16.msra.mxu0 %v4523
    %5406 = vmatpush.bf16.msra.mxu0 %v4522
    %5407 = vmatpush.bf16.msra.mxu0 %v4521
    %5408 = vmatpush.bf16.msra.mxu0 %v4520
    %5409 = vmatpush.bf16.msra.mxu0 %v4519
    %5410 = vmatpush.bf16.msra.mxu0 %v4518
    %5411 = vmatpush.bf16.msra.mxu0 %v4517
    %5412 = vmatpush.bf16.msra.mxu0 %v4516
    %5413 = vmatmul.bf16.gmra.mxu0 %v5404
    %v5414 = vpop.f32.mrf.mxu0
    %v5415 = vadd.f32 0.0, %v5414
    %v5416 = vpop.f32.mrf.mxu0
    %5417 = vdwg.mxu0
    %v5418 = vpack.c.bf16 %v5415, %v5415
    %5419 = vmatpush.bf16.msra.mxu0 %v4841
    %5420 = vmatpush.bf16.msra.mxu0 %v4837
    %5421 = vmatpush.bf16.msra.mxu0 %v4833
    %5422 = vmatpush.bf16.msra.mxu0 %v4829
    %5423 = vmatpush.bf16.msra.mxu0 %v4825
    %5424 = vmatpush.bf16.msra.mxu0 %v4821
    %5425 = vmatpush.bf16.msra.mxu0 %v4817
    %5426 = vmatpush.bf16.msra.mxu0 %v4813
    %5427 = vmatmul.bf16.gmra.mxu0 %v5418
    %v5428 = vpop.f32.mrf.mxu0
    %v5429 = vadd.f32 %v4613, %v5428
    %v5430 = vpop.f32.mrf.mxu0
    %5431 = vdwg.mxu0
    %5432 = vmatpush.bf16.msra.mxu0 %v4873
    %5433 = vmatpush.bf16.msra.mxu0 %v4869
    %5434 = vmatpush.bf16.msra.mxu0 %v4865
    %5435 = vmatpush.bf16.msra.mxu0 %v4861
    %5436 = vmatpush.bf16.msra.mxu0 %v4857
    %5437 = vmatpush.bf16.msra.mxu0 %v4853
    %5438 = vmatpush.bf16.msra.mxu0 %v4849
    %5439 = vmatpush.bf16.msra.mxu0 %v4845
    %5440 = vmatmul.bf16.gmra.mxu0 %v5116
    %v5441 = vpop.f32.mrf.mxu0
    %v5442 = vadd.f32 %v5429, %v5441
    %v5443 = vpop.f32.mrf.mxu0
    %5444 = vdwg.mxu0
    %5445 = vmatpush.bf16.msra.mxu0 %v4842
    %5446 = vmatpush.bf16.msra.mxu0 %v4838
    %5447 = vmatpush.bf16.msra.mxu0 %v4834
    %5448 = vmatpush.bf16.msra.mxu0 %v4830
    %5449 = vmatpush.bf16.msra.mxu0 %v4826
    %5450 = vmatpush.bf16.msra.mxu0 %v4822
    %5451 = vmatpush.bf16.msra.mxu0 %v4818
    %5452 = vmatpush.bf16.msra.mxu0 %v4814
    %5453 = vmatmul.bf16.gmra.mxu0 %v5418
    %v5454 = vpop.f32.mrf.mxu0
    %v5455 = vadd.f32 %v4614, %v5454
    %v5456 = vpop.f32.mrf.mxu0
    %5457 = vdwg.mxu0
    %5458 = vmatpush.bf16.msra.mxu0 %v4874
    %5459 = vmatpush.bf16.msra.mxu0 %v4870
    %5460 = vmatpush.bf16.msra.mxu0 %v4866
    %5461 = vmatpush.bf16.msra.mxu0 %v4862
    %5462 = vmatpush.bf16.msra.mxu0 %v4858
    %5463 = vmatpush.bf16.msra.mxu0 %v4854
    %5464 = vmatpush.bf16.msra.mxu0 %v4850
    %5465 = vmatpush.bf16.msra.mxu0 %v4846
    %5466 = vmatmul.bf16.gmra.mxu0 %v5116
    %v5467 = vpop.f32.mrf.mxu0
    %v5468 = vadd.f32 %v5455, %v5467
    %v5469 = vpop.f32.mrf.mxu0
    %5470 = vdwg.mxu0
    %5471 = vmatpush.bf16.msra.mxu0 %v4843
    %5472 = vmatpush.bf16.msra.mxu0 %v4839
    %5473 = vmatpush.bf16.msra.mxu0 %v4835
    %5474 = vmatpush.bf16.msra.mxu0 %v4831
    %5475 = vmatpush.bf16.msra.mxu0 %v4827
    %5476 = vmatpush.bf16.msra.mxu0 %v4823
    %5477 = vmatpush.bf16.msra.mxu0 %v4819
    %5478 = vmatpush.bf16.msra.mxu0 %v4815
    %5479 = vmatmul.bf16.gmra.mxu0 %v5418
    %v5480 = vpop.f32.mrf.mxu0
    %v5481 = vadd.f32 %v4615, %v5480
    %v5482 = vpop.f32.mrf.mxu0
    %5483 = vdwg.mxu0
    %5484 = vmatpush.bf16.msra.mxu0 %v4875
    %5485 = vmatpush.bf16.msra.mxu0 %v4871
    %5486 = vmatpush.bf16.msra.mxu0 %v4867
    %5487 = vmatpush.bf16.msra.mxu0 %v4863
    %5488 = vmatpush.bf16.msra.mxu0 %v4859
    %5489 = vmatpush.bf16.msra.mxu0 %v4855
    %5490 = vmatpush.bf16.msra.mxu0 %v4851
    %5491 = vmatpush.bf16.msra.mxu0 %v4847
    %5492 = vmatmul.bf16.gmra.mxu0 %v5116
    %v5493 = vpop.f32.mrf.mxu0
    %v5494 = vadd.f32 %v5481, %v5493
    %v5495 = vpop.f32.mrf.mxu0
    %5496 = vdwg.mxu0
    %5497 = vmatpush.bf16.msra.mxu0 %v4844
    %5498 = vmatpush.bf16.msra.mxu0 %v4840
    %5499 = vmatpush.bf16.msra.mxu0 %v4836
    %5500 = vmatpush.bf16.msra.mxu0 %v4832
    %5501 = vmatpush.bf16.msra.mxu0 %v4828
    %5502 = vmatpush.bf16.msra.mxu0 %v4824
    %5503 = vmatpush.bf16.msra.mxu0 %v4820
    %5504 = vmatpush.bf16.msra.mxu0 %v4816
    %5505 = vmatmul.bf16.gmra.mxu0 %v5418
    %v5506 = vpop.f32.mrf.mxu0
    %v5507 = vadd.f32 %v4616, %v5506
    %v5508 = vpop.f32.mrf.mxu0
    %5509 = vdwg.mxu0
    %5510 = vmatpush.bf16.msra.mxu0 %v4876
    %5511 = vmatpush.bf16.msra.mxu0 %v4872
    %5512 = vmatpush.bf16.msra.mxu0 %v4868
    %5513 = vmatpush.bf16.msra.mxu0 %v4864
    %5514 = vmatpush.bf16.msra.mxu0 %v4860
    %5515 = vmatpush.bf16.msra.mxu0 %v4856
    %5516 = vmatpush.bf16.msra.mxu0 %v4852
    %5517 = vmatpush.bf16.msra.mxu0 %v4848
    %5518 = vmatmul.bf16.gmra.mxu0 %v5116
    %v5519 = vpop.f32.mrf.mxu0
    %v5520 = vadd.f32 %v5507, %v5519
    %v5521 = vpop.f32.mrf.mxu0
    %5522 = vdwg.mxu0
    %v5523 = vmul.f32 %v5442, 0.5
    %v5524 = vtanh.pop %v5523
    %v5525 = vadd.f32 %v5524, 1.0
    %v5526 = vmul.f32 %v5525, 0.5
    %v5527 = vmul.f32 %v5468, 0.5
    %v5528 = vtanh.pop %v5527
    %v5529 = vadd.f32 %v5528, 1.0
    %v5530 = vmul.f32 %v5529, 0.5
    %v5531 = vmul.f32 %v5526, %v5520
    %v5532 = vadd.f32 %v5494, %v5531
    %v5533 = vtanh.pop %v5532
    %v5534 = vsub.f32 1.0, %v5530
    %v5535 = vmul.f32 %v5534, %v5533
    %v5536 = vmul.f32 %v5530, %v5059
    %v5537 = vadd.f32 %v5535, %v5536
    %5538 = vmatpush.xpose.msra.mxu0 0.0
    %5539 = vmatpush.xpose.msra.mxu0 0.0
    %5540 = vmatpush.xpose.msra.mxu0 0.0
    %5541 = vmatpush.xpose.msra.mxu0 0.0
    %5542 = vmatpush.xpose.msra.mxu0 0.0
    %5543 = vmatpush.xpose.msra.mxu0 0.0
    %5544 = vmatpush.xpose.msra.mxu0 0.0
    %5545 = vmatpush.xpose.msra.mxu0 0.0
    %5546 = vmatpush.xpose.msra.mxu0 0.0
    %5547 = vmatpush.xpose.msra.mxu0 0.0
    %5548 = vmatpush.xpose.msra.mxu0 0.0
    %5549 = vmatpush.xpose.msra.mxu0 0.0
    %5550 = vmatpush.xpose.msra.mxu0 0.0
    %5551 = vmatpush.xpose.msra.mxu0 0.0
    %5552 = vmatpush.xpose.msra.mxu0 0.0
    %5553 = vmatpush.xpose.msra.mxu0 %v4363
    %5554 = vmatmul.f32.gmra.mxu0 %v5537
    %v5555 = vpop.f32.mrf.mxu0
    %v5556 = vadd.f32 0.0, %v5555
    %5557 = vdwg.mxu0
    %v5558 = vsel %vm5080, %v5556, -inf
    %5559 = vmax.xlane.f32.xlu0 %v5558
    %v5560 = vpop.xlane.xlu0 %5559
    %v5561 = vsub.f32 %v5556, %v5560
    %v5562 = vmul.f32 %v5561, 1.442695
    %v5563 = vpow.pop %v5562
    %v5564 = vsel %vm5080, %v5563, 0.0
    %5565 = vadd.xlane.f32.xlu0 %v5564
    %v5566 = vpop.xlane.xlu0 %5565
    %v5567 = vrcp.pop %v5566
    %v5568 = vmul.f32 %v5563, %v5567
    %v5570 = vsel %vm5092, %v5568, 0
    %5572 = vmatpush.msra.mxu0 0.0
    %5573 = vmatpush.msra.mxu0 0.0
    %5574 = vmatpush.msra.mxu0 0.0
    %5575 = vmatpush.msra.mxu0 0.0
    %5576 = vmatpush.msra.mxu0 0.0
    %5577 = vmatpush.msra.mxu0 0.0
    %5578 = vmatpush.msra.mxu0 0.0
    %5579 = vmatpush.msra.mxu0 0.0
    %5580 = vmatpush.msra.mxu0 0.0
    %5581 = vmatpush.msra.mxu0 0.0
    %5582 = vmatpush.msra.mxu0 0.0
    %5583 = vmatpush.msra.mxu0 0.0
    %5584 = vmatpush.msra.mxu0 0.0
    %5585 = vmatpush.msra.mxu0 0.0
    %5586 = vmatpush.msra.mxu0 0.0
    %5587 = vmatpush.msra.mxu0 %v4363
    %5588 = vmatmul.f32.gmra.mxu0 %v5570
    %v5589 = vpop.f32.mrf.mxu0
    %v5590 = vadd.f32 0.0, %v5589
    %5591 = vdwg.mxu0
    %v5592 = vpack.c.bf16 %v5537, %v5537
    %v5593 = vpack.c.bf16 %v5590, %v5590
    %5594 = vmatpush.bf16.msra.mxu0 %v5225
    %5595 = vmatpush.bf16.msra.mxu0 %v5224
    %5596 = vmatpush.bf16.msra.mxu0 %v5223
    %5597 = vmatpush.bf16.msra.mxu0 %v5222
    %5598 = vmatpush.bf16.msra.mxu0 %v5221
    %5599 = vmatpush.bf16.msra.mxu0 %v5220
    %5600 = vmatpush.bf16.msra.mxu0 %v5219
    %5601 = vmatpush.bf16.msra.mxu0 %v5218
    %5602 = vmatmul.bf16.gmra.mxu0 %v5592
    %v5603 = vpop.f32.mrf.mxu0
    %v5604 = vadd.f32 %v5152, %v5603
    %v5605 = vpop.f32.mrf.mxu0
    %5606 = vdwg.mxu0
    %5607 = vmatpush.bf16.msra.mxu0 %v5233
    %5608 = vmatpush.bf16.msra.mxu0 %v5232
    %5609 = vmatpush.bf16.msra.mxu0 %v5231
    %5610 = vmatpush.bf16.msra.mxu0 %v5230
    %5611 = vmatpush.bf16.msra.mxu0 %v5229
    %5612 = vmatpush.bf16.msra.mxu0 %v5228
    %5613 = vmatpush.bf16.msra.mxu0 %v5227
    %5614 = vmatpush.bf16.msra.mxu0 %v5226
    %5615 = vmatmul.bf16.gmra.mxu0 %v5593
    %v5616 = vpop.f32.mrf.mxu0
    %v5617 = vadd.f32 %v5604, %v5616
    %v5618 = vpop.f32.mrf.mxu0
    %5619 = vdwg.mxu0
    %v5620 = vtanh.pop %v5617
    %v5621 = vpack.c.bf16 %v5620, %v5620
    %5622 = vmatpush.bf16.msra.mxu0 %v5337
    %5623 = vmatpush.bf16.msra.mxu0 %v5336
    %5624 = vmatpush.bf16.msra.mxu0 %v5335
    %5625 = vmatpush.bf16.msra.mxu0 %v5334
    %5626 = vmatpush.bf16.msra.mxu0 %v5333
    %5627 = vmatpush.bf16.msra.mxu0 %v5332
    %5628 = vmatpush.bf16.msra.mxu0 %v5331
    %5629 = vmatpush.bf16.msra.mxu0 %v5330
    %5630 = vmatmul.bf16.gmra.mxu0 %v5621
    %v5631 = vpop.f32.mrf.mxu0
    %v5632 = vadd.f32 %v5296, %v5631
    %v5633 = vpop.f32.mrf.mxu0
    %5634 = vdwg.mxu0
    %v5635 = vsel %vm5359, %v5632, -inf
    %5636 = vmax.xlane.f32.xlu0 %v5635
    %v5637 = vpop.xlane.xlu0 %5636
    %v5638 = vsub.f32 %v5632, %v5637
    %v5639 = vmul.f32 %v5638, 1.442695
    %v5640 = vpow.pop %v5639
    %v5641 = vsel %vm5359, %v5640, 0.0
    %5642 = vadd.xlane.f32.xlu0 %v5641
    %v5643 = vpop.xlane.xlu0 %5642
    %v5644 = vrcp.pop %v5643
    %v5645 = vmul.f32 %v5643, %v5644
    %v5646 = vsub.f32 1.0, %v5645
    %v5647 = vmul.f32 %v5644, %v5646
    %v5648 = vadd.f32 %v5644, %v5647
    %vm5649 = vweird.f32 %v5643
    %vm5650 = vweird.f32 %v5644
    %vm5651 = vmor %vm5649, %vm5650
    %v5652 = vsel %vm5651, %v5644, %v5648
    %v5653 = vand.u32 2147483647, %v5643
    %vm5654 = vcmp.eq.f32.partialorder %v5653, 8.507059e+37
    %v5655 = vand.u32 %v5643, 2147483648
    %v5656 = vor.u32 1.1754944e-38, %v5655
    %v5657 = vsel %vm5654, %v5656, %v5652
    %v5658 = vmul.f32 1.0, %v5657
    %vm5659 = vcmp.ge.f32.partialorder %v5632, %v5637
    %v5660 = vsel %vm5659, %v4463, 128
    %v5661 = vsel %vm5359, %v5660, 2147483647
    %v5662 = vand.u32 %v5661, 65535
    %v5663 = vshra.s32 %v5661, 16
    %v5664 = vcvt.s32.f32 %v5662
    %v5665 = vcvt.s32.f32 %v5663
    %5666 = vmin.xlane.f32.xlu0 %v5665
    %v5667 = vpop.xlane.xlu0 %5666
    %vm5668 = vcmp.eq.f32.partialorder %v5665, %v5667
    %v5669 = vsel %vm5668, %v5664, inf
    %5670 = vmin.xlane.f32.xlu0 %v5669
    %v5671 = vpop.xlane.xlu0 %5670
    %v5672 = vcvt.f32.s32 %v5671
    %v5673 = vcvt.f32.s32 %v5667
    %v5674 = vshll.u32 %v5673, 16
    %v5675 = vadd.s32 %v5674, %v5672
    %vm5676 = vcmp.eq.s32.totalorder %v4463, %v5675
    %v5677 = vsel %vm5676, 1, 0
    %v5678 = vcvt.s32.f32 %v5677
    %v5679 = vpack.c.bf16 %v5678, %v5678
    %5680 = vmatpush.bf16.msra.mxu0 %v4523
    %5681 = vmatpush.bf16.msra.mxu0 %v4522
    %5682 = vmatpush.bf16.msra.mxu0 %v4521
    %5683 = vmatpush.bf16.msra.mxu0 %v4520
    %5684 = vmatpush.bf16.msra.mxu0 %v4519
    %5685 = vmatpush.bf16.msra.mxu0 %v4518
    %5686 = vmatpush.bf16.msra.mxu0 %v4517
    %5687 = vmatpush.bf16.msra.mxu0 %v4516
    %5688 = vmatmul.bf16.gmra.mxu0 %v5679
    %v5689 = vpop.f32.mrf.mxu0
    %v5690 = vadd.f32 0.0, %v5689
    %v5691 = vpop.f32.mrf.mxu0
    %5692 = vdwg.mxu0
    %v5693 = vpack.c.bf16 %v5690, %v5690
    %5694 = vmatpush.bf16.msra.mxu0 %v4841
    %5695 = vmatpush.bf16.msra.mxu0 %v4837
    %5696 = vmatpush.bf16.msra.mxu0 %v4833
    %5697 = vmatpush.bf16.msra.mxu0 %v4829
    %5698 = vmatpush.bf16.msra.mxu0 %v4825
    %5699 = vmatpush.bf16.msra.mxu0 %v4821
    %5700 = vmatpush.bf16.msra.mxu0 %v4817
    %5701 = vmatpush.bf16.msra.mxu0 %v4813
    %5702 = vmatmul.bf16.gmra.mxu0 %v5693
    %v5703 = vpop.f32.mrf.mxu0
    %v5704 = vadd.f32 %v4613, %v5703
    %v5705 = vpop.f32.mrf.mxu0
    %5706 = vdwg.mxu0
    %5707 = vmatpush.bf16.msra.mxu0 %v4873
    %5708 = vmatpush.bf16.msra.mxu0 %v4869
    %5709 = vmatpush.bf16.msra.mxu0 %v4865
    %5710 = vmatpush.bf16.msra.mxu0 %v4861
    %5711 = vmatpush.bf16.msra.mxu0 %v4857
    %5712 = vmatpush.bf16.msra.mxu0 %v4853
    %5713 = vmatpush.bf16.msra.mxu0 %v4849
    %5714 = vmatpush.bf16.msra.mxu0 %v4845
    %5715 = vmatmul.bf16.gmra.mxu0 %v5592
    %v5716 = vpop.f32.mrf.mxu0
    %v5717 = vadd.f32 %v5704, %v5716
    %v5718 = vpop.f32.mrf.mxu0
    %5719 = vdwg.mxu0
    %5720 = vmatpush.bf16.msra.mxu0 %v4842
    %5721 = vmatpush.bf16.msra.mxu0 %v4838
    %5722 = vmatpush.bf16.msra.mxu0 %v4834
    %5723 = vmatpush.bf16.msra.mxu0 %v4830
    %5724 = vmatpush.bf16.msra.mxu0 %v4826
    %5725 = vmatpush.bf16.msra.mxu0 %v4822
    %5726 = vmatpush.bf16.msra.mxu0 %v4818
    %5727 = vmatpush.bf16.msra.mxu0 %v4814
    %5728 = vmatmul.bf16.gmra.mxu0 %v5693
    %v5729 = vpop.f32.mrf.mxu0
    %v5730 = vadd.f32 %v4614, %v5729
    %v5731 = vpop.f32.mrf.mxu0
    %5732 = vdwg.mxu0
    %5733 = vmatpush.bf16.msra.mxu0 %v4874
    %5734 = vmatpush.bf16.msra.mxu0 %v4870
    %5735 = vmatpush.bf16.msra.mxu0 %v4866
    %5736 = vmatpush.bf16.msra.mxu0 %v4862
    %5737 = vmatpush.bf16.msra.mxu0 %v4858
    %5738 = vmatpush.bf16.msra.mxu0 %v4854
    %5739 = vmatpush.bf16.msra.mxu0 %v4850
    %5740 = vmatpush.bf16.msra.mxu0 %v4846
    %5741 = vmatmul.bf16.gmra.mxu0 %v5592
    %v5742 = vpop.f32.mrf.mxu0
    %v5743 = vadd.f32 %v5730, %v5742
    %v5744 = vpop.f32.mrf.mxu0
    %5745 = vdwg.mxu0
    %5746 = vmatpush.bf16.msra.mxu0 %v4843
    %5747 = vmatpush.bf16.msra.mxu0 %v4839
    %5748 = vmatpush.bf16.msra.mxu0 %v4835
    %5749 = vmatpush.bf16.msra.mxu0 %v4831
    %5750 = vmatpush.bf16.msra.mxu0 %v4827
    %5751 = vmatpush.bf16.msra.mxu0 %v4823
    %5752 = vmatpush.bf16.msra.mxu0 %v4819
    %5753 = vmatpush.bf16.msra.mxu0 %v4815
    %5754 = vmatmul.bf16.gmra.mxu0 %v5693
    %v5755 = vpop.f32.mrf.mxu0
    %v5756 = vadd.f32 %v4615, %v5755
    %v5757 = vpop.f32.mrf.mxu0
    %5758 = vdwg.mxu0
    %5759 = vmatpush.bf16.msra.mxu0 %v4875
    %5760 = vmatpush.bf16.msra.mxu0 %v4871
    %5761 = vmatpush.bf16.msra.mxu0 %v4867
    %5762 = vmatpush.bf16.msra.mxu0 %v4863
    %5763 = vmatpush.bf16.msra.mxu0 %v4859
    %5764 = vmatpush.bf16.msra.mxu0 %v4855
    %5765 = vmatpush.bf16.msra.mxu0 %v4851
    %5766 = vmatpush.bf16.msra.mxu0 %v4847
    %5767 = vmatmul.bf16.gmra.mxu0 %v5592
    %v5768 = vpop.f32.mrf.mxu0
    %v5769 = vadd.f32 %v5756, %v5768
    %v5770 = vpop.f32.mrf.mxu0
    %5771 = vdwg.mxu0
    %5772 = vmatpush.bf16.msra.mxu0 %v4844
    %5773 = vmatpush.bf16.msra.mxu0 %v4840
    %5774 = vmatpush.bf16.msra.mxu0 %v4836
    %5775 = vmatpush.bf16.msra.mxu0 %v4832
    %5776 = vmatpush.bf16.msra.mxu0 %v4828
    %5777 = vmatpush.bf16.msra.mxu0 %v4824
    %5778 = vmatpush.bf16.msra.mxu0 %v4820
    %5779 = vmatpush.bf16.msra.mxu0 %v4816
    %5780 = vmatmul.bf16.gmra.mxu0 %v5693
    %v5781 = vpop.f32.mrf.mxu0
    %v5782 = vadd.f32 %v4616, %v5781
    %v5783 = vpop.f32.mrf.mxu0
    %5784 = vdwg.mxu0
    %5785 = vmatpush.bf16.msra.mxu0 %v4876
    %5786 = vmatpush.bf16.msra.mxu0 %v4872
    %5787 = vmatpush.bf16.msra.mxu0 %v4868
    %5788 = vmatpush.bf16.msra.mxu0 %v4864
    %5789 = vmatpush.bf16.msra.mxu0 %v4860
    %5790 = vmatpush.bf16.msra.mxu0 %v4856
    %5791 = vmatpush.bf16.msra.mxu0 %v4852
    %5792 = vmatpush.bf16.msra.mxu0 %v4848
    %5793 = vmatmul.bf16.gmra.mxu0 %v5592
    %v5794 = vpop.f32.mrf.mxu0
    %v5795 = vadd.f32 %v5782, %v5794
    %v5796 = vpop.f32.mrf.mxu0
    %5797 = vdwg.mxu0
    %v5798 = vmul.f32 %v5717, 0.5
    %v5799 = vtanh.pop %v5798
    %v5800 = vadd.f32 %v5799, 1.0
    %v5801 = vmul.f32 %v5800, 0.5
    %v5802 = vmul.f32 %v5743, 0.5
    %v5803 = vtanh.pop %v5802
    %v5804 = vadd.f32 %v5803, 1.0
    %v5805 = vmul.f32 %v5804, 0.5
    %v5806 = vmul.f32 %v5801, %v5795
    %v5807 = vadd.f32 %v5769, %v5806
    %v5808 = vtanh.pop %v5807
    %v5809 = vsub.f32 1.0, %v5805
    %v5810 = vmul.f32 %v5809, %v5808
    %v5811 = vmul.f32 %v5805, %v5537
    %v5812 = vadd.f32 %v5810, %v5811
    %5813 = vmatpush.xpose.msra.mxu0 0.0
    %5814 = vmatpush.xpose.msra.mxu0 0.0
    %5815 = vmatpush.xpose.msra.mxu0 0.0
    %5816 = vmatpush.xpose.msra.mxu0 0.0
    %5817 = vmatpush.xpose.msra.mxu0 0.0
    %5818 = vmatpush.xpose.msra.mxu0 0.0
    %5819 = vmatpush.xpose.msra.mxu0 0.0
    %5820 = vmatpush.xpose.msra.mxu0 0.0
    %5821 = vmatpush.xpose.msra.mxu0 0.0
    %5822 = vmatpush.xpose.msra.mxu0 0.0
    %5823 = vmatpush.xpose.msra.mxu0 0.0
    %5824 = vmatpush.xpose.msra.mxu0 0.0
    %5825 = vmatpush.xpose.msra.mxu0 0.0
    %5826 = vmatpush.xpose.msra.mxu0 0.0
    %5827 = vmatpush.xpose.msra.mxu0 0.0
    %5828 = vmatpush.xpose.msra.mxu0 %v4363
    %5829 = vmatmul.f32.gmra.mxu0 %v5812
    %v5830 = vpop.f32.mrf.mxu0
    %v5831 = vadd.f32 0.0, %v5830
    %5832 = vdwg.mxu0
    %v5833 = vsel %vm5080, %v5831, -inf
    %5834 = vmax.xlane.f32.xlu0 %v5833
    %v5835 = vpop.xlane.xlu0 %5834
    %v5836 = vsub.f32 %v5831, %v5835
    %v5837 = vmul.f32 %v5836, 1.442695
    %v5838 = vpow.pop %v5837
    %v5839 = vsel %vm5080, %v5838, 0.0
    %5840 = vadd.xlane.f32.xlu0 %v5839
    %v5841 = vpop.xlane.xlu0 %5840
    %v5842 = vrcp.pop %v5841
    %v5843 = vmul.f32 %v5838, %v5842
    %v5845 = vsel %vm5092, %v5843, 0
    %5847 = vmatpush.msra.mxu0 0.0
    %5848 = vmatpush.msra.mxu0 0.0
    %5849 = vmatpush.msra.mxu0 0.0
    %5850 = vmatpush.msra.mxu0 0.0
    %5851 = vmatpush.msra.mxu0 0.0
    %5852 = vmatpush.msra.mxu0 0.0
    %5853 = vmatpush.msra.mxu0 0.0
    %5854 = vmatpush.msra.mxu0 0.0
    %5855 = vmatpush.msra.mxu0 0.0
    %5856 = vmatpush.msra.mxu0 0.0
    %5857 = vmatpush.msra.mxu0 0.0
    %5858 = vmatpush.msra.mxu0 0.0
    %5859 = vmatpush.msra.mxu0 0.0
    %5860 = vmatpush.msra.mxu0 0.0
    %5861 = vmatpush.msra.mxu0 0.0
    %5862 = vmatpush.msra.mxu0 %v4363
    %5863 = vmatmul.f32.gmra.mxu0 %v5845
    %v5864 = vpop.f32.mrf.mxu0
    %v5865 = vadd.f32 0.0, %v5864
    %5866 = vdwg.mxu0
    %v5867 = vpack.c.bf16 %v5812, %v5812
    %v5868 = vpack.c.bf16 %v5865, %v5865
    %5869 = vmatpush.bf16.msra.mxu0 %v5225
    %5870 = vmatpush.bf16.msra.mxu0 %v5224
    %5871 = vmatpush.bf16.msra.mxu0 %v5223
    %5872 = vmatpush.bf16.msra.mxu0 %v5222
    %5873 = vmatpush.bf16.msra.mxu0 %v5221
    %5874 = vmatpush.bf16.msra.mxu0 %v5220
    %5875 = vmatpush.bf16.msra.mxu0 %v5219
    %5876 = vmatpush.bf16.msra.mxu0 %v5218
    %5877 = vmatmul.bf16.gmra.mxu0 %v5867
    %v5878 = vpop.f32.mrf.mxu0
    %v5879 = vadd.f32 %v5152, %v5878
    %v5880 = vpop.f32.mrf.mxu0
    %5881 = vdwg.mxu0
    %5882 = vmatpush.bf16.msra.mxu0 %v5233
    %5883 = vmatpush.bf16.msra.mxu0 %v5232
    %5884 = vmatpush.bf16.msra.mxu0 %v5231
    %5885 = vmatpush.bf16.msra.mxu0 %v5230
    %5886 = vmatpush.bf16.msra.mxu0 %v5229
    %5887 = vmatpush.bf16.msra.mxu0 %v5228
    %5888 = vmatpush.bf16.msra.mxu0 %v5227
    %5889 = vmatpush.bf16.msra.mxu0 %v5226
    %5890 = vmatmul.bf16.gmra.mxu0 %v5868
    %v5891 = vpop.f32.mrf.mxu0
    %v5892 = vadd.f32 %v5879, %v5891
    %v5893 = vpop.f32.mrf.mxu0
    %5894 = vdwg.mxu0
    %v5895 = vtanh.pop %v5892
    %v5896 = vpack.c.bf16 %v5895, %v5895
    %5897 = vmatpush.bf16.msra.mxu0 %v5337
    %5898 = vmatpush.bf16.msra.mxu0 %v5336
    %5899 = vmatpush.bf16.msra.mxu0 %v5335
    %5900 = vmatpush.bf16.msra.mxu0 %v5334
    %5901 = vmatpush.bf16.msra.mxu0 %v5333
    %5902 = vmatpush.bf16.msra.mxu0 %v5332
    %5903 = vmatpush.bf16.msra.mxu0 %v5331
    %5904 = vmatpush.bf16.msra.mxu0 %v5330
    %5905 = vmatmul.bf16.gmra.mxu0 %v5896
    %v5906 = vpop.f32.mrf.mxu0
    %v5907 = vadd.f32 %v5296, %v5906
    %v5908 = vpop.f32.mrf.mxu0
    %5909 = vdwg.mxu0
    %v5910 = vsel %vm5359, %v5907, -inf
    %5911 = vmax.xlane.f32.xlu0 %v5910
    %v5912 = vpop.xlane.xlu0 %5911
    %v5913 = vsub.f32 %v5907, %v5912
    %v5914 = vmul.f32 %v5913, 1.442695
    %v5915 = vpow.pop %v5914
    %v5916 = vsel %vm5359, %v5915, 0.0
    %5917 = vadd.xlane.f32.xlu0 %v5916
    %v5918 = vpop.xlane.xlu0 %5917
    %v5919 = vrcp.pop %v5918
    %v5920 = vmul.f32 %v5918, %v5919
    %v5921 = vsub.f32 1.0, %v5920
    %v5922 = vmul.f32 %v5919, %v5921
    %v5923 = vadd.f32 %v5919, %v5922
    %vm5924 = vweird.f32 %v5918
    %vm5925 = vweird.f32 %v5919
    %vm5926 = vmor %vm5924, %vm5925
    %v5927 = vsel %vm5926, %v5919, %v5923
    %v5928 = vand.u32 2147483647, %v5918
    %vm5929 = vcmp.eq.f32.partialorder %v5928, 8.507059e+37
    %v5930 = vand.u32 %v5918, 2147483648
    %v5931 = vor.u32 1.1754944e-38, %v5930
    %v5932 = vsel %vm5929, %v5931, %v5927
    %v5933 = vmul.f32 1.0, %v5932
    %vm5934 = vcmp.ge.f32.partialorder %v5907, %v5912
    %v5935 = vsel %vm5934, %v4463, 128
    %v5936 = vsel %vm5359, %v5935, 2147483647
    %v5937 = vand.u32 %v5936, 65535
    %v5938 = vshra.s32 %v5936, 16
    %v5939 = vcvt.s32.f32 %v5937
    %v5940 = vcvt.s32.f32 %v5938
    %5941 = vmin.xlane.f32.xlu0 %v5940
    %v5942 = vpop.xlane.xlu0 %5941
    %vm5943 = vcmp.eq.f32.partialorder %v5940, %v5942
    %v5944 = vsel %vm5943, %v5939, inf
    %5945 = vmin.xlane.f32.xlu0 %v5944
    %v5946 = vpop.xlane.xlu0 %5945
    %v5947 = vcvt.f32.s32 %v5946
    %v5948 = vcvt.f32.s32 %v5942
    %v5949 = vshll.u32 %v5948, 16
    %v5950 = vadd.s32 %v5949, %v5947
    %vm5951 = vcmp.eq.s32.totalorder %v4463, %v5950
    %v5952 = vsel %vm5951, 1, 0
    %v5953 = vcvt.s32.f32 %v5952
    %v5954 = vpack.c.bf16 %v5953, %v5953
    %5955 = vmatpush.bf16.msra.mxu0 %v4523
    %5956 = vmatpush.bf16.msra.mxu0 %v4522
    %5957 = vmatpush.bf16.msra.mxu0 %v4521
    %5958 = vmatpush.bf16.msra.mxu0 %v4520
    %5959 = vmatpush.bf16.msra.mxu0 %v4519
    %5960 = vmatpush.bf16.msra.mxu0 %v4518
    %5961 = vmatpush.bf16.msra.mxu0 %v4517
    %5962 = vmatpush.bf16.msra.mxu0 %v4516
    %5963 = vmatmul.bf16.gmra.mxu0 %v5954
    %v5964 = vpop.f32.mrf.mxu0
    %v5965 = vadd.f32 0.0, %v5964
    %v5966 = vpop.f32.mrf.mxu0
    %5967 = vdwg.mxu0
    %v5968 = vpack.c.bf16 %v5965, %v5965
    %5969 = vmatpush.bf16.msra.mxu0 %v4841
    %5970 = vmatpush.bf16.msra.mxu0 %v4837
    %5971 = vmatpush.bf16.msra.mxu0 %v4833
    %5972 = vmatpush.bf16.msra.mxu0 %v4829
    %5973 = vmatpush.bf16.msra.mxu0 %v4825
    %5974 = vmatpush.bf16.msra.mxu0 %v4821
    %5975 = vmatpush.bf16.msra.mxu0 %v4817
    %5976 = vmatpush.bf16.msra.mxu0 %v4813
    %5977 = vmatmul.bf16.gmra.mxu0 %v5968
    %v5978 = vpop.f32.mrf.mxu0
    %v5979 = vadd.f32 %v4613, %v5978
    %v5980 = vpop.f32.mrf.mxu0
    %5981 = vdwg.mxu0
    %5982 = vmatpush.bf16.msra.mxu0 %v4873
    %5983 = vmatpush.bf16.msra.mxu0 %v4869
    %5984 = vmatpush.bf16.msra.mxu0 %v4865
    %5985 = vmatpush.bf16.msra.mxu0 %v4861
    %5986 = vmatpush.bf16.msra.mxu0 %v4857
    %5987 = vmatpush.bf16.msra.mxu0 %v4853
    %5988 = vmatpush.bf16.msra.mxu0 %v4849
    %5989 = vmatpush.bf16.msra.mxu0 %v4845
    %5990 = vmatmul.bf16.gmra.mxu0 %v5867
    %v5991 = vpop.f32.mrf.mxu0
    %v5992 = vadd.f32 %v5979, %v5991
    %v5993 = vpop.f32.mrf.mxu0
    %5994 = vdwg.mxu0
    %5995 = vmatpush.bf16.msra.mxu0 %v4842
    %5996 = vmatpush.bf16.msra.mxu0 %v4838
    %5997 = vmatpush.bf16.msra.mxu0 %v4834
    %5998 = vmatpush.bf16.msra.mxu0 %v4830
    %5999 = vmatpush.bf16.msra.mxu0 %v4826
    %6000 = vmatpush.bf16.msra.mxu0 %v4822
    %6001 = vmatpush.bf16.msra.mxu0 %v4818
    %6002 = vmatpush.bf16.msra.mxu0 %v4814
    %6003 = vmatmul.bf16.gmra.mxu0 %v5968
    %v6004 = vpop.f32.mrf.mxu0
    %v6005 = vadd.f32 %v4614, %v6004
    %v6006 = vpop.f32.mrf.mxu0
    %6007 = vdwg.mxu0
    %6008 = vmatpush.bf16.msra.mxu0 %v4874
    %6009 = vmatpush.bf16.msra.mxu0 %v4870
    %6010 = vmatpush.bf16.msra.mxu0 %v4866
    %6011 = vmatpush.bf16.msra.mxu0 %v4862
    %6012 = vmatpush.bf16.msra.mxu0 %v4858
    %6013 = vmatpush.bf16.msra.mxu0 %v4854
    %6014 = vmatpush.bf16.msra.mxu0 %v4850
    %6015 = vmatpush.bf16.msra.mxu0 %v4846
    %6016 = vmatmul.bf16.gmra.mxu0 %v5867
    %v6017 = vpop.f32.mrf.mxu0
    %v6018 = vadd.f32 %v6005, %v6017
    %v6019 = vpop.f32.mrf.mxu0
    %6020 = vdwg.mxu0
    %6021 = vmatpush.bf16.msra.mxu0 %v4843
    %6022 = vmatpush.bf16.msra.mxu0 %v4839
    %6023 = vmatpush.bf16.msra.mxu0 %v4835
    %6024 = vmatpush.bf16.msra.mxu0 %v4831
    %6025 = vmatpush.bf16.msra.mxu0 %v4827
    %6026 = vmatpush.bf16.msra.mxu0 %v4823
    %6027 = vmatpush.bf16.msra.mxu0 %v4819
    %6028 = vmatpush.bf16.msra.mxu0 %v4815
    %6029 = vmatmul.bf16.gmra.mxu0 %v5968
    %v6030 = vpop.f32.mrf.mxu0
    %v6031 = vadd.f32 %v4615, %v6030
    %v6032 = vpop.f32.mrf.mxu0
    %6033 = vdwg.mxu0
    %6034 = vmatpush.bf16.msra.mxu0 %v4875
    %6035 = vmatpush.bf16.msra.mxu0 %v4871
    %6036 = vmatpush.bf16.msra.mxu0 %v4867
    %6037 = vmatpush.bf16.msra.mxu0 %v4863
    %6038 = vmatpush.bf16.msra.mxu0 %v4859
    %6039 = vmatpush.bf16.msra.mxu0 %v4855
    %6040 = vmatpush.bf16.msra.mxu0 %v4851
    %6041 = vmatpush.bf16.msra.mxu0 %v4847
    %6042 = vmatmul.bf16.gmra.mxu0 %v5867
    %v6043 = vpop.f32.mrf.mxu0
    %v6044 = vadd.f32 %v6031, %v6043
    %v6045 = vpop.f32.mrf.mxu0
    %6046 = vdwg.mxu0
    %6047 = vmatpush.bf16.msra.mxu0 %v4844
    %6048 = vmatpush.bf16.msra.mxu0 %v4840
    %6049 = vmatpush.bf16.msra.mxu0 %v4836
    %6050 = vmatpush.bf16.msra.mxu0 %v4832
    %6051 = vmatpush.bf16.msra.mxu0 %v4828
    %6052 = vmatpush.bf16.msra.mxu0 %v4824
    %6053 = vmatpush.bf16.msra.mxu0 %v4820
    %6054 = vmatpush.bf16.msra.mxu0 %v4816
    %6055 = vmatmul.bf16.gmra.mxu0 %v5968
    %v6056 = vpop.f32.mrf.mxu0
    %v6057 = vadd.f32 %v4616, %v6056
    %v6058 = vpop.f32.mrf.mxu0
    %6059 = vdwg.mxu0
    %6060 = vmatpush.bf16.msra.mxu0 %v4876
    %6061 = vmatpush.bf16.msra.mxu0 %v4872
    %6062 = vmatpush.bf16.msra.mxu0 %v4868
    %6063 = vmatpush.bf16.msra.mxu0 %v4864
    %6064 = vmatpush.bf16.msra.mxu0 %v4860
    %6065 = vmatpush.bf16.msra.mxu0 %v4856
    %6066 = vmatpush.bf16.msra.mxu0 %v4852
    %6067 = vmatpush.bf16.msra.mxu0 %v4848
    %6068 = vmatmul.bf16.gmra.mxu0 %v5867
    %v6069 = vpop.f32.mrf.mxu0
    %v6070 = vadd.f32 %v6057, %v6069
    %v6071 = vpop.f32.mrf.mxu0
    %6072 = vdwg.mxu0
    %v6073 = vmul.f32 %v5992, 0.5
    %v6074 = vtanh.pop %v6073
    %v6075 = vadd.f32 %v6074, 1.0
    %v6076 = vmul.f32 %v6075, 0.5
    %v6077 = vmul.f32 %v6018, 0.5
    %v6078 = vtanh.pop %v6077
    %v6079 = vadd.f32 %v6078, 1.0
    %v6080 = vmul.f32 %v6079, 0.5
    %v6081 = vmul.f32 %v6076, %v6070
    %v6082 = vadd.f32 %v6044, %v6081
    %v6083 = vtanh.pop %v6082
    %v6084 = vsub.f32 1.0, %v6080
    %v6085 = vmul.f32 %v6084, %v6083
    %v6086 = vmul.f32 %v6080, %v5812
    %v6087 = vadd.f32 %v6085, %v6086
    %6088 = vmatpush.xpose.msra.mxu0 0.0
    %6089 = vmatpush.xpose.msra.mxu0 0.0
    %6090 = vmatpush.xpose.msra.mxu0 0.0
    %6091 = vmatpush.xpose.msra.mxu0 0.0
    %6092 = vmatpush.xpose.msra.mxu0 0.0
    %6093 = vmatpush.xpose.msra.mxu0 0.0
    %6094 = vmatpush.xpose.msra.mxu0 0.0
    %6095 = vmatpush.xpose.msra.mxu0 0.0
    %6096 = vmatpush.xpose.msra.mxu0 0.0
    %6097 = vmatpush.xpose.msra.mxu0 0.0
    %6098 = vmatpush.xpose.msra.mxu0 0.0
    %6099 = vmatpush.xpose.msra.mxu0 0.0
    %6100 = vmatpush.xpose.msra.mxu0 0.0
    %6101 = vmatpush.xpose.msra.mxu0 0.0
    %6102 = vmatpush.xpose.msra.mxu0 0.0
    %6103 = vmatpush.xpose.msra.mxu0 %v4363
    %6104 = vmatmul.f32.gmra.mxu0 %v6087
    %v6105 = vpop.f32.mrf.mxu0
    %v6106 = vadd.f32 0.0, %v6105
    %6107 = vdwg.mxu0
    %v6108 = vsel %vm5080, %v6106, -inf
    %6109 = vmax.xlane.f32.xlu0 %v6108
    %v6110 = vpop.xlane.xlu0 %6109
    %v6111 = vsub.f32 %v6106, %v6110
    %v6112 = vmul.f32 %v6111, 1.442695
    %v6113 = vpow.pop %v6112
    %v6114 = vsel %vm5080, %v6113, 0.0
    %6115 = vadd.xlane.f32.xlu0 %v6114
    %v6116 = vpop.xlane.xlu0 %6115
    %v6117 = vrcp.pop %v6116
    %v6118 = vmul.f32 %v6113, %v6117
    %v6120 = vsel %vm5092, %v6118, 0
    %6122 = vmatpush.msra.mxu0 0.0
    %6123 = vmatpush.msra.mxu0 0.0
    %6124 = vmatpush.msra.mxu0 0.0
    %6125 = vmatpush.msra.mxu0 0.0
    %6126 = vmatpush.msra.mxu0 0.0
    %6127 = vmatpush.msra.mxu0 0.0
    %6128 = vmatpush.msra.mxu0 0.0
    %6129 = vmatpush.msra.mxu0 0.0
    %6130 = vmatpush.msra.mxu0 0.0
    %6131 = vmatpush.msra.mxu0 0.0
    %6132 = vmatpush.msra.mxu0 0.0
    %6133 = vmatpush.msra.mxu0 0.0
    %6134 = vmatpush.msra.mxu0 0.0
    %6135 = vmatpush.msra.mxu0 0.0
    %6136 = vmatpush.msra.mxu0 0.0
    %6137 = vmatpush.msra.mxu0 %v4363
    %6138 = vmatmul.f32.gmra.mxu0 %v6120
    %v6139 = vpop.f32.mrf.mxu0
    %v6140 = vadd.f32 0.0, %v6139
    %6141 = vdwg.mxu0
    %v6142 = vpack.c.bf16 %v6087, %v6087
    %v6143 = vpack.c.bf16 %v6140, %v6140
    %6144 = vmatpush.bf16.msra.mxu0 %v5225
    %6145 = vmatpush.bf16.msra.mxu0 %v5224
    %6146 = vmatpush.bf16.msra.mxu0 %v5223
    %6147 = vmatpush.bf16.msra.mxu0 %v5222
    %6148 = vmatpush.bf16.msra.mxu0 %v5221
    %6149 = vmatpush.bf16.msra.mxu0 %v5220
    %6150 = vmatpush.bf16.msra.mxu0 %v5219
    %6151 = vmatpush.bf16.msra.mxu0 %v5218
    %6152 = vmatmul.bf16.gmra.mxu0 %v6142
    %v6153 = vpop.f32.mrf.mxu0
    %v6154 = vadd.f32 %v5152, %v6153
    %v6155 = vpop.f32.mrf.mxu0
    %6156 = vdwg.mxu0
    %6157 = vmatpush.bf16.msra.mxu0 %v5233
    %6158 = vmatpush.bf16.msra.mxu0 %v5232
    %6159 = vmatpush.bf16.msra.mxu0 %v5231
    %6160 = vmatpush.bf16.msra.mxu0 %v5230
    %6161 = vmatpush.bf16.msra.mxu0 %v5229
    %6162 = vmatpush.bf16.msra.mxu0 %v5228
    %6163 = vmatpush.bf16.msra.mxu0 %v5227
    %6164 = vmatpush.bf16.msra.mxu0 %v5226
    %6165 = vmatmul.bf16.gmra.mxu0 %v6143
    %v6166 = vpop.f32.mrf.mxu0
    %v6167 = vadd.f32 %v6154, %v6166
    %v6168 = vpop.f32.mrf.mxu0
    %6169 = vdwg.mxu0
    %v6170 = vtanh.pop %v6167
    %v6171 = vpack.c.bf16 %v6170, %v6170
    %6172 = vmatpush.bf16.msra.mxu0 %v5337
    %6173 = vmatpush.bf16.msra.mxu0 %v5336
    %6174 = vmatpush.bf16.msra.mxu0 %v5335
    %6175 = vmatpush.bf16.msra.mxu0 %v5334
    %6176 = vmatpush.bf16.msra.mxu0 %v5333
    %6177 = vmatpush.bf16.msra.mxu0 %v5332
    %6178 = vmatpush.bf16.msra.mxu0 %v5331
    %6179 = vmatpush.bf16.msra.mxu0 %v5330
    %6180 = vmatmul.bf16.gmra.mxu0 %v6171
    %v6181 = vpop.f32.mrf.mxu0
    %v6182 = vadd.f32 %v5296, %v6181
    %v6183 = vpop.f32.mrf.mxu0
    %6184 = vdwg.mxu0
    %v6185 = vsel %vm5359, %v6182, -inf
    %6186 = vmax.xlane.f32.xlu0 %v6185
    %v6187 = vpop.xlane.xlu0 %6186
    %v6188 = vsub.f32 %v6182, %v6187
    %v6189 = vmul.f32 %v6188, 1.442695
    %v6190 = vpow.pop %v6189
    %v6191 = vsel %vm5359, %v6190, 0.0
    %6192 = vadd.xlane.f32.xlu0 %v6191
    %v6193 = vpop.xlane.xlu0 %6192
    %v6194 = vrcp.pop %v6193
    %v6195 = vmul.f32 %v6193, %v6194
    %v6196 = vsub.f32 1.0, %v6195
    %v6197 = vmul.f32 %v6194, %v6196
    %v6198 = vadd.f32 %v6194, %v6197
    %vm6199 = vweird.f32 %v6193
    %vm6200 = vweird.f32 %v6194
    %vm6201 = vmor %vm6199, %vm6200
    %v6202 = vsel %vm6201, %v6194, %v6198
    %v6203 = vand.u32 2147483647, %v6193
    %vm6204 = vcmp.eq.f32.partialorder %v6203, 8.507059e+37
    %v6205 = vand.u32 %v6193, 2147483648
    %v6206 = vor.u32 1.1754944e-38, %v6205
    %v6207 = vsel %vm6204, %v6206, %v6202
    %v6208 = vmul.f32 1.0, %v6207
    %vm6209 = vcmp.ge.f32.partialorder %v6182, %v6187
    %v6210 = vsel %vm6209, %v4463, 128
    %v6211 = vsel %vm5359, %v6210, 2147483647
    %v6212 = vand.u32 %v6211, 65535
    %v6213 = vshra.s32 %v6211, 16
    %v6214 = vcvt.s32.f32 %v6212
    %v6215 = vcvt.s32.f32 %v6213
    %6216 = vmin.xlane.f32.xlu0 %v6215
    %v6217 = vpop.xlane.xlu0 %6216
    %vm6218 = vcmp.eq.f32.partialorder %v6215, %v6217
    %v6219 = vsel %vm6218, %v6214, inf
    %6220 = vmin.xlane.f32.xlu0 %v6219
    %v6221 = vpop.xlane.xlu0 %6220
    %v6222 = vcvt.f32.s32 %v6221
    %v6223 = vcvt.f32.s32 %v6217
    %v6224 = vshll.u32 %v6223, 16
    %v6225 = vadd.s32 %v6224, %v6222
    %vm6226 = vcmp.eq.s32.totalorder %v4463, %v6225
    %v6227 = vsel %vm6226, 1, 0
    %v6228 = vcvt.s32.f32 %v6227
    %v6229 = vpack.c.bf16 %v6228, %v6228
    %6230 = vmatpush.bf16.msra.mxu0 %v4523
    %6231 = vmatpush.bf16.msra.mxu0 %v4522
    %6232 = vmatpush.bf16.msra.mxu0 %v4521
    %6233 = vmatpush.bf16.msra.mxu0 %v4520
    %6234 = vmatpush.bf16.msra.mxu0 %v4519
    %6235 = vmatpush.bf16.msra.mxu0 %v4518
    %6236 = vmatpush.bf16.msra.mxu0 %v4517
    %6237 = vmatpush.bf16.msra.mxu0 %v4516
    %6238 = vmatmul.bf16.gmra.mxu0 %v6229
    %v6239 = vpop.f32.mrf.mxu0
    %v6240 = vadd.f32 0.0, %v6239
    %v6241 = vpop.f32.mrf.mxu0
    %6242 = vdwg.mxu0
    %v6243 = vpack.c.bf16 %v6240, %v6240
    %6244 = vmatpush.bf16.msra.mxu0 %v4841
    %6245 = vmatpush.bf16.msra.mxu0 %v4837
    %6246 = vmatpush.bf16.msra.mxu0 %v4833
    %6247 = vmatpush.bf16.msra.mxu0 %v4829
    %6248 = vmatpush.bf16.msra.mxu0 %v4825
    %6249 = vmatpush.bf16.msra.mxu0 %v4821
    %6250 = vmatpush.bf16.msra.mxu0 %v4817
    %6251 = vmatpush.bf16.msra.mxu0 %v4813
    %6252 = vmatmul.bf16.gmra.mxu0 %v6243
    %v6253 = vpop.f32.mrf.mxu0
    %v6254 = vadd.f32 %v4613, %v6253
    %v6255 = vpop.f32.mrf.mxu0
    %6256 = vdwg.mxu0
    %6257 = vmatpush.bf16.msra.mxu0 %v4873
    %6258 = vmatpush.bf16.msra.mxu0 %v4869
    %6259 = vmatpush.bf16.msra.mxu0 %v4865
    %6260 = vmatpush.bf16.msra.mxu0 %v4861
    %6261 = vmatpush.bf16.msra.mxu0 %v4857
    %6262 = vmatpush.bf16.msra.mxu0 %v4853
    %6263 = vmatpush.bf16.msra.mxu0 %v4849
    %6264 = vmatpush.bf16.msra.mxu0 %v4845
    %6265 = vmatmul.bf16.gmra.mxu0 %v6142
    %v6266 = vpop.f32.mrf.mxu0
    %v6267 = vadd.f32 %v6254, %v6266
    %v6268 = vpop.f32.mrf.mxu0
    %6269 = vdwg.mxu0
    %6270 = vmatpush.bf16.msra.mxu0 %v4842
    %6271 = vmatpush.bf16.msra.mxu0 %v4838
    %6272 = vmatpush.bf16.msra.mxu0 %v4834
    %6273 = vmatpush.bf16.msra.mxu0 %v4830
    %6274 = vmatpush.bf16.msra.mxu0 %v4826
    %6275 = vmatpush.bf16.msra.mxu0 %v4822
    %6276 = vmatpush.bf16.msra.mxu0 %v4818
    %6277 = vmatpush.bf16.msra.mxu0 %v4814
    %6278 = vmatmul.bf16.gmra.mxu0 %v6243
    %v6279 = vpop.f32.mrf.mxu0
    %v6280 = vadd.f32 %v4614, %v6279
    %v6281 = vpop.f32.mrf.mxu0
    %6282 = vdwg.mxu0
    %6283 = vmatpush.bf16.msra.mxu0 %v4874
    %6284 = vmatpush.bf16.msra.mxu0 %v4870
    %6285 = vmatpush.bf16.msra.mxu0 %v4866
    %6286 = vmatpush.bf16.msra.mxu0 %v4862
    %6287 = vmatpush.bf16.msra.mxu0 %v4858
    %6288 = vmatpush.bf16.msra.mxu0 %v4854
    %6289 = vmatpush.bf16.msra.mxu0 %v4850
    %6290 = vmatpush.bf16.msra.mxu0 %v4846
    %6291 = vmatmul.bf16.gmra.mxu0 %v6142
    %v6292 = vpop.f32.mrf.mxu0
    %v6293 = vadd.f32 %v6280, %v6292
    %v6294 = vpop.f32.mrf.mxu0
    %6295 = vdwg.mxu0
    %6296 = vmatpush.bf16.msra.mxu0 %v4843
    %6297 = vmatpush.bf16.msra.mxu0 %v4839
    %6298 = vmatpush.bf16.msra.mxu0 %v4835
    %6299 = vmatpush.bf16.msra.mxu0 %v4831
    %6300 = vmatpush.bf16.msra.mxu0 %v4827
    %6301 = vmatpush.bf16.msra.mxu0 %v4823
    %6302 = vmatpush.bf16.msra.mxu0 %v4819
    %6303 = vmatpush.bf16.msra.mxu0 %v4815
    %6304 = vmatmul.bf16.gmra.mxu0 %v6243
    %v6305 = vpop.f32.mrf.mxu0
    %v6306 = vadd.f32 %v4615, %v6305
    %v6307 = vpop.f32.mrf.mxu0
    %6308 = vdwg.mxu0
    %6309 = vmatpush.bf16.msra.mxu0 %v4875
    %6310 = vmatpush.bf16.msra.mxu0 %v4871
    %6311 = vmatpush.bf16.msra.mxu0 %v4867
    %6312 = vmatpush.bf16.msra.mxu0 %v4863
    %6313 = vmatpush.bf16.msra.mxu0 %v4859
    %6314 = vmatpush.bf16.msra.mxu0 %v4855
    %6315 = vmatpush.bf16.msra.mxu0 %v4851
    %6316 = vmatpush.bf16.msra.mxu0 %v4847
    %6317 = vmatmul.bf16.gmra.mxu0 %v6142
    %v6318 = vpop.f32.mrf.mxu0
    %v6319 = vadd.f32 %v6306, %v6318
    %v6320 = vpop.f32.mrf.mxu0
    %6321 = vdwg.mxu0
    %6322 = vmatpush.bf16.msra.mxu0 %v4844
    %6323 = vmatpush.bf16.msra.mxu0 %v4840
    %6324 = vmatpush.bf16.msra.mxu0 %v4836
    %6325 = vmatpush.bf16.msra.mxu0 %v4832
    %6326 = vmatpush.bf16.msra.mxu0 %v4828
    %6327 = vmatpush.bf16.msra.mxu0 %v4824
    %6328 = vmatpush.bf16.msra.mxu0 %v4820
    %6329 = vmatpush.bf16.msra.mxu0 %v4816
    %6330 = vmatmul.bf16.gmra.mxu0 %v6243
    %v6331 = vpop.f32.mrf.mxu0
    %v6332 = vadd.f32 %v4616, %v6331
    %v6333 = vpop.f32.mrf.mxu0
    %6334 = vdwg.mxu0
    %6335 = vmatpush.bf16.msra.mxu0 %v4876
    %6336 = vmatpush.bf16.msra.mxu0 %v4872
    %6337 = vmatpush.bf16.msra.mxu0 %v4868
    %6338 = vmatpush.bf16.msra.mxu0 %v4864
    %6339 = vmatpush.bf16.msra.mxu0 %v4860
    %6340 = vmatpush.bf16.msra.mxu0 %v4856
    %6341 = vmatpush.bf16.msra.mxu0 %v4852
    %6342 = vmatpush.bf16.msra.mxu0 %v4848
    %6343 = vmatmul.bf16.gmra.mxu0 %v6142
    %v6344 = vpop.f32.mrf.mxu0
    %v6345 = vadd.f32 %v6332, %v6344
    %v6346 = vpop.f32.mrf.mxu0
    %6347 = vdwg.mxu0
    %v6348 = vmul.f32 %v6267, 0.5
    %v6349 = vtanh.pop %v6348
    %v6350 = vadd.f32 %v6349, 1.0
    %v6351 = vmul.f32 %v6350, 0.5
    %v6352 = vmul.f32 %v6293, 0.5
    %v6353 = vtanh.pop %v6352
    %v6354 = vadd.f32 %v6353, 1.0
    %v6355 = vmul.f32 %v6354, 0.5
    %v6356 = vmul.f32 %v6351, %v6345
    %v6357 = vadd.f32 %v6319, %v6356
    %v6358 = vtanh.pop %v6357
    %v6359 = vsub.f32 1.0, %v6355
    %v6360 = vmul.f32 %v6359, %v6358
    %v6361 = vmul.f32 %v6355, %v6087
    %v6362 = vadd.f32 %v6360, %v6361
    %6363 = vmatpush.xpose.msra.mxu0 0.0
    %6364 = vmatpush.xpose.msra.mxu0 0.0
    %6365 = vmatpush.xpose.msra.mxu0 0.0
    %6366 = vmatpush.xpose.msra.mxu0 0.0
    %6367 = vmatpush.xpose.msra.mxu0 0.0
    %6368 = vmatpush.xpose.msra.mxu0 0.0
    %6369 = vmatpush.xpose.msra.mxu0 0.0
    %6370 = vmatpush.xpose.msra.mxu0 0.0
    %6371 = vmatpush.xpose.msra.mxu0 0.0
    %6372 = vmatpush.xpose.msra.mxu0 0.0
    %6373 = vmatpush.xpose.msra.mxu0 0.0
    %6374 = vmatpush.xpose.msra.mxu0 0.0
    %6375 = vmatpush.xpose.msra.mxu0 0.0
    %6376 = vmatpush.xpose.msra.mxu0 0.0
    %6377 = vmatpush.xpose.msra.mxu0 0.0
    %6378 = vmatpush.xpose.msra.mxu0 %v4363
    %6379 = vmatmul.f32.gmra.mxu0 %v6362
    %v6380 = vpop.f32.mrf.mxu0
    %v6381 = vadd.f32 0.0, %v6380
    %6382 = vdwg.mxu0
    %v6383 = vsel %vm5080, %v6381, -inf
    %6384 = vmax.xlane.f32.xlu0 %v6383
    %v6385 = vpop.xlane.xlu0 %6384
    %v6386 = vsub.f32 %v6381, %v6385
    %v6387 = vmul.f32 %v6386, 1.442695
    %v6388 = vpow.pop %v6387
    %v6389 = vsel %vm5080, %v6388, 0.0
    %6390 = vadd.xlane.f32.xlu0 %v6389
    %v6391 = vpop.xlane.xlu0 %6390
    %v6392 = vrcp.pop %v6391
    %v6393 = vmul.f32 %v6388, %v6392
    %v6395 = vsel %vm5092, %v6393, 0
    %6397 = vmatpush.msra.mxu0 0.0
    %6398 = vmatpush.msra.mxu0 0.0
    %6399 = vmatpush.msra.mxu0 0.0
    %6400 = vmatpush.msra.mxu0 0.0
    %6401 = vmatpush.msra.mxu0 0.0
    %6402 = vmatpush.msra.mxu0 0.0
    %6403 = vmatpush.msra.mxu0 0.0
    %6404 = vmatpush.msra.mxu0 0.0
    %6405 = vmatpush.msra.mxu0 0.0
    %6406 = vmatpush.msra.mxu0 0.0
    %6407 = vmatpush.msra.mxu0 0.0
    %6408 = vmatpush.msra.mxu0 0.0
    %6409 = vmatpush.msra.mxu0 0.0
    %6410 = vmatpush.msra.mxu0 0.0
    %6411 = vmatpush.msra.mxu0 0.0
    %6412 = vmatpush.msra.mxu0 %v4363
    %6413 = vmatmul.f32.gmra.mxu0 %v6395
    %v6414 = vpop.f32.mrf.mxu0
    %v6415 = vadd.f32 0.0, %v6414
    %6416 = vdwg.mxu0
    %v6417 = vpack.c.bf16 %v6362, %v6362
    %v6418 = vpack.c.bf16 %v6415, %v6415
    %6419 = vmatpush.bf16.msra.mxu0 %v5225
    %6420 = vmatpush.bf16.msra.mxu0 %v5224
    %6421 = vmatpush.bf16.msra.mxu0 %v5223
    %6422 = vmatpush.bf16.msra.mxu0 %v5222
    %6423 = vmatpush.bf16.msra.mxu0 %v5221
    %6424 = vmatpush.bf16.msra.mxu0 %v5220
    %6425 = vmatpush.bf16.msra.mxu0 %v5219
    %6426 = vmatpush.bf16.msra.mxu0 %v5218
    %6427 = vmatmul.bf16.gmra.mxu0 %v6417
    %v6428 = vpop.f32.mrf.mxu0
    %v6429 = vadd.f32 %v5152, %v6428
    %v6430 = vpop.f32.mrf.mxu0
    %6431 = vdwg.mxu0
    %6432 = vmatpush.bf16.msra.mxu0 %v5233
    %6433 = vmatpush.bf16.msra.mxu0 %v5232
    %6434 = vmatpush.bf16.msra.mxu0 %v5231
    %6435 = vmatpush.bf16.msra.mxu0 %v5230
    %6436 = vmatpush.bf16.msra.mxu0 %v5229
    %6437 = vmatpush.bf16.msra.mxu0 %v5228
    %6438 = vmatpush.bf16.msra.mxu0 %v5227
    %6439 = vmatpush.bf16.msra.mxu0 %v5226
    %6440 = vmatmul.bf16.gmra.mxu0 %v6418
    %v6441 = vpop.f32.mrf.mxu0
    %v6442 = vadd.f32 %v6429, %v6441
    %v6443 = vpop.f32.mrf.mxu0
    %6444 = vdwg.mxu0
    %v6445 = vtanh.pop %v6442
    %v6446 = vpack.c.bf16 %v6445, %v6445
    %6447 = vmatpush.bf16.msra.mxu0 %v5337
    %6448 = vmatpush.bf16.msra.mxu0 %v5336
    %6449 = vmatpush.bf16.msra.mxu0 %v5335
    %6450 = vmatpush.bf16.msra.mxu0 %v5334
    %6451 = vmatpush.bf16.msra.mxu0 %v5333
    %6452 = vmatpush.bf16.msra.mxu0 %v5332
    %6453 = vmatpush.bf16.msra.mxu0 %v5331
    %6454 = vmatpush.bf16.msra.mxu0 %v5330
    %6455 = vmatmul.bf16.gmra.mxu0 %v6446
    %v6456 = vpop.f32.mrf.mxu0
    %v6457 = vadd.f32 %v5296, %v6456
    %v6458 = vpop.f32.mrf.mxu0
    %6459 = vdwg.mxu0
    %v6460 = vsel %vm5359, %v6457, -inf
    %6461 = vmax.xlane.f32.xlu0 %v6460
    %v6462 = vpop.xlane.xlu0 %6461
    %v6463 = vsub.f32 %v6457, %v6462
    %v6464 = vmul.f32 %v6463, 1.442695
    %v6465 = vpow.pop %v6464
    %v6466 = vsel %vm5359, %v6465, 0.0
    %6467 = vadd.xlane.f32.xlu0 %v6466
    %v6468 = vpop.xlane.xlu0 %6467
    %v6469 = vrcp.pop %v6468
    %v6470 = vmul.f32 %v6468, %v6469
    %v6471 = vsub.f32 1.0, %v6470
    %v6472 = vmul.f32 %v6469, %v6471
    %v6473 = vadd.f32 %v6469, %v6472
    %vm6474 = vweird.f32 %v6468
    %vm6475 = vweird.f32 %v6469
    %vm6476 = vmor %vm6474, %vm6475
    %v6477 = vsel %vm6476, %v6469, %v6473
    %v6478 = vand.u32 2147483647, %v6468
    %vm6479 = vcmp.eq.f32.partialorder %v6478, 8.507059e+37
    %v6480 = vand.u32 %v6468, 2147483648
    %v6481 = vor.u32 1.1754944e-38, %v6480
    %v6482 = vsel %vm6479, %v6481, %v6477
    %v6483 = vmul.f32 1.0, %v6482
    %vm6484 = vcmp.ge.f32.partialorder %v6457, %v6462
    %v6485 = vsel %vm6484, %v4463, 128
    %v6486 = vsel %vm5359, %v6485, 2147483647
    %v6487 = vand.u32 %v6486, 65535
    %v6488 = vshra.s32 %v6486, 16
    %v6489 = vcvt.s32.f32 %v6487
    %v6490 = vcvt.s32.f32 %v6488
    %6491 = vmin.xlane.f32.xlu0 %v6490
    %v6492 = vpop.xlane.xlu0 %6491
    %vm6493 = vcmp.eq.f32.partialorder %v6490, %v6492
    %v6494 = vsel %vm6493, %v6489, inf
    %6495 = vmin.xlane.f32.xlu0 %v6494
    %v6496 = vpop.xlane.xlu0 %6495
    %v6497 = vcvt.f32.s32 %v6496
    %v6498 = vcvt.f32.s32 %v6492
    %v6499 = vshll.u32 %v6498, 16
    %v6500 = vadd.s32 %v6499, %v6497
    %vm6501 = vcmp.eq.s32.totalorder %v4463, %v6500
    %v6502 = vsel %vm6501, 1, 0
    %v6503 = vcvt.s32.f32 %v6502
    %v6504 = vpack.c.bf16 %v6503, %v6503
    %6505 = vmatpush.bf16.msra.mxu0 %v4523
    %6506 = vmatpush.bf16.msra.mxu0 %v4522
    %6507 = vmatpush.bf16.msra.mxu0 %v4521
    %6508 = vmatpush.bf16.msra.mxu0 %v4520
    %6509 = vmatpush.bf16.msra.mxu0 %v4519
    %6510 = vmatpush.bf16.msra.mxu0 %v4518
    %6511 = vmatpush.bf16.msra.mxu0 %v4517
    %6512 = vmatpush.bf16.msra.mxu0 %v4516
    %6513 = vmatmul.bf16.gmra.mxu0 %v6504
    %v6514 = vpop.f32.mrf.mxu0
    %v6515 = vadd.f32 0.0, %v6514
    %v6516 = vpop.f32.mrf.mxu0
    %6517 = vdwg.mxu0
    %v6518 = vpack.c.bf16 %v6515, %v6515
    %6519 = vmatpush.bf16.msra.mxu0 %v4841
    %6520 = vmatpush.bf16.msra.mxu0 %v4837
    %6521 = vmatpush.bf16.msra.mxu0 %v4833
    %6522 = vmatpush.bf16.msra.mxu0 %v4829
    %6523 = vmatpush.bf16.msra.mxu0 %v4825
    %6524 = vmatpush.bf16.msra.mxu0 %v4821
    %6525 = vmatpush.bf16.msra.mxu0 %v4817
    %6526 = vmatpush.bf16.msra.mxu0 %v4813
    %6527 = vmatmul.bf16.gmra.mxu0 %v6518
    %v6528 = vpop.f32.mrf.mxu0
    %v6529 = vadd.f32 %v4613, %v6528
    %v6530 = vpop.f32.mrf.mxu0
    %6531 = vdwg.mxu0
    %6532 = vmatpush.bf16.msra.mxu0 %v4873
    %6533 = vmatpush.bf16.msra.mxu0 %v4869
    %6534 = vmatpush.bf16.msra.mxu0 %v4865
    %6535 = vmatpush.bf16.msra.mxu0 %v4861
    %6536 = vmatpush.bf16.msra.mxu0 %v4857
    %6537 = vmatpush.bf16.msra.mxu0 %v4853
    %6538 = vmatpush.bf16.msra.mxu0 %v4849
    %6539 = vmatpush.bf16.msra.mxu0 %v4845
    %6540 = vmatmul.bf16.gmra.mxu0 %v6417
    %v6541 = vpop.f32.mrf.mxu0
    %v6542 = vadd.f32 %v6529, %v6541
    %v6543 = vpop.f32.mrf.mxu0
    %6544 = vdwg.mxu0
    %6545 = vmatpush.bf16.msra.mxu0 %v4842
    %6546 = vmatpush.bf16.msra.mxu0 %v4838
    %6547 = vmatpush.bf16.msra.mxu0 %v4834
    %6548 = vmatpush.bf16.msra.mxu0 %v4830
    %6549 = vmatpush.bf16.msra.mxu0 %v4826
    %6550 = vmatpush.bf16.msra.mxu0 %v4822
    %6551 = vmatpush.bf16.msra.mxu0 %v4818
    %6552 = vmatpush.bf16.msra.mxu0 %v4814
    %6553 = vmatmul.bf16.gmra.mxu0 %v6518
    %v6554 = vpop.f32.mrf.mxu0
    %v6555 = vadd.f32 %v4614, %v6554
    %v6556 = vpop.f32.mrf.mxu0
    %6557 = vdwg.mxu0
    %6558 = vmatpush.bf16.msra.mxu0 %v4874
    %6559 = vmatpush.bf16.msra.mxu0 %v4870
    %6560 = vmatpush.bf16.msra.mxu0 %v4866
    %6561 = vmatpush.bf16.msra.mxu0 %v4862
    %6562 = vmatpush.bf16.msra.mxu0 %v4858
    %6563 = vmatpush.bf16.msra.mxu0 %v4854
    %6564 = vmatpush.bf16.msra.mxu0 %v4850
    %6565 = vmatpush.bf16.msra.mxu0 %v4846
    %6566 = vmatmul.bf16.gmra.mxu0 %v6417
    %v6567 = vpop.f32.mrf.mxu0
    %v6568 = vadd.f32 %v6555, %v6567
    %v6569 = vpop.f32.mrf.mxu0
    %6570 = vdwg.mxu0
    %6571 = vmatpush.bf16.msra.mxu0 %v4843
    %6572 = vmatpush.bf16.msra.mxu0 %v4839
    %6573 = vmatpush.bf16.msra.mxu0 %v4835
    %6574 = vmatpush.bf16.msra.mxu0 %v4831
    %6575 = vmatpush.bf16.msra.mxu0 %v4827
    %6576 = vmatpush.bf16.msra.mxu0 %v4823
    %6577 = vmatpush.bf16.msra.mxu0 %v4819
    %6578 = vmatpush.bf16.msra.mxu0 %v4815
    %6579 = vmatmul.bf16.gmra.mxu0 %v6518
    %v6580 = vpop.f32.mrf.mxu0
    %v6581 = vadd.f32 %v4615, %v6580
    %v6582 = vpop.f32.mrf.mxu0
    %6583 = vdwg.mxu0
    %6584 = vmatpush.bf16.msra.mxu0 %v4875
    %6585 = vmatpush.bf16.msra.mxu0 %v4871
    %6586 = vmatpush.bf16.msra.mxu0 %v4867
    %6587 = vmatpush.bf16.msra.mxu0 %v4863
    %6588 = vmatpush.bf16.msra.mxu0 %v4859
    %6589 = vmatpush.bf16.msra.mxu0 %v4855
    %6590 = vmatpush.bf16.msra.mxu0 %v4851
    %6591 = vmatpush.bf16.msra.mxu0 %v4847
    %6592 = vmatmul.bf16.gmra.mxu0 %v6417
    %v6593 = vpop.f32.mrf.mxu0
    %v6594 = vadd.f32 %v6581, %v6593
    %v6595 = vpop.f32.mrf.mxu0
    %6596 = vdwg.mxu0
    %6597 = vmatpush.bf16.msra.mxu0 %v4844
    %6598 = vmatpush.bf16.msra.mxu0 %v4840
    %6599 = vmatpush.bf16.msra.mxu0 %v4836
    %6600 = vmatpush.bf16.msra.mxu0 %v4832
    %6601 = vmatpush.bf16.msra.mxu0 %v4828
    %6602 = vmatpush.bf16.msra.mxu0 %v4824
    %6603 = vmatpush.bf16.msra.mxu0 %v4820
    %6604 = vmatpush.bf16.msra.mxu0 %v4816
    %6605 = vmatmul.bf16.gmra.mxu0 %v6518
    %v6606 = vpop.f32.mrf.mxu0
    %v6607 = vadd.f32 %v4616, %v6606
    %v6608 = vpop.f32.mrf.mxu0
    %6609 = vdwg.mxu0
    %6610 = vmatpush.bf16.msra.mxu0 %v4876
    %6611 = vmatpush.bf16.msra.mxu0 %v4872
    %6612 = vmatpush.bf16.msra.mxu0 %v4868
    %6613 = vmatpush.bf16.msra.mxu0 %v4864
    %6614 = vmatpush.bf16.msra.mxu0 %v4860
    %6615 = vmatpush.bf16.msra.mxu0 %v4856
    %6616 = vmatpush.bf16.msra.mxu0 %v4852
    %6617 = vmatpush.bf16.msra.mxu0 %v4848
    %6618 = vmatmul.bf16.gmra.mxu0 %v6417
    %v6619 = vpop.f32.mrf.mxu0
    %v6620 = vadd.f32 %v6607, %v6619
    %v6621 = vpop.f32.mrf.mxu0
    %6622 = vdwg.mxu0
    %v6623 = vmul.f32 %v6542, 0.5
    %v6624 = vtanh.pop %v6623
    %v6625 = vadd.f32 %v6624, 1.0
    %v6626 = vmul.f32 %v6625, 0.5
    %v6627 = vmul.f32 %v6568, 0.5
    %v6628 = vtanh.pop %v6627
    %v6629 = vadd.f32 %v6628, 1.0
    %v6630 = vmul.f32 %v6629, 0.5
    %v6631 = vmul.f32 %v6626, %v6620
    %v6632 = vadd.f32 %v6594, %v6631
    %v6633 = vtanh.pop %v6632
    %v6634 = vsub.f32 1.0, %v6630
    %v6635 = vmul.f32 %v6634, %v6633
    %v6636 = vmul.f32 %v6630, %v6362
    %v6637 = vadd.f32 %v6635, %v6636
    %6638 = vmatpush.xpose.msra.mxu0 0.0
    %6639 = vmatpush.xpose.msra.mxu0 0.0
    %6640 = vmatpush.xpose.msra.mxu0 0.0
    %6641 = vmatpush.xpose.msra.mxu0 0.0
    %6642 = vmatpush.xpose.msra.mxu0 0.0
    %6643 = vmatpush.xpose.msra.mxu0 0.0
    %6644 = vmatpush.xpose.msra.mxu0 0.0
    %6645 = vmatpush.xpose.msra.mxu0 0.0
    %6646 = vmatpush.xpose.msra.mxu0 0.0
    %6647 = vmatpush.xpose.msra.mxu0 0.0
    %6648 = vmatpush.xpose.msra.mxu0 0.0
    %6649 = vmatpush.xpose.msra.mxu0 0.0
    %6650 = vmatpush.xpose.msra.mxu0 0.0
    %6651 = vmatpush.xpose.msra.mxu0 0.0
    %6652 = vmatpush.xpose.msra.mxu0 0.0
    %6653 = vmatpush.xpose.msra.mxu0 %v4363
    %6654 = vmatmul.f32.gmra.mxu0 %v6637
    %v6655 = vpop.f32.mrf.mxu0
    %v6656 = vadd.f32 0.0, %v6655
    %6657 = vdwg.mxu0
    %v6658 = vsel %vm5080, %v6656, -inf
    %6659 = vmax.xlane.f32.xlu0 %v6658
    %v6660 = vpop.xlane.xlu0 %6659
    %v6661 = vsub.f32 %v6656, %v6660
    %v6662 = vmul.f32 %v6661, 1.442695
    %v6663 = vpow.pop %v6662
    %v6664 = vsel %vm5080, %v6663, 0.0
    %6665 = vadd.xlane.f32.xlu0 %v6664
    %v6666 = vpop.xlane.xlu0 %6665
    %v6667 = vrcp.pop %v6666
    %v6668 = vmul.f32 %v6663, %v6667
    %v6670 = vsel %vm5092, %v6668, 0
    %6672 = vmatpush.msra.mxu0 0.0
    %6673 = vmatpush.msra.mxu0 0.0
    %6674 = vmatpush.msra.mxu0 0.0
    %6675 = vmatpush.msra.mxu0 0.0
    %6676 = vmatpush.msra.mxu0 0.0
    %6677 = vmatpush.msra.mxu0 0.0
    %6678 = vmatpush.msra.mxu0 0.0
    %6679 = vmatpush.msra.mxu0 0.0
    %6680 = vmatpush.msra.mxu0 0.0
    %6681 = vmatpush.msra.mxu0 0.0
    %6682 = vmatpush.msra.mxu0 0.0
    %6683 = vmatpush.msra.mxu0 0.0
    %6684 = vmatpush.msra.mxu0 0.0
    %6685 = vmatpush.msra.mxu0 0.0
    %6686 = vmatpush.msra.mxu0 0.0
    %6687 = vmatpush.msra.mxu0 %v4363
    %6688 = vmatmul.f32.gmra.mxu0 %v6670
    %v6689 = vpop.f32.mrf.mxu0
    %v6690 = vadd.f32 0.0, %v6689
    %6691 = vdwg.mxu0
    %v6692 = vpack.c.bf16 %v6637, %v6637
    %v6693 = vpack.c.bf16 %v6690, %v6690
    %6694 = vmatpush.bf16.msra.mxu0 %v5225
    %6695 = vmatpush.bf16.msra.mxu0 %v5224
    %6696 = vmatpush.bf16.msra.mxu0 %v5223
    %6697 = vmatpush.bf16.msra.mxu0 %v5222
    %6698 = vmatpush.bf16.msra.mxu0 %v5221
    %6699 = vmatpush.bf16.msra.mxu0 %v5220
    %6700 = vmatpush.bf16.msra.mxu0 %v5219
    %6701 = vmatpush.bf16.msra.mxu0 %v5218
    %6702 = vmatmul.bf16.gmra.mxu0 %v6692
    %v6703 = vpop.f32.mrf.mxu0
    %v6704 = vadd.f32 %v5152, %v6703
    %v6705 = vpop.f32.mrf.mxu0
    %6706 = vdwg.mxu0
    %6707 = vmatpush.bf16.msra.mxu0 %v5233
    %6708 = vmatpush.bf16.msra.mxu0 %v5232
    %6709 = vmatpush.bf16.msra.mxu0 %v5231
    %6710 = vmatpush.bf16.msra.mxu0 %v5230
    %6711 = vmatpush.bf16.msra.mxu0 %v5229
    %6712 = vmatpush.bf16.msra.mxu0 %v5228
    %6713 = vmatpush.bf16.msra.mxu0 %v5227
    %6714 = vmatpush.bf16.msra.mxu0 %v5226
    %6715 = vmatmul.bf16.gmra.mxu0 %v6693
    %v6716 = vpop.f32.mrf.mxu0
    %v6717 = vadd.f32 %v6704, %v6716
    %v6718 = vpop.f32.mrf.mxu0
    %6719 = vdwg.mxu0
    %v6720 = vtanh.pop %v6717
    %v6721 = vpack.c.bf16 %v6720, %v6720
    %6722 = vmatpush.bf16.msra.mxu0 %v5337
    %6723 = vmatpush.bf16.msra.mxu0 %v5336
    %6724 = vmatpush.bf16.msra.mxu0 %v5335
    %6725 = vmatpush.bf16.msra.mxu0 %v5334
    %6726 = vmatpush.bf16.msra.mxu0 %v5333
    %6727 = vmatpush.bf16.msra.mxu0 %v5332
    %6728 = vmatpush.bf16.msra.mxu0 %v5331
    %6729 = vmatpush.bf16.msra.mxu0 %v5330
    %6730 = vmatmul.bf16.gmra.mxu0 %v6721
    %v6731 = vpop.f32.mrf.mxu0
    %v6732 = vadd.f32 %v5296, %v6731
    %v6733 = vpop.f32.mrf.mxu0
    %6734 = vdwg.mxu0
    %v6735 = vsel %vm5359, %v6732, -inf
    %6736 = vmax.xlane.f32.xlu0 %v6735
    %v6737 = vpop.xlane.xlu0 %6736
    %v6738 = vsub.f32 %v6732, %v6737
    %v6739 = vmul.f32 %v6738, 1.442695
    %v6740 = vpow.pop %v6739
    %v6741 = vsel %vm5359, %v6740, 0.0
    %6742 = vadd.xlane.f32.xlu0 %v6741
    %v6743 = vpop.xlane.xlu0 %6742
    %v6744 = vrcp.pop %v6743
    %v6745 = vmul.f32 %v6743, %v6744
    %v6746 = vsub.f32 1.0, %v6745
    %v6747 = vmul.f32 %v6744, %v6746
    %v6748 = vadd.f32 %v6744, %v6747
    %vm6749 = vweird.f32 %v6743
    %vm6750 = vweird.f32 %v6744
    %vm6751 = vmor %vm6749, %vm6750
    %v6752 = vsel %vm6751, %v6744, %v6748
    %v6753 = vand.u32 2147483647, %v6743
    %vm6754 = vcmp.eq.f32.partialorder %v6753, 8.507059e+37
    %v6755 = vand.u32 %v6743, 2147483648
    %v6756 = vor.u32 1.1754944e-38, %v6755
    %v6757 = vsel %vm6754, %v6756, %v6752
    %v6758 = vmul.f32 1.0, %v6757
    %vm6759 = vcmp.ge.f32.partialorder %v6732, %v6737
    %v6760 = vsel %vm6759, %v4463, 128
    %v6761 = vsel %vm5359, %v6760, 2147483647
    %v6762 = vand.u32 %v6761, 65535
    %v6763 = vshra.s32 %v6761, 16
    %v6764 = vcvt.s32.f32 %v6762
    %v6765 = vcvt.s32.f32 %v6763
    %6766 = vmin.xlane.f32.xlu0 %v6765
    %v6767 = vpop.xlane.xlu0 %6766
    %vm6768 = vcmp.eq.f32.partialorder %v6765, %v6767
    %v6769 = vsel %vm6768, %v6764, inf
    %6770 = vmin.xlane.f32.xlu0 %v6769
    %v6771 = vpop.xlane.xlu0 %6770
    %v6772 = vcvt.f32.s32 %v6771
    %v6773 = vcvt.f32.s32 %v6767
    %v6774 = vshll.u32 %v6773, 16
    %v6775 = vadd.s32 %v6774, %v6772
    %vm6776 = vcmp.eq.s32.totalorder %v4463, %v6775
    %v6777 = vsel %vm6776, 1, 0
    %v6778 = vcvt.s32.f32 %v6777
    %v6779 = vpack.c.bf16 %v6778, %v6778
    %6780 = vmatpush.bf16.msra.mxu0 %v4523
    %6781 = vmatpush.bf16.msra.mxu0 %v4522
    %6782 = vmatpush.bf16.msra.mxu0 %v4521
    %6783 = vmatpush.bf16.msra.mxu0 %v4520
    %6784 = vmatpush.bf16.msra.mxu0 %v4519
    %6785 = vmatpush.bf16.msra.mxu0 %v4518
    %6786 = vmatpush.bf16.msra.mxu0 %v4517
    %6787 = vmatpush.bf16.msra.mxu0 %v4516
    %6788 = vmatmul.bf16.gmra.mxu0 %v6779
    %v6789 = vpop.f32.mrf.mxu0
    %v6790 = vadd.f32 0.0, %v6789
    %v6791 = vpop.f32.mrf.mxu0
    %6792 = vdwg.mxu0
    %v6793 = vpack.c.bf16 %v6790, %v6790
    %6794 = vmatpush.bf16.msra.mxu0 %v4841
    %6795 = vmatpush.bf16.msra.mxu0 %v4837
    %6796 = vmatpush.bf16.msra.mxu0 %v4833
    %6797 = vmatpush.bf16.msra.mxu0 %v4829
    %6798 = vmatpush.bf16.msra.mxu0 %v4825
    %6799 = vmatpush.bf16.msra.mxu0 %v4821
    %6800 = vmatpush.bf16.msra.mxu0 %v4817
    %6801 = vmatpush.bf16.msra.mxu0 %v4813
    %6802 = vmatmul.bf16.gmra.mxu0 %v6793
    %v6803 = vpop.f32.mrf.mxu0
    %v6804 = vadd.f32 %v4613, %v6803
    %v6805 = vpop.f32.mrf.mxu0
    %6806 = vdwg.mxu0
    %6807 = vmatpush.bf16.msra.mxu0 %v4873
    %6808 = vmatpush.bf16.msra.mxu0 %v4869
    %6809 = vmatpush.bf16.msra.mxu0 %v4865
    %6810 = vmatpush.bf16.msra.mxu0 %v4861
    %6811 = vmatpush.bf16.msra.mxu0 %v4857
    %6812 = vmatpush.bf16.msra.mxu0 %v4853
    %6813 = vmatpush.bf16.msra.mxu0 %v4849
    %6814 = vmatpush.bf16.msra.mxu0 %v4845
    %6815 = vmatmul.bf16.gmra.mxu0 %v6692
    %v6816 = vpop.f32.mrf.mxu0
    %v6817 = vadd.f32 %v6804, %v6816
    %v6818 = vpop.f32.mrf.mxu0
    %6819 = vdwg.mxu0
    %6820 = vmatpush.bf16.msra.mxu0 %v4842
    %6821 = vmatpush.bf16.msra.mxu0 %v4838
    %6822 = vmatpush.bf16.msra.mxu0 %v4834
    %6823 = vmatpush.bf16.msra.mxu0 %v4830
    %6824 = vmatpush.bf16.msra.mxu0 %v4826
    %6825 = vmatpush.bf16.msra.mxu0 %v4822
    %6826 = vmatpush.bf16.msra.mxu0 %v4818
    %6827 = vmatpush.bf16.msra.mxu0 %v4814
    %6828 = vmatmul.bf16.gmra.mxu0 %v6793
    %v6829 = vpop.f32.mrf.mxu0
    %v6830 = vadd.f32 %v4614, %v6829
    %v6831 = vpop.f32.mrf.mxu0
    %6832 = vdwg.mxu0
    %6833 = vmatpush.bf16.msra.mxu0 %v4874
    %6834 = vmatpush.bf16.msra.mxu0 %v4870
    %6835 = vmatpush.bf16.msra.mxu0 %v4866
    %6836 = vmatpush.bf16.msra.mxu0 %v4862
    %6837 = vmatpush.bf16.msra.mxu0 %v4858
    %6838 = vmatpush.bf16.msra.mxu0 %v4854
    %6839 = vmatpush.bf16.msra.mxu0 %v4850
    %6840 = vmatpush.bf16.msra.mxu0 %v4846
    %6841 = vmatmul.bf16.gmra.mxu0 %v6692
    %v6842 = vpop.f32.mrf.mxu0
    %v6843 = vadd.f32 %v6830, %v6842
    %v6844 = vpop.f32.mrf.mxu0
    %6845 = vdwg.mxu0
    %6846 = vmatpush.bf16.msra.mxu0 %v4843
    %6847 = vmatpush.bf16.msra.mxu0 %v4839
    %6848 = vmatpush.bf16.msra.mxu0 %v4835
    %6849 = vmatpush.bf16.msra.mxu0 %v4831
    %6850 = vmatpush.bf16.msra.mxu0 %v4827
    %6851 = vmatpush.bf16.msra.mxu0 %v4823
    %6852 = vmatpush.bf16.msra.mxu0 %v4819
    %6853 = vmatpush.bf16.msra.mxu0 %v4815
    %6854 = vmatmul.bf16.gmra.mxu0 %v6793
    %v6855 = vpop.f32.mrf.mxu0
    %v6856 = vadd.f32 %v4615, %v6855
    %v6857 = vpop.f32.mrf.mxu0
    %6858 = vdwg.mxu0
    %6859 = vmatpush.bf16.msra.mxu0 %v4875
    %6860 = vmatpush.bf16.msra.mxu0 %v4871
    %6861 = vmatpush.bf16.msra.mxu0 %v4867
    %6862 = vmatpush.bf16.msra.mxu0 %v4863
    %6863 = vmatpush.bf16.msra.mxu0 %v4859
    %6864 = vmatpush.bf16.msra.mxu0 %v4855
    %6865 = vmatpush.bf16.msra.mxu0 %v4851
    %6866 = vmatpush.bf16.msra.mxu0 %v4847
    %6867 = vmatmul.bf16.gmra.mxu0 %v6692
    %v6868 = vpop.f32.mrf.mxu0
    %v6869 = vadd.f32 %v6856, %v6868
    %v6870 = vpop.f32.mrf.mxu0
    %6871 = vdwg.mxu0
    %6872 = vmatpush.bf16.msra.mxu0 %v4844
    %6873 = vmatpush.bf16.msra.mxu0 %v4840
    %6874 = vmatpush.bf16.msra.mxu0 %v4836
    %6875 = vmatpush.bf16.msra.mxu0 %v4832
    %6876 = vmatpush.bf16.msra.mxu0 %v4828
    %6877 = vmatpush.bf16.msra.mxu0 %v4824
    %6878 = vmatpush.bf16.msra.mxu0 %v4820
    %6879 = vmatpush.bf16.msra.mxu0 %v4816
    %6880 = vmatmul.bf16.gmra.mxu0 %v6793
    %v6881 = vpop.f32.mrf.mxu0
    %v6882 = vadd.f32 %v4616, %v6881
    %v6883 = vpop.f32.mrf.mxu0
    %6884 = vdwg.mxu0
    %6885 = vmatpush.bf16.msra.mxu0 %v4876
    %6886 = vmatpush.bf16.msra.mxu0 %v4872
    %6887 = vmatpush.bf16.msra.mxu0 %v4868
    %6888 = vmatpush.bf16.msra.mxu0 %v4864
    %6889 = vmatpush.bf16.msra.mxu0 %v4860
    %6890 = vmatpush.bf16.msra.mxu0 %v4856
    %6891 = vmatpush.bf16.msra.mxu0 %v4852
    %6892 = vmatpush.bf16.msra.mxu0 %v4848
    %6893 = vmatmul.bf16.gmra.mxu0 %v6692
    %v6894 = vpop.f32.mrf.mxu0
    %v6895 = vadd.f32 %v6882, %v6894
    %v6896 = vpop.f32.mrf.mxu0
    %6897 = vdwg.mxu0
    %v6898 = vmul.f32 %v6817, 0.5
    %v6899 = vtanh.pop %v6898
    %v6900 = vadd.f32 %v6899, 1.0
    %v6901 = vmul.f32 %v6900, 0.5
    %v6902 = vmul.f32 %v6843, 0.5
    %v6903 = vtanh.pop %v6902
    %v6904 = vadd.f32 %v6903, 1.0
    %v6905 = vmul.f32 %v6904, 0.5
    %v6906 = vmul.f32 %v6901, %v6895
    %v6907 = vadd.f32 %v6869, %v6906
    %v6908 = vtanh.pop %v6907
    %v6909 = vsub.f32 1.0, %v6905
    %v6910 = vmul.f32 %v6909, %v6908
    %v6911 = vmul.f32 %v6905, %v6637
    %v6912 = vadd.f32 %v6910, %v6911
    %6913 = vmatpush.xpose.msra.mxu0 0.0
    %6914 = vmatpush.xpose.msra.mxu0 0.0
    %6915 = vmatpush.xpose.msra.mxu0 0.0
    %6916 = vmatpush.xpose.msra.mxu0 0.0
    %6917 = vmatpush.xpose.msra.mxu0 0.0
    %6918 = vmatpush.xpose.msra.mxu0 0.0
    %6919 = vmatpush.xpose.msra.mxu0 0.0
    %6920 = vmatpush.xpose.msra.mxu0 0.0
    %6921 = vmatpush.xpose.msra.mxu0 0.0
    %6922 = vmatpush.xpose.msra.mxu0 0.0
    %6923 = vmatpush.xpose.msra.mxu0 0.0
    %6924 = vmatpush.xpose.msra.mxu0 0.0
    %6925 = vmatpush.xpose.msra.mxu0 0.0
    %6926 = vmatpush.xpose.msra.mxu0 0.0
    %6927 = vmatpush.xpose.msra.mxu0 0.0
    %6928 = vmatpush.xpose.msra.mxu0 %v4363
    %6929 = vmatmul.f32.gmra.mxu0 %v6912
    %v6930 = vpop.f32.mrf.mxu0
    %v6931 = vadd.f32 0.0, %v6930
    %6932 = vdwg.mxu0
    %v6933 = vsel %vm5080, %v6931, -inf
    %6934 = vmax.xlane.f32.xlu0 %v6933
    %v6935 = vpop.xlane.xlu0 %6934
    %v6936 = vsub.f32 %v6931, %v6935
    %v6937 = vmul.f32 %v6936, 1.442695
    %v6938 = vpow.pop %v6937
    %v6939 = vsel %vm5080, %v6938, 0.0
    %6940 = vadd.xlane.f32.xlu0 %v6939
    %v6941 = vpop.xlane.xlu0 %6940
    %v6942 = vrcp.pop %v6941
    %v6943 = vmul.f32 %v6938, %v6942
    %v6945 = vsel %vm5092, %v6943, 0
    %6947 = vmatpush.msra.mxu0 0.0
    %6948 = vmatpush.msra.mxu0 0.0
    %6949 = vmatpush.msra.mxu0 0.0
    %6950 = vmatpush.msra.mxu0 0.0
    %6951 = vmatpush.msra.mxu0 0.0
    %6952 = vmatpush.msra.mxu0 0.0
    %6953 = vmatpush.msra.mxu0 0.0
    %6954 = vmatpush.msra.mxu0 0.0
    %6955 = vmatpush.msra.mxu0 0.0
    %6956 = vmatpush.msra.mxu0 0.0
    %6957 = vmatpush.msra.mxu0 0.0
    %6958 = vmatpush.msra.mxu0 0.0
    %6959 = vmatpush.msra.mxu0 0.0
    %6960 = vmatpush.msra.mxu0 0.0
    %6961 = vmatpush.msra.mxu0 0.0
    %6962 = vmatpush.msra.mxu0 %v4363
    %6963 = vmatmul.f32.gmra.mxu0 %v6945
    %v6964 = vpop.f32.mrf.mxu0
    %v6965 = vadd.f32 0.0, %v6964
    %6966 = vdwg.mxu0
    %v6967 = vpack.c.bf16 %v6912, %v6912
    %v6968 = vpack.c.bf16 %v6965, %v6965
    %6969 = vmatpush.bf16.msra.mxu0 %v5225
    %6970 = vmatpush.bf16.msra.mxu0 %v5224
    %6971 = vmatpush.bf16.msra.mxu0 %v5223
    %6972 = vmatpush.bf16.msra.mxu0 %v5222
    %6973 = vmatpush.bf16.msra.mxu0 %v5221
    %6974 = vmatpush.bf16.msra.mxu0 %v5220
    %6975 = vmatpush.bf16.msra.mxu0 %v5219
    %6976 = vmatpush.bf16.msra.mxu0 %v5218
    %6977 = vmatmul.bf16.gmra.mxu0 %v6967
    %v6978 = vpop.f32.mrf.mxu0
    %v6979 = vadd.f32 %v5152, %v6978
    %v6980 = vpop.f32.mrf.mxu0
    %6981 = vdwg.mxu0
    %6982 = vmatpush.bf16.msra.mxu0 %v5233
    %6983 = vmatpush.bf16.msra.mxu0 %v5232
    %6984 = vmatpush.bf16.msra.mxu0 %v5231
    %6985 = vmatpush.bf16.msra.mxu0 %v5230
    %6986 = vmatpush.bf16.msra.mxu0 %v5229
    %6987 = vmatpush.bf16.msra.mxu0 %v5228
    %6988 = vmatpush.bf16.msra.mxu0 %v5227
    %6989 = vmatpush.bf16.msra.mxu0 %v5226
    %6990 = vmatmul.bf16.gmra.mxu0 %v6968
    %v6991 = vpop.f32.mrf.mxu0
    %v6992 = vadd.f32 %v6979, %v6991
    %v6993 = vpop.f32.mrf.mxu0
    %6994 = vdwg.mxu0
    %v6995 = vtanh.pop %v6992
    %v6996 = vpack.c.bf16 %v6995, %v6995
    %6997 = vmatpush.bf16.msra.mxu0 %v5337
    %6998 = vmatpush.bf16.msra.mxu0 %v5336
    %6999 = vmatpush.bf16.msra.mxu0 %v5335
    %7000 = vmatpush.bf16.msra.mxu0 %v5334
    %7001 = vmatpush.bf16.msra.mxu0 %v5333
    %7002 = vmatpush.bf16.msra.mxu0 %v5332
    %7003 = vmatpush.bf16.msra.mxu0 %v5331
    %7004 = vmatpush.bf16.msra.mxu0 %v5330
    %7005 = vmatmul.bf16.gmra.mxu0 %v6996
    %v7006 = vpop.f32.mrf.mxu0
    %v7007 = vadd.f32 %v5296, %v7006
    %v7008 = vpop.f32.mrf.mxu0
    %7009 = vdwg.mxu0
    %v7010 = vsel %vm5359, %v7007, -inf
    %7011 = vmax.xlane.f32.xlu0 %v7010
    %v7012 = vpop.xlane.xlu0 %7011
    %v7013 = vsub.f32 %v7007, %v7012
    %v7014 = vmul.f32 %v7013, 1.442695
    %v7015 = vpow.pop %v7014
    %v7016 = vsel %vm5359, %v7015, 0.0
    %7017 = vadd.xlane.f32.xlu0 %v7016
    %v7018 = vpop.xlane.xlu0 %7017
    %v7019 = vrcp.pop %v7018
    %v7020 = vmul.f32 %v7018, %v7019
    %v7021 = vsub.f32 1.0, %v7020
    %v7022 = vmul.f32 %v7019, %v7021
    %v7023 = vadd.f32 %v7019, %v7022
    %vm7024 = vweird.f32 %v7018
    %vm7025 = vweird.f32 %v7019
    %vm7026 = vmor %vm7024, %vm7025
    %v7027 = vsel %vm7026, %v7019, %v7023
    %v7028 = vand.u32 2147483647, %v7018
    %vm7029 = vcmp.eq.f32.partialorder %v7028, 8.507059e+37
    %v7030 = vand.u32 %v7018, 2147483648
    %v7031 = vor.u32 1.1754944e-38, %v7030
    %v7032 = vsel %vm7029, %v7031, %v7027
    %v7033 = vmul.f32 1.0, %v7032
    %vm7034 = vcmp.ge.f32.partialorder %v7007, %v7012
    %v7035 = vsel %vm7034, %v4463, 128
    %v7036 = vsel %vm5359, %v7035, 2147483647
    %v7037 = vand.u32 %v7036, 65535
    %v7038 = vshra.s32 %v7036, 16
    %v7039 = vcvt.s32.f32 %v7037
    %v7040 = vcvt.s32.f32 %v7038
    %7041 = vmin.xlane.f32.xlu0 %v7040
    %v7042 = vpop.xlane.xlu0 %7041
    %vm7043 = vcmp.eq.f32.partialorder %v7040, %v7042
    %v7044 = vsel %vm7043, %v7039, inf
    %7045 = vmin.xlane.f32.xlu0 %v7044
    %v7046 = vpop.xlane.xlu0 %7045
    %v7047 = vcvt.f32.s32 %v7046
    %v7048 = vcvt.f32.s32 %v7042
    %v7049 = vshll.u32 %v7048, 16
    %v7050 = vadd.s32 %v7049, %v7047
    %vm7051 = vcmp.eq.s32.totalorder %v4463, %v7050
    %v7052 = vsel %vm7051, 1, 0
    %v7053 = vcvt.s32.f32 %v7052
    %v7054 = vpack.c.bf16 %v7053, %v7053
    %7055 = vmatpush.bf16.msra.mxu0 %v4523
    %7056 = vmatpush.bf16.msra.mxu0 %v4522
    %7057 = vmatpush.bf16.msra.mxu0 %v4521
    %7058 = vmatpush.bf16.msra.mxu0 %v4520
    %7059 = vmatpush.bf16.msra.mxu0 %v4519
    %7060 = vmatpush.bf16.msra.mxu0 %v4518
    %7061 = vmatpush.bf16.msra.mxu0 %v4517
    %7062 = vmatpush.bf16.msra.mxu0 %v4516
    %7063 = vmatmul.bf16.gmra.mxu0 %v7054
    %v7064 = vpop.f32.mrf.mxu0
    %v7065 = vadd.f32 0.0, %v7064
    %v7066 = vpop.f32.mrf.mxu0
    %7067 = vdwg.mxu0
    %v7068 = vpack.c.bf16 %v7065, %v7065
    %7069 = vmatpush.bf16.msra.mxu0 %v4841
    %7070 = vmatpush.bf16.msra.mxu0 %v4837
    %7071 = vmatpush.bf16.msra.mxu0 %v4833
    %7072 = vmatpush.bf16.msra.mxu0 %v4829
    %7073 = vmatpush.bf16.msra.mxu0 %v4825
    %7074 = vmatpush.bf16.msra.mxu0 %v4821
    %7075 = vmatpush.bf16.msra.mxu0 %v4817
    %7076 = vmatpush.bf16.msra.mxu0 %v4813
    %7077 = vmatmul.bf16.gmra.mxu0 %v7068
    %v7078 = vpop.f32.mrf.mxu0
    %v7079 = vadd.f32 %v4613, %v7078
    %v7080 = vpop.f32.mrf.mxu0
    %7081 = vdwg.mxu0
    %7082 = vmatpush.bf16.msra.mxu0 %v4873
    %7083 = vmatpush.bf16.msra.mxu0 %v4869
    %7084 = vmatpush.bf16.msra.mxu0 %v4865
    %7085 = vmatpush.bf16.msra.mxu0 %v4861
    %7086 = vmatpush.bf16.msra.mxu0 %v4857
    %7087 = vmatpush.bf16.msra.mxu0 %v4853
    %7088 = vmatpush.bf16.msra.mxu0 %v4849
    %7089 = vmatpush.bf16.msra.mxu0 %v4845
    %7090 = vmatmul.bf16.gmra.mxu0 %v6967
    %v7091 = vpop.f32.mrf.mxu0
    %v7092 = vadd.f32 %v7079, %v7091
    %v7093 = vpop.f32.mrf.mxu0
    %7094 = vdwg.mxu0
    %7095 = vmatpush.bf16.msra.mxu0 %v4842
    %7096 = vmatpush.bf16.msra.mxu0 %v4838
    %7097 = vmatpush.bf16.msra.mxu0 %v4834
    %7098 = vmatpush.bf16.msra.mxu0 %v4830
    %7099 = vmatpush.bf16.msra.mxu0 %v4826
    %7100 = vmatpush.bf16.msra.mxu0 %v4822
    %7101 = vmatpush.bf16.msra.mxu0 %v4818
    %7102 = vmatpush.bf16.msra.mxu0 %v4814
    %7103 = vmatmul.bf16.gmra.mxu0 %v7068
    %v7104 = vpop.f32.mrf.mxu0
    %v7105 = vadd.f32 %v4614, %v7104
    %v7106 = vpop.f32.mrf.mxu0
    %7107 = vdwg.mxu0
    %7108 = vmatpush.bf16.msra.mxu0 %v4874
    %7109 = vmatpush.bf16.msra.mxu0 %v4870
    %7110 = vmatpush.bf16.msra.mxu0 %v4866
    %7111 = vmatpush.bf16.msra.mxu0 %v4862
    %7112 = vmatpush.bf16.msra.mxu0 %v4858
    %7113 = vmatpush.bf16.msra.mxu0 %v4854
    %7114 = vmatpush.bf16.msra.mxu0 %v4850
    %7115 = vmatpush.bf16.msra.mxu0 %v4846
    %7116 = vmatmul.bf16.gmra.mxu0 %v6967
    %v7117 = vpop.f32.mrf.mxu0
    %v7118 = vadd.f32 %v7105, %v7117
    %v7119 = vpop.f32.mrf.mxu0
    %7120 = vdwg.mxu0
    %7121 = vmatpush.bf16.msra.mxu0 %v4843
    %7122 = vmatpush.bf16.msra.mxu0 %v4839
    %7123 = vmatpush.bf16.msra.mxu0 %v4835
    %7124 = vmatpush.bf16.msra.mxu0 %v4831
    %7125 = vmatpush.bf16.msra.mxu0 %v4827
    %7126 = vmatpush.bf16.msra.mxu0 %v4823
    %7127 = vmatpush.bf16.msra.mxu0 %v4819
    %7128 = vmatpush.bf16.msra.mxu0 %v4815
    %7129 = vmatmul.bf16.gmra.mxu0 %v7068
    %v7130 = vpop.f32.mrf.mxu0
    %v7131 = vadd.f32 %v4615, %v7130
    %v7132 = vpop.f32.mrf.mxu0
    %7133 = vdwg.mxu0
    %7134 = vmatpush.bf16.msra.mxu0 %v4875
    %7135 = vmatpush.bf16.msra.mxu0 %v4871
    %7136 = vmatpush.bf16.msra.mxu0 %v4867
    %7137 = vmatpush.bf16.msra.mxu0 %v4863
    %7138 = vmatpush.bf16.msra.mxu0 %v4859
    %7139 = vmatpush.bf16.msra.mxu0 %v4855
    %7140 = vmatpush.bf16.msra.mxu0 %v4851
    %7141 = vmatpush.bf16.msra.mxu0 %v4847
    %7142 = vmatmul.bf16.gmra.mxu0 %v6967
    %v7143 = vpop.f32.mrf.mxu0
    %v7144 = vadd.f32 %v7131, %v7143
    %v7145 = vpop.f32.mrf.mxu0
    %7146 = vdwg.mxu0
    %7147 = vmatpush.bf16.msra.mxu0 %v4844
    %7148 = vmatpush.bf16.msra.mxu0 %v4840
    %7149 = vmatpush.bf16.msra.mxu0 %v4836
    %7150 = vmatpush.bf16.msra.mxu0 %v4832
    %7151 = vmatpush.bf16.msra.mxu0 %v4828
    %7152 = vmatpush.bf16.msra.mxu0 %v4824
    %7153 = vmatpush.bf16.msra.mxu0 %v4820
    %7154 = vmatpush.bf16.msra.mxu0 %v4816
    %7155 = vmatmul.bf16.gmra.mxu0 %v7068
    %v7156 = vpop.f32.mrf.mxu0
    %v7157 = vadd.f32 %v4616, %v7156
    %v7158 = vpop.f32.mrf.mxu0
    %7159 = vdwg.mxu0
    %7160 = vmatpush.bf16.msra.mxu0 %v4876
    %7161 = vmatpush.bf16.msra.mxu0 %v4872
    %7162 = vmatpush.bf16.msra.mxu0 %v4868
    %7163 = vmatpush.bf16.msra.mxu0 %v4864
    %7164 = vmatpush.bf16.msra.mxu0 %v4860
    %7165 = vmatpush.bf16.msra.mxu0 %v4856
    %7166 = vmatpush.bf16.msra.mxu0 %v4852
    %7167 = vmatpush.bf16.msra.mxu0 %v4848
    %7168 = vmatmul.bf16.gmra.mxu0 %v6967
    %v7169 = vpop.f32.mrf.mxu0
    %v7170 = vadd.f32 %v7157, %v7169
    %v7171 = vpop.f32.mrf.mxu0
    %7172 = vdwg.mxu0
    %v7173 = vmul.f32 %v7092, 0.5
    %v7174 = vtanh.pop %v7173
    %v7175 = vadd.f32 %v7174, 1.0
    %v7176 = vmul.f32 %v7175, 0.5
    %v7177 = vmul.f32 %v7118, 0.5
    %v7178 = vtanh.pop %v7177
    %v7179 = vadd.f32 %v7178, 1.0
    %v7180 = vmul.f32 %v7179, 0.5
    %v7181 = vmul.f32 %v7176, %v7170
    %v7182 = vadd.f32 %v7144, %v7181
    %v7183 = vtanh.pop %v7182
    %v7184 = vsub.f32 1.0, %v7180
    %v7185 = vmul.f32 %v7184, %v7183
    %v7186 = vmul.f32 %v7180, %v6912
    %v7187 = vadd.f32 %v7185, %v7186
    %7188 = vmatpush.xpose.msra.mxu0 0.0
    %7189 = vmatpush.xpose.msra.mxu0 0.0
    %7190 = vmatpush.xpose.msra.mxu0 0.0
    %7191 = vmatpush.xpose.msra.mxu0 0.0
    %7192 = vmatpush.xpose.msra.mxu0 0.0
    %7193 = vmatpush.xpose.msra.mxu0 0.0
    %7194 = vmatpush.xpose.msra.mxu0 0.0
    %7195 = vmatpush.xpose.msra.mxu0 0.0
    %7196 = vmatpush.xpose.msra.mxu0 0.0
    %7197 = vmatpush.xpose.msra.mxu0 0.0
    %7198 = vmatpush.xpose.msra.mxu0 0.0
    %7199 = vmatpush.xpose.msra.mxu0 0.0
    %7200 = vmatpush.xpose.msra.mxu0 0.0
    %7201 = vmatpush.xpose.msra.mxu0 0.0
    %7202 = vmatpush.xpose.msra.mxu0 0.0
    %7203 = vmatpush.xpose.msra.mxu0 %v4363
    %7204 = vmatmul.f32.gmra.mxu0 %v7187
    %v7205 = vpop.f32.mrf.mxu0
    %v7206 = vadd.f32 0.0, %v7205
    %7207 = vdwg.mxu0
    %v7208 = vsel %vm5080, %v7206, -inf
    %7209 = vmax.xlane.f32.xlu0 %v7208
    %v7210 = vpop.xlane.xlu0 %7209
    %v7211 = vsub.f32 %v7206, %v7210
    %v7212 = vmul.f32 %v7211, 1.442695
    %v7213 = vpow.pop %v7212
    %v7214 = vsel %vm5080, %v7213, 0.0
    %7215 = vadd.xlane.f32.xlu0 %v7214
    %v7216 = vpop.xlane.xlu0 %7215
    %v7217 = vrcp.pop %v7216
    %v7218 = vmul.f32 %v7213, %v7217
    %v7220 = vsel %vm5092, %v7218, 0
    %7222 = vmatpush.msra.mxu0 0.0
    %7223 = vmatpush.msra.mxu0 0.0
    %7224 = vmatpush.msra.mxu0 0.0
    %7225 = vmatpush.msra.mxu0 0.0
    %7226 = vmatpush.msra.mxu0 0.0
    %7227 = vmatpush.msra.mxu0 0.0
    %7228 = vmatpush.msra.mxu0 0.0
    %7229 = vmatpush.msra.mxu0 0.0
    %7230 = vmatpush.msra.mxu0 0.0
    %7231 = vmatpush.msra.mxu0 0.0
    %7232 = vmatpush.msra.mxu0 0.0
    %7233 = vmatpush.msra.mxu0 0.0
    %7234 = vmatpush.msra.mxu0 0.0
    %7235 = vmatpush.msra.mxu0 0.0
    %7236 = vmatpush.msra.mxu0 0.0
    %7237 = vmatpush.msra.mxu0 %v4363
    %7238 = vmatmul.f32.gmra.mxu0 %v7220
    %v7239 = vpop.f32.mrf.mxu0
    %v7240 = vadd.f32 0.0, %v7239
    %7241 = vdwg.mxu0
    %v7242 = vpack.c.bf16 %v7187, %v7187
    %v7243 = vpack.c.bf16 %v7240, %v7240
    %7244 = vmatpush.bf16.msra.mxu0 %v5225
    %7245 = vmatpush.bf16.msra.mxu0 %v5224
    %7246 = vmatpush.bf16.msra.mxu0 %v5223
    %7247 = vmatpush.bf16.msra.mxu0 %v5222
    %7248 = vmatpush.bf16.msra.mxu0 %v5221
    %7249 = vmatpush.bf16.msra.mxu0 %v5220
    %7250 = vmatpush.bf16.msra.mxu0 %v5219
    %7251 = vmatpush.bf16.msra.mxu0 %v5218
    %7252 = vmatmul.bf16.gmra.mxu0 %v7242
    %v7253 = vpop.f32.mrf.mxu0
    %v7254 = vadd.f32 %v5152, %v7253
    %v7255 = vpop.f32.mrf.mxu0
    %7256 = vdwg.mxu0
    %7257 = vmatpush.bf16.msra.mxu0 %v5233
    %7258 = vmatpush.bf16.msra.mxu0 %v5232
    %7259 = vmatpush.bf16.msra.mxu0 %v5231
    %7260 = vmatpush.bf16.msra.mxu0 %v5230
    %7261 = vmatpush.bf16.msra.mxu0 %v5229
    %7262 = vmatpush.bf16.msra.mxu0 %v5228
    %7263 = vmatpush.bf16.msra.mxu0 %v5227
    %7264 = vmatpush.bf16.msra.mxu0 %v5226
    %7265 = vmatmul.bf16.gmra.mxu0 %v7243
    %v7266 = vpop.f32.mrf.mxu0
    %v7267 = vadd.f32 %v7254, %v7266
    %v7268 = vpop.f32.mrf.mxu0
    %7269 = vdwg.mxu0
    %v7270 = vtanh.pop %v7267
    %v7271 = vpack.c.bf16 %v7270, %v7270
    %7272 = vmatpush.bf16.msra.mxu0 %v5337
    %7273 = vmatpush.bf16.msra.mxu0 %v5336
    %7274 = vmatpush.bf16.msra.mxu0 %v5335
    %7275 = vmatpush.bf16.msra.mxu0 %v5334
    %7276 = vmatpush.bf16.msra.mxu0 %v5333
    %7277 = vmatpush.bf16.msra.mxu0 %v5332
    %7278 = vmatpush.bf16.msra.mxu0 %v5331
    %7279 = vmatpush.bf16.msra.mxu0 %v5330
    %7280 = vmatmul.bf16.gmra.mxu0 %v7271
    %v7281 = vpop.f32.mrf.mxu0
    %v7282 = vadd.f32 %v5296, %v7281
    %v7283 = vpop.f32.mrf.mxu0
    %7284 = vdwg.mxu0
    %v7285 = vsel %vm5359, %v7282, -inf
    %7286 = vmax.xlane.f32.xlu0 %v7285
    %v7287 = vpop.xlane.xlu0 %7286
    %v7288 = vsub.f32 %v7282, %v7287
    %v7289 = vmul.f32 %v7288, 1.442695
    %v7290 = vpow.pop %v7289
    %v7291 = vsel %vm5359, %v7290, 0.0
    %7292 = vadd.xlane.f32.xlu0 %v7291
    %v7293 = vpop.xlane.xlu0 %7292
    %v7294 = vrcp.pop %v7293
    %v7295 = vmul.f32 %v7293, %v7294
    %v7296 = vsub.f32 1.0, %v7295
    %v7297 = vmul.f32 %v7294, %v7296
    %v7298 = vadd.f32 %v7294, %v7297
    %vm7299 = vweird.f32 %v7293
    %vm7300 = vweird.f32 %v7294
    %vm7301 = vmor %vm7299, %vm7300
    %v7302 = vsel %vm7301, %v7294, %v7298
    %v7303 = vand.u32 2147483647, %v7293
    %vm7304 = vcmp.eq.f32.partialorder %v7303, 8.507059e+37
    %v7305 = vand.u32 %v7293, 2147483648
    %v7306 = vor.u32 1.1754944e-38, %v7305
    %v7307 = vsel %vm7304, %v7306, %v7302
    %v7308 = vmul.f32 1.0, %v7307
    %vm7309 = vcmp.ge.f32.partialorder %v7282, %v7287
    %v7310 = vsel %vm7309, %v4463, 128
    %v7311 = vsel %vm5359, %v7310, 2147483647
    %v7312 = vand.u32 %v7311, 65535
    %v7313 = vshra.s32 %v7311, 16
    %v7314 = vcvt.s32.f32 %v7312
    %v7315 = vcvt.s32.f32 %v7313
    %7316 = vmin.xlane.f32.xlu0 %v7315
    %v7317 = vpop.xlane.xlu0 %7316
    %vm7318 = vcmp.eq.f32.partialorder %v7315, %v7317
    %v7319 = vsel %vm7318, %v7314, inf
    %7320 = vmin.xlane.f32.xlu0 %v7319
    %v7321 = vpop.xlane.xlu0 %7320
    %v7322 = vcvt.f32.s32 %v7321
    %v7323 = vcvt.f32.s32 %v7317
    %v7324 = vshll.u32 %v7323, 16
    %v7325 = vadd.s32 %v7324, %v7322
    %vm7326 = vcmask 7168
    %v7327 = vsel %vm7326, %v5400, %v5675
    %vm7328 = vcmask 15360
    %v7329 = vsel %vm7328, %v7327, %v5950
    %vm7330 = vcmask 23552
    %v7331 = vsel %vm7330, %v7329, %v6225
    %vm7332 = vcmask 31744
    %v7333 = vsel %vm7332, %v7331, %v6500
    %vm7334 = vcmask 39936
    %v7335 = vsel %vm7334, %v7333, %v6775
    %vm7336 = vcmask 48128
    %v7337 = vsel %vm7336, %v7335, %v7050
    %vm7338 = vcmask 56320
    %v7339 = vsel %vm7338, %v7337, %v7325
    %7340 = vst.msk [vmem:[#allocation22] sm:$0x3] %vm5080, %v7339
    %v7341 = vsel %vm7326, %v5383, %v5658
    %v7342 = vsel %vm7328, %v7341, %v5933
    %v7343 = vsel %vm7330, %v7342, %v6208
    %v7344 = vsel %vm7332, %v7343, %v6483
    %v7345 = vsel %vm7334, %v7344, %v6758
    %v7346 = vsel %vm7336, %v7345, %v7033
    %v7347 = vsel %vm7338, %v7346, %v7308
    %7348 = vst.msk [vmem:[#allocation23] sm:$0x3] %vm5080, %v7347
    // Predicated region
    $region98: #{tpu_custom_call.1} parent=1 // pred_check
      _
    $region99: #{tpu_custom_call.1} parent=1 // pred_check_branch
      %7350 = sbr.rel (0) target = $region101
    $region100: #{tpu_custom_call.1} parent=1 // pred_region
      %7352 = vsyncadd [#allocation11], 0
      %s7354 = sshll.u32 [#allocation22], 4
      %s7355 = int_to_ptr.vmem [resolvable:$true] %s7354
      %s7356 = sshll.u32 %s17, 4
      %s7357 = int_to_ptr.hbm [resolvable:$true] %s7356
      %7359 = dma.vmem_to_hbm [thread:$0]  %s7355, 32, %s7357, [#allocation11]
    $region101: #{tpu_custom_call.1} parent=1 // pred_fallthru
      _
    // Predicated region
    $region102: #{tpu_custom_call.1} parent=1 // pred_check
      _
    $region103: #{tpu_custom_call.1} parent=1 // pred_check_branch
      %7361 = sbr.rel (0) target = $region105
    $region104: #{tpu_custom_call.1} parent=1 // pred_region
      %7363 = vsyncadd [#allocation24], 0
      %s7365 = sshll.u32 [#allocation23], 4
      %s7366 = int_to_ptr.vmem [resolvable:$true] %s7365
      %s7367 = sshll.u32 %s18, 4
      %s7368 = int_to_ptr.hbm [resolvable:$true] %s7367
      %7370 = dma.vmem_to_hbm [thread:$0]  %s7366, 32, %s7368, [#allocation24]
    $region105: #{tpu_custom_call.1} parent=1 // pred_fallthru
      _
    // Predicated region
    $region106: #{tpu_custom_call.1} parent=1 // pred_check
      _
    $region107: #{tpu_custom_call.1} parent=1 // pred_check_branch
      %7372 = sbr.rel (0) target = $region109
    $region108: #{tpu_custom_call.1} parent=1 // pred_region
      %7374 = dma.done [#allocation11], 32
    $region109: #{tpu_custom_call.1} parent=1 // pred_fallthru
      _
    // Predicated region
    $region110: #{tpu_custom_call.1} parent=1 // pred_check
      _
    $region111: #{tpu_custom_call.1} parent=1 // pred_check_branch
      %7376 = sbr.rel (0) target = $region113
    $region112: #{tpu_custom_call.1} parent=1 // pred_region
      %7378 = dma.done [#allocation24], 32
    $region113: #{tpu_custom_call.1} parent=1 // pred_fallthru
      _
    %7379 = vsyncpa [#allocation10], 1
    %7380 = vsyncpa [#allocation15], 1
    %7381 = vsyncpa [#allocation18], 1
    %7382 = vsyncpa [#allocation21], 1
    %7383 = vsyncpa [#allocation11], 1
    %7384 = vsyncpa [#allocation24], 1
    %7385 = vsyncpa [#allocation12], 1
  %7386 = vsyncmov [#allocation7]
  %s7387 = vpop.sfrf %7386
  %p7388 = scmp.eq.s32.totalorder %s7387, 0
  %p7389 = pneg %p7388
  %7391 = shalt.err (%p7389)
  %s7392 = scalar_lea.sflag [#allocation7], 1
  %7393 = vsyncmov %s7392
  %s7394 = vpop.sfrf %7393
  %p7395 = scmp.eq.s32.totalorder %s7394, 0
  %p7396 = pneg %p7395
  %7398 = shalt.err (%p7396)
  %s7399 = scalar_lea.sflag [#allocation7], 2
  %7400 = vsyncmov %s7399
  %s7401 = vpop.sfrf %7400
  %p7402 = scmp.eq.s32.totalorder %s7401, 0
  %p7403 = pneg %p7402
  %7405 = shalt.err (%p7403)
  %s7406 = scalar_lea.sflag [#allocation7], 3
  %7407 = vsyncmov %s7406
  %s7408 = vpop.sfrf %7407
  %p7409 = scmp.eq.s32.totalorder %s7408, 0
  %p7410 = pneg %p7409
  %7412 = shalt.err (%p7410)

</llo_original>
